<compile_context>
chip_gen: v6e
topology: v6e:2x2x1
jax: 0.10.0
libtpu: 0.0.40
codegen_flags: <defaults>
</compile_context>

<pallas_src>
import functools

import jax
import jax.numpy as jnp
from jax.experimental import pallas as pl
from jax.experimental.pallas import tpu as pltpu

IN_CHANNELS = 4
NUM_CLASSES = 1
BN_EPS = 1e-5

_STAGE_CFG = [(64, 3, 1), (128, 4, 2), (256, 6, 2), (512, 3, 2)]  # resnet34 BasicBlocks


# ----------------------------- small helpers -----------------------------

def _round_up(x, m):
    return (x + m - 1) // m * m


def _out_dim(h, k, s, p):
    return (h + 2 * p - k) // s + 1


def _live_1d(h, k, s, p, ho):
    """Kernel-tap offsets along one spatial dim that ever touch a real input pixel."""
    return [i for i in range(k) if any(0 <= o * s + i - p < h for o in range(ho))]


def _conv_geom(h, w, cin_p, kh, kw, s, p):
    ho, wo = _out_dim(h, kh, s, p), _out_dim(w, kw, s, p)
    taps = [(i, j) for i in _live_1d(h, kh, s, p, ho)
            for j in _live_1d(w, kw, s, p, wo)]
    kp = _round_up(len(taps) * cin_p, 128)
    return ho, wo, taps, kp


def _vmem():
    return pl.BlockSpec(memory_space=pltpu.MemorySpace.VMEM)


# ----------------------------- Pallas kernels -----------------------------

def _gemm_bn_kernel(x_ref, w_ref, s_ref, b_ref, o_ref, *, relu):
    """Single-K-step (x @ w) with fused folded-BN scale/bias (+ReLU); bf16 store."""
    acc = jnp.dot(x_ref[...], w_ref[...], preferred_element_type=jnp.float32)
    y = acc * s_ref[...] + b_ref[...]
    if relu:
        y = jnp.maximum(y, 0.0)
    o_ref[...] = y.astype(o_ref.dtype)


def _gemm_bn_res_kernel(x_ref, w_ref, s_ref, b_ref, r_ref, o_ref, *, relu):
    """Same as above plus a fused residual add before the final ReLU."""
    acc = jnp.dot(x_ref[...], w_ref[...], preferred_element_type=jnp.float32)
    y = acc * s_ref[...] + b_ref[...] + r_ref[...].astype(jnp.float32)
    if relu:
        y = jnp.maximum(y, 0.0)
    o_ref[...] = y.astype(o_ref.dtype)


def _block1x1_kernel(x_ref, w1_ref, s1_ref, b1_ref, w2_ref, s2_ref, b2_ref, o_ref):
    """Whole BasicBlock at 1x1 spatial, identity shortcut, in one call.
    Both 3x3 convs reduce exactly to their centre tap; x is both GEMM1 input and
    the residual; the intermediate activation never leaves VMEM."""
    x = x_ref[...]
    h1 = jnp.dot(x, w1_ref[...], preferred_element_type=jnp.float32)
    h1 = jnp.maximum(h1 * s1_ref[...] + b1_ref[...], 0.0)
    h2 = jnp.dot(h1.astype(jnp.bfloat16), w2_ref[...],
                 preferred_element_type=jnp.float32)
    y = h2 * s2_ref[...] + b2_ref[...] + x.astype(jnp.float32)
    o_ref[...] = jnp.maximum(y, 0.0).astype(o_ref.dtype)


def _block1x1_down_kernel(p1_ref, w1_ref, s1_ref, b1_ref, w2_ref, s2_ref, b2_ref,
                          pd_ref, wd_ref, sd_ref, bd_ref, o_ref):
    """Whole BasicBlock whose conv1 output is 1x1 spatial, projection shortcut fused."""
    h1 = jnp.dot(p1_ref[...], w1_ref[...], preferred_element_type=jnp.float32)
    h1 = jnp.maximum(h1 * s1_ref[...] + b1_ref[...], 0.0)
    h2 = jnp.dot(h1.astype(jnp.bfloat16), w2_ref[...],
                 preferred_element_type=jnp.float32)
    r = jnp.dot(pd_ref[...], wd_ref[...], preferred_element_type=jnp.float32)
    y = h2 * s2_ref[...] + b2_ref[...] + r * sd_ref[...] + bd_ref[...]
    o_ref[...] = jnp.maximum(y, 0.0).astype(o_ref.dtype)


def _head_kernel(x_ref, w_ref, b_ref, o_ref, *, inv_hw):
    """Global average pool over HW, then fc + sigmoid, in one kernel."""
    feat = jnp.sum(x_ref[...].astype(jnp.float32), axis=1) * inv_hw       # (N, C)
    y = jnp.dot(feat, w_ref[...], preferred_element_type=jnp.float32) + b_ref[...]
    o_ref[...] = 1.0 / (1.0 + jnp.exp(-y))


# ----------------------------- Pallas wrappers -----------------------------

def _gemm_tiles(M, Np):
    tm = min(_round_up(M, 16), 256)          # 16: bf16 sublane pack
    Mp = _round_up(M, tm)
    if Mp // tm == 1 and Np >= 256 and (Np // 2) % 128 == 0:
        tn = Np // 2                         # >=2 parallel steps for the 2nd TC (v7x)
    elif Np > 256 and Np % 256 == 0:
        tn = 256
    else:
        tn = 128 if (Np > 128 and Np % 128 == 0) else Np
    return tm, tn, Mp


def _gemm(patches, w, s, b, res, relu):
    """bf16 (patches @ w) with f32 BN(+residual)(+ReLU) epilogue, bf16 output.
    K is collapsed to a single step: all operand tiles fit VMEM at these sizes."""
    M, K = patches.shape
    Kp, Np = w.shape
    assert K == Kp, (K, Kp)
    tm, tn, Mp = _gemm_tiles(M, Np)
    xp = patches if Mp == M else jnp.pad(patches, ((0, Mp - M), (0, 0)))
    grid = (Mp // tm, Np // tn)

    x_spec = pl.BlockSpec((tm, Kp), lambda i, j: (i, 0))
    w_spec = pl.BlockSpec((Kp, tn), lambda i, j: (0, j))
    v_spec = pl.BlockSpec((1, tn), lambda i, j: (0, j))
    o_spec = pl.BlockSpec((tm, tn), lambda i, j: (i, j))
    common = dict(
        grid=grid,
        out_shape=jax.ShapeDtypeStruct((Mp, Np), jnp.bfloat16),
        out_specs=o_spec,
        compiler_params=pltpu.CompilerParams(
            dimension_semantics=("parallel", "parallel")),
    )
    if res is None:
        out = pl.pallas_call(
            functools.partial(_gemm_bn_kernel, relu=relu),
            in_specs=[x_spec, w_spec, v_spec, v_spec],
            **common)(xp, w, s, b)
    else:
        rp = res if res.shape[0] == Mp else jnp.pad(res, ((0, Mp - res.shape[0]), (0, 0)))
        r_spec = pl.BlockSpec((tm, tn), lambda i, j: (i, j))
        out = pl.pallas_call(
            functools.partial(_gemm_bn_res_kernel, relu=relu),
            in_specs=[x_spec, w_spec, v_spec, v_spec, r_spec],
            **common)(xp, w, s, b, rp)
    return out if Mp == M else out[:M]


def _head(x, fc_w, fc_b, classes):
    """x: (N, HW, Cp) bf16 -> sigmoid(mean_HW(x) @ fc_w + fc_b), class dim padded to 128."""
    n, hw, _ = x.shape
    out = pl.pallas_call(
        functools.partial(_head_kernel, inv_hw=1.0 / float(hw)),
        out_shape=jax.ShapeDtypeStruct((n, fc_w.shape[1]), jnp.float32),
        in_specs=[_vmem()] * 3,
        out_specs=_vmem(),
    )(x, fc_w, fc_b)
    return out[:, :classes]


# ----------------------------- JAX glue (layout only, NHWC bf16) -----------------------------

def _im2col(x, meta, kp):
    """NHWC (channels already lane-padded) -> (M, Kp) patches over live taps only.
    Row order (n, ho, wo); column order (tap, channel) matching the prepped weights."""
    n, h, w, c = x.shape
    s, p, kh, kw = meta['stride'], meta['pad'], meta['kh'], meta['kw']
    ho, wo = _out_dim(h, kh, s, p), _out_dim(w, kw, s, p)
    xp = jnp.pad(x, ((0, 0), (p, p), (p, p), (0, 0))) if p else x
    cols = [xp[:, i:i + s * (ho - 1) + 1:s, j:j + s * (wo - 1) + 1:s, :]
            for (i, j) in meta['taps']]
    pt = cols[0] if len(cols) == 1 else jnp.concatenate(cols, axis=-1)
    pt = pt.reshape(n * ho * wo, len(meta['taps']) * c)
    if kp > pt.shape[1]:
        pt = jnp.pad(pt, ((0, 0), (0, kp - pt.shape[1])))
    return pt, ho, wo


def _conv_bn(x, arr, meta, relu, residual=None):
    """Fused Conv2d(bias=False) + folded BN + optional residual + ReLU (NHWC bf16)."""
    n = x.shape[0]
    patches, ho, wo = _im2col(x, meta, arr['w'].shape[0])
    np_ = arr['w'].shape[1]
    res2d = None if residual is None else residual.reshape(-1, np_)
    out = _gemm(patches, arr['w'], arr['s'], arr['b'], res2d, relu)
    return out.reshape(n, ho, wo, np_)


def _maxpool_3x3_s2_p1(x):
    """3x3/stride-2/pad-1 max pool as 8 strided-view maxima in XLA (perf review:
    avoids writing/re-reading a 9x patch stack in HBM; pure elementwise VPU work)."""
    n, h, w, c = x.shape
    ho, wo = _out_dim(h, 3, 2, 1), _out_dim(w, 3, 2, 1)
    xp = jnp.pad(x, ((0, 0), (1, 1), (1, 1), (0, 0)), constant_values=-jnp.inf)
    out = None
    for i in range(3):
        for j in range(3):
            v = xp[:, i:i + 2 * (ho - 1) + 1:2, j:j + 2 * (wo - 1) + 1:2, :]
            out = v if out is None else jnp.maximum(out, v)
    return out


def _basic_block_fused(x, arr, meta):
    """Stages 3/4: one pallas_call per BasicBlock (conv1 output is 1x1 spatial)."""
    n, h, w, c = x.shape
    cp = arr['conv2']['w'].shape[1]
    m = n                                   # 1x1 spatial -> one row per image
    mp = _round_up(m, 16)
    common = dict(out_shape=jax.ShapeDtypeStruct((mp, cp), jnp.bfloat16),
                  out_specs=_vmem())
    if arr['down'] is None:
        xv = jnp.pad(x.reshape(m, c), ((0, mp - m), (0, 0)))
        out = pl.pallas_call(_block1x1_kernel, in_specs=[_vmem()] * 7, **common)(
            xv, arr['conv1']['w'], arr['conv1']['s'], arr['conv1']['b'],
            arr['conv2']['w'], arr['conv2']['s'], arr['conv2']['b'])
    else:
        p1, _, _ = _im2col(x, meta['conv1'], arr['conv1']['w'].shape[0])
        pd, _, _ = _im2col(x, meta['down'], arr['down']['w'].shape[0])
        p1 = jnp.pad(p1, ((0, mp - m), (0, 0)))
        pd = jnp.pad(pd, ((0, mp - m), (0, 0)))
        out = pl.pallas_call(_block1x1_down_kernel, in_specs=[_vmem()] * 11, **common)(
            p1, arr['conv1']['w'], arr['conv1']['s'], arr['conv1']['b'],
            arr['conv2']['w'], arr['conv2']['s'], arr['conv2']['b'],
            pd, arr['down']['w'], arr['down']['s'], arr['down']['b'])
    return out[:m].reshape(n, 1, 1, cp)


# ----------------------------- Parameters (synthetic, deterministic) -----------------------------

def _make_params(key, in_channels, classes):
    keys = iter(jax.random.split(key, 256))

    def conv_w(cout, cin, k):
        fan_in = cin * k * k
        return (jax.random.normal(next(keys), (cout, cin, k, k), jnp.float32)
                * (1.0 / jnp.sqrt(fan_in)))

    def bn(c):
        gamma = jax.random.uniform(next(keys), (c,), minval=0.8, maxval=1.2)
        beta = jax.random.normal(next(keys), (c,)) * 0.05
        mean = jax.random.normal(next(keys), (c,)) * 0.05
        var = jax.random.uniform(next(keys), (c,), minval=0.8, maxval=1.2)
        scale = gamma / jnp.sqrt(var + BN_EPS)
        bias = beta - mean * scale
        return scale.astype(jnp.float32), bias.astype(jnp.float32)

    params = {'conv1_w': conv_w(64, in_channels, 7)}
    params['bn1_scale'], params['bn1_bias'] = bn(64)

    in_c = 64
    stages = []
    for out_c, nblocks, stage_stride in _STAGE_CFG:
        blocks = []
        for b in range(nblocks):
            s = stage_stride if b == 0 else 1
            blk = {'conv1_w': conv_w(out_c, in_c, 3)}
            blk['bn1_scale'], blk['bn1_bias'] = bn(out_c)
            blk['conv2_w'] = conv_w(out_c, out_c, 3)
            blk['bn2_scale'], blk['bn2_bias'] = bn(out_c)
            if s != 1 or in_c != out_c:
                blk['down_w'] = conv_w(out_c, in_c, 1)
                blk['dbn_scale'], blk['dbn_bias'] = bn(out_c)
            blocks.append(blk)
            in_c = out_c
        stages.append(blocks)
    params['stages'] = stages

    params['fc_w'] = (jax.random.normal(next(keys), (classes, 512), jnp.float32)
                      * (1.0 / jnp.sqrt(512.0)))
    params['fc_b'] = jax.random.normal(next(keys), (classes,), jnp.float32) * 0.05
    return params


# ----------------------------- One-time weight preparation -----------------------------

def _prep_conv(w, scale, bias, taps, cin_p, cout_p):
    """(cout,cin,kh,kw) -> live-tap GEMM weight (taps*cin_p -> Kp, cout_p) bf16,
    plus f32 (1, cout_p) folded-BN scale/bias."""
    cout, cin, _, _ = w.shape
    wt = jnp.stack([w[:, :, i, j] for (i, j) in taps], axis=0)        # (T, cout, cin)
    wt = jnp.transpose(wt, (0, 2, 1))                                 # (T, cin, cout)
    wt = jnp.pad(wt, ((0, 0), (0, cin_p - cin), (0, cout_p - cout)))
    k = len(taps) * cin_p
    kp = _round_up(k, 128)
    wm = jnp.pad(wt.reshape(k, cout_p), ((0, kp - k), (0, 0))).astype(jnp.bfloat16)
    s = jnp.pad(scale.astype(jnp.float32).reshape(1, -1), ((0, 0), (0, cout_p - cout)))
    b = jnp.pad(bias.astype(jnp.float32).reshape(1, -1), ((0, 0), (0, cout_p - cout)))
    return {'w': wm, 's': s, 'b': b}


def _prepare(params, in_hw):
    """Pre-format all weights once for the known input spatial size.
    Returns (arrays pytree for jit, static metadata closed over by the forward)."""
    h, w = in_hw
    cin = params['conv1_w'].shape[1]
    arrays, meta = {}, {}

    ho, wo, taps, _ = _conv_geom(h, w, cin, 7, 7, 2, 3)
    arrays['conv1'] = _prep_conv(params['conv1_w'], params['bn1_scale'],
                                 params['bn1_bias'], taps, cin, _round_up(64, 128))
    meta['conv1'] = dict(kh=7, kw=7, stride=2, pad=3, taps=taps)
    h, w = ho, wo
    h, w = _out_dim(h, 3, 2, 1), _out_dim(w, 3, 2, 1)                 # maxpool
    cin_p = _round_up(64, 128)

    arrays['stages'], meta['stages'] = [], []
    for bps, (out_c, _nb, stage_stride) in zip(params['stages'], _STAGE_CFG):
        a_blks, m_blks = [], []
        for bi, bp in enumerate(bps):
            s = stage_stride if bi == 0 else 1
            cout_p = _round_up(out_c, 128)
            ho, wo, taps1, _ = _conv_geom(h, w, cin_p, 3, 3, s, 1)
            _, _, taps2, _ = _conv_geom(ho, wo, cout_p, 3, 3, 1, 1)
            has_down = 'down_w' in bp
            fused = (ho == 1 and wo == 1 and len(taps2) == 1
                     and (has_down or len(taps1) == 1))
            a = {'conv1': _prep_conv(bp['conv1_w'], bp['bn1_scale'], bp['bn1_bias'],
                                     taps1, cin_p, cout_p),
                 'conv2': _prep_conv(bp['conv2_w'], bp['bn2_scale'], bp['bn2_bias'],
                                     taps2, cout_p, cout_p),
                 'down': None}
            m = {'fused': fused,
                 'conv1': dict(kh=3, kw=3, stride=s, pad=1, taps=taps1),
                 'conv2': dict(kh=3, kw=3, stride=1, pad=1, taps=taps2),
                 'down': None}
            if has_down:
                a['down'] = _prep_conv(bp['down_w'], bp['dbn_scale'], bp['dbn_bias'],
                                       [(0, 0)], cin_p, cout_p)
                m['down'] = dict(kh=1, kw=1, stride=s, pad=0, taps=[(0, 0)])
            a_blks.append(a)
            m_blks.append(m)
            h, w, cin_p = ho, wo, cout_p
        arrays['stages'].append(a_blks)
        meta['stages'].append(m_blks)

    classes = params['fc_w'].shape[0]
    ncp = _round_up(classes, 128)
    fcw = jnp.transpose(params['fc_w']).astype(jnp.float32)           # (512, classes)
    fcw = jnp.pad(fcw, ((0, cin_p - fcw.shape[0]), (0, ncp - classes)))
    fcb = jnp.pad(params['fc_b'].astype(jnp.float32).reshape(1, -1),
                  ((0, 0), (0, ncp - classes)))
    arrays['fc_w'], arrays['fc_b'] = fcw, fcb
    meta['classes'] = classes
    return arrays, meta


# ----------------------------- Forward pass -----------------------------

def resnet_forward(arrays, x, meta):
    x = jnp.transpose(x, (0, 2, 3, 1)).astype(jnp.bfloat16)           # NCHW -> NHWC, once
    x = _conv_bn(x, arrays['conv1'], meta['conv1'], relu=True)
    x = _maxpool_3x3_s2_p1(x)
    for st_arr, st_meta in zip(arrays['stages'], meta['stages']):
        for blk_arr, blk_meta in zip(st_arr, st_meta):
            if blk_meta['fused']:
                x = _basic_block_fused(x, blk_arr, blk_meta)
            else:
                identity = x
                out = _conv_bn(x, blk_arr['conv1'], blk_meta['conv1'], relu=True)
                if blk_arr['down'] is not None:
                    identity = _conv_bn(x, blk_arr['down'], blk_meta['down'], relu=False)
                x = _conv_bn(out, blk_arr['conv2'], blk_meta['conv2'], relu=True,
                             residual=identity)
    n, h, w, c = x.shape
    return _head(x.reshape(n, h * w, c), arrays['fc_w'], arrays['fc_b'], meta['classes'])


# ----------------------------- Main -----------------------------

if __name__ == "__main__":
    key = jax.random.PRNGKey(0)
    pkey, xkey = jax.random.split(key)
    params = _make_params(pkey, IN_CHANNELS, NUM_CLASSES)

    x = jax.random.normal(xkey, (2, IN_CHANNELS, 16, 16), jnp.float32)  # NCHW

    arrays, meta = _prepare(params, (16, 16))     # one-time weight formatting
    fwd = jax.jit(functools.partial(resnet_forward, meta=meta))
    out = jax.block_until_ready(fwd(arrays, x))

    assert out.shape == (2, NUM_CLASSES), out.shape
    assert bool(jnp.all(jnp.isfinite(out)))
    assert bool(jnp.all((out >= 0.0) & (out <= 1.0)))  # sigmoid output
    print("KERNEL_OK")
</pallas_src>

<mosaic_0001>
module attributes {stable_mosaic.version = 11 : i64} {
  func.func @_gemm_bn_kernel(%arg0: i32, %arg1: i32, %arg2: memref<128x256xbf16, #tpu.memory_space<vmem>>, %arg3: memref<256x128xbf16, #tpu.memory_space<vmem>>, %arg4: memref<1x128xf32, #tpu.memory_space<vmem>>, %arg5: memref<1x128xf32, #tpu.memory_space<vmem>>, %arg6: memref<128x128xbf16, #tpu.memory_space<vmem>>) attributes {dimension_semantics = [#tpu.dimension_semantics<parallel>, #tpu.dimension_semantics<parallel>], iteration_bounds = array<i64: 1, 1>, scalar_prefetch = 0 : i64, scratch_operands = 0 : i64, tpu.core_type = #tpu.core_type<tc>, window_params = [{transform_indices = @transform_0, window_bounds = array<i64: 128, 256>}, {transform_indices = @transform_1, window_bounds = array<i64: 256, 128>}, {transform_indices = @transform_2, window_bounds = array<i64: 1, 128>}, {transform_indices = @transform_3, window_bounds = array<i64: 1, 128>}, {transform_indices = @transform_4, window_bounds = array<i64: 128, 128>}]} {
    %c0 = arith.constant 0 : index
    %c0_0 = arith.constant 0 : index
    %0 = vector.load %arg2[%c0, %c0_0] : memref<128x256xbf16, #tpu.memory_space<vmem>>, vector<128x256xbf16>
    %c0_1 = arith.constant 0 : index
    %c0_2 = arith.constant 0 : index
    %1 = vector.load %arg3[%c0_1, %c0_2] : memref<256x128xbf16, #tpu.memory_space<vmem>>, vector<256x128xbf16>
    %cst = arith.constant dense<0.000000e+00> : vector<128x128xf32>
    %2 = tpu.matmul %0, %1, %cst {dimension_numbers = #tpu.dot_dimension_numbers<[1], [0], [0], [1], [0, 0, 1, 1], [], []>} : vector<128x256xbf16>, vector<256x128xbf16>, vector<128x128xf32> -> vector<128x128xf32>
    %c0_3 = arith.constant 0 : index
    %c0_4 = arith.constant 0 : index
    %3 = vector.load %arg4[%c0_3, %c0_4] : memref<1x128xf32, #tpu.memory_space<vmem>>, vector<1x128xf32>
    %4 = vector.broadcast %3 : vector<1x128xf32> to vector<128x128xf32>
    %5 = arith.mulf %2, %4 : vector<128x128xf32>
    %c0_5 = arith.constant 0 : index
    %c0_6 = arith.constant 0 : index
    %6 = vector.load %arg5[%c0_5, %c0_6] : memref<1x128xf32, #tpu.memory_space<vmem>>, vector<1x128xf32>
    %7 = vector.broadcast %6 : vector<1x128xf32> to vector<128x128xf32>
    %8 = arith.addf %5, %7 : vector<128x128xf32>
    %cst_7 = arith.constant 0.000000e+00 : f32
    %9 = vector.broadcast %cst_7 : f32 to vector<128x128xf32>
    %10 = arith.maximumf %8, %9 : vector<128x128xf32>
    %11 = arith.truncf %10 : vector<128x128xf32> to vector<128x128xbf16>
    %c0_8 = arith.constant 0 : index
    %c0_9 = arith.constant 0 : index
    %12 = vector.load %arg6[%c0_8, %c0_9] : memref<128x128xbf16, #tpu.memory_space<vmem>>, vector<128x128xbf16>
    tpu.vector_store %arg6[%c0_8, %c0_9], %11 {strides = array<i32>} : memref<128x128xbf16, #tpu.memory_space<vmem>>, vector<128x128xbf16>,
    return
  }
  func.func @transform_0(%arg0: i32, %arg1: i32) -> (i32, i32) {
    %c0_i32 = arith.constant 0 : i32
    %c0_i32_0 = arith.constant 0 : i32
    return %arg0, %c0_i32 : i32, i32
  }
  func.func @transform_1(%arg0: i32, %arg1: i32) -> (i32, i32) {
    %c0_i32 = arith.constant 0 : i32
    %c0_i32_0 = arith.constant 0 : i32
    return %c0_i32, %arg1 : i32, i32
  }
  func.func @transform_2(%arg0: i32, %arg1: i32) -> (i32, i32) {
    %c0_i32 = arith.constant 0 : i32
    %c0_i32_0 = arith.constant 0 : i32
    return %c0_i32, %arg1 : i32, i32
  }
  func.func @transform_3(%arg0: i32, %arg1: i32) -> (i32, i32) {
    %c0_i32 = arith.constant 0 : i32
    %c0_i32_0 = arith.constant 0 : i32
    return %c0_i32, %arg1 : i32, i32
  }
  func.func @transform_4(%arg0: i32, %arg1: i32) -> (i32, i32) {
    %c0_i32 = arith.constant 0 : i32
    return %arg0, %arg1 : i32, i32
  }
}

module attributes {stable_mosaic.version = 11 : i64} {
  func.func @_gemm_bn_kernel(%arg0: i32, %arg1: i32, %arg2: memref<32x1152xbf16, #tpu.memory_space<vmem>>, %arg3: memref<1152x128xbf16, #tpu.memory_space<vmem>>, %arg4: memref<1x128xf32, #tpu.memory_space<vmem>>, %arg5: memref<1x128xf32, #tpu.memory_space<vmem>>, %arg6: memref<32x128xbf16, #tpu.memory_space<vmem>>) attributes {dimension_semantics = [#tpu.dimension_semantics<parallel>, #tpu.dimension_semantics<parallel>], iteration_bounds = array<i64: 1, 1>, scalar_prefetch = 0 : i64, scratch_operands = 0 : i64, tpu.core_type = #tpu.core_type<tc>, window_params = [{transform_indices = @transform_0, window_bounds = array<i64: 32, 1152>}, {transform_indices = @transform_1, window_bounds = array<i64: 1152, 128>}, {transform_indices = @transform_2, window_bounds = array<i64: 1, 128>}, {transform_indices = @transform_3, window_bounds = array<i64: 1, 128>}, {transform_indices = @transform_4, window_bounds = array<i64: 32, 128>}]} {
    %c0 = arith.constant 0 : index
    %c0_0 = arith.constant 0 : index
    %0 = vector.load %arg2[%c0, %c0_0] : memref<32x1152xbf16, #tpu.memory_space<vmem>>, vector<32x1152xbf16>
    %c0_1 = arith.constant 0 : index
    %c0_2 = arith.constant 0 : index
    %1 = vector.load %arg3[%c0_1, %c0_2] : memref<1152x128xbf16, #tpu.memory_space<vmem>>, vector<1152x128xbf16>
    %cst = arith.constant dense<0.000000e+00> : vector<32x128xf32>
    %2 = tpu.matmul %0, %1, %cst {dimension_numbers = #tpu.dot_dimension_numbers<[1], [0], [0], [1], [0, 0, 1, 1], [], []>} : vector<32x1152xbf16>, vector<1152x128xbf16>, vector<32x128xf32> -> vector<32x128xf32>
    %c0_3 = arith.constant 0 : index
    %c0_4 = arith.constant 0 : index
    %3 = vector.load %arg4[%c0_3, %c0_4] : memref<1x128xf32, #tpu.memory_space<vmem>>, vector<1x128xf32>
    %4 = vector.broadcast %3 : vector<1x128xf32> to vector<32x128xf32>
    %5 = arith.mulf %2, %4 : vector<32x128xf32>
    %c0_5 = arith.constant 0 : index
    %c0_6 = arith.constant 0 : index
    %6 = vector.load %arg5[%c0_5, %c0_6] : memref<1x128xf32, #tpu.memory_space<vmem>>, vector<1x128xf32>
    %7 = vector.broadcast %6 : vector<1x128xf32> to vector<32x128xf32>
    %8 = arith.addf %5, %7 : vector<32x128xf32>
    %cst_7 = arith.constant 0.000000e+00 : f32
    %9 = vector.broadcast %cst_7 : f32 to vector<32x128xf32>
    %10 = arith.maximumf %8, %9 : vector<32x128xf32>
    %11 = arith.truncf %10 : vector<32x128xf32> to vector<32x128xbf16>
    %c0_8 = arith.constant 0 : index
    %c0_9 = arith.constant 0 : index
    %12 = vector.load %arg6[%c0_8, %c0_9] : memref<32x128xbf16, #tpu.memory_space<vmem>>, vector<32x128xbf16>
    tpu.vector_store %arg6[%c0_8, %c0_9], %11 {strides = array<i32>} : memref<32x128xbf16, #tpu.memory_space<vmem>>, vector<32x128xbf16>,
    return
  }
  func.func @transform_0(%arg0: i32, %arg1: i32) -> (i32, i32) {
    %c0_i32 = arith.constant 0 : i32
    %c0_i32_0 = arith.constant 0 : i32
    return %arg0, %c0_i32 : i32, i32
  }
  func.func @transform_1(%arg0: i32, %arg1: i32) -> (i32, i32) {
    %c0_i32 = arith.constant 0 : i32
    %c0_i32_0 = arith.constant 0 : i32
    return %c0_i32, %arg1 : i32, i32
  }
  func.func @transform_2(%arg0: i32, %arg1: i32) -> (i32, i32) {
    %c0_i32 = arith.constant 0 : i32
    %c0_i32_0 = arith.constant 0 : i32
    return %c0_i32, %arg1 : i32, i32
  }
  func.func @transform_3(%arg0: i32, %arg1: i32) -> (i32, i32) {
    %c0_i32 = arith.constant 0 : i32
    %c0_i32_0 = arith.constant 0 : i32
    return %c0_i32, %arg1 : i32, i32
  }
  func.func @transform_4(%arg0: i32, %arg1: i32) -> (i32, i32) {
    %c0_i32 = arith.constant 0 : i32
    return %arg0, %arg1 : i32, i32
  }
}

module attributes {stable_mosaic.version = 11 : i64} {
  func.func @_gemm_bn_res_kernel(%arg0: i32, %arg1: i32, %arg2: memref<32x1152xbf16, #tpu.memory_space<vmem>>, %arg3: memref<1152x128xbf16, #tpu.memory_space<vmem>>, %arg4: memref<1x128xf32, #tpu.memory_space<vmem>>, %arg5: memref<1x128xf32, #tpu.memory_space<vmem>>, %arg6: memref<32x128xbf16, #tpu.memory_space<vmem>>, %arg7: memref<32x128xbf16, #tpu.memory_space<vmem>>) attributes {dimension_semantics = [#tpu.dimension_semantics<parallel>, #tpu.dimension_semantics<parallel>], iteration_bounds = array<i64: 1, 1>, scalar_prefetch = 0 : i64, scratch_operands = 0 : i64, tpu.core_type = #tpu.core_type<tc>, window_params = [{transform_indices = @transform_0, window_bounds = array<i64: 32, 1152>}, {transform_indices = @transform_1, window_bounds = array<i64: 1152, 128>}, {transform_indices = @transform_2, window_bounds = array<i64: 1, 128>}, {transform_indices = @transform_3, window_bounds = array<i64: 1, 128>}, {transform_indices = @transform_4, window_bounds = array<i64: 32, 128>}, {transform_indices = @transform_5, window_bounds = array<i64: 32, 128>}]} {
    %c0 = arith.constant 0 : index
    %c0_0 = arith.constant 0 : index
    %0 = vector.load %arg2[%c0, %c0_0] : memref<32x1152xbf16, #tpu.memory_space<vmem>>, vector<32x1152xbf16>
    %c0_1 = arith.constant 0 : index
    %c0_2 = arith.constant 0 : index
    %1 = vector.load %arg3[%c0_1, %c0_2] : memref<1152x128xbf16, #tpu.memory_space<vmem>>, vector<1152x128xbf16>
    %cst = arith.constant dense<0.000000e+00> : vector<32x128xf32>
    %2 = tpu.matmul %0, %1, %cst {dimension_numbers = #tpu.dot_dimension_numbers<[1], [0], [0], [1], [0, 0, 1, 1], [], []>} : vector<32x1152xbf16>, vector<1152x128xbf16>, vector<32x128xf32> -> vector<32x128xf32>
    %c0_3 = arith.constant 0 : index
    %c0_4 = arith.constant 0 : index
    %3 = vector.load %arg4[%c0_3, %c0_4] : memref<1x128xf32, #tpu.memory_space<vmem>>, vector<1x128xf32>
    %4 = vector.broadcast %3 : vector<1x128xf32> to vector<32x128xf32>
    %5 = arith.mulf %2, %4 : vector<32x128xf32>
    %c0_5 = arith.constant 0 : index
    %c0_6 = arith.constant 0 : index
    %6 = vector.load %arg5[%c0_5, %c0_6] : memref<1x128xf32, #tpu.memory_space<vmem>>, vector<1x128xf32>
    %7 = vector.broadcast %6 : vector<1x128xf32> to vector<32x128xf32>
    %8 = arith.addf %5, %7 : vector<32x128xf32>
    %c0_7 = arith.constant 0 : index
    %c0_8 = arith.constant 0 : index
    %9 = vector.load %arg6[%c0_7, %c0_8] : memref<32x128xbf16, #tpu.memory_space<vmem>>, vector<32x128xbf16>
    %10 = arith.extf %9 : vector<32x128xbf16> to vector<32x128xf32>
    %11 = arith.addf %8, %10 : vector<32x128xf32>
    %cst_9 = arith.constant 0.000000e+00 : f32
    %12 = vector.broadcast %cst_9 : f32 to vector<32x128xf32>
    %13 = arith.maximumf %11, %12 : vector<32x128xf32>
    %14 = arith.truncf %13 : vector<32x128xf32> to vector<32x128xbf16>
    %c0_10 = arith.constant 0 : index
    %c0_11 = arith.constant 0 : index
    %15 = vector.load %arg7[%c0_10, %c0_11] : memref<32x128xbf16, #tpu.memory_space<vmem>>, vector<32x128xbf16>
    tpu.vector_store %arg7[%c0_10, %c0_11], %14 {strides = array<i32>} : memref<32x128xbf16, #tpu.memory_space<vmem>>, vector<32x128xbf16>,
    return
  }
  func.func @transform_0(%arg0: i32, %arg1: i32) -> (i32, i32) {
    %c0_i32 = arith.constant 0 : i32
    %c0_i32_0 = arith.constant 0 : i32
    return %arg0, %c0_i32 : i32, i32
  }
  func.func @transform_1(%arg0: i32, %arg1: i32) -> (i32, i32) {
    %c0_i32 = arith.constant 0 : i32
    %c0_i32_0 = arith.constant 0 : i32
    return %c0_i32, %arg1 : i32, i32
  }
  func.func @transform_2(%arg0: i32, %arg1: i32) -> (i32, i32) {
    %c0_i32 = arith.constant 0 : i32
    %c0_i32_0 = arith.constant 0 : i32
    return %c0_i32, %arg1 : i32, i32
  }
  func.func @transform_3(%arg0: i32, %arg1: i32) -> (i32, i32) {
    %c0_i32 = arith.constant 0 : i32
    %c0_i32_0 = arith.constant 0 : i32
    return %c0_i32, %arg1 : i32, i32
  }
  func.func @transform_4(%arg0: i32, %arg1: i32) -> (i32, i32) {
    %c0_i32 = arith.constant 0 : i32
    return %arg0, %arg1 : i32, i32
  }
  func.func @transform_5(%arg0: i32, %arg1: i32) -> (i32, i32) {
    %c0_i32 = arith.constant 0 : i32
    return %arg0, %arg1 : i32, i32
  }
}

module attributes {stable_mosaic.version = 11 : i64} {
  func.func @_gemm_bn_kernel(%arg0: i32, %arg1: i32, %arg2: memref<16x128xbf16, #tpu.memory_space<vmem>>, %arg3: memref<128x128xbf16, #tpu.memory_space<vmem>>, %arg4: memref<1x128xf32, #tpu.memory_space<vmem>>, %arg5: memref<1x128xf32, #tpu.memory_space<vmem>>, %arg6: memref<16x128xbf16, #tpu.memory_space<vmem>>) attributes {dimension_semantics = [#tpu.dimension_semantics<parallel>, #tpu.dimension_semantics<parallel>], iteration_bounds = array<i64: 1, 1>, scalar_prefetch = 0 : i64, scratch_operands = 0 : i64, tpu.core_type = #tpu.core_type<tc>, window_params = [{transform_indices = @transform_0, window_bounds = array<i64: 16, 128>}, {transform_indices = @transform_1, window_bounds = array<i64: 128, 128>}, {transform_indices = @transform_2, window_bounds = array<i64: 1, 128>}, {transform_indices = @transform_3, window_bounds = array<i64: 1, 128>}, {transform_indices = @transform_4, window_bounds = array<i64: 16, 128>}]} {
    %c0 = arith.constant 0 : index
    %c0_0 = arith.constant 0 : index
    %0 = vector.load %arg2[%c0, %c0_0] : memref<16x128xbf16, #tpu.memory_space<vmem>>, vector<16x128xbf16>
    %c0_1 = arith.constant 0 : index
    %c0_2 = arith.constant 0 : index
    %1 = vector.load %arg3[%c0_1, %c0_2] : memref<128x128xbf16, #tpu.memory_space<vmem>>, vector<128x128xbf16>
    %cst = arith.constant dense<0.000000e+00> : vector<16x128xf32>
    %2 = tpu.matmul %0, %1, %cst {dimension_numbers = #tpu.dot_dimension_numbers<[1], [0], [0], [1], [0, 0, 1, 1], [], []>} : vector<16x128xbf16>, vector<128x128xbf16>, vector<16x128xf32> -> vector<16x128xf32>
    %c0_3 = arith.constant 0 : index
    %c0_4 = arith.constant 0 : index
    %3 = vector.load %arg4[%c0_3, %c0_4] : memref<1x128xf32, #tpu.memory_space<vmem>>, vector<1x128xf32>
    %4 = vector.broadcast %3 : vector<1x128xf32> to vector<16x128xf32>
    %5 = arith.mulf %2, %4 : vector<16x128xf32>
    %c0_5 = arith.constant 0 : index
    %c0_6 = arith.constant 0 : index
    %6 = vector.load %arg5[%c0_5, %c0_6] : memref<1x128xf32, #tpu.memory_space<vmem>>, vector<1x128xf32>
    %7 = vector.broadcast %6 : vector<1x128xf32> to vector<16x128xf32>
    %8 = arith.addf %5, %7 : vector<16x128xf32>
    %9 = arith.truncf %8 : vector<16x128xf32> to vector<16x128xbf16>
    %c0_7 = arith.constant 0 : index
    %c0_8 = arith.constant 0 : index
    %10 = vector.load %arg6[%c0_7, %c0_8] : memref<16x128xbf16, #tpu.memory_space<vmem>>, vector<16x128xbf16>
    tpu.vector_store %arg6[%c0_7, %c0_8], %9 {strides = array<i32>} : memref<16x128xbf16, #tpu.memory_space<vmem>>, vector<16x128xbf16>,
    return
  }
  func.func @transform_0(%arg0: i32, %arg1: i32) -> (i32, i32) {
    %c0_i32 = arith.constant 0 : i32
    %c0_i32_0 = arith.constant 0 : i32
    return %arg0, %c0_i32 : i32, i32
  }
  func.func @transform_1(%arg0: i32, %arg1: i32) -> (i32, i32) {
    %c0_i32 = arith.constant 0 : i32
    %c0_i32_0 = arith.constant 0 : i32
    return %c0_i32, %arg1 : i32, i32
  }
  func.func @transform_2(%arg0: i32, %arg1: i32) -> (i32, i32) {
    %c0_i32 = arith.constant 0 : i32
    %c0_i32_0 = arith.constant 0 : i32
    return %c0_i32, %arg1 : i32, i32
  }
  func.func @transform_3(%arg0: i32, %arg1: i32) -> (i32, i32) {
    %c0_i32 = arith.constant 0 : i32
    %c0_i32_0 = arith.constant 0 : i32
    return %c0_i32, %arg1 : i32, i32
  }
  func.func @transform_4(%arg0: i32, %arg1: i32) -> (i32, i32) {
    %c0_i32 = arith.constant 0 : i32
    return %arg0, %arg1 : i32, i32
  }
}

module attributes {stable_mosaic.version = 11 : i64} {
  func.func @_gemm_bn_kernel(%arg0: i32, %arg1: i32, %arg2: memref<16x1152xbf16, #tpu.memory_space<vmem>>, %arg3: memref<1152x128xbf16, #tpu.memory_space<vmem>>, %arg4: memref<1x128xf32, #tpu.memory_space<vmem>>, %arg5: memref<1x128xf32, #tpu.memory_space<vmem>>, %arg6: memref<16x128xbf16, #tpu.memory_space<vmem>>) attributes {dimension_semantics = [#tpu.dimension_semantics<parallel>, #tpu.dimension_semantics<parallel>], iteration_bounds = array<i64: 1, 1>, scalar_prefetch = 0 : i64, scratch_operands = 0 : i64, tpu.core_type = #tpu.core_type<tc>, window_params = [{transform_indices = @transform_0, window_bounds = array<i64: 16, 1152>}, {transform_indices = @transform_1, window_bounds = array<i64: 1152, 128>}, {transform_indices = @transform_2, window_bounds = array<i64: 1, 128>}, {transform_indices = @transform_3, window_bounds = array<i64: 1, 128>}, {transform_indices = @transform_4, window_bounds = array<i64: 16, 128>}]} {
    %c0 = arith.constant 0 : index
    %c0_0 = arith.constant 0 : index
    %0 = vector.load %arg2[%c0, %c0_0] : memref<16x1152xbf16, #tpu.memory_space<vmem>>, vector<16x1152xbf16>
    %c0_1 = arith.constant 0 : index
    %c0_2 = arith.constant 0 : index
    %1 = vector.load %arg3[%c0_1, %c0_2] : memref<1152x128xbf16, #tpu.memory_space<vmem>>, vector<1152x128xbf16>
    %cst = arith.constant dense<0.000000e+00> : vector<16x128xf32>
    %2 = tpu.matmul %0, %1, %cst {dimension_numbers = #tpu.dot_dimension_numbers<[1], [0], [0], [1], [0, 0, 1, 1], [], []>} : vector<16x1152xbf16>, vector<1152x128xbf16>, vector<16x128xf32> -> vector<16x128xf32>
    %c0_3 = arith.constant 0 : index
    %c0_4 = arith.constant 0 : index
    %3 = vector.load %arg4[%c0_3, %c0_4] : memref<1x128xf32, #tpu.memory_space<vmem>>, vector<1x128xf32>
    %4 = vector.broadcast %3 : vector<1x128xf32> to vector<16x128xf32>
    %5 = arith.mulf %2, %4 : vector<16x128xf32>
    %c0_5 = arith.constant 0 : index
    %c0_6 = arith.constant 0 : index
    %6 = vector.load %arg5[%c0_5, %c0_6] : memref<1x128xf32, #tpu.memory_space<vmem>>, vector<1x128xf32>
    %7 = vector.broadcast %6 : vector<1x128xf32> to vector<16x128xf32>
    %8 = arith.addf %5, %7 : vector<16x128xf32>
    %cst_7 = arith.constant 0.000000e+00 : f32
    %9 = vector.broadcast %cst_7 : f32 to vector<16x128xf32>
    %10 = arith.maximumf %8, %9 : vector<16x128xf32>
    %11 = arith.truncf %10 : vector<16x128xf32> to vector<16x128xbf16>
    %c0_8 = arith.constant 0 : index
    %c0_9 = arith.constant 0 : index
    %12 = vector.load %arg6[%c0_8, %c0_9] : memref<16x128xbf16, #tpu.memory_space<vmem>>, vector<16x128xbf16>
    tpu.vector_store %arg6[%c0_8, %c0_9], %11 {strides = array<i32>} : memref<16x128xbf16, #tpu.memory_space<vmem>>, vector<16x128xbf16>,
    return
  }
  func.func @transform_0(%arg0: i32, %arg1: i32) -> (i32, i32) {
    %c0_i32 = arith.constant 0 : i32
    %c0_i32_0 = arith.constant 0 : i32
    return %arg0, %c0_i32 : i32, i32
  }
  func.func @transform_1(%arg0: i32, %arg1: i32) -> (i32, i32) {
    %c0_i32 = arith.constant 0 : i32
    %c0_i32_0 = arith.constant 0 : i32
    return %c0_i32, %arg1 : i32, i32
  }
  func.func @transform_2(%arg0: i32, %arg1: i32) -> (i32, i32) {
    %c0_i32 = arith.constant 0 : i32
    %c0_i32_0 = arith.constant 0 : i32
    return %c0_i32, %arg1 : i32, i32
  }
  func.func @transform_3(%arg0: i32, %arg1: i32) -> (i32, i32) {
    %c0_i32 = arith.constant 0 : i32
    %c0_i32_0 = arith.constant 0 : i32
    return %c0_i32, %arg1 : i32, i32
  }
  func.func @transform_4(%arg0: i32, %arg1: i32) -> (i32, i32) {
    %c0_i32 = arith.constant 0 : i32
    return %arg0, %arg1 : i32, i32
  }
}

module attributes {stable_mosaic.version = 11 : i64} {
  func.func @_gemm_bn_res_kernel(%arg0: i32, %arg1: i32, %arg2: memref<16x1152xbf16, #tpu.memory_space<vmem>>, %arg3: memref<1152x128xbf16, #tpu.memory_space<vmem>>, %arg4: memref<1x128xf32, #tpu.memory_space<vmem>>, %arg5: memref<1x128xf32, #tpu.memory_space<vmem>>, %arg6: memref<16x128xbf16, #tpu.memory_space<vmem>>, %arg7: memref<16x128xbf16, #tpu.memory_space<vmem>>) attributes {dimension_semantics = [#tpu.dimension_semantics<parallel>, #tpu.dimension_semantics<parallel>], iteration_bounds = array<i64: 1, 1>, scalar_prefetch = 0 : i64, scratch_operands = 0 : i64, tpu.core_type = #tpu.core_type<tc>, window_params = [{transform_indices = @transform_0, window_bounds = array<i64: 16, 1152>}, {transform_indices = @transform_1, window_bounds = array<i64: 1152, 128>}, {transform_indices = @transform_2, window_bounds = array<i64: 1, 128>}, {transform_indices = @transform_3, window_bounds = array<i64: 1, 128>}, {transform_indices = @transform_4, window_bounds = array<i64: 16, 128>}, {transform_indices = @transform_5, window_bounds = array<i64: 16, 128>}]} {
    %c0 = arith.constant 0 : index
    %c0_0 = arith.constant 0 : index
    %0 = vector.load %arg2[%c0, %c0_0] : memref<16x1152xbf16, #tpu.memory_space<vmem>>, vector<16x1152xbf16>
    %c0_1 = arith.constant 0 : index
    %c0_2 = arith.constant 0 : index
    %1 = vector.load %arg3[%c0_1, %c0_2] : memref<1152x128xbf16, #tpu.memory_space<vmem>>, vector<1152x128xbf16>
    %cst = arith.constant dense<0.000000e+00> : vector<16x128xf32>
    %2 = tpu.matmul %0, %1, %cst {dimension_numbers = #tpu.dot_dimension_numbers<[1], [0], [0], [1], [0, 0, 1, 1], [], []>} : vector<16x1152xbf16>, vector<1152x128xbf16>, vector<16x128xf32> -> vector<16x128xf32>
    %c0_3 = arith.constant 0 : index
    %c0_4 = arith.constant 0 : index
    %3 = vector.load %arg4[%c0_3, %c0_4] : memref<1x128xf32, #tpu.memory_space<vmem>>, vector<1x128xf32>
    %4 = vector.broadcast %3 : vector<1x128xf32> to vector<16x128xf32>
    %5 = arith.mulf %2, %4 : vector<16x128xf32>
    %c0_5 = arith.constant 0 : index
    %c0_6 = arith.constant 0 : index
    %6 = vector.load %arg5[%c0_5, %c0_6] : memref<1x128xf32, #tpu.memory_space<vmem>>, vector<1x128xf32>
    %7 = vector.broadcast %6 : vector<1x128xf32> to vector<16x128xf32>
    %8 = arith.addf %5, %7 : vector<16x128xf32>
    %c0_7 = arith.constant 0 : index
    %c0_8 = arith.constant 0 : index
    %9 = vector.load %arg6[%c0_7, %c0_8] : memref<16x128xbf16, #tpu.memory_space<vmem>>, vector<16x128xbf16>
    %10 = arith.extf %9 : vector<16x128xbf16> to vector<16x128xf32>
    %11 = arith.addf %8, %10 : vector<16x128xf32>
    %cst_9 = arith.constant 0.000000e+00 : f32
    %12 = vector.broadcast %cst_9 : f32 to vector<16x128xf32>
    %13 = arith.maximumf %11, %12 : vector<16x128xf32>
    %14 = arith.truncf %13 : vector<16x128xf32> to vector<16x128xbf16>
    %c0_10 = arith.constant 0 : index
    %c0_11 = arith.constant 0 : index
    %15 = vector.load %arg7[%c0_10, %c0_11] : memref<16x128xbf16, #tpu.memory_space<vmem>>, vector<16x128xbf16>
    tpu.vector_store %arg7[%c0_10, %c0_11], %14 {strides = array<i32>} : memref<16x128xbf16, #tpu.memory_space<vmem>>, vector<16x128xbf16>,
    return
  }
  func.func @transform_0(%arg0: i32, %arg1: i32) -> (i32, i32) {
    %c0_i32 = arith.constant 0 : i32
    %c0_i32_0 = arith.constant 0 : i32
    return %arg0, %c0_i32 : i32, i32
  }
  func.func @transform_1(%arg0: i32, %arg1: i32) -> (i32, i32) {
    %c0_i32 = arith.constant 0 : i32
    %c0_i32_0 = arith.constant 0 : i32
    return %c0_i32, %arg1 : i32, i32
  }
  func.func @transform_2(%arg0: i32, %arg1: i32) -> (i32, i32) {
    %c0_i32 = arith.constant 0 : i32
    %c0_i32_0 = arith.constant 0 : i32
    return %c0_i32, %arg1 : i32, i32
  }
  func.func @transform_3(%arg0: i32, %arg1: i32) -> (i32, i32) {
    %c0_i32 = arith.constant 0 : i32
    %c0_i32_0 = arith.constant 0 : i32
    return %c0_i32, %arg1 : i32, i32
  }
  func.func @transform_4(%arg0: i32, %arg1: i32) -> (i32, i32) {
    %c0_i32 = arith.constant 0 : i32
    return %arg0, %arg1 : i32, i32
  }
  func.func @transform_5(%arg0: i32, %arg1: i32) -> (i32, i32) {
    %c0_i32 = arith.constant 0 : i32
    return %arg0, %arg1 : i32, i32
  }
}

module attributes {stable_mosaic.version = 11 : i64} {
  func.func @_block1x1_kernel(%arg0: memref<16x256xbf16, #tpu.memory_space<vmem>>, %arg1: memref<256x256xbf16, #tpu.memory_space<vmem>>, %arg2: memref<1x256xf32, #tpu.memory_space<vmem>>, %arg3: memref<1x256xf32, #tpu.memory_space<vmem>>, %arg4: memref<256x256xbf16, #tpu.memory_space<vmem>>, %arg5: memref<1x256xf32, #tpu.memory_space<vmem>>, %arg6: memref<1x256xf32, #tpu.memory_space<vmem>>, %arg7: memref<16x256xbf16, #tpu.memory_space<vmem>>) attributes {dimension_semantics = [], scalar_prefetch = 0 : i64, scratch_operands = 0 : i64, tpu.core_type = #tpu.core_type<tc>} {
    %c0 = arith.constant 0 : index
    %c0_0 = arith.constant 0 : index
    %0 = vector.load %arg0[%c0, %c0_0] : memref<16x256xbf16, #tpu.memory_space<vmem>>, vector<16x256xbf16>
    %c0_1 = arith.constant 0 : index
    %c0_2 = arith.constant 0 : index
    %1 = vector.load %arg1[%c0_1, %c0_2] : memref<256x256xbf16, #tpu.memory_space<vmem>>, vector<256x256xbf16>
    %cst = arith.constant dense<0.000000e+00> : vector<16x256xf32>
    %2 = tpu.matmul %0, %1, %cst {dimension_numbers = #tpu.dot_dimension_numbers<[1], [0], [0], [1], [0, 0, 1, 1], [], []>} : vector<16x256xbf16>, vector<256x256xbf16>, vector<16x256xf32> -> vector<16x256xf32>
    %c0_3 = arith.constant 0 : index
    %c0_4 = arith.constant 0 : index
    %3 = vector.load %arg2[%c0_3, %c0_4] : memref<1x256xf32, #tpu.memory_space<vmem>>, vector<1x256xf32>
    %4 = vector.broadcast %3 : vector<1x256xf32> to vector<16x256xf32>
    %5 = arith.mulf %2, %4 : vector<16x256xf32>
    %c0_5 = arith.constant 0 : index
    %c0_6 = arith.constant 0 : index
    %6 = vector.load %arg3[%c0_5, %c0_6] : memref<1x256xf32, #tpu.memory_space<vmem>>, vector<1x256xf32>
    %7 = vector.broadcast %6 : vector<1x256xf32> to vector<16x256xf32>
    %8 = arith.addf %5, %7 : vector<16x256xf32>
    %cst_7 = arith.constant 0.000000e+00 : f32
    %9 = vector.broadcast %cst_7 : f32 to vector<16x256xf32>
    %10 = arith.maximumf %8, %9 : vector<16x256xf32>
    %11 = arith.truncf %10 : vector<16x256xf32> to vector<16x256xbf16>
    %c0_8 = arith.constant 0 : index
    %c0_9 = arith.constant 0 : index
    %12 = vector.load %arg4[%c0_8, %c0_9] : memref<256x256xbf16, #tpu.memory_space<vmem>>, vector<256x256xbf16>
    %cst_10 = arith.constant dense<0.000000e+00> : vector<16x256xf32>
    %13 = tpu.matmul %11, %12, %cst_10 {dimension_numbers = #tpu.dot_dimension_numbers<[1], [0], [0], [1], [0, 0, 1, 1], [], []>} : vector<16x256xbf16>, vector<256x256xbf16>, vector<16x256xf32> -> vector<16x256xf32>
    %c0_11 = arith.constant 0 : index
    %c0_12 = arith.constant 0 : index
    %14 = vector.load %arg5[%c0_11, %c0_12] : memref<1x256xf32, #tpu.memory_space<vmem>>, vector<1x256xf32>
    %15 = vector.broadcast %14 : vector<1x256xf32> to vector<16x256xf32>
    %16 = arith.mulf %13, %15 : vector<16x256xf32>
    %c0_13 = arith.constant 0 : index
    %c0_14 = arith.constant 0 : index
    %17 = vector.load %arg6[%c0_13, %c0_14] : memref<1x256xf32, #tpu.memory_space<vmem>>, vector<1x256xf32>
    %18 = vector.broadcast %17 : vector<1x256xf32> to vector<16x256xf32>
    %19 = arith.addf %16, %18 : vector<16x256xf32>
    %20 = arith.extf %0 : vector<16x256xbf16> to vector<16x256xf32>
    %21 = arith.addf %19, %20 : vector<16x256xf32>
    %cst_15 = arith.constant 0.000000e+00 : f32
    %22 = vector.broadcast %cst_15 : f32 to vector<16x256xf32>
    %23 = arith.maximumf %21, %22 : vector<16x256xf32>
    %24 = arith.truncf %23 : vector<16x256xf32> to vector<16x256xbf16>
    %c0_16 = arith.constant 0 : index
    %c0_17 = arith.constant 0 : index
    %25 = vector.load %arg7[%c0_16, %c0_17] : memref<16x256xbf16, #tpu.memory_space<vmem>>, vector<16x256xbf16>
    tpu.vector_store %arg7[%c0_16, %c0_17], %24 {strides = array<i32>} : memref<16x256xbf16, #tpu.memory_space<vmem>>, vector<16x256xbf16>,
    return
  }
}

module attributes {stable_mosaic.version = 11 : i64} {
  func.func @_block1x1_down_kernel(%arg0: memref<16x512xbf16, #tpu.memory_space<vmem>>, %arg1: memref<512x256xbf16, #tpu.memory_space<vmem>>, %arg2: memref<1x256xf32, #tpu.memory_space<vmem>>, %arg3: memref<1x256xf32, #tpu.memory_space<vmem>>, %arg4: memref<256x256xbf16, #tpu.memory_space<vmem>>, %arg5: memref<1x256xf32, #tpu.memory_space<vmem>>, %arg6: memref<1x256xf32, #tpu.memory_space<vmem>>, %arg7: memref<16x128xbf16, #tpu.memory_space<vmem>>, %arg8: memref<128x256xbf16, #tpu.memory_space<vmem>>, %arg9: memref<1x256xf32, #tpu.memory_space<vmem>>, %arg10: memref<1x256xf32, #tpu.memory_space<vmem>>, %arg11: memref<16x256xbf16, #tpu.memory_space<vmem>>) attributes {dimension_semantics = [], scalar_prefetch = 0 : i64, scratch_operands = 0 : i64, tpu.core_type = #tpu.core_type<tc>} {
    %c0 = arith.constant 0 : index
    %c0_0 = arith.constant 0 : index
    %0 = vector.load %arg0[%c0, %c0_0] : memref<16x512xbf16, #tpu.memory_space<vmem>>, vector<16x512xbf16>
    %c0_1 = arith.constant 0 : index
    %c0_2 = arith.constant 0 : index
    %1 = vector.load %arg1[%c0_1, %c0_2] : memref<512x256xbf16, #tpu.memory_space<vmem>>, vector<512x256xbf16>
    %cst = arith.constant dense<0.000000e+00> : vector<16x256xf32>
    %2 = tpu.matmul %0, %1, %cst {dimension_numbers = #tpu.dot_dimension_numbers<[1], [0], [0], [1], [0, 0, 1, 1], [], []>} : vector<16x512xbf16>, vector<512x256xbf16>, vector<16x256xf32> -> vector<16x256xf32>
    %c0_3 = arith.constant 0 : index
    %c0_4 = arith.constant 0 : index
    %3 = vector.load %arg2[%c0_3, %c0_4] : memref<1x256xf32, #tpu.memory_space<vmem>>, vector<1x256xf32>
    %4 = vector.broadcast %3 : vector<1x256xf32> to vector<16x256xf32>
    %5 = arith.mulf %2, %4 : vector<16x256xf32>
    %c0_5 = arith.constant 0 : index
    %c0_6 = arith.constant 0 : index
    %6 = vector.load %arg3[%c0_5, %c0_6] : memref<1x256xf32, #tpu.memory_space<vmem>>, vector<1x256xf32>
    %7 = vector.broadcast %6 : vector<1x256xf32> to vector<16x256xf32>
    %8 = arith.addf %5, %7 : vector<16x256xf32>
    %cst_7 = arith.constant 0.000000e+00 : f32
    %9 = vector.broadcast %cst_7 : f32 to vector<16x256xf32>
    %10 = arith.maximumf %8, %9 : vector<16x256xf32>
    %11 = arith.truncf %10 : vector<16x256xf32> to vector<16x256xbf16>
    %c0_8 = arith.constant 0 : index
    %c0_9 = arith.constant 0 : index
    %12 = vector.load %arg4[%c0_8, %c0_9] : memref<256x256xbf16, #tpu.memory_space<vmem>>, vector<256x256xbf16>
    %cst_10 = arith.constant dense<0.000000e+00> : vector<16x256xf32>
    %13 = tpu.matmul %11, %12, %cst_10 {dimension_numbers = #tpu.dot_dimension_numbers<[1], [0], [0], [1], [0, 0, 1, 1], [], []>} : vector<16x256xbf16>, vector<256x256xbf16>, vector<16x256xf32> -> vector<16x256xf32>
    %c0_11 = arith.constant 0 : index
    %c0_12 = arith.constant 0 : index
    %14 = vector.load %arg7[%c0_11, %c0_12] : memref<16x128xbf16, #tpu.memory_space<vmem>>, vector<16x128xbf16>
    %c0_13 = arith.constant 0 : index
    %c0_14 = arith.constant 0 : index
    %15 = vector.load %arg8[%c0_13, %c0_14] : memref<128x256xbf16, #tpu.memory_space<vmem>>, vector<128x256xbf16>
    %cst_15 = arith.constant dense<0.000000e+00> : vector<16x256xf32>
    %16 = tpu.matmul %14, %15, %cst_15 {dimension_numbers = #tpu.dot_dimension_numbers<[1], [0], [0], [1], [0, 0, 1, 1], [], []>} : vector<16x128xbf16>, vector<128x256xbf16>, vector<16x256xf32> -> vector<16x256xf32>
    %c0_16 = arith.constant 0 : index
    %c0_17 = arith.constant 0 : index
    %17 = vector.load %arg5[%c0_16, %c0_17] : memref<1x256xf32, #tpu.memory_space<vmem>>, vector<1x256xf32>
    %18 = vector.broadcast %17 : vector<1x256xf32> to vector<16x256xf32>
    %19 = arith.mulf %13, %18 : vector<16x256xf32>
    %c0_18 = arith.constant 0 : index
    %c0_19 = arith.constant 0 : index
    %20 = vector.load %arg6[%c0_18, %c0_19] : memref<1x256xf32, #tpu.memory_space<vmem>>, vector<1x256xf32>
    %21 = vector.broadcast %20 : vector<1x256xf32> to vector<16x256xf32>
    %22 = arith.addf %19, %21 : vector<16x256xf32>
    %c0_20 = arith.constant 0 : index
    %c0_21 = arith.constant 0 : index
    %23 = vector.load %arg9[%c0_20, %c0_21] : memref<1x256xf32, #tpu.memory_space<vmem>>, vector<1x256xf32>
    %24 = vector.broadcast %23 : vector<1x256xf32> to vector<16x256xf32>
    %25 = arith.mulf %16, %24 : vector<16x256xf32>
    %26 = arith.addf %22, %25 : vector<16x256xf32>
    %c0_22 = arith.constant 0 : index
    %c0_23 = arith.constant 0 : index
    %27 = vector.load %arg10[%c0_22, %c0_23] : memref<1x256xf32, #tpu.memory_space<vmem>>, vector<1x256xf32>
    %28 = vector.broadcast %27 : vector<1x256xf32> to vector<16x256xf32>
    %29 = arith.addf %26, %28 : vector<16x256xf32>
    %cst_24 = arith.constant 0.000000e+00 : f32
    %30 = vector.broadcast %cst_24 : f32 to vector<16x256xf32>
    %31 = arith.maximumf %29, %30 : vector<16x256xf32>
    %32 = arith.truncf %31 : vector<16x256xf32> to vector<16x256xbf16>
    %c0_25 = arith.constant 0 : index
    %c0_26 = arith.constant 0 : index
    %33 = vector.load %arg11[%c0_25, %c0_26] : memref<16x256xbf16, #tpu.memory_space<vmem>>, vector<16x256xbf16>
    tpu.vector_store %arg11[%c0_25, %c0_26], %32 {strides = array<i32>} : memref<16x256xbf16, #tpu.memory_space<vmem>>, vector<16x256xbf16>,
    return
  }
}

module attributes {stable_mosaic.version = 11 : i64} {
  func.func @_block1x1_down_kernel(%arg0: memref<16x256xbf16, #tpu.memory_space<vmem>>, %arg1: memref<256x512xbf16, #tpu.memory_space<vmem>>, %arg2: memref<1x512xf32, #tpu.memory_space<vmem>>, %arg3: memref<1x512xf32, #tpu.memory_space<vmem>>, %arg4: memref<512x512xbf16, #tpu.memory_space<vmem>>, %arg5: memref<1x512xf32, #tpu.memory_space<vmem>>, %arg6: memref<1x512xf32, #tpu.memory_space<vmem>>, %arg7: memref<16x256xbf16, #tpu.memory_space<vmem>>, %arg8: memref<256x512xbf16, #tpu.memory_space<vmem>>, %arg9: memref<1x512xf32, #tpu.memory_space<vmem>>, %arg10: memref<1x512xf32, #tpu.memory_space<vmem>>, %arg11: memref<16x512xbf16, #tpu.memory_space<vmem>>) attributes {dimension_semantics = [], scalar_prefetch = 0 : i64, scratch_operands = 0 : i64, tpu.core_type = #tpu.core_type<tc>} {
    %c0 = arith.constant 0 : index
    %c0_0 = arith.constant 0 : index
    %0 = vector.load %arg0[%c0, %c0_0] : memref<16x256xbf16, #tpu.memory_space<vmem>>, vector<16x256xbf16>
    %c0_1 = arith.constant 0 : index
    %c0_2 = arith.constant 0 : index
    %1 = vector.load %arg1[%c0_1, %c0_2] : memref<256x512xbf16, #tpu.memory_space<vmem>>, vector<256x512xbf16>
    %cst = arith.constant dense<0.000000e+00> : vector<16x512xf32>
    %2 = tpu.matmul %0, %1, %cst {dimension_numbers = #tpu.dot_dimension_numbers<[1], [0], [0], [1], [0, 0, 1, 1], [], []>} : vector<16x256xbf16>, vector<256x512xbf16>, vector<16x512xf32> -> vector<16x512xf32>
    %c0_3 = arith.constant 0 : index
    %c0_4 = arith.constant 0 : index
    %3 = vector.load %arg2[%c0_3, %c0_4] : memref<1x512xf32, #tpu.memory_space<vmem>>, vector<1x512xf32>
    %4 = vector.broadcast %3 : vector<1x512xf32> to vector<16x512xf32>
    %5 = arith.mulf %2, %4 : vector<16x512xf32>
    %c0_5 = arith.constant 0 : index
    %c0_6 = arith.constant 0 : index
    %6 = vector.load %arg3[%c0_5, %c0_6] : memref<1x512xf32, #tpu.memory_space<vmem>>, vector<1x512xf32>
    %7 = vector.broadcast %6 : vector<1x512xf32> to vector<16x512xf32>
    %8 = arith.addf %5, %7 : vector<16x512xf32>
    %cst_7 = arith.constant 0.000000e+00 : f32
    %9 = vector.broadcast %cst_7 : f32 to vector<16x512xf32>
    %10 = arith.maximumf %8, %9 : vector<16x512xf32>
    %11 = arith.truncf %10 : vector<16x512xf32> to vector<16x512xbf16>
    %c0_8 = arith.constant 0 : index
    %c0_9 = arith.constant 0 : index
    %12 = vector.load %arg4[%c0_8, %c0_9] : memref<512x512xbf16, #tpu.memory_space<vmem>>, vector<512x512xbf16>
    %cst_10 = arith.constant dense<0.000000e+00> : vector<16x512xf32>
    %13 = tpu.matmul %11, %12, %cst_10 {dimension_numbers = #tpu.dot_dimension_numbers<[1], [0], [0], [1], [0, 0, 1, 1], [], []>} : vector<16x512xbf16>, vector<512x512xbf16>, vector<16x512xf32> -> vector<16x512xf32>
    %c0_11 = arith.constant 0 : index
    %c0_12 = arith.constant 0 : index
    %14 = vector.load %arg7[%c0_11, %c0_12] : memref<16x256xbf16, #tpu.memory_space<vmem>>, vector<16x256xbf16>
    %c0_13 = arith.constant 0 : index
    %c0_14 = arith.constant 0 : index
    %15 = vector.load %arg8[%c0_13, %c0_14] : memref<256x512xbf16, #tpu.memory_space<vmem>>, vector<256x512xbf16>
    %cst_15 = arith.constant dense<0.000000e+00> : vector<16x512xf32>
    %16 = tpu.matmul %14, %15, %cst_15 {dimension_numbers = #tpu.dot_dimension_numbers<[1], [0], [0], [1], [0, 0, 1, 1], [], []>} : vector<16x256xbf16>, vector<256x512xbf16>, vector<16x512xf32> -> vector<16x512xf32>
    %c0_16 = arith.constant 0 : index
    %c0_17 = arith.constant 0 : index
    %17 = vector.load %arg5[%c0_16, %c0_17] : memref<1x512xf32, #tpu.memory_space<vmem>>, vector<1x512xf32>
    %18 = vector.broadcast %17 : vector<1x512xf32> to vector<16x512xf32>
    %19 = arith.mulf %13, %18 : vector<16x512xf32>
    %c0_18 = arith.constant 0 : index
    %c0_19 = arith.constant 0 : index
    %20 = vector.load %arg6[%c0_18, %c0_19] : memref<1x512xf32, #tpu.memory_space<vmem>>, vector<1x512xf32>
    %21 = vector.broadcast %20 : vector<1x512xf32> to vector<16x512xf32>
    %22 = arith.addf %19, %21 : vector<16x512xf32>
    %c0_20 = arith.constant 0 : index
    %c0_21 = arith.constant 0 : index
    %23 = vector.load %arg9[%c0_20, %c0_21] : memref<1x512xf32, #tpu.memory_space<vmem>>, vector<1x512xf32>
    %24 = vector.broadcast %23 : vector<1x512xf32> to vector<16x512xf32>
    %25 = arith.mulf %16, %24 : vector<16x512xf32>
    %26 = arith.addf %22, %25 : vector<16x512xf32>
    %c0_22 = arith.constant 0 : index
    %c0_23 = arith.constant 0 : index
    %27 = vector.load %arg10[%c0_22, %c0_23] : memref<1x512xf32, #tpu.memory_space<vmem>>, vector<1x512xf32>
    %28 = vector.broadcast %27 : vector<1x512xf32> to vector<16x512xf32>
    %29 = arith.addf %26, %28 : vector<16x512xf32>
    %cst_24 = arith.constant 0.000000e+00 : f32
    %30 = vector.broadcast %cst_24 : f32 to vector<16x512xf32>
    %31 = arith.maximumf %29, %30 : vector<16x512xf32>
    %32 = arith.truncf %31 : vector<16x512xf32> to vector<16x512xbf16>
    %c0_25 = arith.constant 0 : index
    %c0_26 = arith.constant 0 : index
    %33 = vector.load %arg11[%c0_25, %c0_26] : memref<16x512xbf16, #tpu.memory_space<vmem>>, vector<16x512xbf16>
    tpu.vector_store %arg11[%c0_25, %c0_26], %32 {strides = array<i32>} : memref<16x512xbf16, #tpu.memory_space<vmem>>, vector<16x512xbf16>,
    return
  }
}

module attributes {stable_mosaic.version = 11 : i64} {
  func.func @_block1x1_kernel(%arg0: memref<16x512xbf16, #tpu.memory_space<vmem>>, %arg1: memref<512x512xbf16, #tpu.memory_space<vmem>>, %arg2: memref<1x512xf32, #tpu.memory_space<vmem>>, %arg3: memref<1x512xf32, #tpu.memory_space<vmem>>, %arg4: memref<512x512xbf16, #tpu.memory_space<vmem>>, %arg5: memref<1x512xf32, #tpu.memory_space<vmem>>, %arg6: memref<1x512xf32, #tpu.memory_space<vmem>>, %arg7: memref<16x512xbf16, #tpu.memory_space<vmem>>) attributes {dimension_semantics = [], scalar_prefetch = 0 : i64, scratch_operands = 0 : i64, tpu.core_type = #tpu.core_type<tc>} {
    %c0 = arith.constant 0 : index
    %c0_0 = arith.constant 0 : index
    %0 = vector.load %arg0[%c0, %c0_0] : memref<16x512xbf16, #tpu.memory_space<vmem>>, vector<16x512xbf16>
    %c0_1 = arith.constant 0 : index
    %c0_2 = arith.constant 0 : index
    %1 = vector.load %arg1[%c0_1, %c0_2] : memref<512x512xbf16, #tpu.memory_space<vmem>>, vector<512x512xbf16>
    %cst = arith.constant dense<0.000000e+00> : vector<16x512xf32>
    %2 = tpu.matmul %0, %1, %cst {dimension_numbers = #tpu.dot_dimension_numbers<[1], [0], [0], [1], [0, 0, 1, 1], [], []>} : vector<16x512xbf16>, vector<512x512xbf16>, vector<16x512xf32> -> vector<16x512xf32>
    %c0_3 = arith.constant 0 : index
    %c0_4 = arith.constant 0 : index
    %3 = vector.load %arg2[%c0_3, %c0_4] : memref<1x512xf32, #tpu.memory_space<vmem>>, vector<1x512xf32>
    %4 = vector.broadcast %3 : vector<1x512xf32> to vector<16x512xf32>
    %5 = arith.mulf %2, %4 : vector<16x512xf32>
    %c0_5 = arith.constant 0 : index
    %c0_6 = arith.constant 0 : index
    %6 = vector.load %arg3[%c0_5, %c0_6] : memref<1x512xf32, #tpu.memory_space<vmem>>, vector<1x512xf32>
    %7 = vector.broadcast %6 : vector<1x512xf32> to vector<16x512xf32>
    %8 = arith.addf %5, %7 : vector<16x512xf32>
    %cst_7 = arith.constant 0.000000e+00 : f32
    %9 = vector.broadcast %cst_7 : f32 to vector<16x512xf32>
    %10 = arith.maximumf %8, %9 : vector<16x512xf32>
    %11 = arith.truncf %10 : vector<16x512xf32> to vector<16x512xbf16>
    %c0_8 = arith.constant 0 : index
    %c0_9 = arith.constant 0 : index
    %12 = vector.load %arg4[%c0_8, %c0_9] : memref<512x512xbf16, #tpu.memory_space<vmem>>, vector<512x512xbf16>
    %cst_10 = arith.constant dense<0.000000e+00> : vector<16x512xf32>
    %13 = tpu.matmul %11, %12, %cst_10 {dimension_numbers = #tpu.dot_dimension_numbers<[1], [0], [0], [1], [0, 0, 1, 1], [], []>} : vector<16x512xbf16>, vector<512x512xbf16>, vector<16x512xf32> -> vector<16x512xf32>
    %c0_11 = arith.constant 0 : index
    %c0_12 = arith.constant 0 : index
    %14 = vector.load %arg5[%c0_11, %c0_12] : memref<1x512xf32, #tpu.memory_space<vmem>>, vector<1x512xf32>
    %15 = vector.broadcast %14 : vector<1x512xf32> to vector<16x512xf32>
    %16 = arith.mulf %13, %15 : vector<16x512xf32>
    %c0_13 = arith.constant 0 : index
    %c0_14 = arith.constant 0 : index
    %17 = vector.load %arg6[%c0_13, %c0_14] : memref<1x512xf32, #tpu.memory_space<vmem>>, vector<1x512xf32>
    %18 = vector.broadcast %17 : vector<1x512xf32> to vector<16x512xf32>
    %19 = arith.addf %16, %18 : vector<16x512xf32>
    %20 = arith.extf %0 : vector<16x512xbf16> to vector<16x512xf32>
    %21 = arith.addf %19, %20 : vector<16x512xf32>
    %cst_15 = arith.constant 0.000000e+00 : f32
    %22 = vector.broadcast %cst_15 : f32 to vector<16x512xf32>
    %23 = arith.maximumf %21, %22 : vector<16x512xf32>
    %24 = arith.truncf %23 : vector<16x512xf32> to vector<16x512xbf16>
    %c0_16 = arith.constant 0 : index
    %c0_17 = arith.constant 0 : index
    %25 = vector.load %arg7[%c0_16, %c0_17] : memref<16x512xbf16, #tpu.memory_space<vmem>>, vector<16x512xbf16>
    tpu.vector_store %arg7[%c0_16, %c0_17], %24 {strides = array<i32>} : memref<16x512xbf16, #tpu.memory_space<vmem>>, vector<16x512xbf16>,
    return
  }
}

module attributes {stable_mosaic.version = 11 : i64} {
  func.func @_head_kernel(%arg0: memref<2x1x512xbf16, #tpu.memory_space<vmem>>, %arg1: memref<512x128xf32, #tpu.memory_space<vmem>>, %arg2: memref<1x128xf32, #tpu.memory_space<vmem>>, %arg3: memref<2x128xf32, #tpu.memory_space<vmem>>) attributes {dimension_semantics = [], scalar_prefetch = 0 : i64, scratch_operands = 0 : i64, tpu.core_type = #tpu.core_type<tc>} {
    %c0 = arith.constant 0 : index
    %c0_0 = arith.constant 0 : index
    %c0_1 = arith.constant 0 : index
    %0 = vector.load %arg0[%c0, %c0_0, %c0_1] : memref<2x1x512xbf16, #tpu.memory_space<vmem>>, vector<2x1x512xbf16>
    %1 = arith.extf %0 : vector<2x1x512xbf16> to vector<2x1x512xf32>
    %cst = arith.constant dense<0.000000e+00> : vector<2x512xf32>
    %2 = vector.multi_reduction <add>, %1, %cst [1] : vector<2x1x512xf32> to vector<2x512xf32>
    %cst_2 = arith.constant 1.000000e+00 : f32
    %3 = vector.broadcast %cst_2 : f32 to vector<2x512xf32>
    %4 = arith.mulf %2, %3 : vector<2x512xf32>
    %c0_3 = arith.constant 0 : index
    %c0_4 = arith.constant 0 : index
    %5 = vector.load %arg1[%c0_3, %c0_4] : memref<512x128xf32, #tpu.memory_space<vmem>>, vector<512x128xf32>
    %cst_5 = arith.constant dense<0.000000e+00> : vector<2x128xf32>
    %6 = tpu.matmul %4, %5, %cst_5 {dimension_numbers = #tpu.dot_dimension_numbers<[1], [0], [0], [1], [0, 0, 1, 1], [], []>} : vector<2x512xf32>, vector<512x128xf32>, vector<2x128xf32> -> vector<2x128xf32>
    %c0_6 = arith.constant 0 : index
    %c0_7 = arith.constant 0 : index
    %7 = vector.load %arg2[%c0_6, %c0_7] : memref<1x128xf32, #tpu.memory_space<vmem>>, vector<1x128xf32>
    %8 = vector.broadcast %7 : vector<1x128xf32> to vector<2x128xf32>
    %9 = arith.addf %6, %8 : vector<2x128xf32>
    %cst_8 = arith.constant 0.000000e+00 : f32
    %10 = vector.broadcast %cst_8 : f32 to vector<2x128xf32>
    %11 = arith.subf %10, %9 : vector<2x128xf32>
    %12 = math.exp %11 : vector<2x128xf32>
    %cst_9 = arith.constant 1.000000e+00 : f32
    %13 = vector.broadcast %cst_9 : f32 to vector<2x128xf32>
    %14 = arith.addf %13, %12 : vector<2x128xf32>
    %cst_10 = arith.constant 1.000000e+00 : f32
    %15 = vector.broadcast %cst_10 : f32 to vector<2x128xf32>
    %16 = arith.divf %15, %14 : vector<2x128xf32>
    %c0_11 = arith.constant 0 : index
    %c0_12 = arith.constant 0 : index
    %17 = vector.load %arg3[%c0_11, %c0_12] : memref<2x128xf32, #tpu.memory_space<vmem>>, vector<2x128xf32>
    tpu.vector_store %arg3[%c0_11, %c0_12], %16 {strides = array<i32>} : memref<2x128xf32, #tpu.memory_space<vmem>>, vector<2x128xf32>,
    return
  }
}

</mosaic_0001>

<llo_original>
// kernel: resnet_forward.26
$region0: #{resnet_forward.26}
  #allocation0 [shape = 'u32[]', space=smem, size = 0x4, offset = 0x4, fixed_abs, tag = 'smem constant byte address 0x4 - core index']
  #allocation1 [shape = 'u32[144,128]{1,0:T(1,128)}', space=vmem, size = 0x12000, scoped, tag = 'internal scratch']
  %s0 = inlined_call_operand.vmem [shape: bf16[128,256], index: 0, kind: input, shape index: {}]
  %s1 = inlined_call_operand.vmem [shape: bf16[256,128], index: 1, kind: input, shape index: {}]
  %s2 = inlined_call_operand.vmem [shape: f32[1,128], index: 2, kind: input, shape index: {}]
  %s3 = inlined_call_operand.vmem [shape: f32[1,128], index: 3, kind: input, shape index: {}]
  %s4 = inlined_call_operand.vmem [shape: bf16[128,128], index: 4, kind: output, shape index: {}]
  %s5 = sld [smem:[#allocation0]]
  $region26: #{resnet_forward.26} parent=0
    _
  %s7 = ssub.s32 1, %s5
  %s8 = scalar_select 0, %s7, %s5
  // Predicated region
  $region2: #{resnet_forward.26} parent=0 // pred_check
    _
  $region3: #{resnet_forward.26} parent=0 // pred_check_branch
    %10 = sbr.rel (0) target = $region5
  $region4: #{resnet_forward.26} parent=0 // pred_region
    _
  $region5: #{resnet_forward.26} parent=0 // pred_fallthru
    _
  // Predicated region
  $region6: #{resnet_forward.26} parent=0 // pred_check
    _
  $region7: #{resnet_forward.26} parent=0 // pred_check_branch
    %12 = sbr.rel (0) target = $region9
  $region8: #{resnet_forward.26} parent=0 // pred_region
    _
  $region9: #{resnet_forward.26} parent=0 // pred_fallthru
    _
  // Predicated region
  $region10: #{resnet_forward.26} parent=0 // pred_check
    _
  $region11: #{resnet_forward.26} parent=0 // pred_check_branch
    %14 = sbr.rel (0) target = $region13
  $region12: #{resnet_forward.26} parent=0 // pred_region
    _
  $region13: #{resnet_forward.26} parent=0 // pred_fallthru
    _
  // Predicated region
  $region14: #{resnet_forward.26} parent=0 // pred_check
    _
  $region15: #{resnet_forward.26} parent=0 // pred_check_branch
    %16 = sbr.rel (0) target = $region17
  $region16: #{resnet_forward.26} parent=0 // pred_region
    _
  $region17: #{resnet_forward.26} parent=0 // pred_fallthru
    _
  %v18 = vld [vmem:[%s0] sm:$0xff]
  %v19 = vld [vmem:[%s0 + $0x8] sm:$0xff]
  %v20 = vld [vmem:[%s0 + $0x10] sm:$0xff]
  %v21 = vld [vmem:[%s0 + $0x18] sm:$0xff]
  %v22 = vld [vmem:[%s0 + $0x20] sm:$0xff]
  %v23 = vld [vmem:[%s0 + $0x28] sm:$0xff]
  %v24 = vld [vmem:[%s0 + $0x30] sm:$0xff]
  %v25 = vld [vmem:[%s0 + $0x38] sm:$0xff]
  %v26 = vld [vmem:[%s0 + $0x40] sm:$0xff]
  %v27 = vld [vmem:[%s0 + $0x48] sm:$0xff]
  %v28 = vld [vmem:[%s0 + $0x50] sm:$0xff]
  %v29 = vld [vmem:[%s0 + $0x58] sm:$0xff]
  %v30 = vld [vmem:[%s0 + $0x60] sm:$0xff]
  %v31 = vld [vmem:[%s0 + $0x68] sm:$0xff]
  %v32 = vld [vmem:[%s0 + $0x70] sm:$0xff]
  %v33 = vld [vmem:[%s0 + $0x78] sm:$0xff]
  %v34 = vld [vmem:[%s1] sm:$0xf]
  %v35 = vld [vmem:[%s1 + $0x4] sm:$0xf]
  %v36 = vld [vmem:[%s1 + $0x8] sm:$0xf]
  %v37 = vld [vmem:[%s1 + $0xc] sm:$0xf]
  %v38 = vld [vmem:[%s1 + $0x10] sm:$0xf]
  %v39 = vld [vmem:[%s1 + $0x14] sm:$0xf]
  %v40 = vld [vmem:[%s1 + $0x18] sm:$0xf]
  %v41 = vld [vmem:[%s1 + $0x1c] sm:$0xf]
  %v42 = vld [vmem:[%s1 + $0x20] sm:$0xf]
  %v43 = vld [vmem:[%s1 + $0x24] sm:$0xf]
  %v44 = vld [vmem:[%s1 + $0x28] sm:$0xf]
  %v45 = vld [vmem:[%s1 + $0x2c] sm:$0xf]
  %v46 = vld [vmem:[%s1 + $0x30] sm:$0xf]
  %v47 = vld [vmem:[%s1 + $0x34] sm:$0xf]
  %v48 = vld [vmem:[%s1 + $0x38] sm:$0xf]
  %v49 = vld [vmem:[%s1 + $0x3c] sm:$0xf]
  %v50 = vld [vmem:[%s1 + $0x40] sm:$0xf]
  %v51 = vld [vmem:[%s1 + $0x44] sm:$0xf]
  %v52 = vld [vmem:[%s1 + $0x48] sm:$0xf]
  %v53 = vld [vmem:[%s1 + $0x4c] sm:$0xf]
  %v54 = vld [vmem:[%s1 + $0x50] sm:$0xf]
  %v55 = vld [vmem:[%s1 + $0x54] sm:$0xf]
  %v56 = vld [vmem:[%s1 + $0x58] sm:$0xf]
  %v57 = vld [vmem:[%s1 + $0x5c] sm:$0xf]
  %v58 = vld [vmem:[%s1 + $0x60] sm:$0xf]
  %v59 = vld [vmem:[%s1 + $0x64] sm:$0xf]
  %v60 = vld [vmem:[%s1 + $0x68] sm:$0xf]
  %v61 = vld [vmem:[%s1 + $0x6c] sm:$0xf]
  %v62 = vld [vmem:[%s1 + $0x70] sm:$0xf]
  %v63 = vld [vmem:[%s1 + $0x74] sm:$0xf]
  %v64 = vld [vmem:[%s1 + $0x78] sm:$0xf]
  %v65 = vld [vmem:[%s1 + $0x7c] sm:$0xf]
  %v82 = vunpack.c.l.b16 %v18
  %v83 = vunpack.c.h.b16 %v18
  %v84 = vunpack.c.l.b16 %v19
  %v85 = vunpack.c.h.b16 %v19
  %v86 = vunpack.c.l.b16 %v20
  %v87 = vunpack.c.h.b16 %v20
  %v88 = vunpack.c.l.b16 %v21
  %v89 = vunpack.c.h.b16 %v21
  %v90 = vunpack.c.l.b16 %v22
  %v91 = vunpack.c.h.b16 %v22
  %v92 = vunpack.c.l.b16 %v23
  %v93 = vunpack.c.h.b16 %v23
  %v94 = vunpack.c.l.b16 %v24
  %v95 = vunpack.c.h.b16 %v24
  %v96 = vunpack.c.l.b16 %v25
  %v97 = vunpack.c.h.b16 %v25
  %v98 = vunpack.c.l.b16 %v26
  %v99 = vunpack.c.h.b16 %v26
  %v100 = vunpack.c.l.b16 %v27
  %v101 = vunpack.c.h.b16 %v27
  %v102 = vunpack.c.l.b16 %v28
  %v103 = vunpack.c.h.b16 %v28
  %v104 = vunpack.c.l.b16 %v29
  %v105 = vunpack.c.h.b16 %v29
  %v106 = vunpack.c.l.b16 %v30
  %v107 = vunpack.c.h.b16 %v30
  %v108 = vunpack.c.l.b16 %v31
  %v109 = vunpack.c.h.b16 %v31
  %v110 = vunpack.c.l.b16 %v32
  %v111 = vunpack.c.h.b16 %v32
  %v112 = vunpack.c.l.b16 %v33
  %v113 = vunpack.c.h.b16 %v33
  %v114 = vpack.c.b16 %v84, %v82
  %v115 = vpack.c.b16 %v85, %v83
  %v116 = vpack.c.b16 %v88, %v86
  %v117 = vpack.c.b16 %v89, %v87
  %v118 = vpack.c.b16 %v92, %v90
  %v119 = vpack.c.b16 %v93, %v91
  %v120 = vpack.c.b16 %v96, %v94
  %v121 = vpack.c.b16 %v97, %v95
  %v122 = vpack.c.b16 %v100, %v98
  %v123 = vpack.c.b16 %v101, %v99
  %v124 = vpack.c.b16 %v104, %v102
  %v125 = vpack.c.b16 %v105, %v103
  %v126 = vpack.c.b16 %v108, %v106
  %v127 = vpack.c.b16 %v109, %v107
  %v128 = vpack.c.b16 %v112, %v110
  %v129 = vpack.c.b16 %v113, %v111
  %v178 = vunpack.c.l.b16 %v34
  %v179 = vunpack.c.l.b16 %v35
  %v180 = vunpack.c.l.b16 %v36
  %v181 = vunpack.c.l.b16 %v37
  %v182 = vunpack.c.l.b16 %v38
  %v183 = vunpack.c.l.b16 %v39
  %v184 = vunpack.c.l.b16 %v40
  %v185 = vunpack.c.l.b16 %v41
  %v186 = vunpack.c.l.b16 %v42
  %v187 = vunpack.c.l.b16 %v43
  %v188 = vunpack.c.l.b16 %v44
  %v189 = vunpack.c.l.b16 %v45
  %v190 = vunpack.c.l.b16 %v46
  %v191 = vunpack.c.l.b16 %v47
  %v192 = vunpack.c.l.b16 %v48
  %v193 = vunpack.c.l.b16 %v49
  %v194 = vunpack.c.l.b16 %v50
  %v195 = vunpack.c.l.b16 %v51
  %v196 = vunpack.c.l.b16 %v52
  %v197 = vunpack.c.l.b16 %v53
  %v198 = vunpack.c.l.b16 %v54
  %v199 = vunpack.c.l.b16 %v55
  %v200 = vunpack.c.l.b16 %v56
  %v201 = vunpack.c.l.b16 %v57
  %v202 = vunpack.c.l.b16 %v58
  %v203 = vunpack.c.l.b16 %v59
  %v204 = vunpack.c.l.b16 %v60
  %v205 = vunpack.c.l.b16 %v61
  %v206 = vunpack.c.l.b16 %v62
  %v207 = vunpack.c.l.b16 %v63
  %v208 = vunpack.c.l.b16 %v64
  %v209 = vunpack.c.l.b16 %v65
  %v210 = vpack.c.b16 %v179, %v178
  %v211 = vpack.c.b16 %v181, %v180
  %v212 = vpack.c.b16 %v183, %v182
  %v213 = vpack.c.b16 %v185, %v184
  %v214 = vpack.c.b16 %v187, %v186
  %v215 = vpack.c.b16 %v189, %v188
  %v216 = vpack.c.b16 %v191, %v190
  %v217 = vpack.c.b16 %v193, %v192
  %v218 = vpack.c.b16 %v195, %v194
  %v219 = vpack.c.b16 %v197, %v196
  %v220 = vpack.c.b16 %v199, %v198
  %v221 = vpack.c.b16 %v201, %v200
  %v222 = vpack.c.b16 %v203, %v202
  %v223 = vpack.c.b16 %v205, %v204
  %v224 = vpack.c.b16 %v207, %v206
  %v225 = vpack.c.b16 %v209, %v208
  %242 = vmatprep.subr.bf16.mxu0 0
  %243 = vmatpush1.bf16.msra.mxu0 %v217
  %244 = vmatprep.subr.bf16.mxu0 0
  %245 = vmatpush1.bf16.msra.mxu0 %v216
  %246 = vmatprep.subr.bf16.mxu0 0
  %247 = vmatpush1.bf16.msra.mxu0 %v215
  %248 = vmatprep.subr.bf16.mxu0 0
  %249 = vmatpush1.bf16.msra.mxu0 %v214
  %250 = vmatprep.subr.bf16.mxu0 0
  %251 = vmatpush1.bf16.msra.mxu0 %v213
  %252 = vmatprep.subr.bf16.mxu0 0
  %253 = vmatpush1.bf16.msra.mxu0 %v212
  %254 = vmatprep.subr.bf16.mxu0 0
  %255 = vmatpush1.bf16.msra.mxu0 %v211
  %256 = vmatprep.subr.bf16.mxu0 0
  %257 = vmatpush1.bf16.msra.mxu0 %v210
  %258 = vmatprep.subr.bf16.mxu0 0
  %259 = vmatpush2.bf16.msra.mxu0 %v225
  %260 = vmatprep.subr.bf16.mxu0 0
  %261 = vmatpush2.bf16.msra.mxu0 %v224
  %262 = vmatprep.subr.bf16.mxu0 0
  %263 = vmatpush2.bf16.msra.mxu0 %v223
  %264 = vmatprep.subr.bf16.mxu0 0
  %265 = vmatpush2.bf16.msra.mxu0 %v222
  %266 = vmatprep.subr.bf16.mxu0 0
  %267 = vmatpush2.bf16.msra.mxu0 %v221
  %268 = vmatprep.subr.bf16.mxu0 0
  %269 = vmatpush2.bf16.msra.mxu0 %v220
  %270 = vmatprep.subr.bf16.mxu0 0
  %271 = vmatpush2.bf16.msra.mxu0 %v219
  %272 = vmatprep.subr.bf16.mxu0 0
  %273 = vmatpush2.bf16.msra.mxu0 %v218
  %274 = vmatprep.mubr.bf16.mxu0 %v115
  %275 = vmatmul.mubr.bf16.gmra.mxu0 %v114
  %v276 = vpop.f32.mrf.mxu0
  %v277 = vadd.f32 0.0, %v276
  %v278 = vpop.f32.mrf.mxu0
  %v279 = vpop.f32.mrf.mxu0
  %v280 = vadd.f32 0.0, %v279
  %v281 = vpop.f32.mrf.mxu0
  %282 = vmatprep.mubr.bf16.mxu0 %v117
  %283 = vmatmul.mubr.bf16.gmra.mxu0 %v116
  %v284 = vpop.f32.mrf.mxu0
  %v285 = vadd.f32 0.0, %v284
  %v286 = vpop.f32.mrf.mxu0
  %v287 = vpop.f32.mrf.mxu0
  %v288 = vadd.f32 0.0, %v287
  %v289 = vpop.f32.mrf.mxu0
  %290 = vmatprep.mubr.bf16.mxu0 %v119
  %291 = vmatmul.mubr.bf16.gmra.mxu0 %v118
  %v292 = vpop.f32.mrf.mxu0
  %v293 = vadd.f32 0.0, %v292
  %v294 = vpop.f32.mrf.mxu0
  %v295 = vpop.f32.mrf.mxu0
  %v296 = vadd.f32 0.0, %v295
  %v297 = vpop.f32.mrf.mxu0
  %298 = vmatprep.mubr.bf16.mxu0 %v121
  %299 = vmatmul.mubr.bf16.gmra.mxu0 %v120
  %v300 = vpop.f32.mrf.mxu0
  %v301 = vadd.f32 0.0, %v300
  %v302 = vpop.f32.mrf.mxu0
  %v303 = vpop.f32.mrf.mxu0
  %v304 = vadd.f32 0.0, %v303
  %v305 = vpop.f32.mrf.mxu0
  %306 = vmatprep.mubr.bf16.mxu0 %v123
  %307 = vmatmul.mubr.bf16.gmra.mxu0 %v122
  %v308 = vpop.f32.mrf.mxu0
  %v309 = vadd.f32 0.0, %v308
  %v310 = vpop.f32.mrf.mxu0
  %v311 = vpop.f32.mrf.mxu0
  %v312 = vadd.f32 0.0, %v311
  %v313 = vpop.f32.mrf.mxu0
  %314 = vmatprep.mubr.bf16.mxu0 %v125
  %315 = vmatmul.mubr.bf16.gmra.mxu0 %v124
  %v316 = vpop.f32.mrf.mxu0
  %v317 = vadd.f32 0.0, %v316
  %v318 = vpop.f32.mrf.mxu0
  %v319 = vpop.f32.mrf.mxu0
  %v320 = vadd.f32 0.0, %v319
  %v321 = vpop.f32.mrf.mxu0
  %322 = vmatprep.mubr.bf16.mxu0 %v127
  %323 = vmatmul.mubr.bf16.gmra.mxu0 %v126
  %v324 = vpop.f32.mrf.mxu0
  %v325 = vadd.f32 0.0, %v324
  %v326 = vpop.f32.mrf.mxu0
  %v327 = vpop.f32.mrf.mxu0
  %v328 = vadd.f32 0.0, %v327
  %v329 = vpop.f32.mrf.mxu0
  %330 = vmatprep.mubr.bf16.mxu0 %v129
  %331 = vmatmul.mubr.bf16.gmra.mxu0 %v128
  %v332 = vpop.f32.mrf.mxu0
  %v333 = vadd.f32 0.0, %v332
  %v334 = vpop.f32.mrf.mxu0
  %v335 = vpop.f32.mrf.mxu0
  %v336 = vadd.f32 0.0, %v335
  %v337 = vpop.f32.mrf.mxu0
  %338 = vdwg.mxu0
  %v339 = vld [vmem:[%s2] sm:$0x1]
  %v341 = vlaneseq
  %v342 = vshrl.u32 %v341, 7
  %v343 = vsub.s32 0, %v342
  %v344 = vrot.slane %v339, %v343
  %v346 = vmul.f32 %v277, %v344
  %v347 = vmul.f32 %v280, %v344
  %v348 = vmul.f32 %v285, %v344
  %v349 = vmul.f32 %v288, %v344
  %v350 = vmul.f32 %v293, %v344
  %v351 = vmul.f32 %v296, %v344
  %v352 = vmul.f32 %v301, %v344
  %v353 = vmul.f32 %v304, %v344
  %v354 = vmul.f32 %v309, %v344
  %v355 = vmul.f32 %v312, %v344
  %v356 = vmul.f32 %v317, %v344
  %v357 = vmul.f32 %v320, %v344
  %v358 = vmul.f32 %v325, %v344
  %v359 = vmul.f32 %v328, %v344
  %v360 = vmul.f32 %v333, %v344
  %v361 = vmul.f32 %v336, %v344
  %v362 = vld [vmem:[%s3] sm:$0x1]
  %v364 = vlaneseq
  %v365 = vshrl.u32 %v364, 7
  %v366 = vsub.s32 0, %v365
  %v367 = vrot.slane %v362, %v366
  %v369 = vadd.f32 %v346, %v367
  %v370 = vadd.f32 %v347, %v367
  %v371 = vadd.f32 %v348, %v367
  %v372 = vadd.f32 %v349, %v367
  %v373 = vadd.f32 %v350, %v367
  %v374 = vadd.f32 %v351, %v367
  %v375 = vadd.f32 %v352, %v367
  %v376 = vadd.f32 %v353, %v367
  %v377 = vadd.f32 %v354, %v367
  %v378 = vadd.f32 %v355, %v367
  %v379 = vadd.f32 %v356, %v367
  %v380 = vadd.f32 %v357, %v367
  %v381 = vadd.f32 %v358, %v367
  %v382 = vadd.f32 %v359, %v367
  %v383 = vadd.f32 %v360, %v367
  %v384 = vadd.f32 %v361, %v367
  %v385 = vmax.f32 %v369, 0.0
  %v386 = vmax.f32 %v370, 0.0
  %v387 = vmax.f32 %v371, 0.0
  %v388 = vmax.f32 %v372, 0.0
  %v389 = vmax.f32 %v373, 0.0
  %v390 = vmax.f32 %v374, 0.0
  %v391 = vmax.f32 %v375, 0.0
  %v392 = vmax.f32 %v376, 0.0
  %v393 = vmax.f32 %v377, 0.0
  %v394 = vmax.f32 %v378, 0.0
  %v395 = vmax.f32 %v379, 0.0
  %v396 = vmax.f32 %v380, 0.0
  %v397 = vmax.f32 %v381, 0.0
  %v398 = vmax.f32 %v382, 0.0
  %v399 = vmax.f32 %v383, 0.0
  %v400 = vmax.f32 %v384, 0.0
  %v401 = vpack.c.bf16 %v386, %v385
  %v402 = vpack.c.bf16 %v388, %v387
  %v403 = vpack.c.bf16 %v390, %v389
  %v404 = vpack.c.bf16 %v392, %v391
  %v405 = vpack.c.bf16 %v394, %v393
  %v406 = vpack.c.bf16 %v396, %v395
  %v407 = vpack.c.bf16 %v398, %v397
  %v408 = vpack.c.bf16 %v400, %v399
  %v417 = vunpack.c.l.b16 %v401
  %v418 = vunpack.c.h.b16 %v401
  %v419 = vunpack.c.l.b16 %v402
  %v420 = vunpack.c.h.b16 %v402
  %v421 = vunpack.c.l.b16 %v403
  %v422 = vunpack.c.h.b16 %v403
  %v423 = vunpack.c.l.b16 %v404
  %v424 = vunpack.c.h.b16 %v404
  %v425 = vunpack.c.l.b16 %v405
  %v426 = vunpack.c.h.b16 %v405
  %v427 = vunpack.c.l.b16 %v406
  %v428 = vunpack.c.h.b16 %v406
  %v429 = vunpack.c.l.b16 %v407
  %v430 = vunpack.c.h.b16 %v407
  %v431 = vunpack.c.l.b16 %v408
  %v432 = vunpack.c.h.b16 %v408
  %v433 = vpack.c.b16 %v417, %v417
  %v434 = vpack.c.b16 %v418, %v418
  %v435 = vpack.c.b16 %v419, %v419
  %v436 = vpack.c.b16 %v420, %v420
  %v437 = vpack.c.b16 %v421, %v421
  %v438 = vpack.c.b16 %v422, %v422
  %v439 = vpack.c.b16 %v423, %v423
  %v440 = vpack.c.b16 %v424, %v424
  %v441 = vpack.c.b16 %v425, %v425
  %v442 = vpack.c.b16 %v426, %v426
  %v443 = vpack.c.b16 %v427, %v427
  %v444 = vpack.c.b16 %v428, %v428
  %v445 = vpack.c.b16 %v429, %v429
  %v446 = vpack.c.b16 %v430, %v430
  %v447 = vpack.c.b16 %v431, %v431
  %v448 = vpack.c.b16 %v432, %v432
  %465 = vst [vmem:[%s4] sm:$0xf] %v433
  %466 = vst [vmem:[%s4 + $0x4] sm:$0xf] %v434
  %467 = vst [vmem:[%s4 + $0x8] sm:$0xf] %v435
  %468 = vst [vmem:[%s4 + $0xc] sm:$0xf] %v436
  %469 = vst [vmem:[%s4 + $0x10] sm:$0xf] %v437
  %470 = vst [vmem:[%s4 + $0x14] sm:$0xf] %v438
  %471 = vst [vmem:[%s4 + $0x18] sm:$0xf] %v439
  %472 = vst [vmem:[%s4 + $0x1c] sm:$0xf] %v440
  %473 = vst [vmem:[%s4 + $0x20] sm:$0xf] %v441
  %474 = vst [vmem:[%s4 + $0x24] sm:$0xf] %v442
  %475 = vst [vmem:[%s4 + $0x28] sm:$0xf] %v443
  %476 = vst [vmem:[%s4 + $0x2c] sm:$0xf] %v444
  %477 = vst [vmem:[%s4 + $0x30] sm:$0xf] %v445
  %478 = vst [vmem:[%s4 + $0x34] sm:$0xf] %v446
  %479 = vst [vmem:[%s4 + $0x38] sm:$0xf] %v447
  %480 = vst [vmem:[%s4 + $0x3c] sm:$0xf] %v448
  // Predicated region
  $region18: #{resnet_forward.26} parent=0 // pred_check
    _
  $region19: #{resnet_forward.26} parent=0 // pred_check_branch
    %482 = sbr.rel (0) target = $region21
  $region20: #{resnet_forward.26} parent=0 // pred_region
    _
  $region21: #{resnet_forward.26} parent=0 // pred_fallthru
    _
  // Predicated region
  $region22: #{resnet_forward.26} parent=0 // pred_check
    _
  $region23: #{resnet_forward.26} parent=0 // pred_check_branch
    %484 = sbr.rel (0) target = $region25
  $region24: #{resnet_forward.26} parent=0 // pred_region
    _
  $region25: #{resnet_forward.26} parent=0 // pred_fallthru
    _

// kernel: resnet_forward.27
$region0: #{resnet_forward.27}
  #allocation0 [shape = 'u32[]', space=smem, size = 0x4, offset = 0x4, fixed_abs, tag = 'smem constant byte address 0x4 - core index']
  #allocation1 [shape = 'u32[144,128]{1,0:T(1,128)}', space=vmem, size = 0x12000, scoped, tag = 'internal scratch']
  %s0 = inlined_call_operand.vmem [shape: bf16[32,1152], index: 0, kind: input, shape index: {}]
  %s1 = inlined_call_operand.vmem [shape: bf16[1152,128], index: 1, kind: input, shape index: {}]
  %s2 = inlined_call_operand.vmem [shape: f32[1,128], index: 2, kind: input, shape index: {}]
  %s3 = inlined_call_operand.vmem [shape: f32[1,128], index: 3, kind: input, shape index: {}]
  %s4 = inlined_call_operand.vmem [shape: bf16[32,128], index: 4, kind: output, shape index: {}]
  %s5 = sld [smem:[#allocation0]]
  $region26: #{resnet_forward.27} parent=0
    _
  %s7 = ssub.s32 1, %s5
  %s8 = scalar_select 0, %s7, %s5
  // Predicated region
  $region2: #{resnet_forward.27} parent=0 // pred_check
    _
  $region3: #{resnet_forward.27} parent=0 // pred_check_branch
    %10 = sbr.rel (0) target = $region5
  $region4: #{resnet_forward.27} parent=0 // pred_region
    _
  $region5: #{resnet_forward.27} parent=0 // pred_fallthru
    _
  // Predicated region
  $region6: #{resnet_forward.27} parent=0 // pred_check
    _
  $region7: #{resnet_forward.27} parent=0 // pred_check_branch
    %12 = sbr.rel (0) target = $region9
  $region8: #{resnet_forward.27} parent=0 // pred_region
    _
  $region9: #{resnet_forward.27} parent=0 // pred_fallthru
    _
  // Predicated region
  $region10: #{resnet_forward.27} parent=0 // pred_check
    _
  $region11: #{resnet_forward.27} parent=0 // pred_check_branch
    %14 = sbr.rel (0) target = $region13
  $region12: #{resnet_forward.27} parent=0 // pred_region
    _
  $region13: #{resnet_forward.27} parent=0 // pred_fallthru
    _
  // Predicated region
  $region14: #{resnet_forward.27} parent=0 // pred_check
    _
  $region15: #{resnet_forward.27} parent=0 // pred_check_branch
    %16 = sbr.rel (0) target = $region17
  $region16: #{resnet_forward.27} parent=0 // pred_region
    _
  $region17: #{resnet_forward.27} parent=0 // pred_fallthru
    _
  %v18 = vld [vmem:[%s0] sm:$0xff]
  %v19 = vld [vmem:[%s0 + $0x8] sm:$0xff]
  %v20 = vld [vmem:[%s0 + $0x10] sm:$0xff]
  %v21 = vld [vmem:[%s0 + $0x18] sm:$0xff]
  %v22 = vld [vmem:[%s0 + $0x20] sm:$0xf]
  %v23 = vld [vmem:[%s0 + $0x24] sm:$0xff]
  %v24 = vld [vmem:[%s0 + $0x2c] sm:$0xff]
  %v25 = vld [vmem:[%s0 + $0x34] sm:$0xff]
  %v26 = vld [vmem:[%s0 + $0x3c] sm:$0xff]
  %v27 = vld [vmem:[%s0 + $0x44] sm:$0xf]
  %v28 = vld [vmem:[%s0 + $0x48] sm:$0xff]
  %v29 = vld [vmem:[%s0 + $0x50] sm:$0xff]
  %v30 = vld [vmem:[%s0 + $0x58] sm:$0xff]
  %v31 = vld [vmem:[%s0 + $0x60] sm:$0xff]
  %v32 = vld [vmem:[%s0 + $0x68] sm:$0xf]
  %v33 = vld [vmem:[%s0 + $0x6c] sm:$0xff]
  %v34 = vld [vmem:[%s0 + $0x74] sm:$0xff]
  %v35 = vld [vmem:[%s0 + $0x7c] sm:$0xff]
  %v36 = vld [vmem:[%s0 + $0x84] sm:$0xff]
  %v37 = vld [vmem:[%s0 + $0x8c] sm:$0xf]
  %v38 = vld [vmem:[%s1] sm:$0xf]
  %v39 = vld [vmem:[%s1 + $0x4] sm:$0xf]
  %v40 = vld [vmem:[%s1 + $0x8] sm:$0xf]
  %v41 = vld [vmem:[%s1 + $0xc] sm:$0xf]
  %v42 = vld [vmem:[%s1 + $0x10] sm:$0xf]
  %v43 = vld [vmem:[%s1 + $0x14] sm:$0xf]
  %v44 = vld [vmem:[%s1 + $0x18] sm:$0xf]
  %v45 = vld [vmem:[%s1 + $0x1c] sm:$0xf]
  %v46 = vld [vmem:[%s1 + $0x20] sm:$0xf]
  %v47 = vld [vmem:[%s1 + $0x24] sm:$0xf]
  %v48 = vld [vmem:[%s1 + $0x28] sm:$0xf]
  %v49 = vld [vmem:[%s1 + $0x2c] sm:$0xf]
  %v50 = vld [vmem:[%s1 + $0x30] sm:$0xf]
  %v51 = vld [vmem:[%s1 + $0x34] sm:$0xf]
  %v52 = vld [vmem:[%s1 + $0x38] sm:$0xf]
  %v53 = vld [vmem:[%s1 + $0x3c] sm:$0xf]
  %v54 = vld [vmem:[%s1 + $0x40] sm:$0xf]
  %v55 = vld [vmem:[%s1 + $0x44] sm:$0xf]
  %v56 = vld [vmem:[%s1 + $0x48] sm:$0xf]
  %v57 = vld [vmem:[%s1 + $0x4c] sm:$0xf]
  %v58 = vld [vmem:[%s1 + $0x50] sm:$0xf]
  %v59 = vld [vmem:[%s1 + $0x54] sm:$0xf]
  %v60 = vld [vmem:[%s1 + $0x58] sm:$0xf]
  %v61 = vld [vmem:[%s1 + $0x5c] sm:$0xf]
  %v62 = vld [vmem:[%s1 + $0x60] sm:$0xf]
  %v63 = vld [vmem:[%s1 + $0x64] sm:$0xf]
  %v64 = vld [vmem:[%s1 + $0x68] sm:$0xf]
  %v65 = vld [vmem:[%s1 + $0x6c] sm:$0xf]
  %v66 = vld [vmem:[%s1 + $0x70] sm:$0xf]
  %v67 = vld [vmem:[%s1 + $0x74] sm:$0xf]
  %v68 = vld [vmem:[%s1 + $0x78] sm:$0xf]
  %v69 = vld [vmem:[%s1 + $0x7c] sm:$0xf]
  %v70 = vld [vmem:[%s1 + $0x80] sm:$0xf]
  %v71 = vld [vmem:[%s1 + $0x84] sm:$0xf]
  %v72 = vld [vmem:[%s1 + $0x88] sm:$0xf]
  %v73 = vld [vmem:[%s1 + $0x8c] sm:$0xf]
  %v74 = vld [vmem:[%s1 + $0x90] sm:$0xf]
  %v75 = vld [vmem:[%s1 + $0x94] sm:$0xf]
  %v76 = vld [vmem:[%s1 + $0x98] sm:$0xf]
  %v77 = vld [vmem:[%s1 + $0x9c] sm:$0xf]
  %v78 = vld [vmem:[%s1 + $0xa0] sm:$0xf]
  %v79 = vld [vmem:[%s1 + $0xa4] sm:$0xf]
  %v80 = vld [vmem:[%s1 + $0xa8] sm:$0xf]
  %v81 = vld [vmem:[%s1 + $0xac] sm:$0xf]
  %v82 = vld [vmem:[%s1 + $0xb0] sm:$0xf]
  %v83 = vld [vmem:[%s1 + $0xb4] sm:$0xf]
  %v84 = vld [vmem:[%s1 + $0xb8] sm:$0xf]
  %v85 = vld [vmem:[%s1 + $0xbc] sm:$0xf]
  %v86 = vld [vmem:[%s1 + $0xc0] sm:$0xf]
  %v87 = vld [vmem:[%s1 + $0xc4] sm:$0xf]
  %v88 = vld [vmem:[%s1 + $0xc8] sm:$0xf]
  %v89 = vld [vmem:[%s1 + $0xcc] sm:$0xf]
  %v90 = vld [vmem:[%s1 + $0xd0] sm:$0xf]
  %v91 = vld [vmem:[%s1 + $0xd4] sm:$0xf]
  %v92 = vld [vmem:[%s1 + $0xd8] sm:$0xf]
  %v93 = vld [vmem:[%s1 + $0xdc] sm:$0xf]
  %v94 = vld [vmem:[%s1 + $0xe0] sm:$0xf]
  %v95 = vld [vmem:[%s1 + $0xe4] sm:$0xf]
  %v96 = vld [vmem:[%s1 + $0xe8] sm:$0xf]
  %v97 = vld [vmem:[%s1 + $0xec] sm:$0xf]
  %v98 = vld [vmem:[%s1 + $0xf0] sm:$0xf]
  %v99 = vld [vmem:[%s1 + $0xf4] sm:$0xf]
  %v100 = vld [vmem:[%s1 + $0xf8] sm:$0xf]
  %v101 = vld [vmem:[%s1 + $0xfc] sm:$0xf]
  %v102 = vld [vmem:[%s1 + $0x100] sm:$0xf]
  %v103 = vld [vmem:[%s1 + $0x104] sm:$0xf]
  %v104 = vld [vmem:[%s1 + $0x108] sm:$0xf]
  %v105 = vld [vmem:[%s1 + $0x10c] sm:$0xf]
  %v106 = vld [vmem:[%s1 + $0x110] sm:$0xf]
  %v107 = vld [vmem:[%s1 + $0x114] sm:$0xf]
  %v108 = vld [vmem:[%s1 + $0x118] sm:$0xf]
  %v109 = vld [vmem:[%s1 + $0x11c] sm:$0xf]
  %v110 = vld [vmem:[%s1 + $0x120] sm:$0xf]
  %v111 = vld [vmem:[%s1 + $0x124] sm:$0xf]
  %v112 = vld [vmem:[%s1 + $0x128] sm:$0xf]
  %v113 = vld [vmem:[%s1 + $0x12c] sm:$0xf]
  %v114 = vld [vmem:[%s1 + $0x130] sm:$0xf]
  %v115 = vld [vmem:[%s1 + $0x134] sm:$0xf]
  %v116 = vld [vmem:[%s1 + $0x138] sm:$0xf]
  %v117 = vld [vmem:[%s1 + $0x13c] sm:$0xf]
  %v118 = vld [vmem:[%s1 + $0x140] sm:$0xf]
  %v119 = vld [vmem:[%s1 + $0x144] sm:$0xf]
  %v120 = vld [vmem:[%s1 + $0x148] sm:$0xf]
  %v121 = vld [vmem:[%s1 + $0x14c] sm:$0xf]
  %v122 = vld [vmem:[%s1 + $0x150] sm:$0xf]
  %v123 = vld [vmem:[%s1 + $0x154] sm:$0xf]
  %v124 = vld [vmem:[%s1 + $0x158] sm:$0xf]
  %v125 = vld [vmem:[%s1 + $0x15c] sm:$0xf]
  %v126 = vld [vmem:[%s1 + $0x160] sm:$0xf]
  %v127 = vld [vmem:[%s1 + $0x164] sm:$0xf]
  %v128 = vld [vmem:[%s1 + $0x168] sm:$0xf]
  %v129 = vld [vmem:[%s1 + $0x16c] sm:$0xf]
  %v130 = vld [vmem:[%s1 + $0x170] sm:$0xf]
  %v131 = vld [vmem:[%s1 + $0x174] sm:$0xf]
  %v132 = vld [vmem:[%s1 + $0x178] sm:$0xf]
  %v133 = vld [vmem:[%s1 + $0x17c] sm:$0xf]
  %v134 = vld [vmem:[%s1 + $0x180] sm:$0xf]
  %v135 = vld [vmem:[%s1 + $0x184] sm:$0xf]
  %v136 = vld [vmem:[%s1 + $0x188] sm:$0xf]
  %v137 = vld [vmem:[%s1 + $0x18c] sm:$0xf]
  %v138 = vld [vmem:[%s1 + $0x190] sm:$0xf]
  %v139 = vld [vmem:[%s1 + $0x194] sm:$0xf]
  %v140 = vld [vmem:[%s1 + $0x198] sm:$0xf]
  %v141 = vld [vmem:[%s1 + $0x19c] sm:$0xf]
  %v142 = vld [vmem:[%s1 + $0x1a0] sm:$0xf]
  %v143 = vld [vmem:[%s1 + $0x1a4] sm:$0xf]
  %v144 = vld [vmem:[%s1 + $0x1a8] sm:$0xf]
  %v145 = vld [vmem:[%s1 + $0x1ac] sm:$0xf]
  %v146 = vld [vmem:[%s1 + $0x1b0] sm:$0xf]
  %v147 = vld [vmem:[%s1 + $0x1b4] sm:$0xf]
  %v148 = vld [vmem:[%s1 + $0x1b8] sm:$0xf]
  %v149 = vld [vmem:[%s1 + $0x1bc] sm:$0xf]
  %v150 = vld [vmem:[%s1 + $0x1c0] sm:$0xf]
  %v151 = vld [vmem:[%s1 + $0x1c4] sm:$0xf]
  %v152 = vld [vmem:[%s1 + $0x1c8] sm:$0xf]
  %v153 = vld [vmem:[%s1 + $0x1cc] sm:$0xf]
  %v154 = vld [vmem:[%s1 + $0x1d0] sm:$0xf]
  %v155 = vld [vmem:[%s1 + $0x1d4] sm:$0xf]
  %v156 = vld [vmem:[%s1 + $0x1d8] sm:$0xf]
  %v157 = vld [vmem:[%s1 + $0x1dc] sm:$0xf]
  %v158 = vld [vmem:[%s1 + $0x1e0] sm:$0xf]
  %v159 = vld [vmem:[%s1 + $0x1e4] sm:$0xf]
  %v160 = vld [vmem:[%s1 + $0x1e8] sm:$0xf]
  %v161 = vld [vmem:[%s1 + $0x1ec] sm:$0xf]
  %v162 = vld [vmem:[%s1 + $0x1f0] sm:$0xf]
  %v163 = vld [vmem:[%s1 + $0x1f4] sm:$0xf]
  %v164 = vld [vmem:[%s1 + $0x1f8] sm:$0xf]
  %v165 = vld [vmem:[%s1 + $0x1fc] sm:$0xf]
  %v166 = vld [vmem:[%s1 + $0x200] sm:$0xf]
  %v167 = vld [vmem:[%s1 + $0x204] sm:$0xf]
  %v168 = vld [vmem:[%s1 + $0x208] sm:$0xf]
  %v169 = vld [vmem:[%s1 + $0x20c] sm:$0xf]
  %v170 = vld [vmem:[%s1 + $0x210] sm:$0xf]
  %v171 = vld [vmem:[%s1 + $0x214] sm:$0xf]
  %v172 = vld [vmem:[%s1 + $0x218] sm:$0xf]
  %v173 = vld [vmem:[%s1 + $0x21c] sm:$0xf]
  %v174 = vld [vmem:[%s1 + $0x220] sm:$0xf]
  %v175 = vld [vmem:[%s1 + $0x224] sm:$0xf]
  %v176 = vld [vmem:[%s1 + $0x228] sm:$0xf]
  %v177 = vld [vmem:[%s1 + $0x22c] sm:$0xf]
  %v178 = vld [vmem:[%s1 + $0x230] sm:$0xf]
  %v179 = vld [vmem:[%s1 + $0x234] sm:$0xf]
  %v180 = vld [vmem:[%s1 + $0x238] sm:$0xf]
  %v181 = vld [vmem:[%s1 + $0x23c] sm:$0xf]
  %v202 = vunpack.c.l.b16 %v18
  %v203 = vunpack.c.h.b16 %v18
  %v204 = vunpack.c.l.b16 %v19
  %v205 = vunpack.c.h.b16 %v19
  %v206 = vunpack.c.l.b16 %v20
  %v207 = vunpack.c.h.b16 %v20
  %v208 = vunpack.c.l.b16 %v21
  %v209 = vunpack.c.h.b16 %v21
  %v210 = vunpack.c.l.b16 %v22
  %v211 = vunpack.c.l.b16 %v23
  %v212 = vunpack.c.h.b16 %v23
  %v213 = vunpack.c.l.b16 %v24
  %v214 = vunpack.c.h.b16 %v24
  %v215 = vunpack.c.l.b16 %v25
  %v216 = vunpack.c.h.b16 %v25
  %v217 = vunpack.c.l.b16 %v26
  %v218 = vunpack.c.h.b16 %v26
  %v219 = vunpack.c.l.b16 %v27
  %v220 = vunpack.c.l.b16 %v28
  %v221 = vunpack.c.h.b16 %v28
  %v222 = vunpack.c.l.b16 %v29
  %v223 = vunpack.c.h.b16 %v29
  %v224 = vunpack.c.l.b16 %v30
  %v225 = vunpack.c.h.b16 %v30
  %v226 = vunpack.c.l.b16 %v31
  %v227 = vunpack.c.h.b16 %v31
  %v228 = vunpack.c.l.b16 %v32
  %v229 = vunpack.c.l.b16 %v33
  %v230 = vunpack.c.h.b16 %v33
  %v231 = vunpack.c.l.b16 %v34
  %v232 = vunpack.c.h.b16 %v34
  %v233 = vunpack.c.l.b16 %v35
  %v234 = vunpack.c.h.b16 %v35
  %v235 = vunpack.c.l.b16 %v36
  %v236 = vunpack.c.h.b16 %v36
  %v237 = vunpack.c.l.b16 %v37
  %v238 = vpack.c.b16 %v211, %v202
  %v239 = vpack.c.b16 %v212, %v203
  %v240 = vpack.c.b16 %v213, %v204
  %v241 = vpack.c.b16 %v214, %v205
  %v242 = vpack.c.b16 %v215, %v206
  %v243 = vpack.c.b16 %v216, %v207
  %v244 = vpack.c.b16 %v217, %v208
  %v245 = vpack.c.b16 %v218, %v209
  %v246 = vpack.c.b16 %v219, %v210
  %v247 = vpack.c.b16 %v229, %v220
  %v248 = vpack.c.b16 %v230, %v221
  %v249 = vpack.c.b16 %v231, %v222
  %v250 = vpack.c.b16 %v232, %v223
  %v251 = vpack.c.b16 %v233, %v224
  %v252 = vpack.c.b16 %v234, %v225
  %v253 = vpack.c.b16 %v235, %v226
  %v254 = vpack.c.b16 %v236, %v227
  %v255 = vpack.c.b16 %v237, %v228
  %v418 = vunpack.c.l.b16 %v38
  %v419 = vunpack.c.l.b16 %v39
  %v420 = vunpack.c.l.b16 %v40
  %v421 = vunpack.c.l.b16 %v41
  %v422 = vunpack.c.l.b16 %v42
  %v423 = vunpack.c.l.b16 %v43
  %v424 = vunpack.c.l.b16 %v44
  %v425 = vunpack.c.l.b16 %v45
  %v426 = vunpack.c.l.b16 %v46
  %v427 = vunpack.c.l.b16 %v47
  %v428 = vunpack.c.l.b16 %v48
  %v429 = vunpack.c.l.b16 %v49
  %v430 = vunpack.c.l.b16 %v50
  %v431 = vunpack.c.l.b16 %v51
  %v432 = vunpack.c.l.b16 %v52
  %v433 = vunpack.c.l.b16 %v53
  %v434 = vunpack.c.l.b16 %v54
  %v435 = vunpack.c.l.b16 %v55
  %v436 = vunpack.c.l.b16 %v56
  %v437 = vunpack.c.l.b16 %v57
  %v438 = vunpack.c.l.b16 %v58
  %v439 = vunpack.c.l.b16 %v59
  %v440 = vunpack.c.l.b16 %v60
  %v441 = vunpack.c.l.b16 %v61
  %v442 = vunpack.c.l.b16 %v62
  %v443 = vunpack.c.l.b16 %v63
  %v444 = vunpack.c.l.b16 %v64
  %v445 = vunpack.c.l.b16 %v65
  %v446 = vunpack.c.l.b16 %v66
  %v447 = vunpack.c.l.b16 %v67
  %v448 = vunpack.c.l.b16 %v68
  %v449 = vunpack.c.l.b16 %v69
  %v450 = vunpack.c.l.b16 %v70
  %v451 = vunpack.c.l.b16 %v71
  %v452 = vunpack.c.l.b16 %v72
  %v453 = vunpack.c.l.b16 %v73
  %v454 = vunpack.c.l.b16 %v74
  %v455 = vunpack.c.l.b16 %v75
  %v456 = vunpack.c.l.b16 %v76
  %v457 = vunpack.c.l.b16 %v77
  %v458 = vunpack.c.l.b16 %v78
  %v459 = vunpack.c.l.b16 %v79
  %v460 = vunpack.c.l.b16 %v80
  %v461 = vunpack.c.l.b16 %v81
  %v462 = vunpack.c.l.b16 %v82
  %v463 = vunpack.c.l.b16 %v83
  %v464 = vunpack.c.l.b16 %v84
  %v465 = vunpack.c.l.b16 %v85
  %v466 = vunpack.c.l.b16 %v86
  %v467 = vunpack.c.l.b16 %v87
  %v468 = vunpack.c.l.b16 %v88
  %v469 = vunpack.c.l.b16 %v89
  %v470 = vunpack.c.l.b16 %v90
  %v471 = vunpack.c.l.b16 %v91
  %v472 = vunpack.c.l.b16 %v92
  %v473 = vunpack.c.l.b16 %v93
  %v474 = vunpack.c.l.b16 %v94
  %v475 = vunpack.c.l.b16 %v95
  %v476 = vunpack.c.l.b16 %v96
  %v477 = vunpack.c.l.b16 %v97
  %v478 = vunpack.c.l.b16 %v98
  %v479 = vunpack.c.l.b16 %v99
  %v480 = vunpack.c.l.b16 %v100
  %v481 = vunpack.c.l.b16 %v101
  %v482 = vunpack.c.l.b16 %v102
  %v483 = vunpack.c.l.b16 %v103
  %v484 = vunpack.c.l.b16 %v104
  %v485 = vunpack.c.l.b16 %v105
  %v486 = vunpack.c.l.b16 %v106
  %v487 = vunpack.c.l.b16 %v107
  %v488 = vunpack.c.l.b16 %v108
  %v489 = vunpack.c.l.b16 %v109
  %v490 = vunpack.c.l.b16 %v110
  %v491 = vunpack.c.l.b16 %v111
  %v492 = vunpack.c.l.b16 %v112
  %v493 = vunpack.c.l.b16 %v113
  %v494 = vunpack.c.l.b16 %v114
  %v495 = vunpack.c.l.b16 %v115
  %v496 = vunpack.c.l.b16 %v116
  %v497 = vunpack.c.l.b16 %v117
  %v498 = vunpack.c.l.b16 %v118
  %v499 = vunpack.c.l.b16 %v119
  %v500 = vunpack.c.l.b16 %v120
  %v501 = vunpack.c.l.b16 %v121
  %v502 = vunpack.c.l.b16 %v122
  %v503 = vunpack.c.l.b16 %v123
  %v504 = vunpack.c.l.b16 %v124
  %v505 = vunpack.c.l.b16 %v125
  %v506 = vunpack.c.l.b16 %v126
  %v507 = vunpack.c.l.b16 %v127
  %v508 = vunpack.c.l.b16 %v128
  %v509 = vunpack.c.l.b16 %v129
  %v510 = vunpack.c.l.b16 %v130
  %v511 = vunpack.c.l.b16 %v131
  %v512 = vunpack.c.l.b16 %v132
  %v513 = vunpack.c.l.b16 %v133
  %v514 = vunpack.c.l.b16 %v134
  %v515 = vunpack.c.l.b16 %v135
  %v516 = vunpack.c.l.b16 %v136
  %v517 = vunpack.c.l.b16 %v137
  %v518 = vunpack.c.l.b16 %v138
  %v519 = vunpack.c.l.b16 %v139
  %v520 = vunpack.c.l.b16 %v140
  %v521 = vunpack.c.l.b16 %v141
  %v522 = vunpack.c.l.b16 %v142
  %v523 = vunpack.c.l.b16 %v143
  %v524 = vunpack.c.l.b16 %v144
  %v525 = vunpack.c.l.b16 %v145
  %v526 = vunpack.c.l.b16 %v146
  %v527 = vunpack.c.l.b16 %v147
  %v528 = vunpack.c.l.b16 %v148
  %v529 = vunpack.c.l.b16 %v149
  %v530 = vunpack.c.l.b16 %v150
  %v531 = vunpack.c.l.b16 %v151
  %v532 = vunpack.c.l.b16 %v152
  %v533 = vunpack.c.l.b16 %v153
  %v534 = vunpack.c.l.b16 %v154
  %v535 = vunpack.c.l.b16 %v155
  %v536 = vunpack.c.l.b16 %v156
  %v537 = vunpack.c.l.b16 %v157
  %v538 = vunpack.c.l.b16 %v158
  %v539 = vunpack.c.l.b16 %v159
  %v540 = vunpack.c.l.b16 %v160
  %v541 = vunpack.c.l.b16 %v161
  %v542 = vunpack.c.l.b16 %v162
  %v543 = vunpack.c.l.b16 %v163
  %v544 = vunpack.c.l.b16 %v164
  %v545 = vunpack.c.l.b16 %v165
  %v546 = vunpack.c.l.b16 %v166
  %v547 = vunpack.c.l.b16 %v167
  %v548 = vunpack.c.l.b16 %v168
  %v549 = vunpack.c.l.b16 %v169
  %v550 = vunpack.c.l.b16 %v170
  %v551 = vunpack.c.l.b16 %v171
  %v552 = vunpack.c.l.b16 %v172
  %v553 = vunpack.c.l.b16 %v173
  %v554 = vunpack.c.l.b16 %v174
  %v555 = vunpack.c.l.b16 %v175
  %v556 = vunpack.c.l.b16 %v176
  %v557 = vunpack.c.l.b16 %v177
  %v558 = vunpack.c.l.b16 %v178
  %v559 = vunpack.c.l.b16 %v179
  %v560 = vunpack.c.l.b16 %v180
  %v561 = vunpack.c.l.b16 %v181
  %v562 = vpack.c.b16 %v419, %v418
  %v563 = vpack.c.b16 %v421, %v420
  %v564 = vpack.c.b16 %v423, %v422
  %v565 = vpack.c.b16 %v425, %v424
  %v566 = vpack.c.b16 %v427, %v426
  %v567 = vpack.c.b16 %v429, %v428
  %v568 = vpack.c.b16 %v431, %v430
  %v569 = vpack.c.b16 %v433, %v432
  %v570 = vpack.c.b16 %v435, %v434
  %v571 = vpack.c.b16 %v437, %v436
  %v572 = vpack.c.b16 %v439, %v438
  %v573 = vpack.c.b16 %v441, %v440
  %v574 = vpack.c.b16 %v443, %v442
  %v575 = vpack.c.b16 %v445, %v444
  %v576 = vpack.c.b16 %v447, %v446
  %v577 = vpack.c.b16 %v449, %v448
  %v578 = vpack.c.b16 %v451, %v450
  %v579 = vpack.c.b16 %v453, %v452
  %v580 = vpack.c.b16 %v455, %v454
  %v581 = vpack.c.b16 %v457, %v456
  %v582 = vpack.c.b16 %v459, %v458
  %v583 = vpack.c.b16 %v461, %v460
  %v584 = vpack.c.b16 %v463, %v462
  %v585 = vpack.c.b16 %v465, %v464
  %v586 = vpack.c.b16 %v467, %v466
  %v587 = vpack.c.b16 %v469, %v468
  %v588 = vpack.c.b16 %v471, %v470
  %v589 = vpack.c.b16 %v473, %v472
  %v590 = vpack.c.b16 %v475, %v474
  %v591 = vpack.c.b16 %v477, %v476
  %v592 = vpack.c.b16 %v479, %v478
  %v593 = vpack.c.b16 %v481, %v480
  %v594 = vpack.c.b16 %v483, %v482
  %v595 = vpack.c.b16 %v485, %v484
  %v596 = vpack.c.b16 %v487, %v486
  %v597 = vpack.c.b16 %v489, %v488
  %v598 = vpack.c.b16 %v491, %v490
  %v599 = vpack.c.b16 %v493, %v492
  %v600 = vpack.c.b16 %v495, %v494
  %v601 = vpack.c.b16 %v497, %v496
  %v602 = vpack.c.b16 %v499, %v498
  %v603 = vpack.c.b16 %v501, %v500
  %v604 = vpack.c.b16 %v503, %v502
  %v605 = vpack.c.b16 %v505, %v504
  %v606 = vpack.c.b16 %v507, %v506
  %v607 = vpack.c.b16 %v509, %v508
  %v608 = vpack.c.b16 %v511, %v510
  %v609 = vpack.c.b16 %v513, %v512
  %v610 = vpack.c.b16 %v515, %v514
  %v611 = vpack.c.b16 %v517, %v516
  %v612 = vpack.c.b16 %v519, %v518
  %v613 = vpack.c.b16 %v521, %v520
  %v614 = vpack.c.b16 %v523, %v522
  %v615 = vpack.c.b16 %v525, %v524
  %v616 = vpack.c.b16 %v527, %v526
  %v617 = vpack.c.b16 %v529, %v528
  %v618 = vpack.c.b16 %v531, %v530
  %v619 = vpack.c.b16 %v533, %v532
  %v620 = vpack.c.b16 %v535, %v534
  %v621 = vpack.c.b16 %v537, %v536
  %v622 = vpack.c.b16 %v539, %v538
  %v623 = vpack.c.b16 %v541, %v540
  %v624 = vpack.c.b16 %v543, %v542
  %v625 = vpack.c.b16 %v545, %v544
  %v626 = vpack.c.b16 %v547, %v546
  %v627 = vpack.c.b16 %v549, %v548
  %v628 = vpack.c.b16 %v551, %v550
  %v629 = vpack.c.b16 %v553, %v552
  %v630 = vpack.c.b16 %v555, %v554
  %v631 = vpack.c.b16 %v557, %v556
  %v632 = vpack.c.b16 %v559, %v558
  %v633 = vpack.c.b16 %v561, %v560
  %706 = vmatprep.subr.bf16.mxu0 0
  %707 = vmatpush1.bf16.msra.mxu0 %v569
  %708 = vmatprep.subr.bf16.mxu0 0
  %709 = vmatpush1.bf16.msra.mxu0 %v568
  %710 = vmatprep.subr.bf16.mxu0 0
  %711 = vmatpush1.bf16.msra.mxu0 %v567
  %712 = vmatprep.subr.bf16.mxu0 0
  %713 = vmatpush1.bf16.msra.mxu0 %v566
  %714 = vmatprep.subr.bf16.mxu0 0
  %715 = vmatpush1.bf16.msra.mxu0 %v565
  %716 = vmatprep.subr.bf16.mxu0 0
  %717 = vmatpush1.bf16.msra.mxu0 %v564
  %718 = vmatprep.subr.bf16.mxu0 0
  %719 = vmatpush1.bf16.msra.mxu0 %v563
  %720 = vmatprep.subr.bf16.mxu0 0
  %721 = vmatpush1.bf16.msra.mxu0 %v562
  %722 = vmatprep.subr.bf16.mxu0 0
  %723 = vmatpush2.bf16.msra.mxu0 %v577
  %724 = vmatprep.subr.bf16.mxu0 0
  %725 = vmatpush2.bf16.msra.mxu0 %v576
  %726 = vmatprep.subr.bf16.mxu0 0
  %727 = vmatpush2.bf16.msra.mxu0 %v575
  %728 = vmatprep.subr.bf16.mxu0 0
  %729 = vmatpush2.bf16.msra.mxu0 %v574
  %730 = vmatprep.subr.bf16.mxu0 0
  %731 = vmatpush2.bf16.msra.mxu0 %v573
  %732 = vmatprep.subr.bf16.mxu0 0
  %733 = vmatpush2.bf16.msra.mxu0 %v572
  %734 = vmatprep.subr.bf16.mxu0 0
  %735 = vmatpush2.bf16.msra.mxu0 %v571
  %736 = vmatprep.subr.bf16.mxu0 0
  %737 = vmatpush2.bf16.msra.mxu0 %v570
  %738 = vmatprep.mubr.bf16.mxu0 %v239
  %739 = vmatmul.mubr.bf16.gmra.mxu0 %v238
  %v740 = vpop.f32.mrf.mxu0
  %v741 = vadd.f32 0.0, %v740
  %v742 = vpop.f32.mrf.mxu0
  %v743 = vpop.f32.mrf.mxu0
  %v744 = vadd.f32 0.0, %v743
  %v745 = vpop.f32.mrf.mxu0
  %746 = vmatprep.mubr.bf16.mxu0 %v248
  %747 = vmatmul.mubr.bf16.gmra.mxu0 %v247
  %v748 = vpop.f32.mrf.mxu0
  %v749 = vadd.f32 0.0, %v748
  %v750 = vpop.f32.mrf.mxu0
  %v751 = vpop.f32.mrf.mxu0
  %v752 = vadd.f32 0.0, %v751
  %v753 = vpop.f32.mrf.mxu0
  %754 = vdwg.mxu0
  %755 = vmatprep.subr.bf16.mxu0 0
  %756 = vmatpush1.bf16.msra.mxu0 %v585
  %757 = vmatprep.subr.bf16.mxu0 0
  %758 = vmatpush1.bf16.msra.mxu0 %v584
  %759 = vmatprep.subr.bf16.mxu0 0
  %760 = vmatpush1.bf16.msra.mxu0 %v583
  %761 = vmatprep.subr.bf16.mxu0 0
  %762 = vmatpush1.bf16.msra.mxu0 %v582
  %763 = vmatprep.subr.bf16.mxu0 0
  %764 = vmatpush1.bf16.msra.mxu0 %v581
  %765 = vmatprep.subr.bf16.mxu0 0
  %766 = vmatpush1.bf16.msra.mxu0 %v580
  %767 = vmatprep.subr.bf16.mxu0 0
  %768 = vmatpush1.bf16.msra.mxu0 %v579
  %769 = vmatprep.subr.bf16.mxu0 0
  %770 = vmatpush1.bf16.msra.mxu0 %v578
  %771 = vmatprep.subr.bf16.mxu0 0
  %772 = vmatpush2.bf16.msra.mxu0 %v593
  %773 = vmatprep.subr.bf16.mxu0 0
  %774 = vmatpush2.bf16.msra.mxu0 %v592
  %775 = vmatprep.subr.bf16.mxu0 0
  %776 = vmatpush2.bf16.msra.mxu0 %v591
  %777 = vmatprep.subr.bf16.mxu0 0
  %778 = vmatpush2.bf16.msra.mxu0 %v590
  %779 = vmatprep.subr.bf16.mxu0 0
  %780 = vmatpush2.bf16.msra.mxu0 %v589
  %781 = vmatprep.subr.bf16.mxu0 0
  %782 = vmatpush2.bf16.msra.mxu0 %v588
  %783 = vmatprep.subr.bf16.mxu0 0
  %784 = vmatpush2.bf16.msra.mxu0 %v587
  %785 = vmatprep.subr.bf16.mxu0 0
  %786 = vmatpush2.bf16.msra.mxu0 %v586
  %787 = vmatprep.mubr.bf16.mxu0 %v241
  %788 = vmatmul.mubr.bf16.gmra.mxu0 %v240
  %v789 = vpop.f32.mrf.mxu0
  %v790 = vadd.f32 %v741, %v789
  %v791 = vpop.f32.mrf.mxu0
  %v792 = vpop.f32.mrf.mxu0
  %v793 = vadd.f32 %v744, %v792
  %v794 = vpop.f32.mrf.mxu0
  %795 = vmatprep.mubr.bf16.mxu0 %v250
  %796 = vmatmul.mubr.bf16.gmra.mxu0 %v249
  %v797 = vpop.f32.mrf.mxu0
  %v798 = vadd.f32 %v749, %v797
  %v799 = vpop.f32.mrf.mxu0
  %v800 = vpop.f32.mrf.mxu0
  %v801 = vadd.f32 %v752, %v800
  %v802 = vpop.f32.mrf.mxu0
  %803 = vdwg.mxu0
  %804 = vmatprep.subr.bf16.mxu0 0
  %805 = vmatpush1.bf16.msra.mxu0 %v601
  %806 = vmatprep.subr.bf16.mxu0 0
  %807 = vmatpush1.bf16.msra.mxu0 %v600
  %808 = vmatprep.subr.bf16.mxu0 0
  %809 = vmatpush1.bf16.msra.mxu0 %v599
  %810 = vmatprep.subr.bf16.mxu0 0
  %811 = vmatpush1.bf16.msra.mxu0 %v598
  %812 = vmatprep.subr.bf16.mxu0 0
  %813 = vmatpush1.bf16.msra.mxu0 %v597
  %814 = vmatprep.subr.bf16.mxu0 0
  %815 = vmatpush1.bf16.msra.mxu0 %v596
  %816 = vmatprep.subr.bf16.mxu0 0
  %817 = vmatpush1.bf16.msra.mxu0 %v595
  %818 = vmatprep.subr.bf16.mxu0 0
  %819 = vmatpush1.bf16.msra.mxu0 %v594
  %820 = vmatprep.subr.bf16.mxu0 0
  %821 = vmatpush2.bf16.msra.mxu0 %v609
  %822 = vmatprep.subr.bf16.mxu0 0
  %823 = vmatpush2.bf16.msra.mxu0 %v608
  %824 = vmatprep.subr.bf16.mxu0 0
  %825 = vmatpush2.bf16.msra.mxu0 %v607
  %826 = vmatprep.subr.bf16.mxu0 0
  %827 = vmatpush2.bf16.msra.mxu0 %v606
  %828 = vmatprep.subr.bf16.mxu0 0
  %829 = vmatpush2.bf16.msra.mxu0 %v605
  %830 = vmatprep.subr.bf16.mxu0 0
  %831 = vmatpush2.bf16.msra.mxu0 %v604
  %832 = vmatprep.subr.bf16.mxu0 0
  %833 = vmatpush2.bf16.msra.mxu0 %v603
  %834 = vmatprep.subr.bf16.mxu0 0
  %835 = vmatpush2.bf16.msra.mxu0 %v602
  %836 = vmatprep.mubr.bf16.mxu0 %v243
  %837 = vmatmul.mubr.bf16.gmra.mxu0 %v242
  %v838 = vpop.f32.mrf.mxu0
  %v839 = vadd.f32 %v790, %v838
  %v840 = vpop.f32.mrf.mxu0
  %v841 = vpop.f32.mrf.mxu0
  %v842 = vadd.f32 %v793, %v841
  %v843 = vpop.f32.mrf.mxu0
  %844 = vmatprep.mubr.bf16.mxu0 %v252
  %845 = vmatmul.mubr.bf16.gmra.mxu0 %v251
  %v846 = vpop.f32.mrf.mxu0
  %v847 = vadd.f32 %v798, %v846
  %v848 = vpop.f32.mrf.mxu0
  %v849 = vpop.f32.mrf.mxu0
  %v850 = vadd.f32 %v801, %v849
  %v851 = vpop.f32.mrf.mxu0
  %852 = vdwg.mxu0
  %853 = vmatprep.subr.bf16.mxu0 0
  %854 = vmatpush1.bf16.msra.mxu0 %v617
  %855 = vmatprep.subr.bf16.mxu0 0
  %856 = vmatpush1.bf16.msra.mxu0 %v616
  %857 = vmatprep.subr.bf16.mxu0 0
  %858 = vmatpush1.bf16.msra.mxu0 %v615
  %859 = vmatprep.subr.bf16.mxu0 0
  %860 = vmatpush1.bf16.msra.mxu0 %v614
  %861 = vmatprep.subr.bf16.mxu0 0
  %862 = vmatpush1.bf16.msra.mxu0 %v613
  %863 = vmatprep.subr.bf16.mxu0 0
  %864 = vmatpush1.bf16.msra.mxu0 %v612
  %865 = vmatprep.subr.bf16.mxu0 0
  %866 = vmatpush1.bf16.msra.mxu0 %v611
  %867 = vmatprep.subr.bf16.mxu0 0
  %868 = vmatpush1.bf16.msra.mxu0 %v610
  %869 = vmatprep.subr.bf16.mxu0 0
  %870 = vmatpush2.bf16.msra.mxu0 %v625
  %871 = vmatprep.subr.bf16.mxu0 0
  %872 = vmatpush2.bf16.msra.mxu0 %v624
  %873 = vmatprep.subr.bf16.mxu0 0
  %874 = vmatpush2.bf16.msra.mxu0 %v623
  %875 = vmatprep.subr.bf16.mxu0 0
  %876 = vmatpush2.bf16.msra.mxu0 %v622
  %877 = vmatprep.subr.bf16.mxu0 0
  %878 = vmatpush2.bf16.msra.mxu0 %v621
  %879 = vmatprep.subr.bf16.mxu0 0
  %880 = vmatpush2.bf16.msra.mxu0 %v620
  %881 = vmatprep.subr.bf16.mxu0 0
  %882 = vmatpush2.bf16.msra.mxu0 %v619
  %883 = vmatprep.subr.bf16.mxu0 0
  %884 = vmatpush2.bf16.msra.mxu0 %v618
  %885 = vmatprep.mubr.bf16.mxu0 %v245
  %886 = vmatmul.mubr.bf16.gmra.mxu0 %v244
  %v887 = vpop.f32.mrf.mxu0
  %v888 = vadd.f32 %v839, %v887
  %v889 = vpop.f32.mrf.mxu0
  %v890 = vpop.f32.mrf.mxu0
  %v891 = vadd.f32 %v842, %v890
  %v892 = vpop.f32.mrf.mxu0
  %893 = vmatprep.mubr.bf16.mxu0 %v254
  %894 = vmatmul.mubr.bf16.gmra.mxu0 %v253
  %v895 = vpop.f32.mrf.mxu0
  %v896 = vadd.f32 %v847, %v895
  %v897 = vpop.f32.mrf.mxu0
  %v898 = vpop.f32.mrf.mxu0
  %v899 = vadd.f32 %v850, %v898
  %v900 = vpop.f32.mrf.mxu0
  %901 = vdwg.mxu0
  %902 = vmatprep.subr.bf16.mxu0 0
  %903 = vmatpush1.bf16.msra.mxu0 %v633
  %904 = vmatprep.subr.bf16.mxu0 0
  %905 = vmatpush1.bf16.msra.mxu0 %v632
  %906 = vmatprep.subr.bf16.mxu0 0
  %907 = vmatpush1.bf16.msra.mxu0 %v631
  %908 = vmatprep.subr.bf16.mxu0 0
  %909 = vmatpush1.bf16.msra.mxu0 %v630
  %910 = vmatprep.subr.bf16.mxu0 0
  %911 = vmatpush1.bf16.msra.mxu0 %v629
  %912 = vmatprep.subr.bf16.mxu0 0
  %913 = vmatpush1.bf16.msra.mxu0 %v628
  %914 = vmatprep.subr.bf16.mxu0 0
  %915 = vmatpush1.bf16.msra.mxu0 %v627
  %916 = vmatprep.subr.bf16.mxu0 0
  %917 = vmatpush1.bf16.msra.mxu0 %v626
  %918 = vmatprep.subr.bf16.mxu0 0
  %919 = vmatpush2.bf16.msra.mxu0 0
  %920 = vmatprep.subr.bf16.mxu0 0
  %921 = vmatpush2.bf16.msra.mxu0 0
  %922 = vmatprep.subr.bf16.mxu0 0
  %923 = vmatpush2.bf16.msra.mxu0 0
  %924 = vmatprep.subr.bf16.mxu0 0
  %925 = vmatpush2.bf16.msra.mxu0 0
  %926 = vmatprep.subr.bf16.mxu0 0
  %927 = vmatpush2.bf16.msra.mxu0 0
  %928 = vmatprep.subr.bf16.mxu0 0
  %929 = vmatpush2.bf16.msra.mxu0 0
  %930 = vmatprep.subr.bf16.mxu0 0
  %931 = vmatpush2.bf16.msra.mxu0 0
  %932 = vmatprep.subr.bf16.mxu0 0
  %933 = vmatpush2.bf16.msra.mxu0 0
  %934 = vmatprep.mubr.bf16.mxu0 0
  %935 = vmatmul.mubr.bf16.gmra.mxu0 %v246
  %v936 = vpop.f32.mrf.mxu0
  %v937 = vadd.f32 %v888, %v936
  %v938 = vpop.f32.mrf.mxu0
  %v939 = vpop.f32.mrf.mxu0
  %v940 = vadd.f32 %v891, %v939
  %v941 = vpop.f32.mrf.mxu0
  %942 = vmatprep.mubr.bf16.mxu0 0
  %943 = vmatmul.mubr.bf16.gmra.mxu0 %v255
  %v944 = vpop.f32.mrf.mxu0
  %v945 = vadd.f32 %v896, %v944
  %v946 = vpop.f32.mrf.mxu0
  %v947 = vpop.f32.mrf.mxu0
  %v948 = vadd.f32 %v899, %v947
  %v949 = vpop.f32.mrf.mxu0
  %950 = vdwg.mxu0
  %v951 = vld [vmem:[%s2] sm:$0x1]
  %v953 = vlaneseq
  %v954 = vshrl.u32 %v953, 7
  %v955 = vsub.s32 0, %v954
  %v956 = vrot.slane %v951, %v955
  %v958 = vmul.f32 %v937, %v956
  %v959 = vmul.f32 %v940, %v956
  %v960 = vmul.f32 %v945, %v956
  %v961 = vmul.f32 %v948, %v956
  %v962 = vld [vmem:[%s3] sm:$0x1]
  %v964 = vlaneseq
  %v965 = vshrl.u32 %v964, 7
  %v966 = vsub.s32 0, %v965
  %v967 = vrot.slane %v962, %v966
  %v969 = vadd.f32 %v958, %v967
  %v970 = vadd.f32 %v959, %v967
  %v971 = vadd.f32 %v960, %v967
  %v972 = vadd.f32 %v961, %v967
  %v973 = vmax.f32 %v969, 0.0
  %v974 = vmax.f32 %v970, 0.0
  %v975 = vmax.f32 %v971, 0.0
  %v976 = vmax.f32 %v972, 0.0
  %v977 = vpack.c.bf16 %v974, %v973
  %v978 = vpack.c.bf16 %v976, %v975
  %v981 = vunpack.c.l.b16 %v977
  %v982 = vunpack.c.h.b16 %v977
  %v983 = vunpack.c.l.b16 %v978
  %v984 = vunpack.c.h.b16 %v978
  %v985 = vpack.c.b16 %v981, %v981
  %v986 = vpack.c.b16 %v982, %v982
  %v987 = vpack.c.b16 %v983, %v983
  %v988 = vpack.c.b16 %v984, %v984
  %993 = vst [vmem:[%s4] sm:$0xf] %v985
  %994 = vst [vmem:[%s4 + $0x4] sm:$0xf] %v986
  %995 = vst [vmem:[%s4 + $0x8] sm:$0xf] %v987
  %996 = vst [vmem:[%s4 + $0xc] sm:$0xf] %v988
  // Predicated region
  $region18: #{resnet_forward.27} parent=0 // pred_check
    _
  $region19: #{resnet_forward.27} parent=0 // pred_check_branch
    %998 = sbr.rel (0) target = $region21
  $region20: #{resnet_forward.27} parent=0 // pred_region
    _
  $region21: #{resnet_forward.27} parent=0 // pred_fallthru
    _
  // Predicated region
  $region22: #{resnet_forward.27} parent=0 // pred_check
    _
  $region23: #{resnet_forward.27} parent=0 // pred_check_branch
    %1000 = sbr.rel (0) target = $region25
  $region24: #{resnet_forward.27} parent=0 // pred_region
    _
  $region25: #{resnet_forward.27} parent=0 // pred_fallthru
    _

// kernel: resnet_forward.34
$region0: #{resnet_forward.34}
  #allocation0 [shape = 'u32[]', space=smem, size = 0x4, offset = 0x4, fixed_abs, tag = 'smem constant byte address 0x4 - core index']
  #allocation1 [shape = 'u32[144,128]{1,0:T(1,128)}', space=vmem, size = 0x12000, scoped, tag = 'internal scratch']
  %s0 = inlined_call_operand.vmem [shape: bf16[16,128], index: 0, kind: input, shape index: {}]
  %s1 = inlined_call_operand.vmem [shape: bf16[128,128], index: 1, kind: input, shape index: {}]
  %s2 = inlined_call_operand.vmem [shape: f32[1,128], index: 2, kind: input, shape index: {}]
  %s3 = inlined_call_operand.vmem [shape: f32[1,128], index: 3, kind: input, shape index: {}]
  %s4 = inlined_call_operand.vmem [shape: bf16[16,128], index: 4, kind: output, shape index: {}]
  %s5 = sld [smem:[#allocation0]]
  $region26: #{resnet_forward.34} parent=0
    _
  %s7 = ssub.s32 1, %s5
  %s8 = scalar_select 0, %s7, %s5
  // Predicated region
  $region2: #{resnet_forward.34} parent=0 // pred_check
    _
  $region3: #{resnet_forward.34} parent=0 // pred_check_branch
    %10 = sbr.rel (0) target = $region5
  $region4: #{resnet_forward.34} parent=0 // pred_region
    _
  $region5: #{resnet_forward.34} parent=0 // pred_fallthru
    _
  // Predicated region
  $region6: #{resnet_forward.34} parent=0 // pred_check
    _
  $region7: #{resnet_forward.34} parent=0 // pred_check_branch
    %12 = sbr.rel (0) target = $region9
  $region8: #{resnet_forward.34} parent=0 // pred_region
    _
  $region9: #{resnet_forward.34} parent=0 // pred_fallthru
    _
  // Predicated region
  $region10: #{resnet_forward.34} parent=0 // pred_check
    _
  $region11: #{resnet_forward.34} parent=0 // pred_check_branch
    %14 = sbr.rel (0) target = $region13
  $region12: #{resnet_forward.34} parent=0 // pred_region
    _
  $region13: #{resnet_forward.34} parent=0 // pred_fallthru
    _
  // Predicated region
  $region14: #{resnet_forward.34} parent=0 // pred_check
    _
  $region15: #{resnet_forward.34} parent=0 // pred_check_branch
    %16 = sbr.rel (0) target = $region17
  $region16: #{resnet_forward.34} parent=0 // pred_region
    _
  $region17: #{resnet_forward.34} parent=0 // pred_fallthru
    _
  %v18 = vld [vmem:[%s0] sm:$0xf]
  %v19 = vld [vmem:[%s0 + $0x4] sm:$0xf]
  %v20 = vld [vmem:[%s1] sm:$0xf]
  %v21 = vld [vmem:[%s1 + $0x4] sm:$0xf]
  %v22 = vld [vmem:[%s1 + $0x8] sm:$0xf]
  %v23 = vld [vmem:[%s1 + $0xc] sm:$0xf]
  %v24 = vld [vmem:[%s1 + $0x10] sm:$0xf]
  %v25 = vld [vmem:[%s1 + $0x14] sm:$0xf]
  %v26 = vld [vmem:[%s1 + $0x18] sm:$0xf]
  %v27 = vld [vmem:[%s1 + $0x1c] sm:$0xf]
  %v28 = vld [vmem:[%s1 + $0x20] sm:$0xf]
  %v29 = vld [vmem:[%s1 + $0x24] sm:$0xf]
  %v30 = vld [vmem:[%s1 + $0x28] sm:$0xf]
  %v31 = vld [vmem:[%s1 + $0x2c] sm:$0xf]
  %v32 = vld [vmem:[%s1 + $0x30] sm:$0xf]
  %v33 = vld [vmem:[%s1 + $0x34] sm:$0xf]
  %v34 = vld [vmem:[%s1 + $0x38] sm:$0xf]
  %v35 = vld [vmem:[%s1 + $0x3c] sm:$0xf]
  %v38 = vunpack.c.l.b16 %v18
  %v39 = vunpack.c.l.b16 %v19
  %v40 = vpack.c.b16 %v39, %v38
  %v58 = vunpack.c.l.b16 %v20
  %v59 = vunpack.c.l.b16 %v21
  %v60 = vunpack.c.l.b16 %v22
  %v61 = vunpack.c.l.b16 %v23
  %v62 = vunpack.c.l.b16 %v24
  %v63 = vunpack.c.l.b16 %v25
  %v64 = vunpack.c.l.b16 %v26
  %v65 = vunpack.c.l.b16 %v27
  %v66 = vunpack.c.l.b16 %v28
  %v67 = vunpack.c.l.b16 %v29
  %v68 = vunpack.c.l.b16 %v30
  %v69 = vunpack.c.l.b16 %v31
  %v70 = vunpack.c.l.b16 %v32
  %v71 = vunpack.c.l.b16 %v33
  %v72 = vunpack.c.l.b16 %v34
  %v73 = vunpack.c.l.b16 %v35
  %v74 = vpack.c.b16 %v59, %v58
  %v75 = vpack.c.b16 %v61, %v60
  %v76 = vpack.c.b16 %v63, %v62
  %v77 = vpack.c.b16 %v65, %v64
  %v78 = vpack.c.b16 %v67, %v66
  %v79 = vpack.c.b16 %v69, %v68
  %v80 = vpack.c.b16 %v71, %v70
  %v81 = vpack.c.b16 %v73, %v72
  %90 = vmatprep.subr.bf16.mxu0 0
  %91 = vmatpush1.bf16.msra.mxu0 %v81
  %92 = vmatprep.subr.bf16.mxu0 0
  %93 = vmatpush1.bf16.msra.mxu0 %v80
  %94 = vmatprep.subr.bf16.mxu0 0
  %95 = vmatpush1.bf16.msra.mxu0 %v79
  %96 = vmatprep.subr.bf16.mxu0 0
  %97 = vmatpush1.bf16.msra.mxu0 %v78
  %98 = vmatprep.subr.bf16.mxu0 0
  %99 = vmatpush1.bf16.msra.mxu0 %v77
  %100 = vmatprep.subr.bf16.mxu0 0
  %101 = vmatpush1.bf16.msra.mxu0 %v76
  %102 = vmatprep.subr.bf16.mxu0 0
  %103 = vmatpush1.bf16.msra.mxu0 %v75
  %104 = vmatprep.subr.bf16.mxu0 0
  %105 = vmatpush1.bf16.msra.mxu0 %v74
  %106 = vmatprep.subr.bf16.mxu0 0
  %107 = vmatpush2.bf16.msra.mxu0 0
  %108 = vmatprep.subr.bf16.mxu0 0
  %109 = vmatpush2.bf16.msra.mxu0 0
  %110 = vmatprep.subr.bf16.mxu0 0
  %111 = vmatpush2.bf16.msra.mxu0 0
  %112 = vmatprep.subr.bf16.mxu0 0
  %113 = vmatpush2.bf16.msra.mxu0 0
  %114 = vmatprep.subr.bf16.mxu0 0
  %115 = vmatpush2.bf16.msra.mxu0 0
  %116 = vmatprep.subr.bf16.mxu0 0
  %117 = vmatpush2.bf16.msra.mxu0 0
  %118 = vmatprep.subr.bf16.mxu0 0
  %119 = vmatpush2.bf16.msra.mxu0 0
  %120 = vmatprep.subr.bf16.mxu0 0
  %121 = vmatpush2.bf16.msra.mxu0 0
  %122 = vmatprep.mubr.bf16.mxu0 0
  %123 = vmatmul.mubr.bf16.gmra.mxu0 %v40
  %v124 = vpop.f32.mrf.mxu0
  %v125 = vadd.f32 0.0, %v124
  %v126 = vpop.f32.mrf.mxu0
  %v127 = vpop.f32.mrf.mxu0
  %v128 = vadd.f32 0.0, %v127
  %v129 = vpop.f32.mrf.mxu0
  %130 = vdwg.mxu0
  %v131 = vld [vmem:[%s2] sm:$0x1]
  %v133 = vlaneseq
  %v134 = vshrl.u32 %v133, 7
  %v135 = vsub.s32 0, %v134
  %v136 = vrot.slane %v131, %v135
  %v138 = vmul.f32 %v125, %v136
  %v139 = vmul.f32 %v128, %v136
  %v140 = vld [vmem:[%s3] sm:$0x1]
  %v142 = vlaneseq
  %v143 = vshrl.u32 %v142, 7
  %v144 = vsub.s32 0, %v143
  %v145 = vrot.slane %v140, %v144
  %v147 = vadd.f32 %v138, %v145
  %v148 = vadd.f32 %v139, %v145
  %v149 = vpack.c.bf16 %v148, %v147
  %v151 = vunpack.c.l.b16 %v149
  %v152 = vunpack.c.h.b16 %v149
  %v153 = vpack.c.b16 %v151, %v151
  %v154 = vpack.c.b16 %v152, %v152
  %157 = vst [vmem:[%s4] sm:$0xf] %v153
  %158 = vst [vmem:[%s4 + $0x4] sm:$0xf] %v154
  // Predicated region
  $region18: #{resnet_forward.34} parent=0 // pred_check
    _
  $region19: #{resnet_forward.34} parent=0 // pred_check_branch
    %160 = sbr.rel (0) target = $region21
  $region20: #{resnet_forward.34} parent=0 // pred_region
    _
  $region21: #{resnet_forward.34} parent=0 // pred_fallthru
    _
  // Predicated region
  $region22: #{resnet_forward.34} parent=0 // pred_check
    _
  $region23: #{resnet_forward.34} parent=0 // pred_check_branch
    %162 = sbr.rel (0) target = $region25
  $region24: #{resnet_forward.34} parent=0 // pred_region
    _
  $region25: #{resnet_forward.34} parent=0 // pred_fallthru
    _

// kernel: resnet_forward.28
$region0: #{resnet_forward.28}
  #allocation0 [shape = 'u32[]', space=smem, size = 0x4, offset = 0x4, fixed_abs, tag = 'smem constant byte address 0x4 - core index']
  #allocation1 [shape = 'u32[144,128]{1,0:T(1,128)}', space=vmem, size = 0x12000, scoped, tag = 'internal scratch']
  %s0 = inlined_call_operand.vmem [shape: bf16[32,1152], index: 0, kind: input, shape index: {}]
  %s1 = inlined_call_operand.vmem [shape: bf16[1152,128], index: 1, kind: input, shape index: {}]
  %s2 = inlined_call_operand.vmem [shape: f32[1,128], index: 2, kind: input, shape index: {}]
  %s3 = inlined_call_operand.vmem [shape: f32[1,128], index: 3, kind: input, shape index: {}]
  %s4 = inlined_call_operand.vmem [shape: bf16[32,128], index: 4, kind: input, shape index: {}]
  %s5 = inlined_call_operand.vmem [shape: bf16[32,128], index: 5, kind: output, shape index: {}]
  %s6 = sld [smem:[#allocation0]]
  $region30: #{resnet_forward.28} parent=0
    _
  %s8 = ssub.s32 1, %s6
  %s9 = scalar_select 0, %s8, %s6
  // Predicated region
  $region2: #{resnet_forward.28} parent=0 // pred_check
    _
  $region3: #{resnet_forward.28} parent=0 // pred_check_branch
    %11 = sbr.rel (0) target = $region5
  $region4: #{resnet_forward.28} parent=0 // pred_region
    _
  $region5: #{resnet_forward.28} parent=0 // pred_fallthru
    _
  // Predicated region
  $region6: #{resnet_forward.28} parent=0 // pred_check
    _
  $region7: #{resnet_forward.28} parent=0 // pred_check_branch
    %13 = sbr.rel (0) target = $region9
  $region8: #{resnet_forward.28} parent=0 // pred_region
    _
  $region9: #{resnet_forward.28} parent=0 // pred_fallthru
    _
  // Predicated region
  $region10: #{resnet_forward.28} parent=0 // pred_check
    _
  $region11: #{resnet_forward.28} parent=0 // pred_check_branch
    %15 = sbr.rel (0) target = $region13
  $region12: #{resnet_forward.28} parent=0 // pred_region
    _
  $region13: #{resnet_forward.28} parent=0 // pred_fallthru
    _
  // Predicated region
  $region14: #{resnet_forward.28} parent=0 // pred_check
    _
  $region15: #{resnet_forward.28} parent=0 // pred_check_branch
    %17 = sbr.rel (0) target = $region17
  $region16: #{resnet_forward.28} parent=0 // pred_region
    _
  $region17: #{resnet_forward.28} parent=0 // pred_fallthru
    _
  // Predicated region
  $region18: #{resnet_forward.28} parent=0 // pred_check
    _
  $region19: #{resnet_forward.28} parent=0 // pred_check_branch
    %19 = sbr.rel (0) target = $region21
  $region20: #{resnet_forward.28} parent=0 // pred_region
    _
  $region21: #{resnet_forward.28} parent=0 // pred_fallthru
    _
  %v21 = vld [vmem:[%s0] sm:$0xff]
  %v22 = vld [vmem:[%s0 + $0x8] sm:$0xff]
  %v23 = vld [vmem:[%s0 + $0x10] sm:$0xff]
  %v24 = vld [vmem:[%s0 + $0x18] sm:$0xff]
  %v25 = vld [vmem:[%s0 + $0x20] sm:$0xf]
  %v26 = vld [vmem:[%s0 + $0x24] sm:$0xff]
  %v27 = vld [vmem:[%s0 + $0x2c] sm:$0xff]
  %v28 = vld [vmem:[%s0 + $0x34] sm:$0xff]
  %v29 = vld [vmem:[%s0 + $0x3c] sm:$0xff]
  %v30 = vld [vmem:[%s0 + $0x44] sm:$0xf]
  %v31 = vld [vmem:[%s0 + $0x48] sm:$0xff]
  %v32 = vld [vmem:[%s0 + $0x50] sm:$0xff]
  %v33 = vld [vmem:[%s0 + $0x58] sm:$0xff]
  %v34 = vld [vmem:[%s0 + $0x60] sm:$0xff]
  %v35 = vld [vmem:[%s0 + $0x68] sm:$0xf]
  %v36 = vld [vmem:[%s0 + $0x6c] sm:$0xff]
  %v37 = vld [vmem:[%s0 + $0x74] sm:$0xff]
  %v38 = vld [vmem:[%s0 + $0x7c] sm:$0xff]
  %v39 = vld [vmem:[%s0 + $0x84] sm:$0xff]
  %v40 = vld [vmem:[%s0 + $0x8c] sm:$0xf]
  %v41 = vld [vmem:[%s1] sm:$0xf]
  %v42 = vld [vmem:[%s1 + $0x4] sm:$0xf]
  %v43 = vld [vmem:[%s1 + $0x8] sm:$0xf]
  %v44 = vld [vmem:[%s1 + $0xc] sm:$0xf]
  %v45 = vld [vmem:[%s1 + $0x10] sm:$0xf]
  %v46 = vld [vmem:[%s1 + $0x14] sm:$0xf]
  %v47 = vld [vmem:[%s1 + $0x18] sm:$0xf]
  %v48 = vld [vmem:[%s1 + $0x1c] sm:$0xf]
  %v49 = vld [vmem:[%s1 + $0x20] sm:$0xf]
  %v50 = vld [vmem:[%s1 + $0x24] sm:$0xf]
  %v51 = vld [vmem:[%s1 + $0x28] sm:$0xf]
  %v52 = vld [vmem:[%s1 + $0x2c] sm:$0xf]
  %v53 = vld [vmem:[%s1 + $0x30] sm:$0xf]
  %v54 = vld [vmem:[%s1 + $0x34] sm:$0xf]
  %v55 = vld [vmem:[%s1 + $0x38] sm:$0xf]
  %v56 = vld [vmem:[%s1 + $0x3c] sm:$0xf]
  %v57 = vld [vmem:[%s1 + $0x40] sm:$0xf]
  %v58 = vld [vmem:[%s1 + $0x44] sm:$0xf]
  %v59 = vld [vmem:[%s1 + $0x48] sm:$0xf]
  %v60 = vld [vmem:[%s1 + $0x4c] sm:$0xf]
  %v61 = vld [vmem:[%s1 + $0x50] sm:$0xf]
  %v62 = vld [vmem:[%s1 + $0x54] sm:$0xf]
  %v63 = vld [vmem:[%s1 + $0x58] sm:$0xf]
  %v64 = vld [vmem:[%s1 + $0x5c] sm:$0xf]
  %v65 = vld [vmem:[%s1 + $0x60] sm:$0xf]
  %v66 = vld [vmem:[%s1 + $0x64] sm:$0xf]
  %v67 = vld [vmem:[%s1 + $0x68] sm:$0xf]
  %v68 = vld [vmem:[%s1 + $0x6c] sm:$0xf]
  %v69 = vld [vmem:[%s1 + $0x70] sm:$0xf]
  %v70 = vld [vmem:[%s1 + $0x74] sm:$0xf]
  %v71 = vld [vmem:[%s1 + $0x78] sm:$0xf]
  %v72 = vld [vmem:[%s1 + $0x7c] sm:$0xf]
  %v73 = vld [vmem:[%s1 + $0x80] sm:$0xf]
  %v74 = vld [vmem:[%s1 + $0x84] sm:$0xf]
  %v75 = vld [vmem:[%s1 + $0x88] sm:$0xf]
  %v76 = vld [vmem:[%s1 + $0x8c] sm:$0xf]
  %v77 = vld [vmem:[%s1 + $0x90] sm:$0xf]
  %v78 = vld [vmem:[%s1 + $0x94] sm:$0xf]
  %v79 = vld [vmem:[%s1 + $0x98] sm:$0xf]
  %v80 = vld [vmem:[%s1 + $0x9c] sm:$0xf]
  %v81 = vld [vmem:[%s1 + $0xa0] sm:$0xf]
  %v82 = vld [vmem:[%s1 + $0xa4] sm:$0xf]
  %v83 = vld [vmem:[%s1 + $0xa8] sm:$0xf]
  %v84 = vld [vmem:[%s1 + $0xac] sm:$0xf]
  %v85 = vld [vmem:[%s1 + $0xb0] sm:$0xf]
  %v86 = vld [vmem:[%s1 + $0xb4] sm:$0xf]
  %v87 = vld [vmem:[%s1 + $0xb8] sm:$0xf]
  %v88 = vld [vmem:[%s1 + $0xbc] sm:$0xf]
  %v89 = vld [vmem:[%s1 + $0xc0] sm:$0xf]
  %v90 = vld [vmem:[%s1 + $0xc4] sm:$0xf]
  %v91 = vld [vmem:[%s1 + $0xc8] sm:$0xf]
  %v92 = vld [vmem:[%s1 + $0xcc] sm:$0xf]
  %v93 = vld [vmem:[%s1 + $0xd0] sm:$0xf]
  %v94 = vld [vmem:[%s1 + $0xd4] sm:$0xf]
  %v95 = vld [vmem:[%s1 + $0xd8] sm:$0xf]
  %v96 = vld [vmem:[%s1 + $0xdc] sm:$0xf]
  %v97 = vld [vmem:[%s1 + $0xe0] sm:$0xf]
  %v98 = vld [vmem:[%s1 + $0xe4] sm:$0xf]
  %v99 = vld [vmem:[%s1 + $0xe8] sm:$0xf]
  %v100 = vld [vmem:[%s1 + $0xec] sm:$0xf]
  %v101 = vld [vmem:[%s1 + $0xf0] sm:$0xf]
  %v102 = vld [vmem:[%s1 + $0xf4] sm:$0xf]
  %v103 = vld [vmem:[%s1 + $0xf8] sm:$0xf]
  %v104 = vld [vmem:[%s1 + $0xfc] sm:$0xf]
  %v105 = vld [vmem:[%s1 + $0x100] sm:$0xf]
  %v106 = vld [vmem:[%s1 + $0x104] sm:$0xf]
  %v107 = vld [vmem:[%s1 + $0x108] sm:$0xf]
  %v108 = vld [vmem:[%s1 + $0x10c] sm:$0xf]
  %v109 = vld [vmem:[%s1 + $0x110] sm:$0xf]
  %v110 = vld [vmem:[%s1 + $0x114] sm:$0xf]
  %v111 = vld [vmem:[%s1 + $0x118] sm:$0xf]
  %v112 = vld [vmem:[%s1 + $0x11c] sm:$0xf]
  %v113 = vld [vmem:[%s1 + $0x120] sm:$0xf]
  %v114 = vld [vmem:[%s1 + $0x124] sm:$0xf]
  %v115 = vld [vmem:[%s1 + $0x128] sm:$0xf]
  %v116 = vld [vmem:[%s1 + $0x12c] sm:$0xf]
  %v117 = vld [vmem:[%s1 + $0x130] sm:$0xf]
  %v118 = vld [vmem:[%s1 + $0x134] sm:$0xf]
  %v119 = vld [vmem:[%s1 + $0x138] sm:$0xf]
  %v120 = vld [vmem:[%s1 + $0x13c] sm:$0xf]
  %v121 = vld [vmem:[%s1 + $0x140] sm:$0xf]
  %v122 = vld [vmem:[%s1 + $0x144] sm:$0xf]
  %v123 = vld [vmem:[%s1 + $0x148] sm:$0xf]
  %v124 = vld [vmem:[%s1 + $0x14c] sm:$0xf]
  %v125 = vld [vmem:[%s1 + $0x150] sm:$0xf]
  %v126 = vld [vmem:[%s1 + $0x154] sm:$0xf]
  %v127 = vld [vmem:[%s1 + $0x158] sm:$0xf]
  %v128 = vld [vmem:[%s1 + $0x15c] sm:$0xf]
  %v129 = vld [vmem:[%s1 + $0x160] sm:$0xf]
  %v130 = vld [vmem:[%s1 + $0x164] sm:$0xf]
  %v131 = vld [vmem:[%s1 + $0x168] sm:$0xf]
  %v132 = vld [vmem:[%s1 + $0x16c] sm:$0xf]
  %v133 = vld [vmem:[%s1 + $0x170] sm:$0xf]
  %v134 = vld [vmem:[%s1 + $0x174] sm:$0xf]
  %v135 = vld [vmem:[%s1 + $0x178] sm:$0xf]
  %v136 = vld [vmem:[%s1 + $0x17c] sm:$0xf]
  %v137 = vld [vmem:[%s1 + $0x180] sm:$0xf]
  %v138 = vld [vmem:[%s1 + $0x184] sm:$0xf]
  %v139 = vld [vmem:[%s1 + $0x188] sm:$0xf]
  %v140 = vld [vmem:[%s1 + $0x18c] sm:$0xf]
  %v141 = vld [vmem:[%s1 + $0x190] sm:$0xf]
  %v142 = vld [vmem:[%s1 + $0x194] sm:$0xf]
  %v143 = vld [vmem:[%s1 + $0x198] sm:$0xf]
  %v144 = vld [vmem:[%s1 + $0x19c] sm:$0xf]
  %v145 = vld [vmem:[%s1 + $0x1a0] sm:$0xf]
  %v146 = vld [vmem:[%s1 + $0x1a4] sm:$0xf]
  %v147 = vld [vmem:[%s1 + $0x1a8] sm:$0xf]
  %v148 = vld [vmem:[%s1 + $0x1ac] sm:$0xf]
  %v149 = vld [vmem:[%s1 + $0x1b0] sm:$0xf]
  %v150 = vld [vmem:[%s1 + $0x1b4] sm:$0xf]
  %v151 = vld [vmem:[%s1 + $0x1b8] sm:$0xf]
  %v152 = vld [vmem:[%s1 + $0x1bc] sm:$0xf]
  %v153 = vld [vmem:[%s1 + $0x1c0] sm:$0xf]
  %v154 = vld [vmem:[%s1 + $0x1c4] sm:$0xf]
  %v155 = vld [vmem:[%s1 + $0x1c8] sm:$0xf]
  %v156 = vld [vmem:[%s1 + $0x1cc] sm:$0xf]
  %v157 = vld [vmem:[%s1 + $0x1d0] sm:$0xf]
  %v158 = vld [vmem:[%s1 + $0x1d4] sm:$0xf]
  %v159 = vld [vmem:[%s1 + $0x1d8] sm:$0xf]
  %v160 = vld [vmem:[%s1 + $0x1dc] sm:$0xf]
  %v161 = vld [vmem:[%s1 + $0x1e0] sm:$0xf]
  %v162 = vld [vmem:[%s1 + $0x1e4] sm:$0xf]
  %v163 = vld [vmem:[%s1 + $0x1e8] sm:$0xf]
  %v164 = vld [vmem:[%s1 + $0x1ec] sm:$0xf]
  %v165 = vld [vmem:[%s1 + $0x1f0] sm:$0xf]
  %v166 = vld [vmem:[%s1 + $0x1f4] sm:$0xf]
  %v167 = vld [vmem:[%s1 + $0x1f8] sm:$0xf]
  %v168 = vld [vmem:[%s1 + $0x1fc] sm:$0xf]
  %v169 = vld [vmem:[%s1 + $0x200] sm:$0xf]
  %v170 = vld [vmem:[%s1 + $0x204] sm:$0xf]
  %v171 = vld [vmem:[%s1 + $0x208] sm:$0xf]
  %v172 = vld [vmem:[%s1 + $0x20c] sm:$0xf]
  %v173 = vld [vmem:[%s1 + $0x210] sm:$0xf]
  %v174 = vld [vmem:[%s1 + $0x214] sm:$0xf]
  %v175 = vld [vmem:[%s1 + $0x218] sm:$0xf]
  %v176 = vld [vmem:[%s1 + $0x21c] sm:$0xf]
  %v177 = vld [vmem:[%s1 + $0x220] sm:$0xf]
  %v178 = vld [vmem:[%s1 + $0x224] sm:$0xf]
  %v179 = vld [vmem:[%s1 + $0x228] sm:$0xf]
  %v180 = vld [vmem:[%s1 + $0x22c] sm:$0xf]
  %v181 = vld [vmem:[%s1 + $0x230] sm:$0xf]
  %v182 = vld [vmem:[%s1 + $0x234] sm:$0xf]
  %v183 = vld [vmem:[%s1 + $0x238] sm:$0xf]
  %v184 = vld [vmem:[%s1 + $0x23c] sm:$0xf]
  %v205 = vunpack.c.l.b16 %v21
  %v206 = vunpack.c.h.b16 %v21
  %v207 = vunpack.c.l.b16 %v22
  %v208 = vunpack.c.h.b16 %v22
  %v209 = vunpack.c.l.b16 %v23
  %v210 = vunpack.c.h.b16 %v23
  %v211 = vunpack.c.l.b16 %v24
  %v212 = vunpack.c.h.b16 %v24
  %v213 = vunpack.c.l.b16 %v25
  %v214 = vunpack.c.l.b16 %v26
  %v215 = vunpack.c.h.b16 %v26
  %v216 = vunpack.c.l.b16 %v27
  %v217 = vunpack.c.h.b16 %v27
  %v218 = vunpack.c.l.b16 %v28
  %v219 = vunpack.c.h.b16 %v28
  %v220 = vunpack.c.l.b16 %v29
  %v221 = vunpack.c.h.b16 %v29
  %v222 = vunpack.c.l.b16 %v30
  %v223 = vunpack.c.l.b16 %v31
  %v224 = vunpack.c.h.b16 %v31
  %v225 = vunpack.c.l.b16 %v32
  %v226 = vunpack.c.h.b16 %v32
  %v227 = vunpack.c.l.b16 %v33
  %v228 = vunpack.c.h.b16 %v33
  %v229 = vunpack.c.l.b16 %v34
  %v230 = vunpack.c.h.b16 %v34
  %v231 = vunpack.c.l.b16 %v35
  %v232 = vunpack.c.l.b16 %v36
  %v233 = vunpack.c.h.b16 %v36
  %v234 = vunpack.c.l.b16 %v37
  %v235 = vunpack.c.h.b16 %v37
  %v236 = vunpack.c.l.b16 %v38
  %v237 = vunpack.c.h.b16 %v38
  %v238 = vunpack.c.l.b16 %v39
  %v239 = vunpack.c.h.b16 %v39
  %v240 = vunpack.c.l.b16 %v40
  %v241 = vpack.c.b16 %v214, %v205
  %v242 = vpack.c.b16 %v215, %v206
  %v243 = vpack.c.b16 %v216, %v207
  %v244 = vpack.c.b16 %v217, %v208
  %v245 = vpack.c.b16 %v218, %v209
  %v246 = vpack.c.b16 %v219, %v210
  %v247 = vpack.c.b16 %v220, %v211
  %v248 = vpack.c.b16 %v221, %v212
  %v249 = vpack.c.b16 %v222, %v213
  %v250 = vpack.c.b16 %v232, %v223
  %v251 = vpack.c.b16 %v233, %v224
  %v252 = vpack.c.b16 %v234, %v225
  %v253 = vpack.c.b16 %v235, %v226
  %v254 = vpack.c.b16 %v236, %v227
  %v255 = vpack.c.b16 %v237, %v228
  %v256 = vpack.c.b16 %v238, %v229
  %v257 = vpack.c.b16 %v239, %v230
  %v258 = vpack.c.b16 %v240, %v231
  %v421 = vunpack.c.l.b16 %v41
  %v422 = vunpack.c.l.b16 %v42
  %v423 = vunpack.c.l.b16 %v43
  %v424 = vunpack.c.l.b16 %v44
  %v425 = vunpack.c.l.b16 %v45
  %v426 = vunpack.c.l.b16 %v46
  %v427 = vunpack.c.l.b16 %v47
  %v428 = vunpack.c.l.b16 %v48
  %v429 = vunpack.c.l.b16 %v49
  %v430 = vunpack.c.l.b16 %v50
  %v431 = vunpack.c.l.b16 %v51
  %v432 = vunpack.c.l.b16 %v52
  %v433 = vunpack.c.l.b16 %v53
  %v434 = vunpack.c.l.b16 %v54
  %v435 = vunpack.c.l.b16 %v55
  %v436 = vunpack.c.l.b16 %v56
  %v437 = vunpack.c.l.b16 %v57
  %v438 = vunpack.c.l.b16 %v58
  %v439 = vunpack.c.l.b16 %v59
  %v440 = vunpack.c.l.b16 %v60
  %v441 = vunpack.c.l.b16 %v61
  %v442 = vunpack.c.l.b16 %v62
  %v443 = vunpack.c.l.b16 %v63
  %v444 = vunpack.c.l.b16 %v64
  %v445 = vunpack.c.l.b16 %v65
  %v446 = vunpack.c.l.b16 %v66
  %v447 = vunpack.c.l.b16 %v67
  %v448 = vunpack.c.l.b16 %v68
  %v449 = vunpack.c.l.b16 %v69
  %v450 = vunpack.c.l.b16 %v70
  %v451 = vunpack.c.l.b16 %v71
  %v452 = vunpack.c.l.b16 %v72
  %v453 = vunpack.c.l.b16 %v73
  %v454 = vunpack.c.l.b16 %v74
  %v455 = vunpack.c.l.b16 %v75
  %v456 = vunpack.c.l.b16 %v76
  %v457 = vunpack.c.l.b16 %v77
  %v458 = vunpack.c.l.b16 %v78
  %v459 = vunpack.c.l.b16 %v79
  %v460 = vunpack.c.l.b16 %v80
  %v461 = vunpack.c.l.b16 %v81
  %v462 = vunpack.c.l.b16 %v82
  %v463 = vunpack.c.l.b16 %v83
  %v464 = vunpack.c.l.b16 %v84
  %v465 = vunpack.c.l.b16 %v85
  %v466 = vunpack.c.l.b16 %v86
  %v467 = vunpack.c.l.b16 %v87
  %v468 = vunpack.c.l.b16 %v88
  %v469 = vunpack.c.l.b16 %v89
  %v470 = vunpack.c.l.b16 %v90
  %v471 = vunpack.c.l.b16 %v91
  %v472 = vunpack.c.l.b16 %v92
  %v473 = vunpack.c.l.b16 %v93
  %v474 = vunpack.c.l.b16 %v94
  %v475 = vunpack.c.l.b16 %v95
  %v476 = vunpack.c.l.b16 %v96
  %v477 = vunpack.c.l.b16 %v97
  %v478 = vunpack.c.l.b16 %v98
  %v479 = vunpack.c.l.b16 %v99
  %v480 = vunpack.c.l.b16 %v100
  %v481 = vunpack.c.l.b16 %v101
  %v482 = vunpack.c.l.b16 %v102
  %v483 = vunpack.c.l.b16 %v103
  %v484 = vunpack.c.l.b16 %v104
  %v485 = vunpack.c.l.b16 %v105
  %v486 = vunpack.c.l.b16 %v106
  %v487 = vunpack.c.l.b16 %v107
  %v488 = vunpack.c.l.b16 %v108
  %v489 = vunpack.c.l.b16 %v109
  %v490 = vunpack.c.l.b16 %v110
  %v491 = vunpack.c.l.b16 %v111
  %v492 = vunpack.c.l.b16 %v112
  %v493 = vunpack.c.l.b16 %v113
  %v494 = vunpack.c.l.b16 %v114
  %v495 = vunpack.c.l.b16 %v115
  %v496 = vunpack.c.l.b16 %v116
  %v497 = vunpack.c.l.b16 %v117
  %v498 = vunpack.c.l.b16 %v118
  %v499 = vunpack.c.l.b16 %v119
  %v500 = vunpack.c.l.b16 %v120
  %v501 = vunpack.c.l.b16 %v121
  %v502 = vunpack.c.l.b16 %v122
  %v503 = vunpack.c.l.b16 %v123
  %v504 = vunpack.c.l.b16 %v124
  %v505 = vunpack.c.l.b16 %v125
  %v506 = vunpack.c.l.b16 %v126
  %v507 = vunpack.c.l.b16 %v127
  %v508 = vunpack.c.l.b16 %v128
  %v509 = vunpack.c.l.b16 %v129
  %v510 = vunpack.c.l.b16 %v130
  %v511 = vunpack.c.l.b16 %v131
  %v512 = vunpack.c.l.b16 %v132
  %v513 = vunpack.c.l.b16 %v133
  %v514 = vunpack.c.l.b16 %v134
  %v515 = vunpack.c.l.b16 %v135
  %v516 = vunpack.c.l.b16 %v136
  %v517 = vunpack.c.l.b16 %v137
  %v518 = vunpack.c.l.b16 %v138
  %v519 = vunpack.c.l.b16 %v139
  %v520 = vunpack.c.l.b16 %v140
  %v521 = vunpack.c.l.b16 %v141
  %v522 = vunpack.c.l.b16 %v142
  %v523 = vunpack.c.l.b16 %v143
  %v524 = vunpack.c.l.b16 %v144
  %v525 = vunpack.c.l.b16 %v145
  %v526 = vunpack.c.l.b16 %v146
  %v527 = vunpack.c.l.b16 %v147
  %v528 = vunpack.c.l.b16 %v148
  %v529 = vunpack.c.l.b16 %v149
  %v530 = vunpack.c.l.b16 %v150
  %v531 = vunpack.c.l.b16 %v151
  %v532 = vunpack.c.l.b16 %v152
  %v533 = vunpack.c.l.b16 %v153
  %v534 = vunpack.c.l.b16 %v154
  %v535 = vunpack.c.l.b16 %v155
  %v536 = vunpack.c.l.b16 %v156
  %v537 = vunpack.c.l.b16 %v157
  %v538 = vunpack.c.l.b16 %v158
  %v539 = vunpack.c.l.b16 %v159
  %v540 = vunpack.c.l.b16 %v160
  %v541 = vunpack.c.l.b16 %v161
  %v542 = vunpack.c.l.b16 %v162
  %v543 = vunpack.c.l.b16 %v163
  %v544 = vunpack.c.l.b16 %v164
  %v545 = vunpack.c.l.b16 %v165
  %v546 = vunpack.c.l.b16 %v166
  %v547 = vunpack.c.l.b16 %v167
  %v548 = vunpack.c.l.b16 %v168
  %v549 = vunpack.c.l.b16 %v169
  %v550 = vunpack.c.l.b16 %v170
  %v551 = vunpack.c.l.b16 %v171
  %v552 = vunpack.c.l.b16 %v172
  %v553 = vunpack.c.l.b16 %v173
  %v554 = vunpack.c.l.b16 %v174
  %v555 = vunpack.c.l.b16 %v175
  %v556 = vunpack.c.l.b16 %v176
  %v557 = vunpack.c.l.b16 %v177
  %v558 = vunpack.c.l.b16 %v178
  %v559 = vunpack.c.l.b16 %v179
  %v560 = vunpack.c.l.b16 %v180
  %v561 = vunpack.c.l.b16 %v181
  %v562 = vunpack.c.l.b16 %v182
  %v563 = vunpack.c.l.b16 %v183
  %v564 = vunpack.c.l.b16 %v184
  %v565 = vpack.c.b16 %v422, %v421
  %v566 = vpack.c.b16 %v424, %v423
  %v567 = vpack.c.b16 %v426, %v425
  %v568 = vpack.c.b16 %v428, %v427
  %v569 = vpack.c.b16 %v430, %v429
  %v570 = vpack.c.b16 %v432, %v431
  %v571 = vpack.c.b16 %v434, %v433
  %v572 = vpack.c.b16 %v436, %v435
  %v573 = vpack.c.b16 %v438, %v437
  %v574 = vpack.c.b16 %v440, %v439
  %v575 = vpack.c.b16 %v442, %v441
  %v576 = vpack.c.b16 %v444, %v443
  %v577 = vpack.c.b16 %v446, %v445
  %v578 = vpack.c.b16 %v448, %v447
  %v579 = vpack.c.b16 %v450, %v449
  %v580 = vpack.c.b16 %v452, %v451
  %v581 = vpack.c.b16 %v454, %v453
  %v582 = vpack.c.b16 %v456, %v455
  %v583 = vpack.c.b16 %v458, %v457
  %v584 = vpack.c.b16 %v460, %v459
  %v585 = vpack.c.b16 %v462, %v461
  %v586 = vpack.c.b16 %v464, %v463
  %v587 = vpack.c.b16 %v466, %v465
  %v588 = vpack.c.b16 %v468, %v467
  %v589 = vpack.c.b16 %v470, %v469
  %v590 = vpack.c.b16 %v472, %v471
  %v591 = vpack.c.b16 %v474, %v473
  %v592 = vpack.c.b16 %v476, %v475
  %v593 = vpack.c.b16 %v478, %v477
  %v594 = vpack.c.b16 %v480, %v479
  %v595 = vpack.c.b16 %v482, %v481
  %v596 = vpack.c.b16 %v484, %v483
  %v597 = vpack.c.b16 %v486, %v485
  %v598 = vpack.c.b16 %v488, %v487
  %v599 = vpack.c.b16 %v490, %v489
  %v600 = vpack.c.b16 %v492, %v491
  %v601 = vpack.c.b16 %v494, %v493
  %v602 = vpack.c.b16 %v496, %v495
  %v603 = vpack.c.b16 %v498, %v497
  %v604 = vpack.c.b16 %v500, %v499
  %v605 = vpack.c.b16 %v502, %v501
  %v606 = vpack.c.b16 %v504, %v503
  %v607 = vpack.c.b16 %v506, %v505
  %v608 = vpack.c.b16 %v508, %v507
  %v609 = vpack.c.b16 %v510, %v509
  %v610 = vpack.c.b16 %v512, %v511
  %v611 = vpack.c.b16 %v514, %v513
  %v612 = vpack.c.b16 %v516, %v515
  %v613 = vpack.c.b16 %v518, %v517
  %v614 = vpack.c.b16 %v520, %v519
  %v615 = vpack.c.b16 %v522, %v521
  %v616 = vpack.c.b16 %v524, %v523
  %v617 = vpack.c.b16 %v526, %v525
  %v618 = vpack.c.b16 %v528, %v527
  %v619 = vpack.c.b16 %v530, %v529
  %v620 = vpack.c.b16 %v532, %v531
  %v621 = vpack.c.b16 %v534, %v533
  %v622 = vpack.c.b16 %v536, %v535
  %v623 = vpack.c.b16 %v538, %v537
  %v624 = vpack.c.b16 %v540, %v539
  %v625 = vpack.c.b16 %v542, %v541
  %v626 = vpack.c.b16 %v544, %v543
  %v627 = vpack.c.b16 %v546, %v545
  %v628 = vpack.c.b16 %v548, %v547
  %v629 = vpack.c.b16 %v550, %v549
  %v630 = vpack.c.b16 %v552, %v551
  %v631 = vpack.c.b16 %v554, %v553
  %v632 = vpack.c.b16 %v556, %v555
  %v633 = vpack.c.b16 %v558, %v557
  %v634 = vpack.c.b16 %v560, %v559
  %v635 = vpack.c.b16 %v562, %v561
  %v636 = vpack.c.b16 %v564, %v563
  %709 = vmatprep.subr.bf16.mxu0 0
  %710 = vmatpush1.bf16.msra.mxu0 %v572
  %711 = vmatprep.subr.bf16.mxu0 0
  %712 = vmatpush1.bf16.msra.mxu0 %v571
  %713 = vmatprep.subr.bf16.mxu0 0
  %714 = vmatpush1.bf16.msra.mxu0 %v570
  %715 = vmatprep.subr.bf16.mxu0 0
  %716 = vmatpush1.bf16.msra.mxu0 %v569
  %717 = vmatprep.subr.bf16.mxu0 0
  %718 = vmatpush1.bf16.msra.mxu0 %v568
  %719 = vmatprep.subr.bf16.mxu0 0
  %720 = vmatpush1.bf16.msra.mxu0 %v567
  %721 = vmatprep.subr.bf16.mxu0 0
  %722 = vmatpush1.bf16.msra.mxu0 %v566
  %723 = vmatprep.subr.bf16.mxu0 0
  %724 = vmatpush1.bf16.msra.mxu0 %v565
  %725 = vmatprep.subr.bf16.mxu0 0
  %726 = vmatpush2.bf16.msra.mxu0 %v580
  %727 = vmatprep.subr.bf16.mxu0 0
  %728 = vmatpush2.bf16.msra.mxu0 %v579
  %729 = vmatprep.subr.bf16.mxu0 0
  %730 = vmatpush2.bf16.msra.mxu0 %v578
  %731 = vmatprep.subr.bf16.mxu0 0
  %732 = vmatpush2.bf16.msra.mxu0 %v577
  %733 = vmatprep.subr.bf16.mxu0 0
  %734 = vmatpush2.bf16.msra.mxu0 %v576
  %735 = vmatprep.subr.bf16.mxu0 0
  %736 = vmatpush2.bf16.msra.mxu0 %v575
  %737 = vmatprep.subr.bf16.mxu0 0
  %738 = vmatpush2.bf16.msra.mxu0 %v574
  %739 = vmatprep.subr.bf16.mxu0 0
  %740 = vmatpush2.bf16.msra.mxu0 %v573
  %741 = vmatprep.mubr.bf16.mxu0 %v242
  %742 = vmatmul.mubr.bf16.gmra.mxu0 %v241
  %v743 = vpop.f32.mrf.mxu0
  %v744 = vadd.f32 0.0, %v743
  %v745 = vpop.f32.mrf.mxu0
  %v746 = vpop.f32.mrf.mxu0
  %v747 = vadd.f32 0.0, %v746
  %v748 = vpop.f32.mrf.mxu0
  %749 = vmatprep.mubr.bf16.mxu0 %v251
  %750 = vmatmul.mubr.bf16.gmra.mxu0 %v250
  %v751 = vpop.f32.mrf.mxu0
  %v752 = vadd.f32 0.0, %v751
  %v753 = vpop.f32.mrf.mxu0
  %v754 = vpop.f32.mrf.mxu0
  %v755 = vadd.f32 0.0, %v754
  %v756 = vpop.f32.mrf.mxu0
  %757 = vdwg.mxu0
  %758 = vmatprep.subr.bf16.mxu0 0
  %759 = vmatpush1.bf16.msra.mxu0 %v588
  %760 = vmatprep.subr.bf16.mxu0 0
  %761 = vmatpush1.bf16.msra.mxu0 %v587
  %762 = vmatprep.subr.bf16.mxu0 0
  %763 = vmatpush1.bf16.msra.mxu0 %v586
  %764 = vmatprep.subr.bf16.mxu0 0
  %765 = vmatpush1.bf16.msra.mxu0 %v585
  %766 = vmatprep.subr.bf16.mxu0 0
  %767 = vmatpush1.bf16.msra.mxu0 %v584
  %768 = vmatprep.subr.bf16.mxu0 0
  %769 = vmatpush1.bf16.msra.mxu0 %v583
  %770 = vmatprep.subr.bf16.mxu0 0
  %771 = vmatpush1.bf16.msra.mxu0 %v582
  %772 = vmatprep.subr.bf16.mxu0 0
  %773 = vmatpush1.bf16.msra.mxu0 %v581
  %774 = vmatprep.subr.bf16.mxu0 0
  %775 = vmatpush2.bf16.msra.mxu0 %v596
  %776 = vmatprep.subr.bf16.mxu0 0
  %777 = vmatpush2.bf16.msra.mxu0 %v595
  %778 = vmatprep.subr.bf16.mxu0 0
  %779 = vmatpush2.bf16.msra.mxu0 %v594
  %780 = vmatprep.subr.bf16.mxu0 0
  %781 = vmatpush2.bf16.msra.mxu0 %v593
  %782 = vmatprep.subr.bf16.mxu0 0
  %783 = vmatpush2.bf16.msra.mxu0 %v592
  %784 = vmatprep.subr.bf16.mxu0 0
  %785 = vmatpush2.bf16.msra.mxu0 %v591
  %786 = vmatprep.subr.bf16.mxu0 0
  %787 = vmatpush2.bf16.msra.mxu0 %v590
  %788 = vmatprep.subr.bf16.mxu0 0
  %789 = vmatpush2.bf16.msra.mxu0 %v589
  %790 = vmatprep.mubr.bf16.mxu0 %v244
  %791 = vmatmul.mubr.bf16.gmra.mxu0 %v243
  %v792 = vpop.f32.mrf.mxu0
  %v793 = vadd.f32 %v744, %v792
  %v794 = vpop.f32.mrf.mxu0
  %v795 = vpop.f32.mrf.mxu0
  %v796 = vadd.f32 %v747, %v795
  %v797 = vpop.f32.mrf.mxu0
  %798 = vmatprep.mubr.bf16.mxu0 %v253
  %799 = vmatmul.mubr.bf16.gmra.mxu0 %v252
  %v800 = vpop.f32.mrf.mxu0
  %v801 = vadd.f32 %v752, %v800
  %v802 = vpop.f32.mrf.mxu0
  %v803 = vpop.f32.mrf.mxu0
  %v804 = vadd.f32 %v755, %v803
  %v805 = vpop.f32.mrf.mxu0
  %806 = vdwg.mxu0
  %807 = vmatprep.subr.bf16.mxu0 0
  %808 = vmatpush1.bf16.msra.mxu0 %v604
  %809 = vmatprep.subr.bf16.mxu0 0
  %810 = vmatpush1.bf16.msra.mxu0 %v603
  %811 = vmatprep.subr.bf16.mxu0 0
  %812 = vmatpush1.bf16.msra.mxu0 %v602
  %813 = vmatprep.subr.bf16.mxu0 0
  %814 = vmatpush1.bf16.msra.mxu0 %v601
  %815 = vmatprep.subr.bf16.mxu0 0
  %816 = vmatpush1.bf16.msra.mxu0 %v600
  %817 = vmatprep.subr.bf16.mxu0 0
  %818 = vmatpush1.bf16.msra.mxu0 %v599
  %819 = vmatprep.subr.bf16.mxu0 0
  %820 = vmatpush1.bf16.msra.mxu0 %v598
  %821 = vmatprep.subr.bf16.mxu0 0
  %822 = vmatpush1.bf16.msra.mxu0 %v597
  %823 = vmatprep.subr.bf16.mxu0 0
  %824 = vmatpush2.bf16.msra.mxu0 %v612
  %825 = vmatprep.subr.bf16.mxu0 0
  %826 = vmatpush2.bf16.msra.mxu0 %v611
  %827 = vmatprep.subr.bf16.mxu0 0
  %828 = vmatpush2.bf16.msra.mxu0 %v610
  %829 = vmatprep.subr.bf16.mxu0 0
  %830 = vmatpush2.bf16.msra.mxu0 %v609
  %831 = vmatprep.subr.bf16.mxu0 0
  %832 = vmatpush2.bf16.msra.mxu0 %v608
  %833 = vmatprep.subr.bf16.mxu0 0
  %834 = vmatpush2.bf16.msra.mxu0 %v607
  %835 = vmatprep.subr.bf16.mxu0 0
  %836 = vmatpush2.bf16.msra.mxu0 %v606
  %837 = vmatprep.subr.bf16.mxu0 0
  %838 = vmatpush2.bf16.msra.mxu0 %v605
  %839 = vmatprep.mubr.bf16.mxu0 %v246
  %840 = vmatmul.mubr.bf16.gmra.mxu0 %v245
  %v841 = vpop.f32.mrf.mxu0
  %v842 = vadd.f32 %v793, %v841
  %v843 = vpop.f32.mrf.mxu0
  %v844 = vpop.f32.mrf.mxu0
  %v845 = vadd.f32 %v796, %v844
  %v846 = vpop.f32.mrf.mxu0
  %847 = vmatprep.mubr.bf16.mxu0 %v255
  %848 = vmatmul.mubr.bf16.gmra.mxu0 %v254
  %v849 = vpop.f32.mrf.mxu0
  %v850 = vadd.f32 %v801, %v849
  %v851 = vpop.f32.mrf.mxu0
  %v852 = vpop.f32.mrf.mxu0
  %v853 = vadd.f32 %v804, %v852
  %v854 = vpop.f32.mrf.mxu0
  %855 = vdwg.mxu0
  %856 = vmatprep.subr.bf16.mxu0 0
  %857 = vmatpush1.bf16.msra.mxu0 %v620
  %858 = vmatprep.subr.bf16.mxu0 0
  %859 = vmatpush1.bf16.msra.mxu0 %v619
  %860 = vmatprep.subr.bf16.mxu0 0
  %861 = vmatpush1.bf16.msra.mxu0 %v618
  %862 = vmatprep.subr.bf16.mxu0 0
  %863 = vmatpush1.bf16.msra.mxu0 %v617
  %864 = vmatprep.subr.bf16.mxu0 0
  %865 = vmatpush1.bf16.msra.mxu0 %v616
  %866 = vmatprep.subr.bf16.mxu0 0
  %867 = vmatpush1.bf16.msra.mxu0 %v615
  %868 = vmatprep.subr.bf16.mxu0 0
  %869 = vmatpush1.bf16.msra.mxu0 %v614
  %870 = vmatprep.subr.bf16.mxu0 0
  %871 = vmatpush1.bf16.msra.mxu0 %v613
  %872 = vmatprep.subr.bf16.mxu0 0
  %873 = vmatpush2.bf16.msra.mxu0 %v628
  %874 = vmatprep.subr.bf16.mxu0 0
  %875 = vmatpush2.bf16.msra.mxu0 %v627
  %876 = vmatprep.subr.bf16.mxu0 0
  %877 = vmatpush2.bf16.msra.mxu0 %v626
  %878 = vmatprep.subr.bf16.mxu0 0
  %879 = vmatpush2.bf16.msra.mxu0 %v625
  %880 = vmatprep.subr.bf16.mxu0 0
  %881 = vmatpush2.bf16.msra.mxu0 %v624
  %882 = vmatprep.subr.bf16.mxu0 0
  %883 = vmatpush2.bf16.msra.mxu0 %v623
  %884 = vmatprep.subr.bf16.mxu0 0
  %885 = vmatpush2.bf16.msra.mxu0 %v622
  %886 = vmatprep.subr.bf16.mxu0 0
  %887 = vmatpush2.bf16.msra.mxu0 %v621
  %888 = vmatprep.mubr.bf16.mxu0 %v248
  %889 = vmatmul.mubr.bf16.gmra.mxu0 %v247
  %v890 = vpop.f32.mrf.mxu0
  %v891 = vadd.f32 %v842, %v890
  %v892 = vpop.f32.mrf.mxu0
  %v893 = vpop.f32.mrf.mxu0
  %v894 = vadd.f32 %v845, %v893
  %v895 = vpop.f32.mrf.mxu0
  %896 = vmatprep.mubr.bf16.mxu0 %v257
  %897 = vmatmul.mubr.bf16.gmra.mxu0 %v256
  %v898 = vpop.f32.mrf.mxu0
  %v899 = vadd.f32 %v850, %v898
  %v900 = vpop.f32.mrf.mxu0
  %v901 = vpop.f32.mrf.mxu0
  %v902 = vadd.f32 %v853, %v901
  %v903 = vpop.f32.mrf.mxu0
  %904 = vdwg.mxu0
  %905 = vmatprep.subr.bf16.mxu0 0
  %906 = vmatpush1.bf16.msra.mxu0 %v636
  %907 = vmatprep.subr.bf16.mxu0 0
  %908 = vmatpush1.bf16.msra.mxu0 %v635
  %909 = vmatprep.subr.bf16.mxu0 0
  %910 = vmatpush1.bf16.msra.mxu0 %v634
  %911 = vmatprep.subr.bf16.mxu0 0
  %912 = vmatpush1.bf16.msra.mxu0 %v633
  %913 = vmatprep.subr.bf16.mxu0 0
  %914 = vmatpush1.bf16.msra.mxu0 %v632
  %915 = vmatprep.subr.bf16.mxu0 0
  %916 = vmatpush1.bf16.msra.mxu0 %v631
  %917 = vmatprep.subr.bf16.mxu0 0
  %918 = vmatpush1.bf16.msra.mxu0 %v630
  %919 = vmatprep.subr.bf16.mxu0 0
  %920 = vmatpush1.bf16.msra.mxu0 %v629
  %921 = vmatprep.subr.bf16.mxu0 0
  %922 = vmatpush2.bf16.msra.mxu0 0
  %923 = vmatprep.subr.bf16.mxu0 0
  %924 = vmatpush2.bf16.msra.mxu0 0
  %925 = vmatprep.subr.bf16.mxu0 0
  %926 = vmatpush2.bf16.msra.mxu0 0
  %927 = vmatprep.subr.bf16.mxu0 0
  %928 = vmatpush2.bf16.msra.mxu0 0
  %929 = vmatprep.subr.bf16.mxu0 0
  %930 = vmatpush2.bf16.msra.mxu0 0
  %931 = vmatprep.subr.bf16.mxu0 0
  %932 = vmatpush2.bf16.msra.mxu0 0
  %933 = vmatprep.subr.bf16.mxu0 0
  %934 = vmatpush2.bf16.msra.mxu0 0
  %935 = vmatprep.subr.bf16.mxu0 0
  %936 = vmatpush2.bf16.msra.mxu0 0
  %937 = vmatprep.mubr.bf16.mxu0 0
  %938 = vmatmul.mubr.bf16.gmra.mxu0 %v249
  %v939 = vpop.f32.mrf.mxu0
  %v940 = vadd.f32 %v891, %v939
  %v941 = vpop.f32.mrf.mxu0
  %v942 = vpop.f32.mrf.mxu0
  %v943 = vadd.f32 %v894, %v942
  %v944 = vpop.f32.mrf.mxu0
  %945 = vmatprep.mubr.bf16.mxu0 0
  %946 = vmatmul.mubr.bf16.gmra.mxu0 %v258
  %v947 = vpop.f32.mrf.mxu0
  %v948 = vadd.f32 %v899, %v947
  %v949 = vpop.f32.mrf.mxu0
  %v950 = vpop.f32.mrf.mxu0
  %v951 = vadd.f32 %v902, %v950
  %v952 = vpop.f32.mrf.mxu0
  %953 = vdwg.mxu0
  %v954 = vld [vmem:[%s2] sm:$0x1]
  %v956 = vlaneseq
  %v957 = vshrl.u32 %v956, 7
  %v958 = vsub.s32 0, %v957
  %v959 = vrot.slane %v954, %v958
  %v961 = vmul.f32 %v940, %v959
  %v962 = vmul.f32 %v943, %v959
  %v963 = vmul.f32 %v948, %v959
  %v964 = vmul.f32 %v951, %v959
  %v965 = vld [vmem:[%s3] sm:$0x1]
  %v967 = vlaneseq
  %v968 = vshrl.u32 %v967, 7
  %v969 = vsub.s32 0, %v968
  %v970 = vrot.slane %v965, %v969
  %v972 = vadd.f32 %v961, %v970
  %v973 = vadd.f32 %v962, %v970
  %v974 = vadd.f32 %v963, %v970
  %v975 = vadd.f32 %v964, %v970
  %v976 = vld [vmem:[%s4] sm:$0xf]
  %v977 = vld [vmem:[%s4 + $0x4] sm:$0xf]
  %v978 = vld [vmem:[%s4 + $0x8] sm:$0xf]
  %v979 = vld [vmem:[%s4 + $0xc] sm:$0xf]
  %v980 = vunpack.c.l.bf16 %v976
  %v981 = vunpack.c.l.bf16 %v977
  %v982 = vunpack.c.l.bf16 %v978
  %v983 = vunpack.c.l.bf16 %v979
  %v984 = vadd.f32 %v972, %v980
  %v985 = vadd.f32 %v973, %v981
  %v986 = vadd.f32 %v974, %v982
  %v987 = vadd.f32 %v975, %v983
  %v988 = vmax.f32 %v984, 0.0
  %v989 = vmax.f32 %v985, 0.0
  %v990 = vmax.f32 %v986, 0.0
  %v991 = vmax.f32 %v987, 0.0
  %v992 = vpack.c.bf16 %v989, %v988
  %v993 = vpack.c.bf16 %v991, %v990
  %v996 = vunpack.c.l.b16 %v992
  %v997 = vunpack.c.h.b16 %v992
  %v998 = vunpack.c.l.b16 %v993
  %v999 = vunpack.c.h.b16 %v993
  %v1000 = vpack.c.b16 %v996, %v996
  %v1001 = vpack.c.b16 %v997, %v997
  %v1002 = vpack.c.b16 %v998, %v998
  %v1003 = vpack.c.b16 %v999, %v999
  %1008 = vst [vmem:[%s5] sm:$0xf] %v1000
  %1009 = vst [vmem:[%s5 + $0x4] sm:$0xf] %v1001
  %1010 = vst [vmem:[%s5 + $0x8] sm:$0xf] %v1002
  %1011 = vst [vmem:[%s5 + $0xc] sm:$0xf] %v1003
  // Predicated region
  $region22: #{resnet_forward.28} parent=0 // pred_check
    _
  $region23: #{resnet_forward.28} parent=0 // pred_check_branch
    %1013 = sbr.rel (0) target = $region25
  $region24: #{resnet_forward.28} parent=0 // pred_region
    _
  $region25: #{resnet_forward.28} parent=0 // pred_fallthru
    _
  // Predicated region
  $region26: #{resnet_forward.28} parent=0 // pred_check
    _
  $region27: #{resnet_forward.28} parent=0 // pred_check_branch
    %1015 = sbr.rel (0) target = $region29
  $region28: #{resnet_forward.28} parent=0 // pred_region
    _
  $region29: #{resnet_forward.28} parent=0 // pred_fallthru
    _

// kernel: resnet_forward.33
$region0: #{resnet_forward.33}
  #allocation0 [shape = 'u32[]', space=smem, size = 0x4, offset = 0x4, fixed_abs, tag = 'smem constant byte address 0x4 - core index']
  #allocation1 [shape = 'u32[144,128]{1,0:T(1,128)}', space=vmem, size = 0x12000, scoped, tag = 'internal scratch']
  %s0 = inlined_call_operand.vmem [shape: bf16[16,1152], index: 0, kind: input, shape index: {}]
  %s1 = inlined_call_operand.vmem [shape: bf16[1152,128], index: 1, kind: input, shape index: {}]
  %s2 = inlined_call_operand.vmem [shape: f32[1,128], index: 2, kind: input, shape index: {}]
  %s3 = inlined_call_operand.vmem [shape: f32[1,128], index: 3, kind: input, shape index: {}]
  %s4 = inlined_call_operand.vmem [shape: bf16[16,128], index: 4, kind: output, shape index: {}]
  %s5 = sld [smem:[#allocation0]]
  $region26: #{resnet_forward.33} parent=0
    _
  %s7 = ssub.s32 1, %s5
  %s8 = scalar_select 0, %s7, %s5
  // Predicated region
  $region2: #{resnet_forward.33} parent=0 // pred_check
    _
  $region3: #{resnet_forward.33} parent=0 // pred_check_branch
    %10 = sbr.rel (0) target = $region5
  $region4: #{resnet_forward.33} parent=0 // pred_region
    _
  $region5: #{resnet_forward.33} parent=0 // pred_fallthru
    _
  // Predicated region
  $region6: #{resnet_forward.33} parent=0 // pred_check
    _
  $region7: #{resnet_forward.33} parent=0 // pred_check_branch
    %12 = sbr.rel (0) target = $region9
  $region8: #{resnet_forward.33} parent=0 // pred_region
    _
  $region9: #{resnet_forward.33} parent=0 // pred_fallthru
    _
  // Predicated region
  $region10: #{resnet_forward.33} parent=0 // pred_check
    _
  $region11: #{resnet_forward.33} parent=0 // pred_check_branch
    %14 = sbr.rel (0) target = $region13
  $region12: #{resnet_forward.33} parent=0 // pred_region
    _
  $region13: #{resnet_forward.33} parent=0 // pred_fallthru
    _
  // Predicated region
  $region14: #{resnet_forward.33} parent=0 // pred_check
    _
  $region15: #{resnet_forward.33} parent=0 // pred_check_branch
    %16 = sbr.rel (0) target = $region17
  $region16: #{resnet_forward.33} parent=0 // pred_region
    _
  $region17: #{resnet_forward.33} parent=0 // pred_fallthru
    _
  %v18 = vld [vmem:[%s0] sm:$0xff]
  %v19 = vld [vmem:[%s0 + $0x8] sm:$0xff]
  %v20 = vld [vmem:[%s0 + $0x10] sm:$0xff]
  %v21 = vld [vmem:[%s0 + $0x18] sm:$0xff]
  %v22 = vld [vmem:[%s0 + $0x20] sm:$0xf]
  %v23 = vld [vmem:[%s0 + $0x24] sm:$0xff]
  %v24 = vld [vmem:[%s0 + $0x2c] sm:$0xff]
  %v25 = vld [vmem:[%s0 + $0x34] sm:$0xff]
  %v26 = vld [vmem:[%s0 + $0x3c] sm:$0xff]
  %v27 = vld [vmem:[%s0 + $0x44] sm:$0xf]
  %v28 = vld [vmem:[%s1] sm:$0xf]
  %v29 = vld [vmem:[%s1 + $0x4] sm:$0xf]
  %v30 = vld [vmem:[%s1 + $0x8] sm:$0xf]
  %v31 = vld [vmem:[%s1 + $0xc] sm:$0xf]
  %v32 = vld [vmem:[%s1 + $0x10] sm:$0xf]
  %v33 = vld [vmem:[%s1 + $0x14] sm:$0xf]
  %v34 = vld [vmem:[%s1 + $0x18] sm:$0xf]
  %v35 = vld [vmem:[%s1 + $0x1c] sm:$0xf]
  %v36 = vld [vmem:[%s1 + $0x20] sm:$0xf]
  %v37 = vld [vmem:[%s1 + $0x24] sm:$0xf]
  %v38 = vld [vmem:[%s1 + $0x28] sm:$0xf]
  %v39 = vld [vmem:[%s1 + $0x2c] sm:$0xf]
  %v40 = vld [vmem:[%s1 + $0x30] sm:$0xf]
  %v41 = vld [vmem:[%s1 + $0x34] sm:$0xf]
  %v42 = vld [vmem:[%s1 + $0x38] sm:$0xf]
  %v43 = vld [vmem:[%s1 + $0x3c] sm:$0xf]
  %v44 = vld [vmem:[%s1 + $0x40] sm:$0xf]
  %v45 = vld [vmem:[%s1 + $0x44] sm:$0xf]
  %v46 = vld [vmem:[%s1 + $0x48] sm:$0xf]
  %v47 = vld [vmem:[%s1 + $0x4c] sm:$0xf]
  %v48 = vld [vmem:[%s1 + $0x50] sm:$0xf]
  %v49 = vld [vmem:[%s1 + $0x54] sm:$0xf]
  %v50 = vld [vmem:[%s1 + $0x58] sm:$0xf]
  %v51 = vld [vmem:[%s1 + $0x5c] sm:$0xf]
  %v52 = vld [vmem:[%s1 + $0x60] sm:$0xf]
  %v53 = vld [vmem:[%s1 + $0x64] sm:$0xf]
  %v54 = vld [vmem:[%s1 + $0x68] sm:$0xf]
  %v55 = vld [vmem:[%s1 + $0x6c] sm:$0xf]
  %v56 = vld [vmem:[%s1 + $0x70] sm:$0xf]
  %v57 = vld [vmem:[%s1 + $0x74] sm:$0xf]
  %v58 = vld [vmem:[%s1 + $0x78] sm:$0xf]
  %v59 = vld [vmem:[%s1 + $0x7c] sm:$0xf]
  %v60 = vld [vmem:[%s1 + $0x80] sm:$0xf]
  %v61 = vld [vmem:[%s1 + $0x84] sm:$0xf]
  %v62 = vld [vmem:[%s1 + $0x88] sm:$0xf]
  %v63 = vld [vmem:[%s1 + $0x8c] sm:$0xf]
  %v64 = vld [vmem:[%s1 + $0x90] sm:$0xf]
  %v65 = vld [vmem:[%s1 + $0x94] sm:$0xf]
  %v66 = vld [vmem:[%s1 + $0x98] sm:$0xf]
  %v67 = vld [vmem:[%s1 + $0x9c] sm:$0xf]
  %v68 = vld [vmem:[%s1 + $0xa0] sm:$0xf]
  %v69 = vld [vmem:[%s1 + $0xa4] sm:$0xf]
  %v70 = vld [vmem:[%s1 + $0xa8] sm:$0xf]
  %v71 = vld [vmem:[%s1 + $0xac] sm:$0xf]
  %v72 = vld [vmem:[%s1 + $0xb0] sm:$0xf]
  %v73 = vld [vmem:[%s1 + $0xb4] sm:$0xf]
  %v74 = vld [vmem:[%s1 + $0xb8] sm:$0xf]
  %v75 = vld [vmem:[%s1 + $0xbc] sm:$0xf]
  %v76 = vld [vmem:[%s1 + $0xc0] sm:$0xf]
  %v77 = vld [vmem:[%s1 + $0xc4] sm:$0xf]
  %v78 = vld [vmem:[%s1 + $0xc8] sm:$0xf]
  %v79 = vld [vmem:[%s1 + $0xcc] sm:$0xf]
  %v80 = vld [vmem:[%s1 + $0xd0] sm:$0xf]
  %v81 = vld [vmem:[%s1 + $0xd4] sm:$0xf]
  %v82 = vld [vmem:[%s1 + $0xd8] sm:$0xf]
  %v83 = vld [vmem:[%s1 + $0xdc] sm:$0xf]
  %v84 = vld [vmem:[%s1 + $0xe0] sm:$0xf]
  %v85 = vld [vmem:[%s1 + $0xe4] sm:$0xf]
  %v86 = vld [vmem:[%s1 + $0xe8] sm:$0xf]
  %v87 = vld [vmem:[%s1 + $0xec] sm:$0xf]
  %v88 = vld [vmem:[%s1 + $0xf0] sm:$0xf]
  %v89 = vld [vmem:[%s1 + $0xf4] sm:$0xf]
  %v90 = vld [vmem:[%s1 + $0xf8] sm:$0xf]
  %v91 = vld [vmem:[%s1 + $0xfc] sm:$0xf]
  %v92 = vld [vmem:[%s1 + $0x100] sm:$0xf]
  %v93 = vld [vmem:[%s1 + $0x104] sm:$0xf]
  %v94 = vld [vmem:[%s1 + $0x108] sm:$0xf]
  %v95 = vld [vmem:[%s1 + $0x10c] sm:$0xf]
  %v96 = vld [vmem:[%s1 + $0x110] sm:$0xf]
  %v97 = vld [vmem:[%s1 + $0x114] sm:$0xf]
  %v98 = vld [vmem:[%s1 + $0x118] sm:$0xf]
  %v99 = vld [vmem:[%s1 + $0x11c] sm:$0xf]
  %v100 = vld [vmem:[%s1 + $0x120] sm:$0xf]
  %v101 = vld [vmem:[%s1 + $0x124] sm:$0xf]
  %v102 = vld [vmem:[%s1 + $0x128] sm:$0xf]
  %v103 = vld [vmem:[%s1 + $0x12c] sm:$0xf]
  %v104 = vld [vmem:[%s1 + $0x130] sm:$0xf]
  %v105 = vld [vmem:[%s1 + $0x134] sm:$0xf]
  %v106 = vld [vmem:[%s1 + $0x138] sm:$0xf]
  %v107 = vld [vmem:[%s1 + $0x13c] sm:$0xf]
  %v108 = vld [vmem:[%s1 + $0x140] sm:$0xf]
  %v109 = vld [vmem:[%s1 + $0x144] sm:$0xf]
  %v110 = vld [vmem:[%s1 + $0x148] sm:$0xf]
  %v111 = vld [vmem:[%s1 + $0x14c] sm:$0xf]
  %v112 = vld [vmem:[%s1 + $0x150] sm:$0xf]
  %v113 = vld [vmem:[%s1 + $0x154] sm:$0xf]
  %v114 = vld [vmem:[%s1 + $0x158] sm:$0xf]
  %v115 = vld [vmem:[%s1 + $0x15c] sm:$0xf]
  %v116 = vld [vmem:[%s1 + $0x160] sm:$0xf]
  %v117 = vld [vmem:[%s1 + $0x164] sm:$0xf]
  %v118 = vld [vmem:[%s1 + $0x168] sm:$0xf]
  %v119 = vld [vmem:[%s1 + $0x16c] sm:$0xf]
  %v120 = vld [vmem:[%s1 + $0x170] sm:$0xf]
  %v121 = vld [vmem:[%s1 + $0x174] sm:$0xf]
  %v122 = vld [vmem:[%s1 + $0x178] sm:$0xf]
  %v123 = vld [vmem:[%s1 + $0x17c] sm:$0xf]
  %v124 = vld [vmem:[%s1 + $0x180] sm:$0xf]
  %v125 = vld [vmem:[%s1 + $0x184] sm:$0xf]
  %v126 = vld [vmem:[%s1 + $0x188] sm:$0xf]
  %v127 = vld [vmem:[%s1 + $0x18c] sm:$0xf]
  %v128 = vld [vmem:[%s1 + $0x190] sm:$0xf]
  %v129 = vld [vmem:[%s1 + $0x194] sm:$0xf]
  %v130 = vld [vmem:[%s1 + $0x198] sm:$0xf]
  %v131 = vld [vmem:[%s1 + $0x19c] sm:$0xf]
  %v132 = vld [vmem:[%s1 + $0x1a0] sm:$0xf]
  %v133 = vld [vmem:[%s1 + $0x1a4] sm:$0xf]
  %v134 = vld [vmem:[%s1 + $0x1a8] sm:$0xf]
  %v135 = vld [vmem:[%s1 + $0x1ac] sm:$0xf]
  %v136 = vld [vmem:[%s1 + $0x1b0] sm:$0xf]
  %v137 = vld [vmem:[%s1 + $0x1b4] sm:$0xf]
  %v138 = vld [vmem:[%s1 + $0x1b8] sm:$0xf]
  %v139 = vld [vmem:[%s1 + $0x1bc] sm:$0xf]
  %v140 = vld [vmem:[%s1 + $0x1c0] sm:$0xf]
  %v141 = vld [vmem:[%s1 + $0x1c4] sm:$0xf]
  %v142 = vld [vmem:[%s1 + $0x1c8] sm:$0xf]
  %v143 = vld [vmem:[%s1 + $0x1cc] sm:$0xf]
  %v144 = vld [vmem:[%s1 + $0x1d0] sm:$0xf]
  %v145 = vld [vmem:[%s1 + $0x1d4] sm:$0xf]
  %v146 = vld [vmem:[%s1 + $0x1d8] sm:$0xf]
  %v147 = vld [vmem:[%s1 + $0x1dc] sm:$0xf]
  %v148 = vld [vmem:[%s1 + $0x1e0] sm:$0xf]
  %v149 = vld [vmem:[%s1 + $0x1e4] sm:$0xf]
  %v150 = vld [vmem:[%s1 + $0x1e8] sm:$0xf]
  %v151 = vld [vmem:[%s1 + $0x1ec] sm:$0xf]
  %v152 = vld [vmem:[%s1 + $0x1f0] sm:$0xf]
  %v153 = vld [vmem:[%s1 + $0x1f4] sm:$0xf]
  %v154 = vld [vmem:[%s1 + $0x1f8] sm:$0xf]
  %v155 = vld [vmem:[%s1 + $0x1fc] sm:$0xf]
  %v156 = vld [vmem:[%s1 + $0x200] sm:$0xf]
  %v157 = vld [vmem:[%s1 + $0x204] sm:$0xf]
  %v158 = vld [vmem:[%s1 + $0x208] sm:$0xf]
  %v159 = vld [vmem:[%s1 + $0x20c] sm:$0xf]
  %v160 = vld [vmem:[%s1 + $0x210] sm:$0xf]
  %v161 = vld [vmem:[%s1 + $0x214] sm:$0xf]
  %v162 = vld [vmem:[%s1 + $0x218] sm:$0xf]
  %v163 = vld [vmem:[%s1 + $0x21c] sm:$0xf]
  %v164 = vld [vmem:[%s1 + $0x220] sm:$0xf]
  %v165 = vld [vmem:[%s1 + $0x224] sm:$0xf]
  %v166 = vld [vmem:[%s1 + $0x228] sm:$0xf]
  %v167 = vld [vmem:[%s1 + $0x22c] sm:$0xf]
  %v168 = vld [vmem:[%s1 + $0x230] sm:$0xf]
  %v169 = vld [vmem:[%s1 + $0x234] sm:$0xf]
  %v170 = vld [vmem:[%s1 + $0x238] sm:$0xf]
  %v171 = vld [vmem:[%s1 + $0x23c] sm:$0xf]
  %v182 = vunpack.c.l.b16 %v18
  %v183 = vunpack.c.h.b16 %v18
  %v184 = vunpack.c.l.b16 %v19
  %v185 = vunpack.c.h.b16 %v19
  %v186 = vunpack.c.l.b16 %v20
  %v187 = vunpack.c.h.b16 %v20
  %v188 = vunpack.c.l.b16 %v21
  %v189 = vunpack.c.h.b16 %v21
  %v190 = vunpack.c.l.b16 %v22
  %v191 = vunpack.c.l.b16 %v23
  %v192 = vunpack.c.h.b16 %v23
  %v193 = vunpack.c.l.b16 %v24
  %v194 = vunpack.c.h.b16 %v24
  %v195 = vunpack.c.l.b16 %v25
  %v196 = vunpack.c.h.b16 %v25
  %v197 = vunpack.c.l.b16 %v26
  %v198 = vunpack.c.h.b16 %v26
  %v199 = vunpack.c.l.b16 %v27
  %v200 = vpack.c.b16 %v191, %v182
  %v201 = vpack.c.b16 %v192, %v183
  %v202 = vpack.c.b16 %v193, %v184
  %v203 = vpack.c.b16 %v194, %v185
  %v204 = vpack.c.b16 %v195, %v186
  %v205 = vpack.c.b16 %v196, %v187
  %v206 = vpack.c.b16 %v197, %v188
  %v207 = vpack.c.b16 %v198, %v189
  %v208 = vpack.c.b16 %v199, %v190
  %v362 = vunpack.c.l.b16 %v28
  %v363 = vunpack.c.l.b16 %v29
  %v364 = vunpack.c.l.b16 %v30
  %v365 = vunpack.c.l.b16 %v31
  %v366 = vunpack.c.l.b16 %v32
  %v367 = vunpack.c.l.b16 %v33
  %v368 = vunpack.c.l.b16 %v34
  %v369 = vunpack.c.l.b16 %v35
  %v370 = vunpack.c.l.b16 %v36
  %v371 = vunpack.c.l.b16 %v37
  %v372 = vunpack.c.l.b16 %v38
  %v373 = vunpack.c.l.b16 %v39
  %v374 = vunpack.c.l.b16 %v40
  %v375 = vunpack.c.l.b16 %v41
  %v376 = vunpack.c.l.b16 %v42
  %v377 = vunpack.c.l.b16 %v43
  %v378 = vunpack.c.l.b16 %v44
  %v379 = vunpack.c.l.b16 %v45
  %v380 = vunpack.c.l.b16 %v46
  %v381 = vunpack.c.l.b16 %v47
  %v382 = vunpack.c.l.b16 %v48
  %v383 = vunpack.c.l.b16 %v49
  %v384 = vunpack.c.l.b16 %v50
  %v385 = vunpack.c.l.b16 %v51
  %v386 = vunpack.c.l.b16 %v52
  %v387 = vunpack.c.l.b16 %v53
  %v388 = vunpack.c.l.b16 %v54
  %v389 = vunpack.c.l.b16 %v55
  %v390 = vunpack.c.l.b16 %v56
  %v391 = vunpack.c.l.b16 %v57
  %v392 = vunpack.c.l.b16 %v58
  %v393 = vunpack.c.l.b16 %v59
  %v394 = vunpack.c.l.b16 %v60
  %v395 = vunpack.c.l.b16 %v61
  %v396 = vunpack.c.l.b16 %v62
  %v397 = vunpack.c.l.b16 %v63
  %v398 = vunpack.c.l.b16 %v64
  %v399 = vunpack.c.l.b16 %v65
  %v400 = vunpack.c.l.b16 %v66
  %v401 = vunpack.c.l.b16 %v67
  %v402 = vunpack.c.l.b16 %v68
  %v403 = vunpack.c.l.b16 %v69
  %v404 = vunpack.c.l.b16 %v70
  %v405 = vunpack.c.l.b16 %v71
  %v406 = vunpack.c.l.b16 %v72
  %v407 = vunpack.c.l.b16 %v73
  %v408 = vunpack.c.l.b16 %v74
  %v409 = vunpack.c.l.b16 %v75
  %v410 = vunpack.c.l.b16 %v76
  %v411 = vunpack.c.l.b16 %v77
  %v412 = vunpack.c.l.b16 %v78
  %v413 = vunpack.c.l.b16 %v79
  %v414 = vunpack.c.l.b16 %v80
  %v415 = vunpack.c.l.b16 %v81
  %v416 = vunpack.c.l.b16 %v82
  %v417 = vunpack.c.l.b16 %v83
  %v418 = vunpack.c.l.b16 %v84
  %v419 = vunpack.c.l.b16 %v85
  %v420 = vunpack.c.l.b16 %v86
  %v421 = vunpack.c.l.b16 %v87
  %v422 = vunpack.c.l.b16 %v88
  %v423 = vunpack.c.l.b16 %v89
  %v424 = vunpack.c.l.b16 %v90
  %v425 = vunpack.c.l.b16 %v91
  %v426 = vunpack.c.l.b16 %v92
  %v427 = vunpack.c.l.b16 %v93
  %v428 = vunpack.c.l.b16 %v94
  %v429 = vunpack.c.l.b16 %v95
  %v430 = vunpack.c.l.b16 %v96
  %v431 = vunpack.c.l.b16 %v97
  %v432 = vunpack.c.l.b16 %v98
  %v433 = vunpack.c.l.b16 %v99
  %v434 = vunpack.c.l.b16 %v100
  %v435 = vunpack.c.l.b16 %v101
  %v436 = vunpack.c.l.b16 %v102
  %v437 = vunpack.c.l.b16 %v103
  %v438 = vunpack.c.l.b16 %v104
  %v439 = vunpack.c.l.b16 %v105
  %v440 = vunpack.c.l.b16 %v106
  %v441 = vunpack.c.l.b16 %v107
  %v442 = vunpack.c.l.b16 %v108
  %v443 = vunpack.c.l.b16 %v109
  %v444 = vunpack.c.l.b16 %v110
  %v445 = vunpack.c.l.b16 %v111
  %v446 = vunpack.c.l.b16 %v112
  %v447 = vunpack.c.l.b16 %v113
  %v448 = vunpack.c.l.b16 %v114
  %v449 = vunpack.c.l.b16 %v115
  %v450 = vunpack.c.l.b16 %v116
  %v451 = vunpack.c.l.b16 %v117
  %v452 = vunpack.c.l.b16 %v118
  %v453 = vunpack.c.l.b16 %v119
  %v454 = vunpack.c.l.b16 %v120
  %v455 = vunpack.c.l.b16 %v121
  %v456 = vunpack.c.l.b16 %v122
  %v457 = vunpack.c.l.b16 %v123
  %v458 = vunpack.c.l.b16 %v124
  %v459 = vunpack.c.l.b16 %v125
  %v460 = vunpack.c.l.b16 %v126
  %v461 = vunpack.c.l.b16 %v127
  %v462 = vunpack.c.l.b16 %v128
  %v463 = vunpack.c.l.b16 %v129
  %v464 = vunpack.c.l.b16 %v130
  %v465 = vunpack.c.l.b16 %v131
  %v466 = vunpack.c.l.b16 %v132
  %v467 = vunpack.c.l.b16 %v133
  %v468 = vunpack.c.l.b16 %v134
  %v469 = vunpack.c.l.b16 %v135
  %v470 = vunpack.c.l.b16 %v136
  %v471 = vunpack.c.l.b16 %v137
  %v472 = vunpack.c.l.b16 %v138
  %v473 = vunpack.c.l.b16 %v139
  %v474 = vunpack.c.l.b16 %v140
  %v475 = vunpack.c.l.b16 %v141
  %v476 = vunpack.c.l.b16 %v142
  %v477 = vunpack.c.l.b16 %v143
  %v478 = vunpack.c.l.b16 %v144
  %v479 = vunpack.c.l.b16 %v145
  %v480 = vunpack.c.l.b16 %v146
  %v481 = vunpack.c.l.b16 %v147
  %v482 = vunpack.c.l.b16 %v148
  %v483 = vunpack.c.l.b16 %v149
  %v484 = vunpack.c.l.b16 %v150
  %v485 = vunpack.c.l.b16 %v151
  %v486 = vunpack.c.l.b16 %v152
  %v487 = vunpack.c.l.b16 %v153
  %v488 = vunpack.c.l.b16 %v154
  %v489 = vunpack.c.l.b16 %v155
  %v490 = vunpack.c.l.b16 %v156
  %v491 = vunpack.c.l.b16 %v157
  %v492 = vunpack.c.l.b16 %v158
  %v493 = vunpack.c.l.b16 %v159
  %v494 = vunpack.c.l.b16 %v160
  %v495 = vunpack.c.l.b16 %v161
  %v496 = vunpack.c.l.b16 %v162
  %v497 = vunpack.c.l.b16 %v163
  %v498 = vunpack.c.l.b16 %v164
  %v499 = vunpack.c.l.b16 %v165
  %v500 = vunpack.c.l.b16 %v166
  %v501 = vunpack.c.l.b16 %v167
  %v502 = vunpack.c.l.b16 %v168
  %v503 = vunpack.c.l.b16 %v169
  %v504 = vunpack.c.l.b16 %v170
  %v505 = vunpack.c.l.b16 %v171
  %v506 = vpack.c.b16 %v363, %v362
  %v507 = vpack.c.b16 %v365, %v364
  %v508 = vpack.c.b16 %v367, %v366
  %v509 = vpack.c.b16 %v369, %v368
  %v510 = vpack.c.b16 %v371, %v370
  %v511 = vpack.c.b16 %v373, %v372
  %v512 = vpack.c.b16 %v375, %v374
  %v513 = vpack.c.b16 %v377, %v376
  %v514 = vpack.c.b16 %v379, %v378
  %v515 = vpack.c.b16 %v381, %v380
  %v516 = vpack.c.b16 %v383, %v382
  %v517 = vpack.c.b16 %v385, %v384
  %v518 = vpack.c.b16 %v387, %v386
  %v519 = vpack.c.b16 %v389, %v388
  %v520 = vpack.c.b16 %v391, %v390
  %v521 = vpack.c.b16 %v393, %v392
  %v522 = vpack.c.b16 %v395, %v394
  %v523 = vpack.c.b16 %v397, %v396
  %v524 = vpack.c.b16 %v399, %v398
  %v525 = vpack.c.b16 %v401, %v400
  %v526 = vpack.c.b16 %v403, %v402
  %v527 = vpack.c.b16 %v405, %v404
  %v528 = vpack.c.b16 %v407, %v406
  %v529 = vpack.c.b16 %v409, %v408
  %v530 = vpack.c.b16 %v411, %v410
  %v531 = vpack.c.b16 %v413, %v412
  %v532 = vpack.c.b16 %v415, %v414
  %v533 = vpack.c.b16 %v417, %v416
  %v534 = vpack.c.b16 %v419, %v418
  %v535 = vpack.c.b16 %v421, %v420
  %v536 = vpack.c.b16 %v423, %v422
  %v537 = vpack.c.b16 %v425, %v424
  %v538 = vpack.c.b16 %v427, %v426
  %v539 = vpack.c.b16 %v429, %v428
  %v540 = vpack.c.b16 %v431, %v430
  %v541 = vpack.c.b16 %v433, %v432
  %v542 = vpack.c.b16 %v435, %v434
  %v543 = vpack.c.b16 %v437, %v436
  %v544 = vpack.c.b16 %v439, %v438
  %v545 = vpack.c.b16 %v441, %v440
  %v546 = vpack.c.b16 %v443, %v442
  %v547 = vpack.c.b16 %v445, %v444
  %v548 = vpack.c.b16 %v447, %v446
  %v549 = vpack.c.b16 %v449, %v448
  %v550 = vpack.c.b16 %v451, %v450
  %v551 = vpack.c.b16 %v453, %v452
  %v552 = vpack.c.b16 %v455, %v454
  %v553 = vpack.c.b16 %v457, %v456
  %v554 = vpack.c.b16 %v459, %v458
  %v555 = vpack.c.b16 %v461, %v460
  %v556 = vpack.c.b16 %v463, %v462
  %v557 = vpack.c.b16 %v465, %v464
  %v558 = vpack.c.b16 %v467, %v466
  %v559 = vpack.c.b16 %v469, %v468
  %v560 = vpack.c.b16 %v471, %v470
  %v561 = vpack.c.b16 %v473, %v472
  %v562 = vpack.c.b16 %v475, %v474
  %v563 = vpack.c.b16 %v477, %v476
  %v564 = vpack.c.b16 %v479, %v478
  %v565 = vpack.c.b16 %v481, %v480
  %v566 = vpack.c.b16 %v483, %v482
  %v567 = vpack.c.b16 %v485, %v484
  %v568 = vpack.c.b16 %v487, %v486
  %v569 = vpack.c.b16 %v489, %v488
  %v570 = vpack.c.b16 %v491, %v490
  %v571 = vpack.c.b16 %v493, %v492
  %v572 = vpack.c.b16 %v495, %v494
  %v573 = vpack.c.b16 %v497, %v496
  %v574 = vpack.c.b16 %v499, %v498
  %v575 = vpack.c.b16 %v501, %v500
  %v576 = vpack.c.b16 %v503, %v502
  %v577 = vpack.c.b16 %v505, %v504
  %650 = vmatprep.subr.bf16.mxu0 0
  %651 = vmatpush1.bf16.msra.mxu0 %v513
  %652 = vmatprep.subr.bf16.mxu0 0
  %653 = vmatpush1.bf16.msra.mxu0 %v512
  %654 = vmatprep.subr.bf16.mxu0 0
  %655 = vmatpush1.bf16.msra.mxu0 %v511
  %656 = vmatprep.subr.bf16.mxu0 0
  %657 = vmatpush1.bf16.msra.mxu0 %v510
  %658 = vmatprep.subr.bf16.mxu0 0
  %659 = vmatpush1.bf16.msra.mxu0 %v509
  %660 = vmatprep.subr.bf16.mxu0 0
  %661 = vmatpush1.bf16.msra.mxu0 %v508
  %662 = vmatprep.subr.bf16.mxu0 0
  %663 = vmatpush1.bf16.msra.mxu0 %v507
  %664 = vmatprep.subr.bf16.mxu0 0
  %665 = vmatpush1.bf16.msra.mxu0 %v506
  %666 = vmatprep.subr.bf16.mxu0 0
  %667 = vmatpush2.bf16.msra.mxu0 %v521
  %668 = vmatprep.subr.bf16.mxu0 0
  %669 = vmatpush2.bf16.msra.mxu0 %v520
  %670 = vmatprep.subr.bf16.mxu0 0
  %671 = vmatpush2.bf16.msra.mxu0 %v519
  %672 = vmatprep.subr.bf16.mxu0 0
  %673 = vmatpush2.bf16.msra.mxu0 %v518
  %674 = vmatprep.subr.bf16.mxu0 0
  %675 = vmatpush2.bf16.msra.mxu0 %v517
  %676 = vmatprep.subr.bf16.mxu0 0
  %677 = vmatpush2.bf16.msra.mxu0 %v516
  %678 = vmatprep.subr.bf16.mxu0 0
  %679 = vmatpush2.bf16.msra.mxu0 %v515
  %680 = vmatprep.subr.bf16.mxu0 0
  %681 = vmatpush2.bf16.msra.mxu0 %v514
  %682 = vmatprep.mubr.bf16.mxu0 %v201
  %683 = vmatmul.mubr.bf16.gmra.mxu0 %v200
  %v684 = vpop.f32.mrf.mxu0
  %v685 = vadd.f32 0.0, %v684
  %v686 = vpop.f32.mrf.mxu0
  %v687 = vpop.f32.mrf.mxu0
  %v688 = vadd.f32 0.0, %v687
  %v689 = vpop.f32.mrf.mxu0
  %690 = vdwg.mxu0
  %691 = vmatprep.subr.bf16.mxu0 0
  %692 = vmatpush1.bf16.msra.mxu0 %v529
  %693 = vmatprep.subr.bf16.mxu0 0
  %694 = vmatpush1.bf16.msra.mxu0 %v528
  %695 = vmatprep.subr.bf16.mxu0 0
  %696 = vmatpush1.bf16.msra.mxu0 %v527
  %697 = vmatprep.subr.bf16.mxu0 0
  %698 = vmatpush1.bf16.msra.mxu0 %v526
  %699 = vmatprep.subr.bf16.mxu0 0
  %700 = vmatpush1.bf16.msra.mxu0 %v525
  %701 = vmatprep.subr.bf16.mxu0 0
  %702 = vmatpush1.bf16.msra.mxu0 %v524
  %703 = vmatprep.subr.bf16.mxu0 0
  %704 = vmatpush1.bf16.msra.mxu0 %v523
  %705 = vmatprep.subr.bf16.mxu0 0
  %706 = vmatpush1.bf16.msra.mxu0 %v522
  %707 = vmatprep.subr.bf16.mxu0 0
  %708 = vmatpush2.bf16.msra.mxu0 %v537
  %709 = vmatprep.subr.bf16.mxu0 0
  %710 = vmatpush2.bf16.msra.mxu0 %v536
  %711 = vmatprep.subr.bf16.mxu0 0
  %712 = vmatpush2.bf16.msra.mxu0 %v535
  %713 = vmatprep.subr.bf16.mxu0 0
  %714 = vmatpush2.bf16.msra.mxu0 %v534
  %715 = vmatprep.subr.bf16.mxu0 0
  %716 = vmatpush2.bf16.msra.mxu0 %v533
  %717 = vmatprep.subr.bf16.mxu0 0
  %718 = vmatpush2.bf16.msra.mxu0 %v532
  %719 = vmatprep.subr.bf16.mxu0 0
  %720 = vmatpush2.bf16.msra.mxu0 %v531
  %721 = vmatprep.subr.bf16.mxu0 0
  %722 = vmatpush2.bf16.msra.mxu0 %v530
  %723 = vmatprep.mubr.bf16.mxu0 %v203
  %724 = vmatmul.mubr.bf16.gmra.mxu0 %v202
  %v725 = vpop.f32.mrf.mxu0
  %v726 = vadd.f32 %v685, %v725
  %v727 = vpop.f32.mrf.mxu0
  %v728 = vpop.f32.mrf.mxu0
  %v729 = vadd.f32 %v688, %v728
  %v730 = vpop.f32.mrf.mxu0
  %731 = vdwg.mxu0
  %732 = vmatprep.subr.bf16.mxu0 0
  %733 = vmatpush1.bf16.msra.mxu0 %v545
  %734 = vmatprep.subr.bf16.mxu0 0
  %735 = vmatpush1.bf16.msra.mxu0 %v544
  %736 = vmatprep.subr.bf16.mxu0 0
  %737 = vmatpush1.bf16.msra.mxu0 %v543
  %738 = vmatprep.subr.bf16.mxu0 0
  %739 = vmatpush1.bf16.msra.mxu0 %v542
  %740 = vmatprep.subr.bf16.mxu0 0
  %741 = vmatpush1.bf16.msra.mxu0 %v541
  %742 = vmatprep.subr.bf16.mxu0 0
  %743 = vmatpush1.bf16.msra.mxu0 %v540
  %744 = vmatprep.subr.bf16.mxu0 0
  %745 = vmatpush1.bf16.msra.mxu0 %v539
  %746 = vmatprep.subr.bf16.mxu0 0
  %747 = vmatpush1.bf16.msra.mxu0 %v538
  %748 = vmatprep.subr.bf16.mxu0 0
  %749 = vmatpush2.bf16.msra.mxu0 %v553
  %750 = vmatprep.subr.bf16.mxu0 0
  %751 = vmatpush2.bf16.msra.mxu0 %v552
  %752 = vmatprep.subr.bf16.mxu0 0
  %753 = vmatpush2.bf16.msra.mxu0 %v551
  %754 = vmatprep.subr.bf16.mxu0 0
  %755 = vmatpush2.bf16.msra.mxu0 %v550
  %756 = vmatprep.subr.bf16.mxu0 0
  %757 = vmatpush2.bf16.msra.mxu0 %v549
  %758 = vmatprep.subr.bf16.mxu0 0
  %759 = vmatpush2.bf16.msra.mxu0 %v548
  %760 = vmatprep.subr.bf16.mxu0 0
  %761 = vmatpush2.bf16.msra.mxu0 %v547
  %762 = vmatprep.subr.bf16.mxu0 0
  %763 = vmatpush2.bf16.msra.mxu0 %v546
  %764 = vmatprep.mubr.bf16.mxu0 %v205
  %765 = vmatmul.mubr.bf16.gmra.mxu0 %v204
  %v766 = vpop.f32.mrf.mxu0
  %v767 = vadd.f32 %v726, %v766
  %v768 = vpop.f32.mrf.mxu0
  %v769 = vpop.f32.mrf.mxu0
  %v770 = vadd.f32 %v729, %v769
  %v771 = vpop.f32.mrf.mxu0
  %772 = vdwg.mxu0
  %773 = vmatprep.subr.bf16.mxu0 0
  %774 = vmatpush1.bf16.msra.mxu0 %v561
  %775 = vmatprep.subr.bf16.mxu0 0
  %776 = vmatpush1.bf16.msra.mxu0 %v560
  %777 = vmatprep.subr.bf16.mxu0 0
  %778 = vmatpush1.bf16.msra.mxu0 %v559
  %779 = vmatprep.subr.bf16.mxu0 0
  %780 = vmatpush1.bf16.msra.mxu0 %v558
  %781 = vmatprep.subr.bf16.mxu0 0
  %782 = vmatpush1.bf16.msra.mxu0 %v557
  %783 = vmatprep.subr.bf16.mxu0 0
  %784 = vmatpush1.bf16.msra.mxu0 %v556
  %785 = vmatprep.subr.bf16.mxu0 0
  %786 = vmatpush1.bf16.msra.mxu0 %v555
  %787 = vmatprep.subr.bf16.mxu0 0
  %788 = vmatpush1.bf16.msra.mxu0 %v554
  %789 = vmatprep.subr.bf16.mxu0 0
  %790 = vmatpush2.bf16.msra.mxu0 %v569
  %791 = vmatprep.subr.bf16.mxu0 0
  %792 = vmatpush2.bf16.msra.mxu0 %v568
  %793 = vmatprep.subr.bf16.mxu0 0
  %794 = vmatpush2.bf16.msra.mxu0 %v567
  %795 = vmatprep.subr.bf16.mxu0 0
  %796 = vmatpush2.bf16.msra.mxu0 %v566
  %797 = vmatprep.subr.bf16.mxu0 0
  %798 = vmatpush2.bf16.msra.mxu0 %v565
  %799 = vmatprep.subr.bf16.mxu0 0
  %800 = vmatpush2.bf16.msra.mxu0 %v564
  %801 = vmatprep.subr.bf16.mxu0 0
  %802 = vmatpush2.bf16.msra.mxu0 %v563
  %803 = vmatprep.subr.bf16.mxu0 0
  %804 = vmatpush2.bf16.msra.mxu0 %v562
  %805 = vmatprep.mubr.bf16.mxu0 %v207
  %806 = vmatmul.mubr.bf16.gmra.mxu0 %v206
  %v807 = vpop.f32.mrf.mxu0
  %v808 = vadd.f32 %v767, %v807
  %v809 = vpop.f32.mrf.mxu0
  %v810 = vpop.f32.mrf.mxu0
  %v811 = vadd.f32 %v770, %v810
  %v812 = vpop.f32.mrf.mxu0
  %813 = vdwg.mxu0
  %814 = vmatprep.subr.bf16.mxu0 0
  %815 = vmatpush1.bf16.msra.mxu0 %v577
  %816 = vmatprep.subr.bf16.mxu0 0
  %817 = vmatpush1.bf16.msra.mxu0 %v576
  %818 = vmatprep.subr.bf16.mxu0 0
  %819 = vmatpush1.bf16.msra.mxu0 %v575
  %820 = vmatprep.subr.bf16.mxu0 0
  %821 = vmatpush1.bf16.msra.mxu0 %v574
  %822 = vmatprep.subr.bf16.mxu0 0
  %823 = vmatpush1.bf16.msra.mxu0 %v573
  %824 = vmatprep.subr.bf16.mxu0 0
  %825 = vmatpush1.bf16.msra.mxu0 %v572
  %826 = vmatprep.subr.bf16.mxu0 0
  %827 = vmatpush1.bf16.msra.mxu0 %v571
  %828 = vmatprep.subr.bf16.mxu0 0
  %829 = vmatpush1.bf16.msra.mxu0 %v570
  %830 = vmatprep.subr.bf16.mxu0 0
  %831 = vmatpush2.bf16.msra.mxu0 0
  %832 = vmatprep.subr.bf16.mxu0 0
  %833 = vmatpush2.bf16.msra.mxu0 0
  %834 = vmatprep.subr.bf16.mxu0 0
  %835 = vmatpush2.bf16.msra.mxu0 0
  %836 = vmatprep.subr.bf16.mxu0 0
  %837 = vmatpush2.bf16.msra.mxu0 0
  %838 = vmatprep.subr.bf16.mxu0 0
  %839 = vmatpush2.bf16.msra.mxu0 0
  %840 = vmatprep.subr.bf16.mxu0 0
  %841 = vmatpush2.bf16.msra.mxu0 0
  %842 = vmatprep.subr.bf16.mxu0 0
  %843 = vmatpush2.bf16.msra.mxu0 0
  %844 = vmatprep.subr.bf16.mxu0 0
  %845 = vmatpush2.bf16.msra.mxu0 0
  %846 = vmatprep.mubr.bf16.mxu0 0
  %847 = vmatmul.mubr.bf16.gmra.mxu0 %v208
  %v848 = vpop.f32.mrf.mxu0
  %v849 = vadd.f32 %v808, %v848
  %v850 = vpop.f32.mrf.mxu0
  %v851 = vpop.f32.mrf.mxu0
  %v852 = vadd.f32 %v811, %v851
  %v853 = vpop.f32.mrf.mxu0
  %854 = vdwg.mxu0
  %v855 = vld [vmem:[%s2] sm:$0x1]
  %v857 = vlaneseq
  %v858 = vshrl.u32 %v857, 7
  %v859 = vsub.s32 0, %v858
  %v860 = vrot.slane %v855, %v859
  %v862 = vmul.f32 %v849, %v860
  %v863 = vmul.f32 %v852, %v860
  %v864 = vld [vmem:[%s3] sm:$0x1]
  %v866 = vlaneseq
  %v867 = vshrl.u32 %v866, 7
  %v868 = vsub.s32 0, %v867
  %v869 = vrot.slane %v864, %v868
  %v871 = vadd.f32 %v862, %v869
  %v872 = vadd.f32 %v863, %v869
  %v873 = vmax.f32 %v871, 0.0
  %v874 = vmax.f32 %v872, 0.0
  %v875 = vpack.c.bf16 %v874, %v873
  %v877 = vunpack.c.l.b16 %v875
  %v878 = vunpack.c.h.b16 %v875
  %v879 = vpack.c.b16 %v877, %v877
  %v880 = vpack.c.b16 %v878, %v878
  %883 = vst [vmem:[%s4] sm:$0xf] %v879
  %884 = vst [vmem:[%s4 + $0x4] sm:$0xf] %v880
  // Predicated region
  $region18: #{resnet_forward.33} parent=0 // pred_check
    _
  $region19: #{resnet_forward.33} parent=0 // pred_check_branch
    %886 = sbr.rel (0) target = $region21
  $region20: #{resnet_forward.33} parent=0 // pred_region
    _
  $region21: #{resnet_forward.33} parent=0 // pred_fallthru
    _
  // Predicated region
  $region22: #{resnet_forward.33} parent=0 // pred_check
    _
  $region23: #{resnet_forward.33} parent=0 // pred_check_branch
    %888 = sbr.rel (0) target = $region25
  $region24: #{resnet_forward.33} parent=0 // pred_region
    _
  $region25: #{resnet_forward.33} parent=0 // pred_fallthru
    _

// kernel: resnet_forward.35
$region0: #{resnet_forward.35}
  #allocation0 [shape = 'u32[]', space=smem, size = 0x4, offset = 0x4, fixed_abs, tag = 'smem constant byte address 0x4 - core index']
  #allocation1 [shape = 'u32[144,128]{1,0:T(1,128)}', space=vmem, size = 0x12000, scoped, tag = 'internal scratch']
  %s0 = inlined_call_operand.vmem [shape: bf16[16,1152], index: 0, kind: input, shape index: {}]
  %s1 = inlined_call_operand.vmem [shape: bf16[1152,128], index: 1, kind: input, shape index: {}]
  %s2 = inlined_call_operand.vmem [shape: f32[1,128], index: 2, kind: input, shape index: {}]
  %s3 = inlined_call_operand.vmem [shape: f32[1,128], index: 3, kind: input, shape index: {}]
  %s4 = inlined_call_operand.vmem [shape: bf16[16,128], index: 4, kind: input, shape index: {}]
  %s5 = inlined_call_operand.vmem [shape: bf16[16,128], index: 5, kind: output, shape index: {}]
  %s6 = sld [smem:[#allocation0]]
  $region30: #{resnet_forward.35} parent=0
    _
  %s8 = ssub.s32 1, %s6
  %s9 = scalar_select 0, %s8, %s6
  // Predicated region
  $region2: #{resnet_forward.35} parent=0 // pred_check
    _
  $region3: #{resnet_forward.35} parent=0 // pred_check_branch
    %11 = sbr.rel (0) target = $region5
  $region4: #{resnet_forward.35} parent=0 // pred_region
    _
  $region5: #{resnet_forward.35} parent=0 // pred_fallthru
    _
  // Predicated region
  $region6: #{resnet_forward.35} parent=0 // pred_check
    _
  $region7: #{resnet_forward.35} parent=0 // pred_check_branch
    %13 = sbr.rel (0) target = $region9
  $region8: #{resnet_forward.35} parent=0 // pred_region
    _
  $region9: #{resnet_forward.35} parent=0 // pred_fallthru
    _
  // Predicated region
  $region10: #{resnet_forward.35} parent=0 // pred_check
    _
  $region11: #{resnet_forward.35} parent=0 // pred_check_branch
    %15 = sbr.rel (0) target = $region13
  $region12: #{resnet_forward.35} parent=0 // pred_region
    _
  $region13: #{resnet_forward.35} parent=0 // pred_fallthru
    _
  // Predicated region
  $region14: #{resnet_forward.35} parent=0 // pred_check
    _
  $region15: #{resnet_forward.35} parent=0 // pred_check_branch
    %17 = sbr.rel (0) target = $region17
  $region16: #{resnet_forward.35} parent=0 // pred_region
    _
  $region17: #{resnet_forward.35} parent=0 // pred_fallthru
    _
  // Predicated region
  $region18: #{resnet_forward.35} parent=0 // pred_check
    _
  $region19: #{resnet_forward.35} parent=0 // pred_check_branch
    %19 = sbr.rel (0) target = $region21
  $region20: #{resnet_forward.35} parent=0 // pred_region
    _
  $region21: #{resnet_forward.35} parent=0 // pred_fallthru
    _
  %v21 = vld [vmem:[%s0] sm:$0xff]
  %v22 = vld [vmem:[%s0 + $0x8] sm:$0xff]
  %v23 = vld [vmem:[%s0 + $0x10] sm:$0xff]
  %v24 = vld [vmem:[%s0 + $0x18] sm:$0xff]
  %v25 = vld [vmem:[%s0 + $0x20] sm:$0xf]
  %v26 = vld [vmem:[%s0 + $0x24] sm:$0xff]
  %v27 = vld [vmem:[%s0 + $0x2c] sm:$0xff]
  %v28 = vld [vmem:[%s0 + $0x34] sm:$0xff]
  %v29 = vld [vmem:[%s0 + $0x3c] sm:$0xff]
  %v30 = vld [vmem:[%s0 + $0x44] sm:$0xf]
  %v31 = vld [vmem:[%s1] sm:$0xf]
  %v32 = vld [vmem:[%s1 + $0x4] sm:$0xf]
  %v33 = vld [vmem:[%s1 + $0x8] sm:$0xf]
  %v34 = vld [vmem:[%s1 + $0xc] sm:$0xf]
  %v35 = vld [vmem:[%s1 + $0x10] sm:$0xf]
  %v36 = vld [vmem:[%s1 + $0x14] sm:$0xf]
  %v37 = vld [vmem:[%s1 + $0x18] sm:$0xf]
  %v38 = vld [vmem:[%s1 + $0x1c] sm:$0xf]
  %v39 = vld [vmem:[%s1 + $0x20] sm:$0xf]
  %v40 = vld [vmem:[%s1 + $0x24] sm:$0xf]
  %v41 = vld [vmem:[%s1 + $0x28] sm:$0xf]
  %v42 = vld [vmem:[%s1 + $0x2c] sm:$0xf]
  %v43 = vld [vmem:[%s1 + $0x30] sm:$0xf]
  %v44 = vld [vmem:[%s1 + $0x34] sm:$0xf]
  %v45 = vld [vmem:[%s1 + $0x38] sm:$0xf]
  %v46 = vld [vmem:[%s1 + $0x3c] sm:$0xf]
  %v47 = vld [vmem:[%s1 + $0x40] sm:$0xf]
  %v48 = vld [vmem:[%s1 + $0x44] sm:$0xf]
  %v49 = vld [vmem:[%s1 + $0x48] sm:$0xf]
  %v50 = vld [vmem:[%s1 + $0x4c] sm:$0xf]
  %v51 = vld [vmem:[%s1 + $0x50] sm:$0xf]
  %v52 = vld [vmem:[%s1 + $0x54] sm:$0xf]
  %v53 = vld [vmem:[%s1 + $0x58] sm:$0xf]
  %v54 = vld [vmem:[%s1 + $0x5c] sm:$0xf]
  %v55 = vld [vmem:[%s1 + $0x60] sm:$0xf]
  %v56 = vld [vmem:[%s1 + $0x64] sm:$0xf]
  %v57 = vld [vmem:[%s1 + $0x68] sm:$0xf]
  %v58 = vld [vmem:[%s1 + $0x6c] sm:$0xf]
  %v59 = vld [vmem:[%s1 + $0x70] sm:$0xf]
  %v60 = vld [vmem:[%s1 + $0x74] sm:$0xf]
  %v61 = vld [vmem:[%s1 + $0x78] sm:$0xf]
  %v62 = vld [vmem:[%s1 + $0x7c] sm:$0xf]
  %v63 = vld [vmem:[%s1 + $0x80] sm:$0xf]
  %v64 = vld [vmem:[%s1 + $0x84] sm:$0xf]
  %v65 = vld [vmem:[%s1 + $0x88] sm:$0xf]
  %v66 = vld [vmem:[%s1 + $0x8c] sm:$0xf]
  %v67 = vld [vmem:[%s1 + $0x90] sm:$0xf]
  %v68 = vld [vmem:[%s1 + $0x94] sm:$0xf]
  %v69 = vld [vmem:[%s1 + $0x98] sm:$0xf]
  %v70 = vld [vmem:[%s1 + $0x9c] sm:$0xf]
  %v71 = vld [vmem:[%s1 + $0xa0] sm:$0xf]
  %v72 = vld [vmem:[%s1 + $0xa4] sm:$0xf]
  %v73 = vld [vmem:[%s1 + $0xa8] sm:$0xf]
  %v74 = vld [vmem:[%s1 + $0xac] sm:$0xf]
  %v75 = vld [vmem:[%s1 + $0xb0] sm:$0xf]
  %v76 = vld [vmem:[%s1 + $0xb4] sm:$0xf]
  %v77 = vld [vmem:[%s1 + $0xb8] sm:$0xf]
  %v78 = vld [vmem:[%s1 + $0xbc] sm:$0xf]
  %v79 = vld [vmem:[%s1 + $0xc0] sm:$0xf]
  %v80 = vld [vmem:[%s1 + $0xc4] sm:$0xf]
  %v81 = vld [vmem:[%s1 + $0xc8] sm:$0xf]
  %v82 = vld [vmem:[%s1 + $0xcc] sm:$0xf]
  %v83 = vld [vmem:[%s1 + $0xd0] sm:$0xf]
  %v84 = vld [vmem:[%s1 + $0xd4] sm:$0xf]
  %v85 = vld [vmem:[%s1 + $0xd8] sm:$0xf]
  %v86 = vld [vmem:[%s1 + $0xdc] sm:$0xf]
  %v87 = vld [vmem:[%s1 + $0xe0] sm:$0xf]
  %v88 = vld [vmem:[%s1 + $0xe4] sm:$0xf]
  %v89 = vld [vmem:[%s1 + $0xe8] sm:$0xf]
  %v90 = vld [vmem:[%s1 + $0xec] sm:$0xf]
  %v91 = vld [vmem:[%s1 + $0xf0] sm:$0xf]
  %v92 = vld [vmem:[%s1 + $0xf4] sm:$0xf]
  %v93 = vld [vmem:[%s1 + $0xf8] sm:$0xf]
  %v94 = vld [vmem:[%s1 + $0xfc] sm:$0xf]
  %v95 = vld [vmem:[%s1 + $0x100] sm:$0xf]
  %v96 = vld [vmem:[%s1 + $0x104] sm:$0xf]
  %v97 = vld [vmem:[%s1 + $0x108] sm:$0xf]
  %v98 = vld [vmem:[%s1 + $0x10c] sm:$0xf]
  %v99 = vld [vmem:[%s1 + $0x110] sm:$0xf]
  %v100 = vld [vmem:[%s1 + $0x114] sm:$0xf]
  %v101 = vld [vmem:[%s1 + $0x118] sm:$0xf]
  %v102 = vld [vmem:[%s1 + $0x11c] sm:$0xf]
  %v103 = vld [vmem:[%s1 + $0x120] sm:$0xf]
  %v104 = vld [vmem:[%s1 + $0x124] sm:$0xf]
  %v105 = vld [vmem:[%s1 + $0x128] sm:$0xf]
  %v106 = vld [vmem:[%s1 + $0x12c] sm:$0xf]
  %v107 = vld [vmem:[%s1 + $0x130] sm:$0xf]
  %v108 = vld [vmem:[%s1 + $0x134] sm:$0xf]
  %v109 = vld [vmem:[%s1 + $0x138] sm:$0xf]
  %v110 = vld [vmem:[%s1 + $0x13c] sm:$0xf]
  %v111 = vld [vmem:[%s1 + $0x140] sm:$0xf]
  %v112 = vld [vmem:[%s1 + $0x144] sm:$0xf]
  %v113 = vld [vmem:[%s1 + $0x148] sm:$0xf]
  %v114 = vld [vmem:[%s1 + $0x14c] sm:$0xf]
  %v115 = vld [vmem:[%s1 + $0x150] sm:$0xf]
  %v116 = vld [vmem:[%s1 + $0x154] sm:$0xf]
  %v117 = vld [vmem:[%s1 + $0x158] sm:$0xf]
  %v118 = vld [vmem:[%s1 + $0x15c] sm:$0xf]
  %v119 = vld [vmem:[%s1 + $0x160] sm:$0xf]
  %v120 = vld [vmem:[%s1 + $0x164] sm:$0xf]
  %v121 = vld [vmem:[%s1 + $0x168] sm:$0xf]
  %v122 = vld [vmem:[%s1 + $0x16c] sm:$0xf]
  %v123 = vld [vmem:[%s1 + $0x170] sm:$0xf]
  %v124 = vld [vmem:[%s1 + $0x174] sm:$0xf]
  %v125 = vld [vmem:[%s1 + $0x178] sm:$0xf]
  %v126 = vld [vmem:[%s1 + $0x17c] sm:$0xf]
  %v127 = vld [vmem:[%s1 + $0x180] sm:$0xf]
  %v128 = vld [vmem:[%s1 + $0x184] sm:$0xf]
  %v129 = vld [vmem:[%s1 + $0x188] sm:$0xf]
  %v130 = vld [vmem:[%s1 + $0x18c] sm:$0xf]
  %v131 = vld [vmem:[%s1 + $0x190] sm:$0xf]
  %v132 = vld [vmem:[%s1 + $0x194] sm:$0xf]
  %v133 = vld [vmem:[%s1 + $0x198] sm:$0xf]
  %v134 = vld [vmem:[%s1 + $0x19c] sm:$0xf]
  %v135 = vld [vmem:[%s1 + $0x1a0] sm:$0xf]
  %v136 = vld [vmem:[%s1 + $0x1a4] sm:$0xf]
  %v137 = vld [vmem:[%s1 + $0x1a8] sm:$0xf]
  %v138 = vld [vmem:[%s1 + $0x1ac] sm:$0xf]
  %v139 = vld [vmem:[%s1 + $0x1b0] sm:$0xf]
  %v140 = vld [vmem:[%s1 + $0x1b4] sm:$0xf]
  %v141 = vld [vmem:[%s1 + $0x1b8] sm:$0xf]
  %v142 = vld [vmem:[%s1 + $0x1bc] sm:$0xf]
  %v143 = vld [vmem:[%s1 + $0x1c0] sm:$0xf]
  %v144 = vld [vmem:[%s1 + $0x1c4] sm:$0xf]
  %v145 = vld [vmem:[%s1 + $0x1c8] sm:$0xf]
  %v146 = vld [vmem:[%s1 + $0x1cc] sm:$0xf]
  %v147 = vld [vmem:[%s1 + $0x1d0] sm:$0xf]
  %v148 = vld [vmem:[%s1 + $0x1d4] sm:$0xf]
  %v149 = vld [vmem:[%s1 + $0x1d8] sm:$0xf]
  %v150 = vld [vmem:[%s1 + $0x1dc] sm:$0xf]
  %v151 = vld [vmem:[%s1 + $0x1e0] sm:$0xf]
  %v152 = vld [vmem:[%s1 + $0x1e4] sm:$0xf]
  %v153 = vld [vmem:[%s1 + $0x1e8] sm:$0xf]
  %v154 = vld [vmem:[%s1 + $0x1ec] sm:$0xf]
  %v155 = vld [vmem:[%s1 + $0x1f0] sm:$0xf]
  %v156 = vld [vmem:[%s1 + $0x1f4] sm:$0xf]
  %v157 = vld [vmem:[%s1 + $0x1f8] sm:$0xf]
  %v158 = vld [vmem:[%s1 + $0x1fc] sm:$0xf]
  %v159 = vld [vmem:[%s1 + $0x200] sm:$0xf]
  %v160 = vld [vmem:[%s1 + $0x204] sm:$0xf]
  %v161 = vld [vmem:[%s1 + $0x208] sm:$0xf]
  %v162 = vld [vmem:[%s1 + $0x20c] sm:$0xf]
  %v163 = vld [vmem:[%s1 + $0x210] sm:$0xf]
  %v164 = vld [vmem:[%s1 + $0x214] sm:$0xf]
  %v165 = vld [vmem:[%s1 + $0x218] sm:$0xf]
  %v166 = vld [vmem:[%s1 + $0x21c] sm:$0xf]
  %v167 = vld [vmem:[%s1 + $0x220] sm:$0xf]
  %v168 = vld [vmem:[%s1 + $0x224] sm:$0xf]
  %v169 = vld [vmem:[%s1 + $0x228] sm:$0xf]
  %v170 = vld [vmem:[%s1 + $0x22c] sm:$0xf]
  %v171 = vld [vmem:[%s1 + $0x230] sm:$0xf]
  %v172 = vld [vmem:[%s1 + $0x234] sm:$0xf]
  %v173 = vld [vmem:[%s1 + $0x238] sm:$0xf]
  %v174 = vld [vmem:[%s1 + $0x23c] sm:$0xf]
  %v185 = vunpack.c.l.b16 %v21
  %v186 = vunpack.c.h.b16 %v21
  %v187 = vunpack.c.l.b16 %v22
  %v188 = vunpack.c.h.b16 %v22
  %v189 = vunpack.c.l.b16 %v23
  %v190 = vunpack.c.h.b16 %v23
  %v191 = vunpack.c.l.b16 %v24
  %v192 = vunpack.c.h.b16 %v24
  %v193 = vunpack.c.l.b16 %v25
  %v194 = vunpack.c.l.b16 %v26
  %v195 = vunpack.c.h.b16 %v26
  %v196 = vunpack.c.l.b16 %v27
  %v197 = vunpack.c.h.b16 %v27
  %v198 = vunpack.c.l.b16 %v28
  %v199 = vunpack.c.h.b16 %v28
  %v200 = vunpack.c.l.b16 %v29
  %v201 = vunpack.c.h.b16 %v29
  %v202 = vunpack.c.l.b16 %v30
  %v203 = vpack.c.b16 %v194, %v185
  %v204 = vpack.c.b16 %v195, %v186
  %v205 = vpack.c.b16 %v196, %v187
  %v206 = vpack.c.b16 %v197, %v188
  %v207 = vpack.c.b16 %v198, %v189
  %v208 = vpack.c.b16 %v199, %v190
  %v209 = vpack.c.b16 %v200, %v191
  %v210 = vpack.c.b16 %v201, %v192
  %v211 = vpack.c.b16 %v202, %v193
  %v365 = vunpack.c.l.b16 %v31
  %v366 = vunpack.c.l.b16 %v32
  %v367 = vunpack.c.l.b16 %v33
  %v368 = vunpack.c.l.b16 %v34
  %v369 = vunpack.c.l.b16 %v35
  %v370 = vunpack.c.l.b16 %v36
  %v371 = vunpack.c.l.b16 %v37
  %v372 = vunpack.c.l.b16 %v38
  %v373 = vunpack.c.l.b16 %v39
  %v374 = vunpack.c.l.b16 %v40
  %v375 = vunpack.c.l.b16 %v41
  %v376 = vunpack.c.l.b16 %v42
  %v377 = vunpack.c.l.b16 %v43
  %v378 = vunpack.c.l.b16 %v44
  %v379 = vunpack.c.l.b16 %v45
  %v380 = vunpack.c.l.b16 %v46
  %v381 = vunpack.c.l.b16 %v47
  %v382 = vunpack.c.l.b16 %v48
  %v383 = vunpack.c.l.b16 %v49
  %v384 = vunpack.c.l.b16 %v50
  %v385 = vunpack.c.l.b16 %v51
  %v386 = vunpack.c.l.b16 %v52
  %v387 = vunpack.c.l.b16 %v53
  %v388 = vunpack.c.l.b16 %v54
  %v389 = vunpack.c.l.b16 %v55
  %v390 = vunpack.c.l.b16 %v56
  %v391 = vunpack.c.l.b16 %v57
  %v392 = vunpack.c.l.b16 %v58
  %v393 = vunpack.c.l.b16 %v59
  %v394 = vunpack.c.l.b16 %v60
  %v395 = vunpack.c.l.b16 %v61
  %v396 = vunpack.c.l.b16 %v62
  %v397 = vunpack.c.l.b16 %v63
  %v398 = vunpack.c.l.b16 %v64
  %v399 = vunpack.c.l.b16 %v65
  %v400 = vunpack.c.l.b16 %v66
  %v401 = vunpack.c.l.b16 %v67
  %v402 = vunpack.c.l.b16 %v68
  %v403 = vunpack.c.l.b16 %v69
  %v404 = vunpack.c.l.b16 %v70
  %v405 = vunpack.c.l.b16 %v71
  %v406 = vunpack.c.l.b16 %v72
  %v407 = vunpack.c.l.b16 %v73
  %v408 = vunpack.c.l.b16 %v74
  %v409 = vunpack.c.l.b16 %v75
  %v410 = vunpack.c.l.b16 %v76
  %v411 = vunpack.c.l.b16 %v77
  %v412 = vunpack.c.l.b16 %v78
  %v413 = vunpack.c.l.b16 %v79
  %v414 = vunpack.c.l.b16 %v80
  %v415 = vunpack.c.l.b16 %v81
  %v416 = vunpack.c.l.b16 %v82
  %v417 = vunpack.c.l.b16 %v83
  %v418 = vunpack.c.l.b16 %v84
  %v419 = vunpack.c.l.b16 %v85
  %v420 = vunpack.c.l.b16 %v86
  %v421 = vunpack.c.l.b16 %v87
  %v422 = vunpack.c.l.b16 %v88
  %v423 = vunpack.c.l.b16 %v89
  %v424 = vunpack.c.l.b16 %v90
  %v425 = vunpack.c.l.b16 %v91
  %v426 = vunpack.c.l.b16 %v92
  %v427 = vunpack.c.l.b16 %v93
  %v428 = vunpack.c.l.b16 %v94
  %v429 = vunpack.c.l.b16 %v95
  %v430 = vunpack.c.l.b16 %v96
  %v431 = vunpack.c.l.b16 %v97
  %v432 = vunpack.c.l.b16 %v98
  %v433 = vunpack.c.l.b16 %v99
  %v434 = vunpack.c.l.b16 %v100
  %v435 = vunpack.c.l.b16 %v101
  %v436 = vunpack.c.l.b16 %v102
  %v437 = vunpack.c.l.b16 %v103
  %v438 = vunpack.c.l.b16 %v104
  %v439 = vunpack.c.l.b16 %v105
  %v440 = vunpack.c.l.b16 %v106
  %v441 = vunpack.c.l.b16 %v107
  %v442 = vunpack.c.l.b16 %v108
  %v443 = vunpack.c.l.b16 %v109
  %v444 = vunpack.c.l.b16 %v110
  %v445 = vunpack.c.l.b16 %v111
  %v446 = vunpack.c.l.b16 %v112
  %v447 = vunpack.c.l.b16 %v113
  %v448 = vunpack.c.l.b16 %v114
  %v449 = vunpack.c.l.b16 %v115
  %v450 = vunpack.c.l.b16 %v116
  %v451 = vunpack.c.l.b16 %v117
  %v452 = vunpack.c.l.b16 %v118
  %v453 = vunpack.c.l.b16 %v119
  %v454 = vunpack.c.l.b16 %v120
  %v455 = vunpack.c.l.b16 %v121
  %v456 = vunpack.c.l.b16 %v122
  %v457 = vunpack.c.l.b16 %v123
  %v458 = vunpack.c.l.b16 %v124
  %v459 = vunpack.c.l.b16 %v125
  %v460 = vunpack.c.l.b16 %v126
  %v461 = vunpack.c.l.b16 %v127
  %v462 = vunpack.c.l.b16 %v128
  %v463 = vunpack.c.l.b16 %v129
  %v464 = vunpack.c.l.b16 %v130
  %v465 = vunpack.c.l.b16 %v131
  %v466 = vunpack.c.l.b16 %v132
  %v467 = vunpack.c.l.b16 %v133
  %v468 = vunpack.c.l.b16 %v134
  %v469 = vunpack.c.l.b16 %v135
  %v470 = vunpack.c.l.b16 %v136
  %v471 = vunpack.c.l.b16 %v137
  %v472 = vunpack.c.l.b16 %v138
  %v473 = vunpack.c.l.b16 %v139
  %v474 = vunpack.c.l.b16 %v140
  %v475 = vunpack.c.l.b16 %v141
  %v476 = vunpack.c.l.b16 %v142
  %v477 = vunpack.c.l.b16 %v143
  %v478 = vunpack.c.l.b16 %v144
  %v479 = vunpack.c.l.b16 %v145
  %v480 = vunpack.c.l.b16 %v146
  %v481 = vunpack.c.l.b16 %v147
  %v482 = vunpack.c.l.b16 %v148
  %v483 = vunpack.c.l.b16 %v149
  %v484 = vunpack.c.l.b16 %v150
  %v485 = vunpack.c.l.b16 %v151
  %v486 = vunpack.c.l.b16 %v152
  %v487 = vunpack.c.l.b16 %v153
  %v488 = vunpack.c.l.b16 %v154
  %v489 = vunpack.c.l.b16 %v155
  %v490 = vunpack.c.l.b16 %v156
  %v491 = vunpack.c.l.b16 %v157
  %v492 = vunpack.c.l.b16 %v158
  %v493 = vunpack.c.l.b16 %v159
  %v494 = vunpack.c.l.b16 %v160
  %v495 = vunpack.c.l.b16 %v161
  %v496 = vunpack.c.l.b16 %v162
  %v497 = vunpack.c.l.b16 %v163
  %v498 = vunpack.c.l.b16 %v164
  %v499 = vunpack.c.l.b16 %v165
  %v500 = vunpack.c.l.b16 %v166
  %v501 = vunpack.c.l.b16 %v167
  %v502 = vunpack.c.l.b16 %v168
  %v503 = vunpack.c.l.b16 %v169
  %v504 = vunpack.c.l.b16 %v170
  %v505 = vunpack.c.l.b16 %v171
  %v506 = vunpack.c.l.b16 %v172
  %v507 = vunpack.c.l.b16 %v173
  %v508 = vunpack.c.l.b16 %v174
  %v509 = vpack.c.b16 %v366, %v365
  %v510 = vpack.c.b16 %v368, %v367
  %v511 = vpack.c.b16 %v370, %v369
  %v512 = vpack.c.b16 %v372, %v371
  %v513 = vpack.c.b16 %v374, %v373
  %v514 = vpack.c.b16 %v376, %v375
  %v515 = vpack.c.b16 %v378, %v377
  %v516 = vpack.c.b16 %v380, %v379
  %v517 = vpack.c.b16 %v382, %v381
  %v518 = vpack.c.b16 %v384, %v383
  %v519 = vpack.c.b16 %v386, %v385
  %v520 = vpack.c.b16 %v388, %v387
  %v521 = vpack.c.b16 %v390, %v389
  %v522 = vpack.c.b16 %v392, %v391
  %v523 = vpack.c.b16 %v394, %v393
  %v524 = vpack.c.b16 %v396, %v395
  %v525 = vpack.c.b16 %v398, %v397
  %v526 = vpack.c.b16 %v400, %v399
  %v527 = vpack.c.b16 %v402, %v401
  %v528 = vpack.c.b16 %v404, %v403
  %v529 = vpack.c.b16 %v406, %v405
  %v530 = vpack.c.b16 %v408, %v407
  %v531 = vpack.c.b16 %v410, %v409
  %v532 = vpack.c.b16 %v412, %v411
  %v533 = vpack.c.b16 %v414, %v413
  %v534 = vpack.c.b16 %v416, %v415
  %v535 = vpack.c.b16 %v418, %v417
  %v536 = vpack.c.b16 %v420, %v419
  %v537 = vpack.c.b16 %v422, %v421
  %v538 = vpack.c.b16 %v424, %v423
  %v539 = vpack.c.b16 %v426, %v425
  %v540 = vpack.c.b16 %v428, %v427
  %v541 = vpack.c.b16 %v430, %v429
  %v542 = vpack.c.b16 %v432, %v431
  %v543 = vpack.c.b16 %v434, %v433
  %v544 = vpack.c.b16 %v436, %v435
  %v545 = vpack.c.b16 %v438, %v437
  %v546 = vpack.c.b16 %v440, %v439
  %v547 = vpack.c.b16 %v442, %v441
  %v548 = vpack.c.b16 %v444, %v443
  %v549 = vpack.c.b16 %v446, %v445
  %v550 = vpack.c.b16 %v448, %v447
  %v551 = vpack.c.b16 %v450, %v449
  %v552 = vpack.c.b16 %v452, %v451
  %v553 = vpack.c.b16 %v454, %v453
  %v554 = vpack.c.b16 %v456, %v455
  %v555 = vpack.c.b16 %v458, %v457
  %v556 = vpack.c.b16 %v460, %v459
  %v557 = vpack.c.b16 %v462, %v461
  %v558 = vpack.c.b16 %v464, %v463
  %v559 = vpack.c.b16 %v466, %v465
  %v560 = vpack.c.b16 %v468, %v467
  %v561 = vpack.c.b16 %v470, %v469
  %v562 = vpack.c.b16 %v472, %v471
  %v563 = vpack.c.b16 %v474, %v473
  %v564 = vpack.c.b16 %v476, %v475
  %v565 = vpack.c.b16 %v478, %v477
  %v566 = vpack.c.b16 %v480, %v479
  %v567 = vpack.c.b16 %v482, %v481
  %v568 = vpack.c.b16 %v484, %v483
  %v569 = vpack.c.b16 %v486, %v485
  %v570 = vpack.c.b16 %v488, %v487
  %v571 = vpack.c.b16 %v490, %v489
  %v572 = vpack.c.b16 %v492, %v491
  %v573 = vpack.c.b16 %v494, %v493
  %v574 = vpack.c.b16 %v496, %v495
  %v575 = vpack.c.b16 %v498, %v497
  %v576 = vpack.c.b16 %v500, %v499
  %v577 = vpack.c.b16 %v502, %v501
  %v578 = vpack.c.b16 %v504, %v503
  %v579 = vpack.c.b16 %v506, %v505
  %v580 = vpack.c.b16 %v508, %v507
  %653 = vmatprep.subr.bf16.mxu0 0
  %654 = vmatpush1.bf16.msra.mxu0 %v516
  %655 = vmatprep.subr.bf16.mxu0 0
  %656 = vmatpush1.bf16.msra.mxu0 %v515
  %657 = vmatprep.subr.bf16.mxu0 0
  %658 = vmatpush1.bf16.msra.mxu0 %v514
  %659 = vmatprep.subr.bf16.mxu0 0
  %660 = vmatpush1.bf16.msra.mxu0 %v513
  %661 = vmatprep.subr.bf16.mxu0 0
  %662 = vmatpush1.bf16.msra.mxu0 %v512
  %663 = vmatprep.subr.bf16.mxu0 0
  %664 = vmatpush1.bf16.msra.mxu0 %v511
  %665 = vmatprep.subr.bf16.mxu0 0
  %666 = vmatpush1.bf16.msra.mxu0 %v510
  %667 = vmatprep.subr.bf16.mxu0 0
  %668 = vmatpush1.bf16.msra.mxu0 %v509
  %669 = vmatprep.subr.bf16.mxu0 0
  %670 = vmatpush2.bf16.msra.mxu0 %v524
  %671 = vmatprep.subr.bf16.mxu0 0
  %672 = vmatpush2.bf16.msra.mxu0 %v523
  %673 = vmatprep.subr.bf16.mxu0 0
  %674 = vmatpush2.bf16.msra.mxu0 %v522
  %675 = vmatprep.subr.bf16.mxu0 0
  %676 = vmatpush2.bf16.msra.mxu0 %v521
  %677 = vmatprep.subr.bf16.mxu0 0
  %678 = vmatpush2.bf16.msra.mxu0 %v520
  %679 = vmatprep.subr.bf16.mxu0 0
  %680 = vmatpush2.bf16.msra.mxu0 %v519
  %681 = vmatprep.subr.bf16.mxu0 0
  %682 = vmatpush2.bf16.msra.mxu0 %v518
  %683 = vmatprep.subr.bf16.mxu0 0
  %684 = vmatpush2.bf16.msra.mxu0 %v517
  %685 = vmatprep.mubr.bf16.mxu0 %v204
  %686 = vmatmul.mubr.bf16.gmra.mxu0 %v203
  %v687 = vpop.f32.mrf.mxu0
  %v688 = vadd.f32 0.0, %v687
  %v689 = vpop.f32.mrf.mxu0
  %v690 = vpop.f32.mrf.mxu0
  %v691 = vadd.f32 0.0, %v690
  %v692 = vpop.f32.mrf.mxu0
  %693 = vdwg.mxu0
  %694 = vmatprep.subr.bf16.mxu0 0
  %695 = vmatpush1.bf16.msra.mxu0 %v532
  %696 = vmatprep.subr.bf16.mxu0 0
  %697 = vmatpush1.bf16.msra.mxu0 %v531
  %698 = vmatprep.subr.bf16.mxu0 0
  %699 = vmatpush1.bf16.msra.mxu0 %v530
  %700 = vmatprep.subr.bf16.mxu0 0
  %701 = vmatpush1.bf16.msra.mxu0 %v529
  %702 = vmatprep.subr.bf16.mxu0 0
  %703 = vmatpush1.bf16.msra.mxu0 %v528
  %704 = vmatprep.subr.bf16.mxu0 0
  %705 = vmatpush1.bf16.msra.mxu0 %v527
  %706 = vmatprep.subr.bf16.mxu0 0
  %707 = vmatpush1.bf16.msra.mxu0 %v526
  %708 = vmatprep.subr.bf16.mxu0 0
  %709 = vmatpush1.bf16.msra.mxu0 %v525
  %710 = vmatprep.subr.bf16.mxu0 0
  %711 = vmatpush2.bf16.msra.mxu0 %v540
  %712 = vmatprep.subr.bf16.mxu0 0
  %713 = vmatpush2.bf16.msra.mxu0 %v539
  %714 = vmatprep.subr.bf16.mxu0 0
  %715 = vmatpush2.bf16.msra.mxu0 %v538
  %716 = vmatprep.subr.bf16.mxu0 0
  %717 = vmatpush2.bf16.msra.mxu0 %v537
  %718 = vmatprep.subr.bf16.mxu0 0
  %719 = vmatpush2.bf16.msra.mxu0 %v536
  %720 = vmatprep.subr.bf16.mxu0 0
  %721 = vmatpush2.bf16.msra.mxu0 %v535
  %722 = vmatprep.subr.bf16.mxu0 0
  %723 = vmatpush2.bf16.msra.mxu0 %v534
  %724 = vmatprep.subr.bf16.mxu0 0
  %725 = vmatpush2.bf16.msra.mxu0 %v533
  %726 = vmatprep.mubr.bf16.mxu0 %v206
  %727 = vmatmul.mubr.bf16.gmra.mxu0 %v205
  %v728 = vpop.f32.mrf.mxu0
  %v729 = vadd.f32 %v688, %v728
  %v730 = vpop.f32.mrf.mxu0
  %v731 = vpop.f32.mrf.mxu0
  %v732 = vadd.f32 %v691, %v731
  %v733 = vpop.f32.mrf.mxu0
  %734 = vdwg.mxu0
  %735 = vmatprep.subr.bf16.mxu0 0
  %736 = vmatpush1.bf16.msra.mxu0 %v548
  %737 = vmatprep.subr.bf16.mxu0 0
  %738 = vmatpush1.bf16.msra.mxu0 %v547
  %739 = vmatprep.subr.bf16.mxu0 0
  %740 = vmatpush1.bf16.msra.mxu0 %v546
  %741 = vmatprep.subr.bf16.mxu0 0
  %742 = vmatpush1.bf16.msra.mxu0 %v545
  %743 = vmatprep.subr.bf16.mxu0 0
  %744 = vmatpush1.bf16.msra.mxu0 %v544
  %745 = vmatprep.subr.bf16.mxu0 0
  %746 = vmatpush1.bf16.msra.mxu0 %v543
  %747 = vmatprep.subr.bf16.mxu0 0
  %748 = vmatpush1.bf16.msra.mxu0 %v542
  %749 = vmatprep.subr.bf16.mxu0 0
  %750 = vmatpush1.bf16.msra.mxu0 %v541
  %751 = vmatprep.subr.bf16.mxu0 0
  %752 = vmatpush2.bf16.msra.mxu0 %v556
  %753 = vmatprep.subr.bf16.mxu0 0
  %754 = vmatpush2.bf16.msra.mxu0 %v555
  %755 = vmatprep.subr.bf16.mxu0 0
  %756 = vmatpush2.bf16.msra.mxu0 %v554
  %757 = vmatprep.subr.bf16.mxu0 0
  %758 = vmatpush2.bf16.msra.mxu0 %v553
  %759 = vmatprep.subr.bf16.mxu0 0
  %760 = vmatpush2.bf16.msra.mxu0 %v552
  %761 = vmatprep.subr.bf16.mxu0 0
  %762 = vmatpush2.bf16.msra.mxu0 %v551
  %763 = vmatprep.subr.bf16.mxu0 0
  %764 = vmatpush2.bf16.msra.mxu0 %v550
  %765 = vmatprep.subr.bf16.mxu0 0
  %766 = vmatpush2.bf16.msra.mxu0 %v549
  %767 = vmatprep.mubr.bf16.mxu0 %v208
  %768 = vmatmul.mubr.bf16.gmra.mxu0 %v207
  %v769 = vpop.f32.mrf.mxu0
  %v770 = vadd.f32 %v729, %v769
  %v771 = vpop.f32.mrf.mxu0
  %v772 = vpop.f32.mrf.mxu0
  %v773 = vadd.f32 %v732, %v772
  %v774 = vpop.f32.mrf.mxu0
  %775 = vdwg.mxu0
  %776 = vmatprep.subr.bf16.mxu0 0
  %777 = vmatpush1.bf16.msra.mxu0 %v564
  %778 = vmatprep.subr.bf16.mxu0 0
  %779 = vmatpush1.bf16.msra.mxu0 %v563
  %780 = vmatprep.subr.bf16.mxu0 0
  %781 = vmatpush1.bf16.msra.mxu0 %v562
  %782 = vmatprep.subr.bf16.mxu0 0
  %783 = vmatpush1.bf16.msra.mxu0 %v561
  %784 = vmatprep.subr.bf16.mxu0 0
  %785 = vmatpush1.bf16.msra.mxu0 %v560
  %786 = vmatprep.subr.bf16.mxu0 0
  %787 = vmatpush1.bf16.msra.mxu0 %v559
  %788 = vmatprep.subr.bf16.mxu0 0
  %789 = vmatpush1.bf16.msra.mxu0 %v558
  %790 = vmatprep.subr.bf16.mxu0 0
  %791 = vmatpush1.bf16.msra.mxu0 %v557
  %792 = vmatprep.subr.bf16.mxu0 0
  %793 = vmatpush2.bf16.msra.mxu0 %v572
  %794 = vmatprep.subr.bf16.mxu0 0
  %795 = vmatpush2.bf16.msra.mxu0 %v571
  %796 = vmatprep.subr.bf16.mxu0 0
  %797 = vmatpush2.bf16.msra.mxu0 %v570
  %798 = vmatprep.subr.bf16.mxu0 0
  %799 = vmatpush2.bf16.msra.mxu0 %v569
  %800 = vmatprep.subr.bf16.mxu0 0
  %801 = vmatpush2.bf16.msra.mxu0 %v568
  %802 = vmatprep.subr.bf16.mxu0 0
  %803 = vmatpush2.bf16.msra.mxu0 %v567
  %804 = vmatprep.subr.bf16.mxu0 0
  %805 = vmatpush2.bf16.msra.mxu0 %v566
  %806 = vmatprep.subr.bf16.mxu0 0
  %807 = vmatpush2.bf16.msra.mxu0 %v565
  %808 = vmatprep.mubr.bf16.mxu0 %v210
  %809 = vmatmul.mubr.bf16.gmra.mxu0 %v209
  %v810 = vpop.f32.mrf.mxu0
  %v811 = vadd.f32 %v770, %v810
  %v812 = vpop.f32.mrf.mxu0
  %v813 = vpop.f32.mrf.mxu0
  %v814 = vadd.f32 %v773, %v813
  %v815 = vpop.f32.mrf.mxu0
  %816 = vdwg.mxu0
  %817 = vmatprep.subr.bf16.mxu0 0
  %818 = vmatpush1.bf16.msra.mxu0 %v580
  %819 = vmatprep.subr.bf16.mxu0 0
  %820 = vmatpush1.bf16.msra.mxu0 %v579
  %821 = vmatprep.subr.bf16.mxu0 0
  %822 = vmatpush1.bf16.msra.mxu0 %v578
  %823 = vmatprep.subr.bf16.mxu0 0
  %824 = vmatpush1.bf16.msra.mxu0 %v577
  %825 = vmatprep.subr.bf16.mxu0 0
  %826 = vmatpush1.bf16.msra.mxu0 %v576
  %827 = vmatprep.subr.bf16.mxu0 0
  %828 = vmatpush1.bf16.msra.mxu0 %v575
  %829 = vmatprep.subr.bf16.mxu0 0
  %830 = vmatpush1.bf16.msra.mxu0 %v574
  %831 = vmatprep.subr.bf16.mxu0 0
  %832 = vmatpush1.bf16.msra.mxu0 %v573
  %833 = vmatprep.subr.bf16.mxu0 0
  %834 = vmatpush2.bf16.msra.mxu0 0
  %835 = vmatprep.subr.bf16.mxu0 0
  %836 = vmatpush2.bf16.msra.mxu0 0
  %837 = vmatprep.subr.bf16.mxu0 0
  %838 = vmatpush2.bf16.msra.mxu0 0
  %839 = vmatprep.subr.bf16.mxu0 0
  %840 = vmatpush2.bf16.msra.mxu0 0
  %841 = vmatprep.subr.bf16.mxu0 0
  %842 = vmatpush2.bf16.msra.mxu0 0
  %843 = vmatprep.subr.bf16.mxu0 0
  %844 = vmatpush2.bf16.msra.mxu0 0
  %845 = vmatprep.subr.bf16.mxu0 0
  %846 = vmatpush2.bf16.msra.mxu0 0
  %847 = vmatprep.subr.bf16.mxu0 0
  %848 = vmatpush2.bf16.msra.mxu0 0
  %849 = vmatprep.mubr.bf16.mxu0 0
  %850 = vmatmul.mubr.bf16.gmra.mxu0 %v211
  %v851 = vpop.f32.mrf.mxu0
  %v852 = vadd.f32 %v811, %v851
  %v853 = vpop.f32.mrf.mxu0
  %v854 = vpop.f32.mrf.mxu0
  %v855 = vadd.f32 %v814, %v854
  %v856 = vpop.f32.mrf.mxu0
  %857 = vdwg.mxu0
  %v858 = vld [vmem:[%s2] sm:$0x1]
  %v860 = vlaneseq
  %v861 = vshrl.u32 %v860, 7
  %v862 = vsub.s32 0, %v861
  %v863 = vrot.slane %v858, %v862
  %v865 = vmul.f32 %v852, %v863
  %v866 = vmul.f32 %v855, %v863
  %v867 = vld [vmem:[%s3] sm:$0x1]
  %v869 = vlaneseq
  %v870 = vshrl.u32 %v869, 7
  %v871 = vsub.s32 0, %v870
  %v872 = vrot.slane %v867, %v871
  %v874 = vadd.f32 %v865, %v872
  %v875 = vadd.f32 %v866, %v872
  %v876 = vld [vmem:[%s4] sm:$0xf]
  %v877 = vld [vmem:[%s4 + $0x4] sm:$0xf]
  %v878 = vunpack.c.l.bf16 %v876
  %v879 = vunpack.c.l.bf16 %v877
  %v880 = vadd.f32 %v874, %v878
  %v881 = vadd.f32 %v875, %v879
  %v882 = vmax.f32 %v880, 0.0
  %v883 = vmax.f32 %v881, 0.0
  %v884 = vpack.c.bf16 %v883, %v882
  %v886 = vunpack.c.l.b16 %v884
  %v887 = vunpack.c.h.b16 %v884
  %v888 = vpack.c.b16 %v886, %v886
  %v889 = vpack.c.b16 %v887, %v887
  %892 = vst [vmem:[%s5] sm:$0xf] %v888
  %893 = vst [vmem:[%s5 + $0x4] sm:$0xf] %v889
  // Predicated region
  $region22: #{resnet_forward.35} parent=0 // pred_check
    _
  $region23: #{resnet_forward.35} parent=0 // pred_check_branch
    %895 = sbr.rel (0) target = $region25
  $region24: #{resnet_forward.35} parent=0 // pred_region
    _
  $region25: #{resnet_forward.35} parent=0 // pred_fallthru
    _
  // Predicated region
  $region26: #{resnet_forward.35} parent=0 // pred_check
    _
  $region27: #{resnet_forward.35} parent=0 // pred_check_branch
    %897 = sbr.rel (0) target = $region29
  $region28: #{resnet_forward.35} parent=0 // pred_region
    _
  $region29: #{resnet_forward.35} parent=0 // pred_fallthru
    _

// kernel: resnet_forward.43
$region0: #{resnet_forward.43}
  #allocation0 [shape = 'u32[]', space=smem, size = 0x4, offset = 0x4, fixed_abs, tag = 'smem constant byte address 0x4 - core index']
  #allocation1 [shape = 'u32[144,128]{1,0:T(1,128)}', space=vmem, size = 0x12000, scoped, tag = 'internal scratch']
  %s0 = inlined_call_operand.vmem [shape: bf16[16,256], index: 0, kind: input, shape index: {}]
  %s1 = inlined_call_operand.vmem [shape: bf16[256,256], index: 1, kind: input, shape index: {}]
  %s2 = inlined_call_operand.vmem [shape: f32[1,256], index: 2, kind: input, shape index: {}]
  %s3 = inlined_call_operand.vmem [shape: f32[1,256], index: 3, kind: input, shape index: {}]
  %s4 = inlined_call_operand.vmem [shape: bf16[256,256], index: 4, kind: input, shape index: {}]
  %s5 = inlined_call_operand.vmem [shape: f32[1,256], index: 5, kind: input, shape index: {}]
  %s6 = inlined_call_operand.vmem [shape: f32[1,256], index: 6, kind: input, shape index: {}]
  %s7 = inlined_call_operand.vmem [shape: bf16[16,256], index: 7, kind: output, shape index: {}]
  %s8 = sld [smem:[#allocation0]]
  $region38: #{resnet_forward.43} parent=0
    _
  %s10 = ssub.s32 1, %s8
  %s11 = scalar_select 0, %s10, %s8
  // Predicated region
  $region2: #{resnet_forward.43} parent=0 // pred_check
    _
  $region3: #{resnet_forward.43} parent=0 // pred_check_branch
    %13 = sbr.rel (0) target = $region5
  $region4: #{resnet_forward.43} parent=0 // pred_region
    _
  $region5: #{resnet_forward.43} parent=0 // pred_fallthru
    _
  // Predicated region
  $region6: #{resnet_forward.43} parent=0 // pred_check
    _
  $region7: #{resnet_forward.43} parent=0 // pred_check_branch
    %15 = sbr.rel (0) target = $region9
  $region8: #{resnet_forward.43} parent=0 // pred_region
    _
  $region9: #{resnet_forward.43} parent=0 // pred_fallthru
    _
  // Predicated region
  $region10: #{resnet_forward.43} parent=0 // pred_check
    _
  $region11: #{resnet_forward.43} parent=0 // pred_check_branch
    %17 = sbr.rel (0) target = $region13
  $region12: #{resnet_forward.43} parent=0 // pred_region
    _
  $region13: #{resnet_forward.43} parent=0 // pred_fallthru
    _
  // Predicated region
  $region14: #{resnet_forward.43} parent=0 // pred_check
    _
  $region15: #{resnet_forward.43} parent=0 // pred_check_branch
    %19 = sbr.rel (0) target = $region17
  $region16: #{resnet_forward.43} parent=0 // pred_region
    _
  $region17: #{resnet_forward.43} parent=0 // pred_fallthru
    _
  // Predicated region
  $region18: #{resnet_forward.43} parent=0 // pred_check
    _
  $region19: #{resnet_forward.43} parent=0 // pred_check_branch
    %21 = sbr.rel (0) target = $region21
  $region20: #{resnet_forward.43} parent=0 // pred_region
    _
  $region21: #{resnet_forward.43} parent=0 // pred_fallthru
    _
  // Predicated region
  $region22: #{resnet_forward.43} parent=0 // pred_check
    _
  $region23: #{resnet_forward.43} parent=0 // pred_check_branch
    %23 = sbr.rel (0) target = $region25
  $region24: #{resnet_forward.43} parent=0 // pred_region
    _
  $region25: #{resnet_forward.43} parent=0 // pred_fallthru
    _
  // Predicated region
  $region26: #{resnet_forward.43} parent=0 // pred_check
    _
  $region27: #{resnet_forward.43} parent=0 // pred_check_branch
    %25 = sbr.rel (0) target = $region29
  $region28: #{resnet_forward.43} parent=0 // pred_region
    _
  $region29: #{resnet_forward.43} parent=0 // pred_fallthru
    _
  %v26 = vld [vmem:[%s0] sm:$0xff]
  %v27 = vld [vmem:[%s0 + $0x8] sm:$0xff]
  %v28 = vld [vmem:[%s1] sm:$0xff]
  %v29 = vld [vmem:[%s1 + $0x8] sm:$0xff]
  %v30 = vld [vmem:[%s1 + $0x10] sm:$0xff]
  %v31 = vld [vmem:[%s1 + $0x18] sm:$0xff]
  %v32 = vld [vmem:[%s1 + $0x20] sm:$0xff]
  %v33 = vld [vmem:[%s1 + $0x28] sm:$0xff]
  %v34 = vld [vmem:[%s1 + $0x30] sm:$0xff]
  %v35 = vld [vmem:[%s1 + $0x38] sm:$0xff]
  %v36 = vld [vmem:[%s1 + $0x40] sm:$0xff]
  %v37 = vld [vmem:[%s1 + $0x48] sm:$0xff]
  %v38 = vld [vmem:[%s1 + $0x50] sm:$0xff]
  %v39 = vld [vmem:[%s1 + $0x58] sm:$0xff]
  %v40 = vld [vmem:[%s1 + $0x60] sm:$0xff]
  %v41 = vld [vmem:[%s1 + $0x68] sm:$0xff]
  %v42 = vld [vmem:[%s1 + $0x70] sm:$0xff]
  %v43 = vld [vmem:[%s1 + $0x78] sm:$0xff]
  %v44 = vld [vmem:[%s1 + $0x80] sm:$0xff]
  %v45 = vld [vmem:[%s1 + $0x88] sm:$0xff]
  %v46 = vld [vmem:[%s1 + $0x90] sm:$0xff]
  %v47 = vld [vmem:[%s1 + $0x98] sm:$0xff]
  %v48 = vld [vmem:[%s1 + $0xa0] sm:$0xff]
  %v49 = vld [vmem:[%s1 + $0xa8] sm:$0xff]
  %v50 = vld [vmem:[%s1 + $0xb0] sm:$0xff]
  %v51 = vld [vmem:[%s1 + $0xb8] sm:$0xff]
  %v52 = vld [vmem:[%s1 + $0xc0] sm:$0xff]
  %v53 = vld [vmem:[%s1 + $0xc8] sm:$0xff]
  %v54 = vld [vmem:[%s1 + $0xd0] sm:$0xff]
  %v55 = vld [vmem:[%s1 + $0xd8] sm:$0xff]
  %v56 = vld [vmem:[%s1 + $0xe0] sm:$0xff]
  %v57 = vld [vmem:[%s1 + $0xe8] sm:$0xff]
  %v58 = vld [vmem:[%s1 + $0xf0] sm:$0xff]
  %v59 = vld [vmem:[%s1 + $0xf8] sm:$0xff]
  %v62 = vunpack.c.l.b16 %v26
  %v63 = vunpack.c.h.b16 %v26
  %v64 = vunpack.c.l.b16 %v27
  %v65 = vunpack.c.h.b16 %v27
  %v66 = vpack.c.b16 %v64, %v62
  %v67 = vpack.c.b16 %v65, %v63
  %v102 = vunpack.c.l.b16 %v28
  %v103 = vunpack.c.h.b16 %v28
  %v104 = vunpack.c.l.b16 %v29
  %v105 = vunpack.c.h.b16 %v29
  %v106 = vunpack.c.l.b16 %v30
  %v107 = vunpack.c.h.b16 %v30
  %v108 = vunpack.c.l.b16 %v31
  %v109 = vunpack.c.h.b16 %v31
  %v110 = vunpack.c.l.b16 %v32
  %v111 = vunpack.c.h.b16 %v32
  %v112 = vunpack.c.l.b16 %v33
  %v113 = vunpack.c.h.b16 %v33
  %v114 = vunpack.c.l.b16 %v34
  %v115 = vunpack.c.h.b16 %v34
  %v116 = vunpack.c.l.b16 %v35
  %v117 = vunpack.c.h.b16 %v35
  %v118 = vunpack.c.l.b16 %v36
  %v119 = vunpack.c.h.b16 %v36
  %v120 = vunpack.c.l.b16 %v37
  %v121 = vunpack.c.h.b16 %v37
  %v122 = vunpack.c.l.b16 %v38
  %v123 = vunpack.c.h.b16 %v38
  %v124 = vunpack.c.l.b16 %v39
  %v125 = vunpack.c.h.b16 %v39
  %v126 = vunpack.c.l.b16 %v40
  %v127 = vunpack.c.h.b16 %v40
  %v128 = vunpack.c.l.b16 %v41
  %v129 = vunpack.c.h.b16 %v41
  %v130 = vunpack.c.l.b16 %v42
  %v131 = vunpack.c.h.b16 %v42
  %v132 = vunpack.c.l.b16 %v43
  %v133 = vunpack.c.h.b16 %v43
  %v134 = vunpack.c.l.b16 %v44
  %v135 = vunpack.c.h.b16 %v44
  %v136 = vunpack.c.l.b16 %v45
  %v137 = vunpack.c.h.b16 %v45
  %v138 = vunpack.c.l.b16 %v46
  %v139 = vunpack.c.h.b16 %v46
  %v140 = vunpack.c.l.b16 %v47
  %v141 = vunpack.c.h.b16 %v47
  %v142 = vunpack.c.l.b16 %v48
  %v143 = vunpack.c.h.b16 %v48
  %v144 = vunpack.c.l.b16 %v49
  %v145 = vunpack.c.h.b16 %v49
  %v146 = vunpack.c.l.b16 %v50
  %v147 = vunpack.c.h.b16 %v50
  %v148 = vunpack.c.l.b16 %v51
  %v149 = vunpack.c.h.b16 %v51
  %v150 = vunpack.c.l.b16 %v52
  %v151 = vunpack.c.h.b16 %v52
  %v152 = vunpack.c.l.b16 %v53
  %v153 = vunpack.c.h.b16 %v53
  %v154 = vunpack.c.l.b16 %v54
  %v155 = vunpack.c.h.b16 %v54
  %v156 = vunpack.c.l.b16 %v55
  %v157 = vunpack.c.h.b16 %v55
  %v158 = vunpack.c.l.b16 %v56
  %v159 = vunpack.c.h.b16 %v56
  %v160 = vunpack.c.l.b16 %v57
  %v161 = vunpack.c.h.b16 %v57
  %v162 = vunpack.c.l.b16 %v58
  %v163 = vunpack.c.h.b16 %v58
  %v164 = vunpack.c.l.b16 %v59
  %v165 = vunpack.c.h.b16 %v59
  %v166 = vpack.c.b16 %v104, %v102
  %v167 = vpack.c.b16 %v105, %v103
  %v168 = vpack.c.b16 %v108, %v106
  %v169 = vpack.c.b16 %v109, %v107
  %v170 = vpack.c.b16 %v112, %v110
  %v171 = vpack.c.b16 %v113, %v111
  %v172 = vpack.c.b16 %v116, %v114
  %v173 = vpack.c.b16 %v117, %v115
  %v174 = vpack.c.b16 %v120, %v118
  %v175 = vpack.c.b16 %v121, %v119
  %v176 = vpack.c.b16 %v124, %v122
  %v177 = vpack.c.b16 %v125, %v123
  %v178 = vpack.c.b16 %v128, %v126
  %v179 = vpack.c.b16 %v129, %v127
  %v180 = vpack.c.b16 %v132, %v130
  %v181 = vpack.c.b16 %v133, %v131
  %v182 = vpack.c.b16 %v136, %v134
  %v183 = vpack.c.b16 %v137, %v135
  %v184 = vpack.c.b16 %v140, %v138
  %v185 = vpack.c.b16 %v141, %v139
  %v186 = vpack.c.b16 %v144, %v142
  %v187 = vpack.c.b16 %v145, %v143
  %v188 = vpack.c.b16 %v148, %v146
  %v189 = vpack.c.b16 %v149, %v147
  %v190 = vpack.c.b16 %v152, %v150
  %v191 = vpack.c.b16 %v153, %v151
  %v192 = vpack.c.b16 %v156, %v154
  %v193 = vpack.c.b16 %v157, %v155
  %v194 = vpack.c.b16 %v160, %v158
  %v195 = vpack.c.b16 %v161, %v159
  %v196 = vpack.c.b16 %v164, %v162
  %v197 = vpack.c.b16 %v165, %v163
  %230 = vmatprep.subr.bf16.mxu0 %v181
  %231 = vmatpush1.bf16.msra.mxu0 %v180
  %232 = vmatprep.subr.bf16.mxu0 %v179
  %233 = vmatpush1.bf16.msra.mxu0 %v178
  %234 = vmatprep.subr.bf16.mxu0 %v177
  %235 = vmatpush1.bf16.msra.mxu0 %v176
  %236 = vmatprep.subr.bf16.mxu0 %v175
  %237 = vmatpush1.bf16.msra.mxu0 %v174
  %238 = vmatprep.subr.bf16.mxu0 %v173
  %239 = vmatpush1.bf16.msra.mxu0 %v172
  %240 = vmatprep.subr.bf16.mxu0 %v171
  %241 = vmatpush1.bf16.msra.mxu0 %v170
  %242 = vmatprep.subr.bf16.mxu0 %v169
  %243 = vmatpush1.bf16.msra.mxu0 %v168
  %244 = vmatprep.subr.bf16.mxu0 %v167
  %245 = vmatpush1.bf16.msra.mxu0 %v166
  %246 = vmatprep.subr.bf16.mxu0 %v197
  %247 = vmatpush2.bf16.msra.mxu0 %v196
  %248 = vmatprep.subr.bf16.mxu0 %v195
  %249 = vmatpush2.bf16.msra.mxu0 %v194
  %250 = vmatprep.subr.bf16.mxu0 %v193
  %251 = vmatpush2.bf16.msra.mxu0 %v192
  %252 = vmatprep.subr.bf16.mxu0 %v191
  %253 = vmatpush2.bf16.msra.mxu0 %v190
  %254 = vmatprep.subr.bf16.mxu0 %v189
  %255 = vmatpush2.bf16.msra.mxu0 %v188
  %256 = vmatprep.subr.bf16.mxu0 %v187
  %257 = vmatpush2.bf16.msra.mxu0 %v186
  %258 = vmatprep.subr.bf16.mxu0 %v185
  %259 = vmatpush2.bf16.msra.mxu0 %v184
  %260 = vmatprep.subr.bf16.mxu0 %v183
  %261 = vmatpush2.bf16.msra.mxu0 %v182
  %262 = vmatprep.mubr.bf16.mxu0 %v67
  %263 = vmatmul.mubr.bf16.gmra.mxu0 %v66
  %v264 = vpop.f32.mrf.mxu0
  %v265 = vadd.f32 0.0, %v264
  %v266 = vpop.f32.mrf.mxu0
  %v267 = vadd.f32 0.0, %v266
  %v268 = vpop.f32.mrf.mxu0
  %v269 = vadd.f32 0.0, %v268
  %v270 = vpop.f32.mrf.mxu0
  %v271 = vadd.f32 0.0, %v270
  %272 = vdwg.mxu0
  %v273 = vld [vmem:[%s2] sm:$0x3]
  %v275 = vlaneseq
  %v276 = vshrl.u32 %v275, 7
  %v277 = vsub.s32 0, %v276
  %v278 = vrot.slane %v273, %v277
  %v279 = vlaneseq
  %v280 = vshrl.u32 %v279, 7
  %v281 = vsub.s32 1, %v280
  %v282 = vrot.slane %v273, %v281
  %v285 = vmul.f32 %v265, %v278
  %v286 = vmul.f32 %v267, %v282
  %v287 = vmul.f32 %v269, %v278
  %v288 = vmul.f32 %v271, %v282
  %v289 = vld [vmem:[%s3] sm:$0x3]
  %v291 = vlaneseq
  %v292 = vshrl.u32 %v291, 7
  %v293 = vsub.s32 0, %v292
  %v294 = vrot.slane %v289, %v293
  %v295 = vlaneseq
  %v296 = vshrl.u32 %v295, 7
  %v297 = vsub.s32 1, %v296
  %v298 = vrot.slane %v289, %v297
  %v301 = vadd.f32 %v285, %v294
  %v302 = vadd.f32 %v286, %v298
  %v303 = vadd.f32 %v287, %v294
  %v304 = vadd.f32 %v288, %v298
  %v305 = vmax.f32 %v301, 0.0
  %v306 = vmax.f32 %v302, 0.0
  %v307 = vmax.f32 %v303, 0.0
  %v308 = vmax.f32 %v304, 0.0
  %v309 = vpack.c.bf16 %v307, %v305
  %v310 = vpack.c.bf16 %v308, %v306
  %v311 = vld [vmem:[%s4] sm:$0xff]
  %v312 = vld [vmem:[%s4 + $0x8] sm:$0xff]
  %v313 = vld [vmem:[%s4 + $0x10] sm:$0xff]
  %v314 = vld [vmem:[%s4 + $0x18] sm:$0xff]
  %v315 = vld [vmem:[%s4 + $0x20] sm:$0xff]
  %v316 = vld [vmem:[%s4 + $0x28] sm:$0xff]
  %v317 = vld [vmem:[%s4 + $0x30] sm:$0xff]
  %v318 = vld [vmem:[%s4 + $0x38] sm:$0xff]
  %v319 = vld [vmem:[%s4 + $0x40] sm:$0xff]
  %v320 = vld [vmem:[%s4 + $0x48] sm:$0xff]
  %v321 = vld [vmem:[%s4 + $0x50] sm:$0xff]
  %v322 = vld [vmem:[%s4 + $0x58] sm:$0xff]
  %v323 = vld [vmem:[%s4 + $0x60] sm:$0xff]
  %v324 = vld [vmem:[%s4 + $0x68] sm:$0xff]
  %v325 = vld [vmem:[%s4 + $0x70] sm:$0xff]
  %v326 = vld [vmem:[%s4 + $0x78] sm:$0xff]
  %v327 = vld [vmem:[%s4 + $0x80] sm:$0xff]
  %v328 = vld [vmem:[%s4 + $0x88] sm:$0xff]
  %v329 = vld [vmem:[%s4 + $0x90] sm:$0xff]
  %v330 = vld [vmem:[%s4 + $0x98] sm:$0xff]
  %v331 = vld [vmem:[%s4 + $0xa0] sm:$0xff]
  %v332 = vld [vmem:[%s4 + $0xa8] sm:$0xff]
  %v333 = vld [vmem:[%s4 + $0xb0] sm:$0xff]
  %v334 = vld [vmem:[%s4 + $0xb8] sm:$0xff]
  %v335 = vld [vmem:[%s4 + $0xc0] sm:$0xff]
  %v336 = vld [vmem:[%s4 + $0xc8] sm:$0xff]
  %v337 = vld [vmem:[%s4 + $0xd0] sm:$0xff]
  %v338 = vld [vmem:[%s4 + $0xd8] sm:$0xff]
  %v339 = vld [vmem:[%s4 + $0xe0] sm:$0xff]
  %v340 = vld [vmem:[%s4 + $0xe8] sm:$0xff]
  %v341 = vld [vmem:[%s4 + $0xf0] sm:$0xff]
  %v342 = vld [vmem:[%s4 + $0xf8] sm:$0xff]
  %v375 = vunpack.c.l.b16 %v311
  %v376 = vunpack.c.h.b16 %v311
  %v377 = vunpack.c.l.b16 %v312
  %v378 = vunpack.c.h.b16 %v312
  %v379 = vunpack.c.l.b16 %v313
  %v380 = vunpack.c.h.b16 %v313
  %v381 = vunpack.c.l.b16 %v314
  %v382 = vunpack.c.h.b16 %v314
  %v383 = vunpack.c.l.b16 %v315
  %v384 = vunpack.c.h.b16 %v315
  %v385 = vunpack.c.l.b16 %v316
  %v386 = vunpack.c.h.b16 %v316
  %v387 = vunpack.c.l.b16 %v317
  %v388 = vunpack.c.h.b16 %v317
  %v389 = vunpack.c.l.b16 %v318
  %v390 = vunpack.c.h.b16 %v318
  %v391 = vunpack.c.l.b16 %v319
  %v392 = vunpack.c.h.b16 %v319
  %v393 = vunpack.c.l.b16 %v320
  %v394 = vunpack.c.h.b16 %v320
  %v395 = vunpack.c.l.b16 %v321
  %v396 = vunpack.c.h.b16 %v321
  %v397 = vunpack.c.l.b16 %v322
  %v398 = vunpack.c.h.b16 %v322
  %v399 = vunpack.c.l.b16 %v323
  %v400 = vunpack.c.h.b16 %v323
  %v401 = vunpack.c.l.b16 %v324
  %v402 = vunpack.c.h.b16 %v324
  %v403 = vunpack.c.l.b16 %v325
  %v404 = vunpack.c.h.b16 %v325
  %v405 = vunpack.c.l.b16 %v326
  %v406 = vunpack.c.h.b16 %v326
  %v407 = vunpack.c.l.b16 %v327
  %v408 = vunpack.c.h.b16 %v327
  %v409 = vunpack.c.l.b16 %v328
  %v410 = vunpack.c.h.b16 %v328
  %v411 = vunpack.c.l.b16 %v329
  %v412 = vunpack.c.h.b16 %v329
  %v413 = vunpack.c.l.b16 %v330
  %v414 = vunpack.c.h.b16 %v330
  %v415 = vunpack.c.l.b16 %v331
  %v416 = vunpack.c.h.b16 %v331
  %v417 = vunpack.c.l.b16 %v332
  %v418 = vunpack.c.h.b16 %v332
  %v419 = vunpack.c.l.b16 %v333
  %v420 = vunpack.c.h.b16 %v333
  %v421 = vunpack.c.l.b16 %v334
  %v422 = vunpack.c.h.b16 %v334
  %v423 = vunpack.c.l.b16 %v335
  %v424 = vunpack.c.h.b16 %v335
  %v425 = vunpack.c.l.b16 %v336
  %v426 = vunpack.c.h.b16 %v336
  %v427 = vunpack.c.l.b16 %v337
  %v428 = vunpack.c.h.b16 %v337
  %v429 = vunpack.c.l.b16 %v338
  %v430 = vunpack.c.h.b16 %v338
  %v431 = vunpack.c.l.b16 %v339
  %v432 = vunpack.c.h.b16 %v339
  %v433 = vunpack.c.l.b16 %v340
  %v434 = vunpack.c.h.b16 %v340
  %v435 = vunpack.c.l.b16 %v341
  %v436 = vunpack.c.h.b16 %v341
  %v437 = vunpack.c.l.b16 %v342
  %v438 = vunpack.c.h.b16 %v342
  %v439 = vpack.c.b16 %v377, %v375
  %v440 = vpack.c.b16 %v378, %v376
  %v441 = vpack.c.b16 %v381, %v379
  %v442 = vpack.c.b16 %v382, %v380
  %v443 = vpack.c.b16 %v385, %v383
  %v444 = vpack.c.b16 %v386, %v384
  %v445 = vpack.c.b16 %v389, %v387
  %v446 = vpack.c.b16 %v390, %v388
  %v447 = vpack.c.b16 %v393, %v391
  %v448 = vpack.c.b16 %v394, %v392
  %v449 = vpack.c.b16 %v397, %v395
  %v450 = vpack.c.b16 %v398, %v396
  %v451 = vpack.c.b16 %v401, %v399
  %v452 = vpack.c.b16 %v402, %v400
  %v453 = vpack.c.b16 %v405, %v403
  %v454 = vpack.c.b16 %v406, %v404
  %v455 = vpack.c.b16 %v409, %v407
  %v456 = vpack.c.b16 %v410, %v408
  %v457 = vpack.c.b16 %v413, %v411
  %v458 = vpack.c.b16 %v414, %v412
  %v459 = vpack.c.b16 %v417, %v415
  %v460 = vpack.c.b16 %v418, %v416
  %v461 = vpack.c.b16 %v421, %v419
  %v462 = vpack.c.b16 %v422, %v420
  %v463 = vpack.c.b16 %v425, %v423
  %v464 = vpack.c.b16 %v426, %v424
  %v465 = vpack.c.b16 %v429, %v427
  %v466 = vpack.c.b16 %v430, %v428
  %v467 = vpack.c.b16 %v433, %v431
  %v468 = vpack.c.b16 %v434, %v432
  %v469 = vpack.c.b16 %v437, %v435
  %v470 = vpack.c.b16 %v438, %v436
  %503 = vmatprep.subr.bf16.mxu0 %v454
  %504 = vmatpush1.bf16.msra.mxu0 %v453
  %505 = vmatprep.subr.bf16.mxu0 %v452
  %506 = vmatpush1.bf16.msra.mxu0 %v451
  %507 = vmatprep.subr.bf16.mxu0 %v450
  %508 = vmatpush1.bf16.msra.mxu0 %v449
  %509 = vmatprep.subr.bf16.mxu0 %v448
  %510 = vmatpush1.bf16.msra.mxu0 %v447
  %511 = vmatprep.subr.bf16.mxu0 %v446
  %512 = vmatpush1.bf16.msra.mxu0 %v445
  %513 = vmatprep.subr.bf16.mxu0 %v444
  %514 = vmatpush1.bf16.msra.mxu0 %v443
  %515 = vmatprep.subr.bf16.mxu0 %v442
  %516 = vmatpush1.bf16.msra.mxu0 %v441
  %517 = vmatprep.subr.bf16.mxu0 %v440
  %518 = vmatpush1.bf16.msra.mxu0 %v439
  %519 = vmatprep.subr.bf16.mxu0 %v470
  %520 = vmatpush2.bf16.msra.mxu0 %v469
  %521 = vmatprep.subr.bf16.mxu0 %v468
  %522 = vmatpush2.bf16.msra.mxu0 %v467
  %523 = vmatprep.subr.bf16.mxu0 %v466
  %524 = vmatpush2.bf16.msra.mxu0 %v465
  %525 = vmatprep.subr.bf16.mxu0 %v464
  %526 = vmatpush2.bf16.msra.mxu0 %v463
  %527 = vmatprep.subr.bf16.mxu0 %v462
  %528 = vmatpush2.bf16.msra.mxu0 %v461
  %529 = vmatprep.subr.bf16.mxu0 %v460
  %530 = vmatpush2.bf16.msra.mxu0 %v459
  %531 = vmatprep.subr.bf16.mxu0 %v458
  %532 = vmatpush2.bf16.msra.mxu0 %v457
  %533 = vmatprep.subr.bf16.mxu0 %v456
  %534 = vmatpush2.bf16.msra.mxu0 %v455
  %535 = vmatprep.mubr.bf16.mxu0 %v310
  %536 = vmatmul.mubr.bf16.gmra.mxu0 %v309
  %v537 = vpop.f32.mrf.mxu0
  %v538 = vadd.f32 0.0, %v537
  %v539 = vpop.f32.mrf.mxu0
  %v540 = vadd.f32 0.0, %v539
  %v541 = vpop.f32.mrf.mxu0
  %v542 = vadd.f32 0.0, %v541
  %v543 = vpop.f32.mrf.mxu0
  %v544 = vadd.f32 0.0, %v543
  %545 = vdwg.mxu0
  %v546 = vld [vmem:[%s5] sm:$0x3]
  %v548 = vlaneseq
  %v549 = vshrl.u32 %v548, 7
  %v550 = vsub.s32 0, %v549
  %v551 = vrot.slane %v546, %v550
  %v552 = vlaneseq
  %v553 = vshrl.u32 %v552, 7
  %v554 = vsub.s32 1, %v553
  %v555 = vrot.slane %v546, %v554
  %v558 = vmul.f32 %v538, %v551
  %v559 = vmul.f32 %v540, %v555
  %v560 = vmul.f32 %v542, %v551
  %v561 = vmul.f32 %v544, %v555
  %v562 = vld [vmem:[%s6] sm:$0x3]
  %v564 = vlaneseq
  %v565 = vshrl.u32 %v564, 7
  %v566 = vsub.s32 0, %v565
  %v567 = vrot.slane %v562, %v566
  %v568 = vlaneseq
  %v569 = vshrl.u32 %v568, 7
  %v570 = vsub.s32 1, %v569
  %v571 = vrot.slane %v562, %v570
  %v574 = vadd.f32 %v558, %v567
  %v575 = vadd.f32 %v559, %v571
  %v576 = vadd.f32 %v560, %v567
  %v577 = vadd.f32 %v561, %v571
  %v578 = vunpack.c.l.bf16 %v26
  %v579 = vunpack.c.h.bf16 %v26
  %v580 = vunpack.c.l.bf16 %v27
  %v581 = vunpack.c.h.bf16 %v27
  %v582 = vadd.f32 %v574, %v578
  %v583 = vadd.f32 %v575, %v579
  %v584 = vadd.f32 %v576, %v580
  %v585 = vadd.f32 %v577, %v581
  %v586 = vmax.f32 %v582, 0.0
  %v587 = vmax.f32 %v583, 0.0
  %v588 = vmax.f32 %v584, 0.0
  %v589 = vmax.f32 %v585, 0.0
  %v590 = vpack.c.bf16 %v588, %v586
  %v591 = vpack.c.bf16 %v589, %v587
  %v594 = vunpack.c.l.b16 %v590
  %v595 = vunpack.c.l.b16 %v591
  %v596 = vunpack.c.h.b16 %v590
  %v597 = vunpack.c.h.b16 %v591
  %v598 = vpack.c.b16 %v595, %v594
  %v599 = vpack.c.b16 %v597, %v596
  %602 = vst [vmem:[%s7] sm:$0xff] %v598
  %603 = vst [vmem:[%s7 + $0x8] sm:$0xff] %v599
  // Predicated region
  $region30: #{resnet_forward.43} parent=0 // pred_check
    _
  $region31: #{resnet_forward.43} parent=0 // pred_check_branch
    %605 = sbr.rel (0) target = $region33
  $region32: #{resnet_forward.43} parent=0 // pred_region
    _
  $region33: #{resnet_forward.43} parent=0 // pred_fallthru
    _
  // Predicated region
  $region34: #{resnet_forward.43} parent=0 // pred_check
    _
  $region35: #{resnet_forward.43} parent=0 // pred_check_branch
    %607 = sbr.rel (0) target = $region37
  $region36: #{resnet_forward.43} parent=0 // pred_region
    _
  $region37: #{resnet_forward.43} parent=0 // pred_fallthru
    _

// kernel: resnet_forward.42
$region0: #{resnet_forward.42}
  #allocation0 [shape = 'u32[]', space=smem, size = 0x4, offset = 0x4, fixed_abs, tag = 'smem constant byte address 0x4 - core index']
  #allocation1 [shape = 'u32[144,128]{1,0:T(1,128)}', space=vmem, size = 0x12000, scoped, tag = 'internal scratch']
  %s0 = inlined_call_operand.vmem [shape: bf16[16,512], index: 0, kind: input, shape index: {}]
  %s1 = inlined_call_operand.vmem [shape: bf16[512,256], index: 1, kind: input, shape index: {}]
  %s2 = inlined_call_operand.vmem [shape: f32[1,256], index: 2, kind: input, shape index: {}]
  %s3 = inlined_call_operand.vmem [shape: f32[1,256], index: 3, kind: input, shape index: {}]
  %s4 = inlined_call_operand.vmem [shape: bf16[256,256], index: 4, kind: input, shape index: {}]
  %s5 = inlined_call_operand.vmem [shape: f32[1,256], index: 5, kind: input, shape index: {}]
  %s6 = inlined_call_operand.vmem [shape: f32[1,256], index: 6, kind: input, shape index: {}]
  %s7 = inlined_call_operand.vmem [shape: bf16[16,128], index: 7, kind: input, shape index: {}]
  %s8 = inlined_call_operand.vmem [shape: bf16[128,256], index: 8, kind: input, shape index: {}]
  %s9 = inlined_call_operand.vmem [shape: f32[1,256], index: 9, kind: input, shape index: {}]
  %s10 = inlined_call_operand.vmem [shape: f32[1,256], index: 10, kind: input, shape index: {}]
  %s11 = inlined_call_operand.vmem [shape: bf16[16,256], index: 11, kind: output, shape index: {}]
  %s12 = sld [smem:[#allocation0]]
  $region54: #{resnet_forward.42} parent=0
    _
  %s14 = ssub.s32 1, %s12
  %s15 = scalar_select 0, %s14, %s12
  // Predicated region
  $region2: #{resnet_forward.42} parent=0 // pred_check
    _
  $region3: #{resnet_forward.42} parent=0 // pred_check_branch
    %17 = sbr.rel (0) target = $region5
  $region4: #{resnet_forward.42} parent=0 // pred_region
    _
  $region5: #{resnet_forward.42} parent=0 // pred_fallthru
    _
  // Predicated region
  $region6: #{resnet_forward.42} parent=0 // pred_check
    _
  $region7: #{resnet_forward.42} parent=0 // pred_check_branch
    %19 = sbr.rel (0) target = $region9
  $region8: #{resnet_forward.42} parent=0 // pred_region
    _
  $region9: #{resnet_forward.42} parent=0 // pred_fallthru
    _
  // Predicated region
  $region10: #{resnet_forward.42} parent=0 // pred_check
    _
  $region11: #{resnet_forward.42} parent=0 // pred_check_branch
    %21 = sbr.rel (0) target = $region13
  $region12: #{resnet_forward.42} parent=0 // pred_region
    _
  $region13: #{resnet_forward.42} parent=0 // pred_fallthru
    _
  // Predicated region
  $region14: #{resnet_forward.42} parent=0 // pred_check
    _
  $region15: #{resnet_forward.42} parent=0 // pred_check_branch
    %23 = sbr.rel (0) target = $region17
  $region16: #{resnet_forward.42} parent=0 // pred_region
    _
  $region17: #{resnet_forward.42} parent=0 // pred_fallthru
    _
  // Predicated region
  $region18: #{resnet_forward.42} parent=0 // pred_check
    _
  $region19: #{resnet_forward.42} parent=0 // pred_check_branch
    %25 = sbr.rel (0) target = $region21
  $region20: #{resnet_forward.42} parent=0 // pred_region
    _
  $region21: #{resnet_forward.42} parent=0 // pred_fallthru
    _
  // Predicated region
  $region22: #{resnet_forward.42} parent=0 // pred_check
    _
  $region23: #{resnet_forward.42} parent=0 // pred_check_branch
    %27 = sbr.rel (0) target = $region25
  $region24: #{resnet_forward.42} parent=0 // pred_region
    _
  $region25: #{resnet_forward.42} parent=0 // pred_fallthru
    _
  // Predicated region
  $region26: #{resnet_forward.42} parent=0 // pred_check
    _
  $region27: #{resnet_forward.42} parent=0 // pred_check_branch
    %29 = sbr.rel (0) target = $region29
  $region28: #{resnet_forward.42} parent=0 // pred_region
    _
  $region29: #{resnet_forward.42} parent=0 // pred_fallthru
    _
  // Predicated region
  $region30: #{resnet_forward.42} parent=0 // pred_check
    _
  $region31: #{resnet_forward.42} parent=0 // pred_check_branch
    %31 = sbr.rel (0) target = $region33
  $region32: #{resnet_forward.42} parent=0 // pred_region
    _
  $region33: #{resnet_forward.42} parent=0 // pred_fallthru
    _
  // Predicated region
  $region34: #{resnet_forward.42} parent=0 // pred_check
    _
  $region35: #{resnet_forward.42} parent=0 // pred_check_branch
    %33 = sbr.rel (0) target = $region37
  $region36: #{resnet_forward.42} parent=0 // pred_region
    _
  $region37: #{resnet_forward.42} parent=0 // pred_fallthru
    _
  // Predicated region
  $region38: #{resnet_forward.42} parent=0 // pred_check
    _
  $region39: #{resnet_forward.42} parent=0 // pred_check_branch
    %35 = sbr.rel (0) target = $region41
  $region40: #{resnet_forward.42} parent=0 // pred_region
    _
  $region41: #{resnet_forward.42} parent=0 // pred_fallthru
    _
  // Predicated region
  $region42: #{resnet_forward.42} parent=0 // pred_check
    _
  $region43: #{resnet_forward.42} parent=0 // pred_check_branch
    %37 = sbr.rel (0) target = $region45
  $region44: #{resnet_forward.42} parent=0 // pred_region
    _
  $region45: #{resnet_forward.42} parent=0 // pred_fallthru
    _
  %v39 = vld [vmem:[%s0] sm:$0xff]
  %v40 = vld [vmem:[%s0 + $0x8] sm:$0xff]
  %v41 = vld [vmem:[%s0 + $0x10] sm:$0xff]
  %v42 = vld [vmem:[%s0 + $0x18] sm:$0xff]
  %v43 = vld [vmem:[%s1] sm:$0xff]
  %v44 = vld [vmem:[%s1 + $0x8] sm:$0xff]
  %v45 = vld [vmem:[%s1 + $0x10] sm:$0xff]
  %v46 = vld [vmem:[%s1 + $0x18] sm:$0xff]
  %v47 = vld [vmem:[%s1 + $0x20] sm:$0xff]
  %v48 = vld [vmem:[%s1 + $0x28] sm:$0xff]
  %v49 = vld [vmem:[%s1 + $0x30] sm:$0xff]
  %v50 = vld [vmem:[%s1 + $0x38] sm:$0xff]
  %v51 = vld [vmem:[%s1 + $0x40] sm:$0xff]
  %v52 = vld [vmem:[%s1 + $0x48] sm:$0xff]
  %v53 = vld [vmem:[%s1 + $0x50] sm:$0xff]
  %v54 = vld [vmem:[%s1 + $0x58] sm:$0xff]
  %v55 = vld [vmem:[%s1 + $0x60] sm:$0xff]
  %v56 = vld [vmem:[%s1 + $0x68] sm:$0xff]
  %v57 = vld [vmem:[%s1 + $0x70] sm:$0xff]
  %v58 = vld [vmem:[%s1 + $0x78] sm:$0xff]
  %v59 = vld [vmem:[%s1 + $0x80] sm:$0xff]
  %v60 = vld [vmem:[%s1 + $0x88] sm:$0xff]
  %v61 = vld [vmem:[%s1 + $0x90] sm:$0xff]
  %v62 = vld [vmem:[%s1 + $0x98] sm:$0xff]
  %v63 = vld [vmem:[%s1 + $0xa0] sm:$0xff]
  %v64 = vld [vmem:[%s1 + $0xa8] sm:$0xff]
  %v65 = vld [vmem:[%s1 + $0xb0] sm:$0xff]
  %v66 = vld [vmem:[%s1 + $0xb8] sm:$0xff]
  %v67 = vld [vmem:[%s1 + $0xc0] sm:$0xff]
  %v68 = vld [vmem:[%s1 + $0xc8] sm:$0xff]
  %v69 = vld [vmem:[%s1 + $0xd0] sm:$0xff]
  %v70 = vld [vmem:[%s1 + $0xd8] sm:$0xff]
  %v71 = vld [vmem:[%s1 + $0xe0] sm:$0xff]
  %v72 = vld [vmem:[%s1 + $0xe8] sm:$0xff]
  %v73 = vld [vmem:[%s1 + $0xf0] sm:$0xff]
  %v74 = vld [vmem:[%s1 + $0xf8] sm:$0xff]
  %v75 = vld [vmem:[%s1 + $0x100] sm:$0xff]
  %v76 = vld [vmem:[%s1 + $0x108] sm:$0xff]
  %v77 = vld [vmem:[%s1 + $0x110] sm:$0xff]
  %v78 = vld [vmem:[%s1 + $0x118] sm:$0xff]
  %v79 = vld [vmem:[%s1 + $0x120] sm:$0xff]
  %v80 = vld [vmem:[%s1 + $0x128] sm:$0xff]
  %v81 = vld [vmem:[%s1 + $0x130] sm:$0xff]
  %v82 = vld [vmem:[%s1 + $0x138] sm:$0xff]
  %v83 = vld [vmem:[%s1 + $0x140] sm:$0xff]
  %v84 = vld [vmem:[%s1 + $0x148] sm:$0xff]
  %v85 = vld [vmem:[%s1 + $0x150] sm:$0xff]
  %v86 = vld [vmem:[%s1 + $0x158] sm:$0xff]
  %v87 = vld [vmem:[%s1 + $0x160] sm:$0xff]
  %v88 = vld [vmem:[%s1 + $0x168] sm:$0xff]
  %v89 = vld [vmem:[%s1 + $0x170] sm:$0xff]
  %v90 = vld [vmem:[%s1 + $0x178] sm:$0xff]
  %v91 = vld [vmem:[%s1 + $0x180] sm:$0xff]
  %v92 = vld [vmem:[%s1 + $0x188] sm:$0xff]
  %v93 = vld [vmem:[%s1 + $0x190] sm:$0xff]
  %v94 = vld [vmem:[%s1 + $0x198] sm:$0xff]
  %v95 = vld [vmem:[%s1 + $0x1a0] sm:$0xff]
  %v96 = vld [vmem:[%s1 + $0x1a8] sm:$0xff]
  %v97 = vld [vmem:[%s1 + $0x1b0] sm:$0xff]
  %v98 = vld [vmem:[%s1 + $0x1b8] sm:$0xff]
  %v99 = vld [vmem:[%s1 + $0x1c0] sm:$0xff]
  %v100 = vld [vmem:[%s1 + $0x1c8] sm:$0xff]
  %v101 = vld [vmem:[%s1 + $0x1d0] sm:$0xff]
  %v102 = vld [vmem:[%s1 + $0x1d8] sm:$0xff]
  %v103 = vld [vmem:[%s1 + $0x1e0] sm:$0xff]
  %v104 = vld [vmem:[%s1 + $0x1e8] sm:$0xff]
  %v105 = vld [vmem:[%s1 + $0x1f0] sm:$0xff]
  %v106 = vld [vmem:[%s1 + $0x1f8] sm:$0xff]
  %v111 = vunpack.c.l.b16 %v39
  %v112 = vunpack.c.h.b16 %v39
  %v113 = vunpack.c.l.b16 %v40
  %v114 = vunpack.c.h.b16 %v40
  %v115 = vunpack.c.l.b16 %v41
  %v116 = vunpack.c.h.b16 %v41
  %v117 = vunpack.c.l.b16 %v42
  %v118 = vunpack.c.h.b16 %v42
  %v119 = vpack.c.b16 %v115, %v111
  %v120 = vpack.c.b16 %v116, %v112
  %v121 = vpack.c.b16 %v117, %v113
  %v122 = vpack.c.b16 %v118, %v114
  %v191 = vunpack.c.l.b16 %v43
  %v192 = vunpack.c.h.b16 %v43
  %v193 = vunpack.c.l.b16 %v44
  %v194 = vunpack.c.h.b16 %v44
  %v195 = vunpack.c.l.b16 %v45
  %v196 = vunpack.c.h.b16 %v45
  %v197 = vunpack.c.l.b16 %v46
  %v198 = vunpack.c.h.b16 %v46
  %v199 = vunpack.c.l.b16 %v47
  %v200 = vunpack.c.h.b16 %v47
  %v201 = vunpack.c.l.b16 %v48
  %v202 = vunpack.c.h.b16 %v48
  %v203 = vunpack.c.l.b16 %v49
  %v204 = vunpack.c.h.b16 %v49
  %v205 = vunpack.c.l.b16 %v50
  %v206 = vunpack.c.h.b16 %v50
  %v207 = vunpack.c.l.b16 %v51
  %v208 = vunpack.c.h.b16 %v51
  %v209 = vunpack.c.l.b16 %v52
  %v210 = vunpack.c.h.b16 %v52
  %v211 = vunpack.c.l.b16 %v53
  %v212 = vunpack.c.h.b16 %v53
  %v213 = vunpack.c.l.b16 %v54
  %v214 = vunpack.c.h.b16 %v54
  %v215 = vunpack.c.l.b16 %v55
  %v216 = vunpack.c.h.b16 %v55
  %v217 = vunpack.c.l.b16 %v56
  %v218 = vunpack.c.h.b16 %v56
  %v219 = vunpack.c.l.b16 %v57
  %v220 = vunpack.c.h.b16 %v57
  %v221 = vunpack.c.l.b16 %v58
  %v222 = vunpack.c.h.b16 %v58
  %v223 = vunpack.c.l.b16 %v59
  %v224 = vunpack.c.h.b16 %v59
  %v225 = vunpack.c.l.b16 %v60
  %v226 = vunpack.c.h.b16 %v60
  %v227 = vunpack.c.l.b16 %v61
  %v228 = vunpack.c.h.b16 %v61
  %v229 = vunpack.c.l.b16 %v62
  %v230 = vunpack.c.h.b16 %v62
  %v231 = vunpack.c.l.b16 %v63
  %v232 = vunpack.c.h.b16 %v63
  %v233 = vunpack.c.l.b16 %v64
  %v234 = vunpack.c.h.b16 %v64
  %v235 = vunpack.c.l.b16 %v65
  %v236 = vunpack.c.h.b16 %v65
  %v237 = vunpack.c.l.b16 %v66
  %v238 = vunpack.c.h.b16 %v66
  %v239 = vunpack.c.l.b16 %v67
  %v240 = vunpack.c.h.b16 %v67
  %v241 = vunpack.c.l.b16 %v68
  %v242 = vunpack.c.h.b16 %v68
  %v243 = vunpack.c.l.b16 %v69
  %v244 = vunpack.c.h.b16 %v69
  %v245 = vunpack.c.l.b16 %v70
  %v246 = vunpack.c.h.b16 %v70
  %v247 = vunpack.c.l.b16 %v71
  %v248 = vunpack.c.h.b16 %v71
  %v249 = vunpack.c.l.b16 %v72
  %v250 = vunpack.c.h.b16 %v72
  %v251 = vunpack.c.l.b16 %v73
  %v252 = vunpack.c.h.b16 %v73
  %v253 = vunpack.c.l.b16 %v74
  %v254 = vunpack.c.h.b16 %v74
  %v255 = vunpack.c.l.b16 %v75
  %v256 = vunpack.c.h.b16 %v75
  %v257 = vunpack.c.l.b16 %v76
  %v258 = vunpack.c.h.b16 %v76
  %v259 = vunpack.c.l.b16 %v77
  %v260 = vunpack.c.h.b16 %v77
  %v261 = vunpack.c.l.b16 %v78
  %v262 = vunpack.c.h.b16 %v78
  %v263 = vunpack.c.l.b16 %v79
  %v264 = vunpack.c.h.b16 %v79
  %v265 = vunpack.c.l.b16 %v80
  %v266 = vunpack.c.h.b16 %v80
  %v267 = vunpack.c.l.b16 %v81
  %v268 = vunpack.c.h.b16 %v81
  %v269 = vunpack.c.l.b16 %v82
  %v270 = vunpack.c.h.b16 %v82
  %v271 = vunpack.c.l.b16 %v83
  %v272 = vunpack.c.h.b16 %v83
  %v273 = vunpack.c.l.b16 %v84
  %v274 = vunpack.c.h.b16 %v84
  %v275 = vunpack.c.l.b16 %v85
  %v276 = vunpack.c.h.b16 %v85
  %v277 = vunpack.c.l.b16 %v86
  %v278 = vunpack.c.h.b16 %v86
  %v279 = vunpack.c.l.b16 %v87
  %v280 = vunpack.c.h.b16 %v87
  %v281 = vunpack.c.l.b16 %v88
  %v282 = vunpack.c.h.b16 %v88
  %v283 = vunpack.c.l.b16 %v89
  %v284 = vunpack.c.h.b16 %v89
  %v285 = vunpack.c.l.b16 %v90
  %v286 = vunpack.c.h.b16 %v90
  %v287 = vunpack.c.l.b16 %v91
  %v288 = vunpack.c.h.b16 %v91
  %v289 = vunpack.c.l.b16 %v92
  %v290 = vunpack.c.h.b16 %v92
  %v291 = vunpack.c.l.b16 %v93
  %v292 = vunpack.c.h.b16 %v93
  %v293 = vunpack.c.l.b16 %v94
  %v294 = vunpack.c.h.b16 %v94
  %v295 = vunpack.c.l.b16 %v95
  %v296 = vunpack.c.h.b16 %v95
  %v297 = vunpack.c.l.b16 %v96
  %v298 = vunpack.c.h.b16 %v96
  %v299 = vunpack.c.l.b16 %v97
  %v300 = vunpack.c.h.b16 %v97
  %v301 = vunpack.c.l.b16 %v98
  %v302 = vunpack.c.h.b16 %v98
  %v303 = vunpack.c.l.b16 %v99
  %v304 = vunpack.c.h.b16 %v99
  %v305 = vunpack.c.l.b16 %v100
  %v306 = vunpack.c.h.b16 %v100
  %v307 = vunpack.c.l.b16 %v101
  %v308 = vunpack.c.h.b16 %v101
  %v309 = vunpack.c.l.b16 %v102
  %v310 = vunpack.c.h.b16 %v102
  %v311 = vunpack.c.l.b16 %v103
  %v312 = vunpack.c.h.b16 %v103
  %v313 = vunpack.c.l.b16 %v104
  %v314 = vunpack.c.h.b16 %v104
  %v315 = vunpack.c.l.b16 %v105
  %v316 = vunpack.c.h.b16 %v105
  %v317 = vunpack.c.l.b16 %v106
  %v318 = vunpack.c.h.b16 %v106
  %v319 = vpack.c.b16 %v193, %v191
  %v320 = vpack.c.b16 %v194, %v192
  %v321 = vpack.c.b16 %v197, %v195
  %v322 = vpack.c.b16 %v198, %v196
  %v323 = vpack.c.b16 %v201, %v199
  %v324 = vpack.c.b16 %v202, %v200
  %v325 = vpack.c.b16 %v205, %v203
  %v326 = vpack.c.b16 %v206, %v204
  %v327 = vpack.c.b16 %v209, %v207
  %v328 = vpack.c.b16 %v210, %v208
  %v329 = vpack.c.b16 %v213, %v211
  %v330 = vpack.c.b16 %v214, %v212
  %v331 = vpack.c.b16 %v217, %v215
  %v332 = vpack.c.b16 %v218, %v216
  %v333 = vpack.c.b16 %v221, %v219
  %v334 = vpack.c.b16 %v222, %v220
  %v335 = vpack.c.b16 %v225, %v223
  %v336 = vpack.c.b16 %v226, %v224
  %v337 = vpack.c.b16 %v229, %v227
  %v338 = vpack.c.b16 %v230, %v228
  %v339 = vpack.c.b16 %v233, %v231
  %v340 = vpack.c.b16 %v234, %v232
  %v341 = vpack.c.b16 %v237, %v235
  %v342 = vpack.c.b16 %v238, %v236
  %v343 = vpack.c.b16 %v241, %v239
  %v344 = vpack.c.b16 %v242, %v240
  %v345 = vpack.c.b16 %v245, %v243
  %v346 = vpack.c.b16 %v246, %v244
  %v347 = vpack.c.b16 %v249, %v247
  %v348 = vpack.c.b16 %v250, %v248
  %v349 = vpack.c.b16 %v253, %v251
  %v350 = vpack.c.b16 %v254, %v252
  %v351 = vpack.c.b16 %v257, %v255
  %v352 = vpack.c.b16 %v258, %v256
  %v353 = vpack.c.b16 %v261, %v259
  %v354 = vpack.c.b16 %v262, %v260
  %v355 = vpack.c.b16 %v265, %v263
  %v356 = vpack.c.b16 %v266, %v264
  %v357 = vpack.c.b16 %v269, %v267
  %v358 = vpack.c.b16 %v270, %v268
  %v359 = vpack.c.b16 %v273, %v271
  %v360 = vpack.c.b16 %v274, %v272
  %v361 = vpack.c.b16 %v277, %v275
  %v362 = vpack.c.b16 %v278, %v276
  %v363 = vpack.c.b16 %v281, %v279
  %v364 = vpack.c.b16 %v282, %v280
  %v365 = vpack.c.b16 %v285, %v283
  %v366 = vpack.c.b16 %v286, %v284
  %v367 = vpack.c.b16 %v289, %v287
  %v368 = vpack.c.b16 %v290, %v288
  %v369 = vpack.c.b16 %v293, %v291
  %v370 = vpack.c.b16 %v294, %v292
  %v371 = vpack.c.b16 %v297, %v295
  %v372 = vpack.c.b16 %v298, %v296
  %v373 = vpack.c.b16 %v301, %v299
  %v374 = vpack.c.b16 %v302, %v300
  %v375 = vpack.c.b16 %v305, %v303
  %v376 = vpack.c.b16 %v306, %v304
  %v377 = vpack.c.b16 %v309, %v307
  %v378 = vpack.c.b16 %v310, %v308
  %v379 = vpack.c.b16 %v313, %v311
  %v380 = vpack.c.b16 %v314, %v312
  %v381 = vpack.c.b16 %v317, %v315
  %v382 = vpack.c.b16 %v318, %v316
  %447 = vmatprep.subr.bf16.mxu0 %v334
  %448 = vmatpush1.bf16.msra.mxu0 %v333
  %449 = vmatprep.subr.bf16.mxu0 %v332
  %450 = vmatpush1.bf16.msra.mxu0 %v331
  %451 = vmatprep.subr.bf16.mxu0 %v330
  %452 = vmatpush1.bf16.msra.mxu0 %v329
  %453 = vmatprep.subr.bf16.mxu0 %v328
  %454 = vmatpush1.bf16.msra.mxu0 %v327
  %455 = vmatprep.subr.bf16.mxu0 %v326
  %456 = vmatpush1.bf16.msra.mxu0 %v325
  %457 = vmatprep.subr.bf16.mxu0 %v324
  %458 = vmatpush1.bf16.msra.mxu0 %v323
  %459 = vmatprep.subr.bf16.mxu0 %v322
  %460 = vmatpush1.bf16.msra.mxu0 %v321
  %461 = vmatprep.subr.bf16.mxu0 %v320
  %462 = vmatpush1.bf16.msra.mxu0 %v319
  %463 = vmatprep.subr.bf16.mxu0 %v350
  %464 = vmatpush2.bf16.msra.mxu0 %v349
  %465 = vmatprep.subr.bf16.mxu0 %v348
  %466 = vmatpush2.bf16.msra.mxu0 %v347
  %467 = vmatprep.subr.bf16.mxu0 %v346
  %468 = vmatpush2.bf16.msra.mxu0 %v345
  %469 = vmatprep.subr.bf16.mxu0 %v344
  %470 = vmatpush2.bf16.msra.mxu0 %v343
  %471 = vmatprep.subr.bf16.mxu0 %v342
  %472 = vmatpush2.bf16.msra.mxu0 %v341
  %473 = vmatprep.subr.bf16.mxu0 %v340
  %474 = vmatpush2.bf16.msra.mxu0 %v339
  %475 = vmatprep.subr.bf16.mxu0 %v338
  %476 = vmatpush2.bf16.msra.mxu0 %v337
  %477 = vmatprep.subr.bf16.mxu0 %v336
  %478 = vmatpush2.bf16.msra.mxu0 %v335
  %479 = vmatprep.mubr.bf16.mxu0 %v120
  %480 = vmatmul.mubr.bf16.gmra.mxu0 %v119
  %v481 = vpop.f32.mrf.mxu0
  %v482 = vadd.f32 0.0, %v481
  %v483 = vpop.f32.mrf.mxu0
  %v484 = vadd.f32 0.0, %v483
  %v485 = vpop.f32.mrf.mxu0
  %v486 = vadd.f32 0.0, %v485
  %v487 = vpop.f32.mrf.mxu0
  %v488 = vadd.f32 0.0, %v487
  %489 = vdwg.mxu0
  %490 = vmatprep.subr.bf16.mxu0 %v366
  %491 = vmatpush1.bf16.msra.mxu0 %v365
  %492 = vmatprep.subr.bf16.mxu0 %v364
  %493 = vmatpush1.bf16.msra.mxu0 %v363
  %494 = vmatprep.subr.bf16.mxu0 %v362
  %495 = vmatpush1.bf16.msra.mxu0 %v361
  %496 = vmatprep.subr.bf16.mxu0 %v360
  %497 = vmatpush1.bf16.msra.mxu0 %v359
  %498 = vmatprep.subr.bf16.mxu0 %v358
  %499 = vmatpush1.bf16.msra.mxu0 %v357
  %500 = vmatprep.subr.bf16.mxu0 %v356
  %501 = vmatpush1.bf16.msra.mxu0 %v355
  %502 = vmatprep.subr.bf16.mxu0 %v354
  %503 = vmatpush1.bf16.msra.mxu0 %v353
  %504 = vmatprep.subr.bf16.mxu0 %v352
  %505 = vmatpush1.bf16.msra.mxu0 %v351
  %506 = vmatprep.subr.bf16.mxu0 %v382
  %507 = vmatpush2.bf16.msra.mxu0 %v381
  %508 = vmatprep.subr.bf16.mxu0 %v380
  %509 = vmatpush2.bf16.msra.mxu0 %v379
  %510 = vmatprep.subr.bf16.mxu0 %v378
  %511 = vmatpush2.bf16.msra.mxu0 %v377
  %512 = vmatprep.subr.bf16.mxu0 %v376
  %513 = vmatpush2.bf16.msra.mxu0 %v375
  %514 = vmatprep.subr.bf16.mxu0 %v374
  %515 = vmatpush2.bf16.msra.mxu0 %v373
  %516 = vmatprep.subr.bf16.mxu0 %v372
  %517 = vmatpush2.bf16.msra.mxu0 %v371
  %518 = vmatprep.subr.bf16.mxu0 %v370
  %519 = vmatpush2.bf16.msra.mxu0 %v369
  %520 = vmatprep.subr.bf16.mxu0 %v368
  %521 = vmatpush2.bf16.msra.mxu0 %v367
  %522 = vmatprep.mubr.bf16.mxu0 %v122
  %523 = vmatmul.mubr.bf16.gmra.mxu0 %v121
  %v524 = vpop.f32.mrf.mxu0
  %v525 = vadd.f32 %v482, %v524
  %v526 = vpop.f32.mrf.mxu0
  %v527 = vadd.f32 %v484, %v526
  %v528 = vpop.f32.mrf.mxu0
  %v529 = vadd.f32 %v486, %v528
  %v530 = vpop.f32.mrf.mxu0
  %v531 = vadd.f32 %v488, %v530
  %532 = vdwg.mxu0
  %v533 = vld [vmem:[%s2] sm:$0x3]
  %v535 = vlaneseq
  %v536 = vshrl.u32 %v535, 7
  %v537 = vsub.s32 0, %v536
  %v538 = vrot.slane %v533, %v537
  %v539 = vlaneseq
  %v540 = vshrl.u32 %v539, 7
  %v541 = vsub.s32 1, %v540
  %v542 = vrot.slane %v533, %v541
  %v545 = vmul.f32 %v525, %v538
  %v546 = vmul.f32 %v527, %v542
  %v547 = vmul.f32 %v529, %v538
  %v548 = vmul.f32 %v531, %v542
  %v549 = vld [vmem:[%s3] sm:$0x3]
  %v551 = vlaneseq
  %v552 = vshrl.u32 %v551, 7
  %v553 = vsub.s32 0, %v552
  %v554 = vrot.slane %v549, %v553
  %v555 = vlaneseq
  %v556 = vshrl.u32 %v555, 7
  %v557 = vsub.s32 1, %v556
  %v558 = vrot.slane %v549, %v557
  %v561 = vadd.f32 %v545, %v554
  %v562 = vadd.f32 %v546, %v558
  %v563 = vadd.f32 %v547, %v554
  %v564 = vadd.f32 %v548, %v558
  %v565 = vmax.f32 %v561, 0.0
  %v566 = vmax.f32 %v562, 0.0
  %v567 = vmax.f32 %v563, 0.0
  %v568 = vmax.f32 %v564, 0.0
  %v569 = vpack.c.bf16 %v567, %v565
  %v570 = vpack.c.bf16 %v568, %v566
  %v571 = vld [vmem:[%s4] sm:$0xff]
  %v572 = vld [vmem:[%s4 + $0x8] sm:$0xff]
  %v573 = vld [vmem:[%s4 + $0x10] sm:$0xff]
  %v574 = vld [vmem:[%s4 + $0x18] sm:$0xff]
  %v575 = vld [vmem:[%s4 + $0x20] sm:$0xff]
  %v576 = vld [vmem:[%s4 + $0x28] sm:$0xff]
  %v577 = vld [vmem:[%s4 + $0x30] sm:$0xff]
  %v578 = vld [vmem:[%s4 + $0x38] sm:$0xff]
  %v579 = vld [vmem:[%s4 + $0x40] sm:$0xff]
  %v580 = vld [vmem:[%s4 + $0x48] sm:$0xff]
  %v581 = vld [vmem:[%s4 + $0x50] sm:$0xff]
  %v582 = vld [vmem:[%s4 + $0x58] sm:$0xff]
  %v583 = vld [vmem:[%s4 + $0x60] sm:$0xff]
  %v584 = vld [vmem:[%s4 + $0x68] sm:$0xff]
  %v585 = vld [vmem:[%s4 + $0x70] sm:$0xff]
  %v586 = vld [vmem:[%s4 + $0x78] sm:$0xff]
  %v587 = vld [vmem:[%s4 + $0x80] sm:$0xff]
  %v588 = vld [vmem:[%s4 + $0x88] sm:$0xff]
  %v589 = vld [vmem:[%s4 + $0x90] sm:$0xff]
  %v590 = vld [vmem:[%s4 + $0x98] sm:$0xff]
  %v591 = vld [vmem:[%s4 + $0xa0] sm:$0xff]
  %v592 = vld [vmem:[%s4 + $0xa8] sm:$0xff]
  %v593 = vld [vmem:[%s4 + $0xb0] sm:$0xff]
  %v594 = vld [vmem:[%s4 + $0xb8] sm:$0xff]
  %v595 = vld [vmem:[%s4 + $0xc0] sm:$0xff]
  %v596 = vld [vmem:[%s4 + $0xc8] sm:$0xff]
  %v597 = vld [vmem:[%s4 + $0xd0] sm:$0xff]
  %v598 = vld [vmem:[%s4 + $0xd8] sm:$0xff]
  %v599 = vld [vmem:[%s4 + $0xe0] sm:$0xff]
  %v600 = vld [vmem:[%s4 + $0xe8] sm:$0xff]
  %v601 = vld [vmem:[%s4 + $0xf0] sm:$0xff]
  %v602 = vld [vmem:[%s4 + $0xf8] sm:$0xff]
  %v635 = vunpack.c.l.b16 %v571
  %v636 = vunpack.c.h.b16 %v571
  %v637 = vunpack.c.l.b16 %v572
  %v638 = vunpack.c.h.b16 %v572
  %v639 = vunpack.c.l.b16 %v573
  %v640 = vunpack.c.h.b16 %v573
  %v641 = vunpack.c.l.b16 %v574
  %v642 = vunpack.c.h.b16 %v574
  %v643 = vunpack.c.l.b16 %v575
  %v644 = vunpack.c.h.b16 %v575
  %v645 = vunpack.c.l.b16 %v576
  %v646 = vunpack.c.h.b16 %v576
  %v647 = vunpack.c.l.b16 %v577
  %v648 = vunpack.c.h.b16 %v577
  %v649 = vunpack.c.l.b16 %v578
  %v650 = vunpack.c.h.b16 %v578
  %v651 = vunpack.c.l.b16 %v579
  %v652 = vunpack.c.h.b16 %v579
  %v653 = vunpack.c.l.b16 %v580
  %v654 = vunpack.c.h.b16 %v580
  %v655 = vunpack.c.l.b16 %v581
  %v656 = vunpack.c.h.b16 %v581
  %v657 = vunpack.c.l.b16 %v582
  %v658 = vunpack.c.h.b16 %v582
  %v659 = vunpack.c.l.b16 %v583
  %v660 = vunpack.c.h.b16 %v583
  %v661 = vunpack.c.l.b16 %v584
  %v662 = vunpack.c.h.b16 %v584
  %v663 = vunpack.c.l.b16 %v585
  %v664 = vunpack.c.h.b16 %v585
  %v665 = vunpack.c.l.b16 %v586
  %v666 = vunpack.c.h.b16 %v586
  %v667 = vunpack.c.l.b16 %v587
  %v668 = vunpack.c.h.b16 %v587
  %v669 = vunpack.c.l.b16 %v588
  %v670 = vunpack.c.h.b16 %v588
  %v671 = vunpack.c.l.b16 %v589
  %v672 = vunpack.c.h.b16 %v589
  %v673 = vunpack.c.l.b16 %v590
  %v674 = vunpack.c.h.b16 %v590
  %v675 = vunpack.c.l.b16 %v591
  %v676 = vunpack.c.h.b16 %v591
  %v677 = vunpack.c.l.b16 %v592
  %v678 = vunpack.c.h.b16 %v592
  %v679 = vunpack.c.l.b16 %v593
  %v680 = vunpack.c.h.b16 %v593
  %v681 = vunpack.c.l.b16 %v594
  %v682 = vunpack.c.h.b16 %v594
  %v683 = vunpack.c.l.b16 %v595
  %v684 = vunpack.c.h.b16 %v595
  %v685 = vunpack.c.l.b16 %v596
  %v686 = vunpack.c.h.b16 %v596
  %v687 = vunpack.c.l.b16 %v597
  %v688 = vunpack.c.h.b16 %v597
  %v689 = vunpack.c.l.b16 %v598
  %v690 = vunpack.c.h.b16 %v598
  %v691 = vunpack.c.l.b16 %v599
  %v692 = vunpack.c.h.b16 %v599
  %v693 = vunpack.c.l.b16 %v600
  %v694 = vunpack.c.h.b16 %v600
  %v695 = vunpack.c.l.b16 %v601
  %v696 = vunpack.c.h.b16 %v601
  %v697 = vunpack.c.l.b16 %v602
  %v698 = vunpack.c.h.b16 %v602
  %v699 = vpack.c.b16 %v637, %v635
  %v700 = vpack.c.b16 %v638, %v636
  %v701 = vpack.c.b16 %v641, %v639
  %v702 = vpack.c.b16 %v642, %v640
  %v703 = vpack.c.b16 %v645, %v643
  %v704 = vpack.c.b16 %v646, %v644
  %v705 = vpack.c.b16 %v649, %v647
  %v706 = vpack.c.b16 %v650, %v648
  %v707 = vpack.c.b16 %v653, %v651
  %v708 = vpack.c.b16 %v654, %v652
  %v709 = vpack.c.b16 %v657, %v655
  %v710 = vpack.c.b16 %v658, %v656
  %v711 = vpack.c.b16 %v661, %v659
  %v712 = vpack.c.b16 %v662, %v660
  %v713 = vpack.c.b16 %v665, %v663
  %v714 = vpack.c.b16 %v666, %v664
  %v715 = vpack.c.b16 %v669, %v667
  %v716 = vpack.c.b16 %v670, %v668
  %v717 = vpack.c.b16 %v673, %v671
  %v718 = vpack.c.b16 %v674, %v672
  %v719 = vpack.c.b16 %v677, %v675
  %v720 = vpack.c.b16 %v678, %v676
  %v721 = vpack.c.b16 %v681, %v679
  %v722 = vpack.c.b16 %v682, %v680
  %v723 = vpack.c.b16 %v685, %v683
  %v724 = vpack.c.b16 %v686, %v684
  %v725 = vpack.c.b16 %v689, %v687
  %v726 = vpack.c.b16 %v690, %v688
  %v727 = vpack.c.b16 %v693, %v691
  %v728 = vpack.c.b16 %v694, %v692
  %v729 = vpack.c.b16 %v697, %v695
  %v730 = vpack.c.b16 %v698, %v696
  %763 = vmatprep.subr.bf16.mxu0 %v714
  %764 = vmatpush1.bf16.msra.mxu0 %v713
  %765 = vmatprep.subr.bf16.mxu0 %v712
  %766 = vmatpush1.bf16.msra.mxu0 %v711
  %767 = vmatprep.subr.bf16.mxu0 %v710
  %768 = vmatpush1.bf16.msra.mxu0 %v709
  %769 = vmatprep.subr.bf16.mxu0 %v708
  %770 = vmatpush1.bf16.msra.mxu0 %v707
  %771 = vmatprep.subr.bf16.mxu0 %v706
  %772 = vmatpush1.bf16.msra.mxu0 %v705
  %773 = vmatprep.subr.bf16.mxu0 %v704
  %774 = vmatpush1.bf16.msra.mxu0 %v703
  %775 = vmatprep.subr.bf16.mxu0 %v702
  %776 = vmatpush1.bf16.msra.mxu0 %v701
  %777 = vmatprep.subr.bf16.mxu0 %v700
  %778 = vmatpush1.bf16.msra.mxu0 %v699
  %779 = vmatprep.subr.bf16.mxu0 %v730
  %780 = vmatpush2.bf16.msra.mxu0 %v729
  %781 = vmatprep.subr.bf16.mxu0 %v728
  %782 = vmatpush2.bf16.msra.mxu0 %v727
  %783 = vmatprep.subr.bf16.mxu0 %v726
  %784 = vmatpush2.bf16.msra.mxu0 %v725
  %785 = vmatprep.subr.bf16.mxu0 %v724
  %786 = vmatpush2.bf16.msra.mxu0 %v723
  %787 = vmatprep.subr.bf16.mxu0 %v722
  %788 = vmatpush2.bf16.msra.mxu0 %v721
  %789 = vmatprep.subr.bf16.mxu0 %v720
  %790 = vmatpush2.bf16.msra.mxu0 %v719
  %791 = vmatprep.subr.bf16.mxu0 %v718
  %792 = vmatpush2.bf16.msra.mxu0 %v717
  %793 = vmatprep.subr.bf16.mxu0 %v716
  %794 = vmatpush2.bf16.msra.mxu0 %v715
  %795 = vmatprep.mubr.bf16.mxu0 %v570
  %796 = vmatmul.mubr.bf16.gmra.mxu0 %v569
  %v797 = vpop.f32.mrf.mxu0
  %v798 = vadd.f32 0.0, %v797
  %v799 = vpop.f32.mrf.mxu0
  %v800 = vadd.f32 0.0, %v799
  %v801 = vpop.f32.mrf.mxu0
  %v802 = vadd.f32 0.0, %v801
  %v803 = vpop.f32.mrf.mxu0
  %v804 = vadd.f32 0.0, %v803
  %805 = vdwg.mxu0
  %v806 = vld [vmem:[%s7] sm:$0xf]
  %v807 = vld [vmem:[%s7 + $0x4] sm:$0xf]
  %v808 = vld [vmem:[%s8] sm:$0xff]
  %v809 = vld [vmem:[%s8 + $0x8] sm:$0xff]
  %v810 = vld [vmem:[%s8 + $0x10] sm:$0xff]
  %v811 = vld [vmem:[%s8 + $0x18] sm:$0xff]
  %v812 = vld [vmem:[%s8 + $0x20] sm:$0xff]
  %v813 = vld [vmem:[%s8 + $0x28] sm:$0xff]
  %v814 = vld [vmem:[%s8 + $0x30] sm:$0xff]
  %v815 = vld [vmem:[%s8 + $0x38] sm:$0xff]
  %v816 = vld [vmem:[%s8 + $0x40] sm:$0xff]
  %v817 = vld [vmem:[%s8 + $0x48] sm:$0xff]
  %v818 = vld [vmem:[%s8 + $0x50] sm:$0xff]
  %v819 = vld [vmem:[%s8 + $0x58] sm:$0xff]
  %v820 = vld [vmem:[%s8 + $0x60] sm:$0xff]
  %v821 = vld [vmem:[%s8 + $0x68] sm:$0xff]
  %v822 = vld [vmem:[%s8 + $0x70] sm:$0xff]
  %v823 = vld [vmem:[%s8 + $0x78] sm:$0xff]
  %v826 = vunpack.c.l.b16 %v806
  %v827 = vunpack.c.l.b16 %v807
  %v828 = vpack.c.b16 %v827, %v826
  %v846 = vunpack.c.l.b16 %v808
  %v847 = vunpack.c.h.b16 %v808
  %v848 = vunpack.c.l.b16 %v809
  %v849 = vunpack.c.h.b16 %v809
  %v850 = vunpack.c.l.b16 %v810
  %v851 = vunpack.c.h.b16 %v810
  %v852 = vunpack.c.l.b16 %v811
  %v853 = vunpack.c.h.b16 %v811
  %v854 = vunpack.c.l.b16 %v812
  %v855 = vunpack.c.h.b16 %v812
  %v856 = vunpack.c.l.b16 %v813
  %v857 = vunpack.c.h.b16 %v813
  %v858 = vunpack.c.l.b16 %v814
  %v859 = vunpack.c.h.b16 %v814
  %v860 = vunpack.c.l.b16 %v815
  %v861 = vunpack.c.h.b16 %v815
  %v862 = vunpack.c.l.b16 %v816
  %v863 = vunpack.c.h.b16 %v816
  %v864 = vunpack.c.l.b16 %v817
  %v865 = vunpack.c.h.b16 %v817
  %v866 = vunpack.c.l.b16 %v818
  %v867 = vunpack.c.h.b16 %v818
  %v868 = vunpack.c.l.b16 %v819
  %v869 = vunpack.c.h.b16 %v819
  %v870 = vunpack.c.l.b16 %v820
  %v871 = vunpack.c.h.b16 %v820
  %v872 = vunpack.c.l.b16 %v821
  %v873 = vunpack.c.h.b16 %v821
  %v874 = vunpack.c.l.b16 %v822
  %v875 = vunpack.c.h.b16 %v822
  %v876 = vunpack.c.l.b16 %v823
  %v877 = vunpack.c.h.b16 %v823
  %v878 = vpack.c.b16 %v848, %v846
  %v879 = vpack.c.b16 %v849, %v847
  %v880 = vpack.c.b16 %v852, %v850
  %v881 = vpack.c.b16 %v853, %v851
  %v882 = vpack.c.b16 %v856, %v854
  %v883 = vpack.c.b16 %v857, %v855
  %v884 = vpack.c.b16 %v860, %v858
  %v885 = vpack.c.b16 %v861, %v859
  %v886 = vpack.c.b16 %v864, %v862
  %v887 = vpack.c.b16 %v865, %v863
  %v888 = vpack.c.b16 %v868, %v866
  %v889 = vpack.c.b16 %v869, %v867
  %v890 = vpack.c.b16 %v872, %v870
  %v891 = vpack.c.b16 %v873, %v871
  %v892 = vpack.c.b16 %v876, %v874
  %v893 = vpack.c.b16 %v877, %v875
  %910 = vmatprep.subr.bf16.mxu0 %v893
  %911 = vmatpush1.bf16.msra.mxu0 %v892
  %912 = vmatprep.subr.bf16.mxu0 %v891
  %913 = vmatpush1.bf16.msra.mxu0 %v890
  %914 = vmatprep.subr.bf16.mxu0 %v889
  %915 = vmatpush1.bf16.msra.mxu0 %v888
  %916 = vmatprep.subr.bf16.mxu0 %v887
  %917 = vmatpush1.bf16.msra.mxu0 %v886
  %918 = vmatprep.subr.bf16.mxu0 %v885
  %919 = vmatpush1.bf16.msra.mxu0 %v884
  %920 = vmatprep.subr.bf16.mxu0 %v883
  %921 = vmatpush1.bf16.msra.mxu0 %v882
  %922 = vmatprep.subr.bf16.mxu0 %v881
  %923 = vmatpush1.bf16.msra.mxu0 %v880
  %924 = vmatprep.subr.bf16.mxu0 %v879
  %925 = vmatpush1.bf16.msra.mxu0 %v878
  %926 = vmatprep.subr.bf16.mxu0 0
  %927 = vmatpush2.bf16.msra.mxu0 0
  %928 = vmatprep.subr.bf16.mxu0 0
  %929 = vmatpush2.bf16.msra.mxu0 0
  %930 = vmatprep.subr.bf16.mxu0 0
  %931 = vmatpush2.bf16.msra.mxu0 0
  %932 = vmatprep.subr.bf16.mxu0 0
  %933 = vmatpush2.bf16.msra.mxu0 0
  %934 = vmatprep.subr.bf16.mxu0 0
  %935 = vmatpush2.bf16.msra.mxu0 0
  %936 = vmatprep.subr.bf16.mxu0 0
  %937 = vmatpush2.bf16.msra.mxu0 0
  %938 = vmatprep.subr.bf16.mxu0 0
  %939 = vmatpush2.bf16.msra.mxu0 0
  %940 = vmatprep.subr.bf16.mxu0 0
  %941 = vmatpush2.bf16.msra.mxu0 0
  %942 = vmatprep.mubr.bf16.mxu0 0
  %943 = vmatmul.mubr.bf16.gmra.mxu0 %v828
  %v944 = vpop.f32.mrf.mxu0
  %v945 = vadd.f32 0.0, %v944
  %v946 = vpop.f32.mrf.mxu0
  %v947 = vadd.f32 0.0, %v946
  %v948 = vpop.f32.mrf.mxu0
  %v949 = vadd.f32 0.0, %v948
  %v950 = vpop.f32.mrf.mxu0
  %v951 = vadd.f32 0.0, %v950
  %952 = vdwg.mxu0
  %v953 = vld [vmem:[%s5] sm:$0x3]
  %v955 = vlaneseq
  %v956 = vshrl.u32 %v955, 7
  %v957 = vsub.s32 0, %v956
  %v958 = vrot.slane %v953, %v957
  %v959 = vlaneseq
  %v960 = vshrl.u32 %v959, 7
  %v961 = vsub.s32 1, %v960
  %v962 = vrot.slane %v953, %v961
  %v965 = vmul.f32 %v798, %v958
  %v966 = vmul.f32 %v800, %v962
  %v967 = vmul.f32 %v802, %v958
  %v968 = vmul.f32 %v804, %v962
  %v969 = vld [vmem:[%s6] sm:$0x3]
  %v971 = vlaneseq
  %v972 = vshrl.u32 %v971, 7
  %v973 = vsub.s32 0, %v972
  %v974 = vrot.slane %v969, %v973
  %v975 = vlaneseq
  %v976 = vshrl.u32 %v975, 7
  %v977 = vsub.s32 1, %v976
  %v978 = vrot.slane %v969, %v977
  %v981 = vadd.f32 %v965, %v974
  %v982 = vadd.f32 %v966, %v978
  %v983 = vadd.f32 %v967, %v974
  %v984 = vadd.f32 %v968, %v978
  %v985 = vld [vmem:[%s9] sm:$0x3]
  %v987 = vlaneseq
  %v988 = vshrl.u32 %v987, 7
  %v989 = vsub.s32 0, %v988
  %v990 = vrot.slane %v985, %v989
  %v991 = vlaneseq
  %v992 = vshrl.u32 %v991, 7
  %v993 = vsub.s32 1, %v992
  %v994 = vrot.slane %v985, %v993
  %v997 = vmul.f32 %v945, %v990
  %v998 = vmul.f32 %v947, %v994
  %v999 = vmul.f32 %v949, %v990
  %v1000 = vmul.f32 %v951, %v994
  %v1001 = vadd.f32 %v981, %v997
  %v1002 = vadd.f32 %v982, %v998
  %v1003 = vadd.f32 %v983, %v999
  %v1004 = vadd.f32 %v984, %v1000
  %v1005 = vld [vmem:[%s10] sm:$0x3]
  %v1007 = vlaneseq
  %v1008 = vshrl.u32 %v1007, 7
  %v1009 = vsub.s32 0, %v1008
  %v1010 = vrot.slane %v1005, %v1009
  %v1011 = vlaneseq
  %v1012 = vshrl.u32 %v1011, 7
  %v1013 = vsub.s32 1, %v1012
  %v1014 = vrot.slane %v1005, %v1013
  %v1017 = vadd.f32 %v1001, %v1010
  %v1018 = vadd.f32 %v1002, %v1014
  %v1019 = vadd.f32 %v1003, %v1010
  %v1020 = vadd.f32 %v1004, %v1014
  %v1021 = vmax.f32 %v1017, 0.0
  %v1022 = vmax.f32 %v1018, 0.0
  %v1023 = vmax.f32 %v1019, 0.0
  %v1024 = vmax.f32 %v1020, 0.0
  %v1025 = vpack.c.bf16 %v1023, %v1021
  %v1026 = vpack.c.bf16 %v1024, %v1022
  %v1029 = vunpack.c.l.b16 %v1025
  %v1030 = vunpack.c.l.b16 %v1026
  %v1031 = vunpack.c.h.b16 %v1025
  %v1032 = vunpack.c.h.b16 %v1026
  %v1033 = vpack.c.b16 %v1030, %v1029
  %v1034 = vpack.c.b16 %v1032, %v1031
  %1037 = vst [vmem:[%s11] sm:$0xff] %v1033
  %1038 = vst [vmem:[%s11 + $0x8] sm:$0xff] %v1034
  // Predicated region
  $region46: #{resnet_forward.42} parent=0 // pred_check
    _
  $region47: #{resnet_forward.42} parent=0 // pred_check_branch
    %1040 = sbr.rel (0) target = $region49
  $region48: #{resnet_forward.42} parent=0 // pred_region
    _
  $region49: #{resnet_forward.42} parent=0 // pred_fallthru
    _
  // Predicated region
  $region50: #{resnet_forward.42} parent=0 // pred_check
    _
  $region51: #{resnet_forward.42} parent=0 // pred_check_branch
    %1042 = sbr.rel (0) target = $region53
  $region52: #{resnet_forward.42} parent=0 // pred_region
    _
  $region53: #{resnet_forward.42} parent=0 // pred_fallthru
    _

// kernel: resnet_forward.51
$region0: #{resnet_forward.51}
  #allocation0 [shape = 'u32[]', space=smem, size = 0x4, offset = 0x4, fixed_abs, tag = 'smem constant byte address 0x4 - core index']
  #allocation1 [shape = 'u32[144,128]{1,0:T(1,128)}', space=vmem, size = 0x12000, scoped, tag = 'internal scratch']
  %s0 = inlined_call_operand.vmem [shape: bf16[2,1,512], index: 0, kind: input, shape index: {}]
  %s1 = inlined_call_operand.vmem [shape: f32[512,128], index: 1, kind: input, shape index: {}]
  %s2 = inlined_call_operand.vmem [shape: f32[1,128], index: 2, kind: input, shape index: {}]
  %s3 = inlined_call_operand.vmem [shape: f32[2,128], index: 3, kind: output, shape index: {}]
  %s4 = sld [smem:[#allocation0]]
  $region22: #{resnet_forward.51} parent=0
    _
  %s6 = ssub.s32 1, %s4
  %s7 = scalar_select 0, %s6, %s4
  // Predicated region
  $region2: #{resnet_forward.51} parent=0 // pred_check
    _
  $region3: #{resnet_forward.51} parent=0 // pred_check_branch
    %9 = sbr.rel (0) target = $region5
  $region4: #{resnet_forward.51} parent=0 // pred_region
    _
  $region5: #{resnet_forward.51} parent=0 // pred_fallthru
    _
  // Predicated region
  $region6: #{resnet_forward.51} parent=0 // pred_check
    _
  $region7: #{resnet_forward.51} parent=0 // pred_check_branch
    %11 = sbr.rel (0) target = $region9
  $region8: #{resnet_forward.51} parent=0 // pred_region
    _
  $region9: #{resnet_forward.51} parent=0 // pred_fallthru
    _
  // Predicated region
  $region10: #{resnet_forward.51} parent=0 // pred_check
    _
  $region11: #{resnet_forward.51} parent=0 // pred_check_branch
    %13 = sbr.rel (0) target = $region13
  $region12: #{resnet_forward.51} parent=0 // pred_region
    _
  $region13: #{resnet_forward.51} parent=0 // pred_fallthru
    _
  %v14 = vld [vmem:[%s0] sm:$0xf]
  %v15 = vld [vmem:[%s0 + $0x4] sm:$0xf]
  %v16 = vunpack.c.l.bf16 %v14
  %v17 = vunpack.c.l.bf16 %v15
  %v18 = vadd.f32 %v16, 0.0
  %v19 = vadd.f32 %v17, 0.0
  %v20 = vld [vmem:[%s1] sm:$0xff]
  %v21 = vld [vmem:[%s1 + $0x8] sm:$0xff]
  %v22 = vld [vmem:[%s1 + $0x10] sm:$0xff]
  %v23 = vld [vmem:[%s1 + $0x18] sm:$0xff]
  %v24 = vld [vmem:[%s1 + $0x20] sm:$0xff]
  %v25 = vld [vmem:[%s1 + $0x28] sm:$0xff]
  %v26 = vld [vmem:[%s1 + $0x30] sm:$0xff]
  %v27 = vld [vmem:[%s1 + $0x38] sm:$0xff]
  %v28 = vld [vmem:[%s1 + $0x40] sm:$0xff]
  %v29 = vld [vmem:[%s1 + $0x48] sm:$0xff]
  %v30 = vld [vmem:[%s1 + $0x50] sm:$0xff]
  %v31 = vld [vmem:[%s1 + $0x58] sm:$0xff]
  %v32 = vld [vmem:[%s1 + $0x60] sm:$0xff]
  %v33 = vld [vmem:[%s1 + $0x68] sm:$0xff]
  %v34 = vld [vmem:[%s1 + $0x70] sm:$0xff]
  %v35 = vld [vmem:[%s1 + $0x78] sm:$0xff]
  %v36 = vld [vmem:[%s1 + $0x80] sm:$0xff]
  %v37 = vld [vmem:[%s1 + $0x88] sm:$0xff]
  %v38 = vld [vmem:[%s1 + $0x90] sm:$0xff]
  %v39 = vld [vmem:[%s1 + $0x98] sm:$0xff]
  %v40 = vld [vmem:[%s1 + $0xa0] sm:$0xff]
  %v41 = vld [vmem:[%s1 + $0xa8] sm:$0xff]
  %v42 = vld [vmem:[%s1 + $0xb0] sm:$0xff]
  %v43 = vld [vmem:[%s1 + $0xb8] sm:$0xff]
  %v44 = vld [vmem:[%s1 + $0xc0] sm:$0xff]
  %v45 = vld [vmem:[%s1 + $0xc8] sm:$0xff]
  %v46 = vld [vmem:[%s1 + $0xd0] sm:$0xff]
  %v47 = vld [vmem:[%s1 + $0xd8] sm:$0xff]
  %v48 = vld [vmem:[%s1 + $0xe0] sm:$0xff]
  %v49 = vld [vmem:[%s1 + $0xe8] sm:$0xff]
  %v50 = vld [vmem:[%s1 + $0xf0] sm:$0xff]
  %v51 = vld [vmem:[%s1 + $0xf8] sm:$0xff]
  %v52 = vld [vmem:[%s1 + $0x100] sm:$0xff]
  %v53 = vld [vmem:[%s1 + $0x108] sm:$0xff]
  %v54 = vld [vmem:[%s1 + $0x110] sm:$0xff]
  %v55 = vld [vmem:[%s1 + $0x118] sm:$0xff]
  %v56 = vld [vmem:[%s1 + $0x120] sm:$0xff]
  %v57 = vld [vmem:[%s1 + $0x128] sm:$0xff]
  %v58 = vld [vmem:[%s1 + $0x130] sm:$0xff]
  %v59 = vld [vmem:[%s1 + $0x138] sm:$0xff]
  %v60 = vld [vmem:[%s1 + $0x140] sm:$0xff]
  %v61 = vld [vmem:[%s1 + $0x148] sm:$0xff]
  %v62 = vld [vmem:[%s1 + $0x150] sm:$0xff]
  %v63 = vld [vmem:[%s1 + $0x158] sm:$0xff]
  %v64 = vld [vmem:[%s1 + $0x160] sm:$0xff]
  %v65 = vld [vmem:[%s1 + $0x168] sm:$0xff]
  %v66 = vld [vmem:[%s1 + $0x170] sm:$0xff]
  %v67 = vld [vmem:[%s1 + $0x178] sm:$0xff]
  %v68 = vld [vmem:[%s1 + $0x180] sm:$0xff]
  %v69 = vld [vmem:[%s1 + $0x188] sm:$0xff]
  %v70 = vld [vmem:[%s1 + $0x190] sm:$0xff]
  %v71 = vld [vmem:[%s1 + $0x198] sm:$0xff]
  %v72 = vld [vmem:[%s1 + $0x1a0] sm:$0xff]
  %v73 = vld [vmem:[%s1 + $0x1a8] sm:$0xff]
  %v74 = vld [vmem:[%s1 + $0x1b0] sm:$0xff]
  %v75 = vld [vmem:[%s1 + $0x1b8] sm:$0xff]
  %v76 = vld [vmem:[%s1 + $0x1c0] sm:$0xff]
  %v77 = vld [vmem:[%s1 + $0x1c8] sm:$0xff]
  %v78 = vld [vmem:[%s1 + $0x1d0] sm:$0xff]
  %v79 = vld [vmem:[%s1 + $0x1d8] sm:$0xff]
  %v80 = vld [vmem:[%s1 + $0x1e0] sm:$0xff]
  %v81 = vld [vmem:[%s1 + $0x1e8] sm:$0xff]
  %v82 = vld [vmem:[%s1 + $0x1f0] sm:$0xff]
  %v83 = vld [vmem:[%s1 + $0x1f8] sm:$0xff]
  %v84 = vld [vmem:[%s2] sm:$0x1]
  %v86 = vlaneseq
  %v87 = vshrl.u32 %v86, 7
  %v88 = vsub.s32 0, %v87
  %v89 = vrot.slane %v84, %v88
  %v93 = vlaneseq
  %v94 = vshrl.u32 %v93, 7
  %v95 = vsub.s32 0, %v94
  %v96 = vrot.slane %v18, %v95
  %v97 = vlaneseq
  %v98 = vshrl.u32 %v97, 7
  %v99 = vsub.s32 2, %v98
  %v100 = vrot.slane %v18, %v99
  %v101 = vlaneseq
  %v102 = vshrl.u32 %v101, 7
  %v103 = vsub.s32 4, %v102
  %v104 = vrot.slane %v18, %v103
  %v105 = vlaneseq
  %v106 = vshrl.u32 %v105, 7
  %v107 = vsub.s32 6, %v106
  %v108 = vrot.slane %v18, %v107
  %v109 = vlaneseq
  %v110 = vshrl.u32 %v109, 7
  %v111 = vsub.s32 0, %v110
  %v112 = vrot.slane %v19, %v111
  %v113 = vlaneseq
  %v114 = vshrl.u32 %v113, 7
  %v115 = vsub.s32 2, %v114
  %v116 = vrot.slane %v19, %v115
  %v117 = vlaneseq
  %v118 = vshrl.u32 %v117, 7
  %v119 = vsub.s32 4, %v118
  %v120 = vrot.slane %v19, %v119
  %v121 = vlaneseq
  %v122 = vshrl.u32 %v121, 7
  %v123 = vsub.s32 6, %v122
  %v124 = vrot.slane %v19, %v123
  %vm125 = vcmask 1041409
  %v126 = vsel %vm125, %v112, %v96
  %v127 = vsel %vm125, %v116, %v100
  %v128 = vsel %vm125, %v120, %v104
  %v129 = vsel %vm125, %v124, %v108
  %134 = vmatprep.subr.mxu0 0.0
  %135 = vmatpush1.msra.mxu0 %v35
  %136 = vmatprep.subr.mxu0 0.0
  %137 = vmatpush1.msra.mxu0 %v34
  %138 = vmatprep.subr.mxu0 0.0
  %139 = vmatpush1.msra.mxu0 %v33
  %140 = vmatprep.subr.mxu0 0.0
  %141 = vmatpush1.msra.mxu0 %v32
  %142 = vmatprep.subr.mxu0 0.0
  %143 = vmatpush1.msra.mxu0 %v31
  %144 = vmatprep.subr.mxu0 0.0
  %145 = vmatpush1.msra.mxu0 %v30
  %146 = vmatprep.subr.mxu0 0.0
  %147 = vmatpush1.msra.mxu0 %v29
  %148 = vmatprep.subr.mxu0 0.0
  %149 = vmatpush1.msra.mxu0 %v28
  %150 = vmatprep.subr.mxu0 0.0
  %151 = vmatpush1.msra.mxu0 %v27
  %152 = vmatprep.subr.mxu0 0.0
  %153 = vmatpush1.msra.mxu0 %v26
  %154 = vmatprep.subr.mxu0 0.0
  %155 = vmatpush1.msra.mxu0 %v25
  %156 = vmatprep.subr.mxu0 0.0
  %157 = vmatpush1.msra.mxu0 %v24
  %158 = vmatprep.subr.mxu0 0.0
  %159 = vmatpush1.msra.mxu0 %v23
  %160 = vmatprep.subr.mxu0 0.0
  %161 = vmatpush1.msra.mxu0 %v22
  %162 = vmatprep.subr.mxu0 0.0
  %163 = vmatpush1.msra.mxu0 %v21
  %164 = vmatprep.subr.mxu0 0.0
  %165 = vmatpush1.msra.mxu0 %v20
  %166 = vmatprep.subr.mxu0 0.0
  %167 = vmatpush2.msra.mxu0 %v51
  %168 = vmatprep.subr.mxu0 0.0
  %169 = vmatpush2.msra.mxu0 %v50
  %170 = vmatprep.subr.mxu0 0.0
  %171 = vmatpush2.msra.mxu0 %v49
  %172 = vmatprep.subr.mxu0 0.0
  %173 = vmatpush2.msra.mxu0 %v48
  %174 = vmatprep.subr.mxu0 0.0
  %175 = vmatpush2.msra.mxu0 %v47
  %176 = vmatprep.subr.mxu0 0.0
  %177 = vmatpush2.msra.mxu0 %v46
  %178 = vmatprep.subr.mxu0 0.0
  %179 = vmatpush2.msra.mxu0 %v45
  %180 = vmatprep.subr.mxu0 0.0
  %181 = vmatpush2.msra.mxu0 %v44
  %182 = vmatprep.subr.mxu0 0.0
  %183 = vmatpush2.msra.mxu0 %v43
  %184 = vmatprep.subr.mxu0 0.0
  %185 = vmatpush2.msra.mxu0 %v42
  %186 = vmatprep.subr.mxu0 0.0
  %187 = vmatpush2.msra.mxu0 %v41
  %188 = vmatprep.subr.mxu0 0.0
  %189 = vmatpush2.msra.mxu0 %v40
  %190 = vmatprep.subr.mxu0 0.0
  %191 = vmatpush2.msra.mxu0 %v39
  %192 = vmatprep.subr.mxu0 0.0
  %193 = vmatpush2.msra.mxu0 %v38
  %194 = vmatprep.subr.mxu0 0.0
  %195 = vmatpush2.msra.mxu0 %v37
  %196 = vmatprep.subr.mxu0 0.0
  %197 = vmatpush2.msra.mxu0 %v36
  %198 = vmatprep.mubr.f32.mxu0 %v127
  %199 = vmatmul.mubr.f32.gmra.mxu0 %v126
  %v200 = vpop.f32.mrf.mxu0
  %v201 = vadd.f32 %v89, %v200
  %v202 = vpop.f32.mrf.mxu0
  %203 = vdwg.mxu0
  %204 = vmatprep.subr.mxu0 0.0
  %205 = vmatpush1.msra.mxu0 %v67
  %206 = vmatprep.subr.mxu0 0.0
  %207 = vmatpush1.msra.mxu0 %v66
  %208 = vmatprep.subr.mxu0 0.0
  %209 = vmatpush1.msra.mxu0 %v65
  %210 = vmatprep.subr.mxu0 0.0
  %211 = vmatpush1.msra.mxu0 %v64
  %212 = vmatprep.subr.mxu0 0.0
  %213 = vmatpush1.msra.mxu0 %v63
  %214 = vmatprep.subr.mxu0 0.0
  %215 = vmatpush1.msra.mxu0 %v62
  %216 = vmatprep.subr.mxu0 0.0
  %217 = vmatpush1.msra.mxu0 %v61
  %218 = vmatprep.subr.mxu0 0.0
  %219 = vmatpush1.msra.mxu0 %v60
  %220 = vmatprep.subr.mxu0 0.0
  %221 = vmatpush1.msra.mxu0 %v59
  %222 = vmatprep.subr.mxu0 0.0
  %223 = vmatpush1.msra.mxu0 %v58
  %224 = vmatprep.subr.mxu0 0.0
  %225 = vmatpush1.msra.mxu0 %v57
  %226 = vmatprep.subr.mxu0 0.0
  %227 = vmatpush1.msra.mxu0 %v56
  %228 = vmatprep.subr.mxu0 0.0
  %229 = vmatpush1.msra.mxu0 %v55
  %230 = vmatprep.subr.mxu0 0.0
  %231 = vmatpush1.msra.mxu0 %v54
  %232 = vmatprep.subr.mxu0 0.0
  %233 = vmatpush1.msra.mxu0 %v53
  %234 = vmatprep.subr.mxu0 0.0
  %235 = vmatpush1.msra.mxu0 %v52
  %236 = vmatprep.subr.mxu0 0.0
  %237 = vmatpush2.msra.mxu0 %v83
  %238 = vmatprep.subr.mxu0 0.0
  %239 = vmatpush2.msra.mxu0 %v82
  %240 = vmatprep.subr.mxu0 0.0
  %241 = vmatpush2.msra.mxu0 %v81
  %242 = vmatprep.subr.mxu0 0.0
  %243 = vmatpush2.msra.mxu0 %v80
  %244 = vmatprep.subr.mxu0 0.0
  %245 = vmatpush2.msra.mxu0 %v79
  %246 = vmatprep.subr.mxu0 0.0
  %247 = vmatpush2.msra.mxu0 %v78
  %248 = vmatprep.subr.mxu0 0.0
  %249 = vmatpush2.msra.mxu0 %v77
  %250 = vmatprep.subr.mxu0 0.0
  %251 = vmatpush2.msra.mxu0 %v76
  %252 = vmatprep.subr.mxu0 0.0
  %253 = vmatpush2.msra.mxu0 %v75
  %254 = vmatprep.subr.mxu0 0.0
  %255 = vmatpush2.msra.mxu0 %v74
  %256 = vmatprep.subr.mxu0 0.0
  %257 = vmatpush2.msra.mxu0 %v73
  %258 = vmatprep.subr.mxu0 0.0
  %259 = vmatpush2.msra.mxu0 %v72
  %260 = vmatprep.subr.mxu0 0.0
  %261 = vmatpush2.msra.mxu0 %v71
  %262 = vmatprep.subr.mxu0 0.0
  %263 = vmatpush2.msra.mxu0 %v70
  %264 = vmatprep.subr.mxu0 0.0
  %265 = vmatpush2.msra.mxu0 %v69
  %266 = vmatprep.subr.mxu0 0.0
  %267 = vmatpush2.msra.mxu0 %v68
  %268 = vmatprep.mubr.f32.mxu0 %v129
  %269 = vmatmul.mubr.f32.gmra.mxu0 %v128
  %v270 = vpop.f32.mrf.mxu0
  %v271 = vadd.f32 %v201, %v270
  %v272 = vpop.f32.mrf.mxu0
  %273 = vdwg.mxu0
  %v274 = vsub.f32 0.0, %v271
  %v275 = vmul.f32 %v274, 1.442695
  %v276 = vpow.pop %v275
  %v277 = vadd.f32 %v276, 1.0
  %v278 = vrcp.pop %v277
  %v279 = vmul.f32 1.0, %v278
  %280 = vst [vmem:[%s3] sm:$0x3] %v279
  // Predicated region
  $region14: #{resnet_forward.51} parent=0 // pred_check
    _
  $region15: #{resnet_forward.51} parent=0 // pred_check_branch
    %282 = sbr.rel (0) target = $region17
  $region16: #{resnet_forward.51} parent=0 // pred_region
    _
  $region17: #{resnet_forward.51} parent=0 // pred_fallthru
    _
  // Predicated region
  $region18: #{resnet_forward.51} parent=0 // pred_check
    _
  $region19: #{resnet_forward.51} parent=0 // pred_check_branch
    %284 = sbr.rel (0) target = $region21
  $region20: #{resnet_forward.51} parent=0 // pred_region
    _
  $region21: #{resnet_forward.51} parent=0 // pred_fallthru
    _

// kernel: resnet_forward.48
$region0: #{resnet_forward.48}
  #allocation0 [shape = 'u32[]', space=smem, size = 0x4, offset = 0x4, fixed_abs, tag = 'smem constant byte address 0x4 - core index']
  #allocation1 [shape = 'u32[144,128]{1,0:T(1,128)}', space=vmem, size = 0x12000, scoped, tag = 'internal scratch']
  %s0 = inlined_call_operand.vmem [shape: bf16[16,256], index: 0, kind: input, shape index: {}, may-alias: {0,7}]
  %s1 = inlined_call_operand.vmem [shape: bf16[256,512], index: 1, kind: input, shape index: {}]
  %s2 = inlined_call_operand.vmem [shape: f32[1,512], index: 2, kind: input, shape index: {}]
  %s3 = inlined_call_operand.vmem [shape: f32[1,512], index: 3, kind: input, shape index: {}]
  %s4 = inlined_call_operand.vmem [shape: bf16[512,512], index: 4, kind: input, shape index: {}]
  %s5 = inlined_call_operand.vmem [shape: f32[1,512], index: 5, kind: input, shape index: {}]
  %s6 = inlined_call_operand.vmem [shape: f32[1,512], index: 6, kind: input, shape index: {}]
  %s7 = inlined_call_operand.vmem [shape: bf16[16,256], index: 7, kind: input, shape index: {}, may-alias: {0,7}]
  %s8 = inlined_call_operand.vmem [shape: bf16[256,512], index: 8, kind: input, shape index: {}]
  %s9 = inlined_call_operand.vmem [shape: f32[1,512], index: 9, kind: input, shape index: {}]
  %s10 = inlined_call_operand.vmem [shape: f32[1,512], index: 10, kind: input, shape index: {}]
  %s11 = inlined_call_operand.vmem [shape: bf16[16,512], index: 11, kind: output, shape index: {}]
  %s12 = sld [smem:[#allocation0]]
  $region54: #{resnet_forward.48} parent=0
    _
  %s14 = ssub.s32 1, %s12
  %s15 = scalar_select 0, %s14, %s12
  // Predicated region
  $region2: #{resnet_forward.48} parent=0 // pred_check
    _
  $region3: #{resnet_forward.48} parent=0 // pred_check_branch
    %17 = sbr.rel (0) target = $region5
  $region4: #{resnet_forward.48} parent=0 // pred_region
    _
  $region5: #{resnet_forward.48} parent=0 // pred_fallthru
    _
  // Predicated region
  $region6: #{resnet_forward.48} parent=0 // pred_check
    _
  $region7: #{resnet_forward.48} parent=0 // pred_check_branch
    %19 = sbr.rel (0) target = $region9
  $region8: #{resnet_forward.48} parent=0 // pred_region
    _
  $region9: #{resnet_forward.48} parent=0 // pred_fallthru
    _
  // Predicated region
  $region10: #{resnet_forward.48} parent=0 // pred_check
    _
  $region11: #{resnet_forward.48} parent=0 // pred_check_branch
    %21 = sbr.rel (0) target = $region13
  $region12: #{resnet_forward.48} parent=0 // pred_region
    _
  $region13: #{resnet_forward.48} parent=0 // pred_fallthru
    _
  // Predicated region
  $region14: #{resnet_forward.48} parent=0 // pred_check
    _
  $region15: #{resnet_forward.48} parent=0 // pred_check_branch
    %23 = sbr.rel (0) target = $region17
  $region16: #{resnet_forward.48} parent=0 // pred_region
    _
  $region17: #{resnet_forward.48} parent=0 // pred_fallthru
    _
  // Predicated region
  $region18: #{resnet_forward.48} parent=0 // pred_check
    _
  $region19: #{resnet_forward.48} parent=0 // pred_check_branch
    %25 = sbr.rel (0) target = $region21
  $region20: #{resnet_forward.48} parent=0 // pred_region
    _
  $region21: #{resnet_forward.48} parent=0 // pred_fallthru
    _
  // Predicated region
  $region22: #{resnet_forward.48} parent=0 // pred_check
    _
  $region23: #{resnet_forward.48} parent=0 // pred_check_branch
    %27 = sbr.rel (0) target = $region25
  $region24: #{resnet_forward.48} parent=0 // pred_region
    _
  $region25: #{resnet_forward.48} parent=0 // pred_fallthru
    _
  // Predicated region
  $region26: #{resnet_forward.48} parent=0 // pred_check
    _
  $region27: #{resnet_forward.48} parent=0 // pred_check_branch
    %29 = sbr.rel (0) target = $region29
  $region28: #{resnet_forward.48} parent=0 // pred_region
    _
  $region29: #{resnet_forward.48} parent=0 // pred_fallthru
    _
  // Predicated region
  $region30: #{resnet_forward.48} parent=0 // pred_check
    _
  $region31: #{resnet_forward.48} parent=0 // pred_check_branch
    %31 = sbr.rel (0) target = $region33
  $region32: #{resnet_forward.48} parent=0 // pred_region
    _
  $region33: #{resnet_forward.48} parent=0 // pred_fallthru
    _
  // Predicated region
  $region34: #{resnet_forward.48} parent=0 // pred_check
    _
  $region35: #{resnet_forward.48} parent=0 // pred_check_branch
    %33 = sbr.rel (0) target = $region37
  $region36: #{resnet_forward.48} parent=0 // pred_region
    _
  $region37: #{resnet_forward.48} parent=0 // pred_fallthru
    _
  // Predicated region
  $region38: #{resnet_forward.48} parent=0 // pred_check
    _
  $region39: #{resnet_forward.48} parent=0 // pred_check_branch
    %35 = sbr.rel (0) target = $region41
  $region40: #{resnet_forward.48} parent=0 // pred_region
    _
  $region41: #{resnet_forward.48} parent=0 // pred_fallthru
    _
  // Predicated region
  $region42: #{resnet_forward.48} parent=0 // pred_check
    _
  $region43: #{resnet_forward.48} parent=0 // pred_check_branch
    %37 = sbr.rel (0) target = $region45
  $region44: #{resnet_forward.48} parent=0 // pred_region
    _
  $region45: #{resnet_forward.48} parent=0 // pred_fallthru
    _
  %v38 = vld [vmem:[%s0] sm:$0xff]
  %v39 = vld [vmem:[%s0 + $0x8] sm:$0xff]
  %v40 = vld [vmem:[%s1] sm:$0xff]
  %v41 = vld [vmem:[%s1 + $0x8] sm:$0xff]
  %v42 = vld [vmem:[%s1 + $0x10] sm:$0xff]
  %v43 = vld [vmem:[%s1 + $0x18] sm:$0xff]
  %v44 = vld [vmem:[%s1 + $0x20] sm:$0xff]
  %v45 = vld [vmem:[%s1 + $0x28] sm:$0xff]
  %v46 = vld [vmem:[%s1 + $0x30] sm:$0xff]
  %v47 = vld [vmem:[%s1 + $0x38] sm:$0xff]
  %v48 = vld [vmem:[%s1 + $0x40] sm:$0xff]
  %v49 = vld [vmem:[%s1 + $0x48] sm:$0xff]
  %v50 = vld [vmem:[%s1 + $0x50] sm:$0xff]
  %v51 = vld [vmem:[%s1 + $0x58] sm:$0xff]
  %v52 = vld [vmem:[%s1 + $0x60] sm:$0xff]
  %v53 = vld [vmem:[%s1 + $0x68] sm:$0xff]
  %v54 = vld [vmem:[%s1 + $0x70] sm:$0xff]
  %v55 = vld [vmem:[%s1 + $0x78] sm:$0xff]
  %v56 = vld [vmem:[%s1 + $0x80] sm:$0xff]
  %v57 = vld [vmem:[%s1 + $0x88] sm:$0xff]
  %v58 = vld [vmem:[%s1 + $0x90] sm:$0xff]
  %v59 = vld [vmem:[%s1 + $0x98] sm:$0xff]
  %v60 = vld [vmem:[%s1 + $0xa0] sm:$0xff]
  %v61 = vld [vmem:[%s1 + $0xa8] sm:$0xff]
  %v62 = vld [vmem:[%s1 + $0xb0] sm:$0xff]
  %v63 = vld [vmem:[%s1 + $0xb8] sm:$0xff]
  %v64 = vld [vmem:[%s1 + $0xc0] sm:$0xff]
  %v65 = vld [vmem:[%s1 + $0xc8] sm:$0xff]
  %v66 = vld [vmem:[%s1 + $0xd0] sm:$0xff]
  %v67 = vld [vmem:[%s1 + $0xd8] sm:$0xff]
  %v68 = vld [vmem:[%s1 + $0xe0] sm:$0xff]
  %v69 = vld [vmem:[%s1 + $0xe8] sm:$0xff]
  %v70 = vld [vmem:[%s1 + $0xf0] sm:$0xff]
  %v71 = vld [vmem:[%s1 + $0xf8] sm:$0xff]
  %v72 = vld [vmem:[%s1 + $0x100] sm:$0xff]
  %v73 = vld [vmem:[%s1 + $0x108] sm:$0xff]
  %v74 = vld [vmem:[%s1 + $0x110] sm:$0xff]
  %v75 = vld [vmem:[%s1 + $0x118] sm:$0xff]
  %v76 = vld [vmem:[%s1 + $0x120] sm:$0xff]
  %v77 = vld [vmem:[%s1 + $0x128] sm:$0xff]
  %v78 = vld [vmem:[%s1 + $0x130] sm:$0xff]
  %v79 = vld [vmem:[%s1 + $0x138] sm:$0xff]
  %v80 = vld [vmem:[%s1 + $0x140] sm:$0xff]
  %v81 = vld [vmem:[%s1 + $0x148] sm:$0xff]
  %v82 = vld [vmem:[%s1 + $0x150] sm:$0xff]
  %v83 = vld [vmem:[%s1 + $0x158] sm:$0xff]
  %v84 = vld [vmem:[%s1 + $0x160] sm:$0xff]
  %v85 = vld [vmem:[%s1 + $0x168] sm:$0xff]
  %v86 = vld [vmem:[%s1 + $0x170] sm:$0xff]
  %v87 = vld [vmem:[%s1 + $0x178] sm:$0xff]
  %v88 = vld [vmem:[%s1 + $0x180] sm:$0xff]
  %v89 = vld [vmem:[%s1 + $0x188] sm:$0xff]
  %v90 = vld [vmem:[%s1 + $0x190] sm:$0xff]
  %v91 = vld [vmem:[%s1 + $0x198] sm:$0xff]
  %v92 = vld [vmem:[%s1 + $0x1a0] sm:$0xff]
  %v93 = vld [vmem:[%s1 + $0x1a8] sm:$0xff]
  %v94 = vld [vmem:[%s1 + $0x1b0] sm:$0xff]
  %v95 = vld [vmem:[%s1 + $0x1b8] sm:$0xff]
  %v96 = vld [vmem:[%s1 + $0x1c0] sm:$0xff]
  %v97 = vld [vmem:[%s1 + $0x1c8] sm:$0xff]
  %v98 = vld [vmem:[%s1 + $0x1d0] sm:$0xff]
  %v99 = vld [vmem:[%s1 + $0x1d8] sm:$0xff]
  %v100 = vld [vmem:[%s1 + $0x1e0] sm:$0xff]
  %v101 = vld [vmem:[%s1 + $0x1e8] sm:$0xff]
  %v102 = vld [vmem:[%s1 + $0x1f0] sm:$0xff]
  %v103 = vld [vmem:[%s1 + $0x1f8] sm:$0xff]
  %v106 = vunpack.c.l.b16 %v38
  %v107 = vunpack.c.h.b16 %v38
  %v108 = vunpack.c.l.b16 %v39
  %v109 = vunpack.c.h.b16 %v39
  %v110 = vpack.c.b16 %v108, %v106
  %v111 = vpack.c.b16 %v109, %v107
  %v178 = vunpack.c.l.b16 %v40
  %v179 = vunpack.c.h.b16 %v40
  %v180 = vunpack.c.l.b16 %v41
  %v181 = vunpack.c.h.b16 %v41
  %v182 = vunpack.c.l.b16 %v42
  %v183 = vunpack.c.h.b16 %v42
  %v184 = vunpack.c.l.b16 %v43
  %v185 = vunpack.c.h.b16 %v43
  %v186 = vunpack.c.l.b16 %v44
  %v187 = vunpack.c.h.b16 %v44
  %v188 = vunpack.c.l.b16 %v45
  %v189 = vunpack.c.h.b16 %v45
  %v190 = vunpack.c.l.b16 %v46
  %v191 = vunpack.c.h.b16 %v46
  %v192 = vunpack.c.l.b16 %v47
  %v193 = vunpack.c.h.b16 %v47
  %v194 = vunpack.c.l.b16 %v48
  %v195 = vunpack.c.h.b16 %v48
  %v196 = vunpack.c.l.b16 %v49
  %v197 = vunpack.c.h.b16 %v49
  %v198 = vunpack.c.l.b16 %v50
  %v199 = vunpack.c.h.b16 %v50
  %v200 = vunpack.c.l.b16 %v51
  %v201 = vunpack.c.h.b16 %v51
  %v202 = vunpack.c.l.b16 %v52
  %v203 = vunpack.c.h.b16 %v52
  %v204 = vunpack.c.l.b16 %v53
  %v205 = vunpack.c.h.b16 %v53
  %v206 = vunpack.c.l.b16 %v54
  %v207 = vunpack.c.h.b16 %v54
  %v208 = vunpack.c.l.b16 %v55
  %v209 = vunpack.c.h.b16 %v55
  %v210 = vunpack.c.l.b16 %v56
  %v211 = vunpack.c.h.b16 %v56
  %v212 = vunpack.c.l.b16 %v57
  %v213 = vunpack.c.h.b16 %v57
  %v214 = vunpack.c.l.b16 %v58
  %v215 = vunpack.c.h.b16 %v58
  %v216 = vunpack.c.l.b16 %v59
  %v217 = vunpack.c.h.b16 %v59
  %v218 = vunpack.c.l.b16 %v60
  %v219 = vunpack.c.h.b16 %v60
  %v220 = vunpack.c.l.b16 %v61
  %v221 = vunpack.c.h.b16 %v61
  %v222 = vunpack.c.l.b16 %v62
  %v223 = vunpack.c.h.b16 %v62
  %v224 = vunpack.c.l.b16 %v63
  %v225 = vunpack.c.h.b16 %v63
  %v226 = vunpack.c.l.b16 %v64
  %v227 = vunpack.c.h.b16 %v64
  %v228 = vunpack.c.l.b16 %v65
  %v229 = vunpack.c.h.b16 %v65
  %v230 = vunpack.c.l.b16 %v66
  %v231 = vunpack.c.h.b16 %v66
  %v232 = vunpack.c.l.b16 %v67
  %v233 = vunpack.c.h.b16 %v67
  %v234 = vunpack.c.l.b16 %v68
  %v235 = vunpack.c.h.b16 %v68
  %v236 = vunpack.c.l.b16 %v69
  %v237 = vunpack.c.h.b16 %v69
  %v238 = vunpack.c.l.b16 %v70
  %v239 = vunpack.c.h.b16 %v70
  %v240 = vunpack.c.l.b16 %v71
  %v241 = vunpack.c.h.b16 %v71
  %v242 = vunpack.c.l.b16 %v72
  %v243 = vunpack.c.h.b16 %v72
  %v244 = vunpack.c.l.b16 %v73
  %v245 = vunpack.c.h.b16 %v73
  %v246 = vunpack.c.l.b16 %v74
  %v247 = vunpack.c.h.b16 %v74
  %v248 = vunpack.c.l.b16 %v75
  %v249 = vunpack.c.h.b16 %v75
  %v250 = vunpack.c.l.b16 %v76
  %v251 = vunpack.c.h.b16 %v76
  %v252 = vunpack.c.l.b16 %v77
  %v253 = vunpack.c.h.b16 %v77
  %v254 = vunpack.c.l.b16 %v78
  %v255 = vunpack.c.h.b16 %v78
  %v256 = vunpack.c.l.b16 %v79
  %v257 = vunpack.c.h.b16 %v79
  %v258 = vunpack.c.l.b16 %v80
  %v259 = vunpack.c.h.b16 %v80
  %v260 = vunpack.c.l.b16 %v81
  %v261 = vunpack.c.h.b16 %v81
  %v262 = vunpack.c.l.b16 %v82
  %v263 = vunpack.c.h.b16 %v82
  %v264 = vunpack.c.l.b16 %v83
  %v265 = vunpack.c.h.b16 %v83
  %v266 = vunpack.c.l.b16 %v84
  %v267 = vunpack.c.h.b16 %v84
  %v268 = vunpack.c.l.b16 %v85
  %v269 = vunpack.c.h.b16 %v85
  %v270 = vunpack.c.l.b16 %v86
  %v271 = vunpack.c.h.b16 %v86
  %v272 = vunpack.c.l.b16 %v87
  %v273 = vunpack.c.h.b16 %v87
  %v274 = vunpack.c.l.b16 %v88
  %v275 = vunpack.c.h.b16 %v88
  %v276 = vunpack.c.l.b16 %v89
  %v277 = vunpack.c.h.b16 %v89
  %v278 = vunpack.c.l.b16 %v90
  %v279 = vunpack.c.h.b16 %v90
  %v280 = vunpack.c.l.b16 %v91
  %v281 = vunpack.c.h.b16 %v91
  %v282 = vunpack.c.l.b16 %v92
  %v283 = vunpack.c.h.b16 %v92
  %v284 = vunpack.c.l.b16 %v93
  %v285 = vunpack.c.h.b16 %v93
  %v286 = vunpack.c.l.b16 %v94
  %v287 = vunpack.c.h.b16 %v94
  %v288 = vunpack.c.l.b16 %v95
  %v289 = vunpack.c.h.b16 %v95
  %v290 = vunpack.c.l.b16 %v96
  %v291 = vunpack.c.h.b16 %v96
  %v292 = vunpack.c.l.b16 %v97
  %v293 = vunpack.c.h.b16 %v97
  %v294 = vunpack.c.l.b16 %v98
  %v295 = vunpack.c.h.b16 %v98
  %v296 = vunpack.c.l.b16 %v99
  %v297 = vunpack.c.h.b16 %v99
  %v298 = vunpack.c.l.b16 %v100
  %v299 = vunpack.c.h.b16 %v100
  %v300 = vunpack.c.l.b16 %v101
  %v301 = vunpack.c.h.b16 %v101
  %v302 = vunpack.c.l.b16 %v102
  %v303 = vunpack.c.h.b16 %v102
  %v304 = vunpack.c.l.b16 %v103
  %v305 = vunpack.c.h.b16 %v103
  %v306 = vpack.c.b16 %v182, %v178
  %v307 = vpack.c.b16 %v183, %v179
  %v308 = vpack.c.b16 %v184, %v180
  %v309 = vpack.c.b16 %v185, %v181
  %v310 = vpack.c.b16 %v190, %v186
  %v311 = vpack.c.b16 %v191, %v187
  %v312 = vpack.c.b16 %v192, %v188
  %v313 = vpack.c.b16 %v193, %v189
  %v314 = vpack.c.b16 %v198, %v194
  %v315 = vpack.c.b16 %v199, %v195
  %v316 = vpack.c.b16 %v200, %v196
  %v317 = vpack.c.b16 %v201, %v197
  %v318 = vpack.c.b16 %v206, %v202
  %v319 = vpack.c.b16 %v207, %v203
  %v320 = vpack.c.b16 %v208, %v204
  %v321 = vpack.c.b16 %v209, %v205
  %v322 = vpack.c.b16 %v214, %v210
  %v323 = vpack.c.b16 %v215, %v211
  %v324 = vpack.c.b16 %v216, %v212
  %v325 = vpack.c.b16 %v217, %v213
  %v326 = vpack.c.b16 %v222, %v218
  %v327 = vpack.c.b16 %v223, %v219
  %v328 = vpack.c.b16 %v224, %v220
  %v329 = vpack.c.b16 %v225, %v221
  %v330 = vpack.c.b16 %v230, %v226
  %v331 = vpack.c.b16 %v231, %v227
  %v332 = vpack.c.b16 %v232, %v228
  %v333 = vpack.c.b16 %v233, %v229
  %v334 = vpack.c.b16 %v238, %v234
  %v335 = vpack.c.b16 %v239, %v235
  %v336 = vpack.c.b16 %v240, %v236
  %v337 = vpack.c.b16 %v241, %v237
  %v338 = vpack.c.b16 %v246, %v242
  %v339 = vpack.c.b16 %v247, %v243
  %v340 = vpack.c.b16 %v248, %v244
  %v341 = vpack.c.b16 %v249, %v245
  %v342 = vpack.c.b16 %v254, %v250
  %v343 = vpack.c.b16 %v255, %v251
  %v344 = vpack.c.b16 %v256, %v252
  %v345 = vpack.c.b16 %v257, %v253
  %v346 = vpack.c.b16 %v262, %v258
  %v347 = vpack.c.b16 %v263, %v259
  %v348 = vpack.c.b16 %v264, %v260
  %v349 = vpack.c.b16 %v265, %v261
  %v350 = vpack.c.b16 %v270, %v266
  %v351 = vpack.c.b16 %v271, %v267
  %v352 = vpack.c.b16 %v272, %v268
  %v353 = vpack.c.b16 %v273, %v269
  %v354 = vpack.c.b16 %v278, %v274
  %v355 = vpack.c.b16 %v279, %v275
  %v356 = vpack.c.b16 %v280, %v276
  %v357 = vpack.c.b16 %v281, %v277
  %v358 = vpack.c.b16 %v286, %v282
  %v359 = vpack.c.b16 %v287, %v283
  %v360 = vpack.c.b16 %v288, %v284
  %v361 = vpack.c.b16 %v289, %v285
  %v362 = vpack.c.b16 %v294, %v290
  %v363 = vpack.c.b16 %v295, %v291
  %v364 = vpack.c.b16 %v296, %v292
  %v365 = vpack.c.b16 %v297, %v293
  %v366 = vpack.c.b16 %v302, %v298
  %v367 = vpack.c.b16 %v303, %v299
  %v368 = vpack.c.b16 %v304, %v300
  %v369 = vpack.c.b16 %v305, %v301
  %434 = vmatprep.subr.bf16.mxu0 %v335
  %435 = vmatpush1.bf16.msra.mxu0 %v334
  %436 = vmatprep.subr.bf16.mxu0 %v331
  %437 = vmatpush1.bf16.msra.mxu0 %v330
  %438 = vmatprep.subr.bf16.mxu0 %v327
  %439 = vmatpush1.bf16.msra.mxu0 %v326
  %440 = vmatprep.subr.bf16.mxu0 %v323
  %441 = vmatpush1.bf16.msra.mxu0 %v322
  %442 = vmatprep.subr.bf16.mxu0 %v319
  %443 = vmatpush1.bf16.msra.mxu0 %v318
  %444 = vmatprep.subr.bf16.mxu0 %v315
  %445 = vmatpush1.bf16.msra.mxu0 %v314
  %446 = vmatprep.subr.bf16.mxu0 %v311
  %447 = vmatpush1.bf16.msra.mxu0 %v310
  %448 = vmatprep.subr.bf16.mxu0 %v307
  %449 = vmatpush1.bf16.msra.mxu0 %v306
  %450 = vmatprep.subr.bf16.mxu0 %v367
  %451 = vmatpush2.bf16.msra.mxu0 %v366
  %452 = vmatprep.subr.bf16.mxu0 %v363
  %453 = vmatpush2.bf16.msra.mxu0 %v362
  %454 = vmatprep.subr.bf16.mxu0 %v359
  %455 = vmatpush2.bf16.msra.mxu0 %v358
  %456 = vmatprep.subr.bf16.mxu0 %v355
  %457 = vmatpush2.bf16.msra.mxu0 %v354
  %458 = vmatprep.subr.bf16.mxu0 %v351
  %459 = vmatpush2.bf16.msra.mxu0 %v350
  %460 = vmatprep.subr.bf16.mxu0 %v347
  %461 = vmatpush2.bf16.msra.mxu0 %v346
  %462 = vmatprep.subr.bf16.mxu0 %v343
  %463 = vmatpush2.bf16.msra.mxu0 %v342
  %464 = vmatprep.subr.bf16.mxu0 %v339
  %465 = vmatpush2.bf16.msra.mxu0 %v338
  %466 = vmatprep.mubr.bf16.mxu0 %v111
  %467 = vmatmul.mubr.bf16.gmra.mxu0 %v110
  %v468 = vpop.f32.mrf.mxu0
  %v469 = vadd.f32 0.0, %v468
  %v470 = vpop.f32.mrf.mxu0
  %v471 = vadd.f32 0.0, %v470
  %v472 = vpop.f32.mrf.mxu0
  %v473 = vadd.f32 0.0, %v472
  %v474 = vpop.f32.mrf.mxu0
  %v475 = vadd.f32 0.0, %v474
  %476 = vdwg.mxu0
  %477 = vmatprep.subr.bf16.mxu0 %v337
  %478 = vmatpush1.bf16.msra.mxu0 %v336
  %479 = vmatprep.subr.bf16.mxu0 %v333
  %480 = vmatpush1.bf16.msra.mxu0 %v332
  %481 = vmatprep.subr.bf16.mxu0 %v329
  %482 = vmatpush1.bf16.msra.mxu0 %v328
  %483 = vmatprep.subr.bf16.mxu0 %v325
  %484 = vmatpush1.bf16.msra.mxu0 %v324
  %485 = vmatprep.subr.bf16.mxu0 %v321
  %486 = vmatpush1.bf16.msra.mxu0 %v320
  %487 = vmatprep.subr.bf16.mxu0 %v317
  %488 = vmatpush1.bf16.msra.mxu0 %v316
  %489 = vmatprep.subr.bf16.mxu0 %v313
  %490 = vmatpush1.bf16.msra.mxu0 %v312
  %491 = vmatprep.subr.bf16.mxu0 %v309
  %492 = vmatpush1.bf16.msra.mxu0 %v308
  %493 = vmatprep.subr.bf16.mxu0 %v369
  %494 = vmatpush2.bf16.msra.mxu0 %v368
  %495 = vmatprep.subr.bf16.mxu0 %v365
  %496 = vmatpush2.bf16.msra.mxu0 %v364
  %497 = vmatprep.subr.bf16.mxu0 %v361
  %498 = vmatpush2.bf16.msra.mxu0 %v360
  %499 = vmatprep.subr.bf16.mxu0 %v357
  %500 = vmatpush2.bf16.msra.mxu0 %v356
  %501 = vmatprep.subr.bf16.mxu0 %v353
  %502 = vmatpush2.bf16.msra.mxu0 %v352
  %503 = vmatprep.subr.bf16.mxu0 %v349
  %504 = vmatpush2.bf16.msra.mxu0 %v348
  %505 = vmatprep.subr.bf16.mxu0 %v345
  %506 = vmatpush2.bf16.msra.mxu0 %v344
  %507 = vmatprep.subr.bf16.mxu0 %v341
  %508 = vmatpush2.bf16.msra.mxu0 %v340
  %509 = vmatprep.mubr.bf16.mxu0 %v111
  %510 = vmatmul.mubr.bf16.gmra.mxu0 %v110
  %v511 = vpop.f32.mrf.mxu0
  %v512 = vadd.f32 0.0, %v511
  %v513 = vpop.f32.mrf.mxu0
  %v514 = vadd.f32 0.0, %v513
  %v515 = vpop.f32.mrf.mxu0
  %v516 = vadd.f32 0.0, %v515
  %v517 = vpop.f32.mrf.mxu0
  %v518 = vadd.f32 0.0, %v517
  %519 = vdwg.mxu0
  %v520 = vld [vmem:[%s2] sm:$0xf]
  %v522 = vlaneseq
  %v523 = vshrl.u32 %v522, 7
  %v524 = vsub.s32 0, %v523
  %v525 = vrot.slane %v520, %v524
  %v526 = vlaneseq
  %v527 = vshrl.u32 %v526, 7
  %v528 = vsub.s32 1, %v527
  %v529 = vrot.slane %v520, %v528
  %v530 = vlaneseq
  %v531 = vshrl.u32 %v530, 7
  %v532 = vsub.s32 2, %v531
  %v533 = vrot.slane %v520, %v532
  %v534 = vlaneseq
  %v535 = vshrl.u32 %v534, 7
  %v536 = vsub.s32 3, %v535
  %v537 = vrot.slane %v520, %v536
  %v542 = vmul.f32 %v469, %v525
  %v543 = vmul.f32 %v471, %v529
  %v544 = vmul.f32 %v512, %v533
  %v545 = vmul.f32 %v514, %v537
  %v546 = vmul.f32 %v473, %v525
  %v547 = vmul.f32 %v475, %v529
  %v548 = vmul.f32 %v516, %v533
  %v549 = vmul.f32 %v518, %v537
  %v550 = vld [vmem:[%s3] sm:$0xf]
  %v552 = vlaneseq
  %v553 = vshrl.u32 %v552, 7
  %v554 = vsub.s32 0, %v553
  %v555 = vrot.slane %v550, %v554
  %v556 = vlaneseq
  %v557 = vshrl.u32 %v556, 7
  %v558 = vsub.s32 1, %v557
  %v559 = vrot.slane %v550, %v558
  %v560 = vlaneseq
  %v561 = vshrl.u32 %v560, 7
  %v562 = vsub.s32 2, %v561
  %v563 = vrot.slane %v550, %v562
  %v564 = vlaneseq
  %v565 = vshrl.u32 %v564, 7
  %v566 = vsub.s32 3, %v565
  %v567 = vrot.slane %v550, %v566
  %v572 = vadd.f32 %v542, %v555
  %v573 = vadd.f32 %v543, %v559
  %v574 = vadd.f32 %v544, %v563
  %v575 = vadd.f32 %v545, %v567
  %v576 = vadd.f32 %v546, %v555
  %v577 = vadd.f32 %v547, %v559
  %v578 = vadd.f32 %v548, %v563
  %v579 = vadd.f32 %v549, %v567
  %v580 = vmax.f32 %v572, 0.0
  %v581 = vmax.f32 %v573, 0.0
  %v582 = vmax.f32 %v574, 0.0
  %v583 = vmax.f32 %v575, 0.0
  %v584 = vmax.f32 %v576, 0.0
  %v585 = vmax.f32 %v577, 0.0
  %v586 = vmax.f32 %v578, 0.0
  %v587 = vmax.f32 %v579, 0.0
  %v588 = vpack.c.bf16 %v584, %v580
  %v589 = vpack.c.bf16 %v585, %v581
  %v590 = vpack.c.bf16 %v586, %v582
  %v591 = vpack.c.bf16 %v587, %v583
  %v592 = vld [vmem:[%s4] sm:$0xff]
  %v593 = vld [vmem:[%s4 + $0x8] sm:$0xff]
  %v594 = vld [vmem:[%s4 + $0x10] sm:$0xff]
  %v595 = vld [vmem:[%s4 + $0x18] sm:$0xff]
  %v596 = vld [vmem:[%s4 + $0x20] sm:$0xff]
  %v597 = vld [vmem:[%s4 + $0x28] sm:$0xff]
  %v598 = vld [vmem:[%s4 + $0x30] sm:$0xff]
  %v599 = vld [vmem:[%s4 + $0x38] sm:$0xff]
  %v600 = vld [vmem:[%s4 + $0x40] sm:$0xff]
  %v601 = vld [vmem:[%s4 + $0x48] sm:$0xff]
  %v602 = vld [vmem:[%s4 + $0x50] sm:$0xff]
  %v603 = vld [vmem:[%s4 + $0x58] sm:$0xff]
  %v604 = vld [vmem:[%s4 + $0x60] sm:$0xff]
  %v605 = vld [vmem:[%s4 + $0x68] sm:$0xff]
  %v606 = vld [vmem:[%s4 + $0x70] sm:$0xff]
  %v607 = vld [vmem:[%s4 + $0x78] sm:$0xff]
  %v608 = vld [vmem:[%s4 + $0x80] sm:$0xff]
  %v609 = vld [vmem:[%s4 + $0x88] sm:$0xff]
  %v610 = vld [vmem:[%s4 + $0x90] sm:$0xff]
  %v611 = vld [vmem:[%s4 + $0x98] sm:$0xff]
  %v612 = vld [vmem:[%s4 + $0xa0] sm:$0xff]
  %v613 = vld [vmem:[%s4 + $0xa8] sm:$0xff]
  %v614 = vld [vmem:[%s4 + $0xb0] sm:$0xff]
  %v615 = vld [vmem:[%s4 + $0xb8] sm:$0xff]
  %v616 = vld [vmem:[%s4 + $0xc0] sm:$0xff]
  %v617 = vld [vmem:[%s4 + $0xc8] sm:$0xff]
  %v618 = vld [vmem:[%s4 + $0xd0] sm:$0xff]
  %v619 = vld [vmem:[%s4 + $0xd8] sm:$0xff]
  %v620 = vld [vmem:[%s4 + $0xe0] sm:$0xff]
  %v621 = vld [vmem:[%s4 + $0xe8] sm:$0xff]
  %v622 = vld [vmem:[%s4 + $0xf0] sm:$0xff]
  %v623 = vld [vmem:[%s4 + $0xf8] sm:$0xff]
  %v624 = vld [vmem:[%s4 + $0x100] sm:$0xff]
  %v625 = vld [vmem:[%s4 + $0x108] sm:$0xff]
  %v626 = vld [vmem:[%s4 + $0x110] sm:$0xff]
  %v627 = vld [vmem:[%s4 + $0x118] sm:$0xff]
  %v628 = vld [vmem:[%s4 + $0x120] sm:$0xff]
  %v629 = vld [vmem:[%s4 + $0x128] sm:$0xff]
  %v630 = vld [vmem:[%s4 + $0x130] sm:$0xff]
  %v631 = vld [vmem:[%s4 + $0x138] sm:$0xff]
  %v632 = vld [vmem:[%s4 + $0x140] sm:$0xff]
  %v633 = vld [vmem:[%s4 + $0x148] sm:$0xff]
  %v634 = vld [vmem:[%s4 + $0x150] sm:$0xff]
  %v635 = vld [vmem:[%s4 + $0x158] sm:$0xff]
  %v636 = vld [vmem:[%s4 + $0x160] sm:$0xff]
  %v637 = vld [vmem:[%s4 + $0x168] sm:$0xff]
  %v638 = vld [vmem:[%s4 + $0x170] sm:$0xff]
  %v639 = vld [vmem:[%s4 + $0x178] sm:$0xff]
  %v640 = vld [vmem:[%s4 + $0x180] sm:$0xff]
  %v641 = vld [vmem:[%s4 + $0x188] sm:$0xff]
  %v642 = vld [vmem:[%s4 + $0x190] sm:$0xff]
  %v643 = vld [vmem:[%s4 + $0x198] sm:$0xff]
  %v644 = vld [vmem:[%s4 + $0x1a0] sm:$0xff]
  %v645 = vld [vmem:[%s4 + $0x1a8] sm:$0xff]
  %v646 = vld [vmem:[%s4 + $0x1b0] sm:$0xff]
  %v647 = vld [vmem:[%s4 + $0x1b8] sm:$0xff]
  %v648 = vld [vmem:[%s4 + $0x1c0] sm:$0xff]
  %v649 = vld [vmem:[%s4 + $0x1c8] sm:$0xff]
  %v650 = vld [vmem:[%s4 + $0x1d0] sm:$0xff]
  %v651 = vld [vmem:[%s4 + $0x1d8] sm:$0xff]
  %v652 = vld [vmem:[%s4 + $0x1e0] sm:$0xff]
  %v653 = vld [vmem:[%s4 + $0x1e8] sm:$0xff]
  %v654 = vld [vmem:[%s4 + $0x1f0] sm:$0xff]
  %v655 = vld [vmem:[%s4 + $0x1f8] sm:$0xff]
  %v656 = vld [vmem:[%s4 + $0x200] sm:$0xff]
  %v657 = vld [vmem:[%s4 + $0x208] sm:$0xff]
  %v658 = vld [vmem:[%s4 + $0x210] sm:$0xff]
  %v659 = vld [vmem:[%s4 + $0x218] sm:$0xff]
  %v660 = vld [vmem:[%s4 + $0x220] sm:$0xff]
  %v661 = vld [vmem:[%s4 + $0x228] sm:$0xff]
  %v662 = vld [vmem:[%s4 + $0x230] sm:$0xff]
  %v663 = vld [vmem:[%s4 + $0x238] sm:$0xff]
  %v664 = vld [vmem:[%s4 + $0x240] sm:$0xff]
  %v665 = vld [vmem:[%s4 + $0x248] sm:$0xff]
  %v666 = vld [vmem:[%s4 + $0x250] sm:$0xff]
  %v667 = vld [vmem:[%s4 + $0x258] sm:$0xff]
  %v668 = vld [vmem:[%s4 + $0x260] sm:$0xff]
  %v669 = vld [vmem:[%s4 + $0x268] sm:$0xff]
  %v670 = vld [vmem:[%s4 + $0x270] sm:$0xff]
  %v671 = vld [vmem:[%s4 + $0x278] sm:$0xff]
  %v672 = vld [vmem:[%s4 + $0x280] sm:$0xff]
  %v673 = vld [vmem:[%s4 + $0x288] sm:$0xff]
  %v674 = vld [vmem:[%s4 + $0x290] sm:$0xff]
  %v675 = vld [vmem:[%s4 + $0x298] sm:$0xff]
  %v676 = vld [vmem:[%s4 + $0x2a0] sm:$0xff]
  %v677 = vld [vmem:[%s4 + $0x2a8] sm:$0xff]
  %v678 = vld [vmem:[%s4 + $0x2b0] sm:$0xff]
  %v679 = vld [vmem:[%s4 + $0x2b8] sm:$0xff]
  %v680 = vld [vmem:[%s4 + $0x2c0] sm:$0xff]
  %v681 = vld [vmem:[%s4 + $0x2c8] sm:$0xff]
  %v682 = vld [vmem:[%s4 + $0x2d0] sm:$0xff]
  %v683 = vld [vmem:[%s4 + $0x2d8] sm:$0xff]
  %v684 = vld [vmem:[%s4 + $0x2e0] sm:$0xff]
  %v685 = vld [vmem:[%s4 + $0x2e8] sm:$0xff]
  %v686 = vld [vmem:[%s4 + $0x2f0] sm:$0xff]
  %v687 = vld [vmem:[%s4 + $0x2f8] sm:$0xff]
  %v688 = vld [vmem:[%s4 + $0x300] sm:$0xff]
  %v689 = vld [vmem:[%s4 + $0x308] sm:$0xff]
  %v690 = vld [vmem:[%s4 + $0x310] sm:$0xff]
  %v691 = vld [vmem:[%s4 + $0x318] sm:$0xff]
  %v692 = vld [vmem:[%s4 + $0x320] sm:$0xff]
  %v693 = vld [vmem:[%s4 + $0x328] sm:$0xff]
  %v694 = vld [vmem:[%s4 + $0x330] sm:$0xff]
  %v695 = vld [vmem:[%s4 + $0x338] sm:$0xff]
  %v696 = vld [vmem:[%s4 + $0x340] sm:$0xff]
  %v697 = vld [vmem:[%s4 + $0x348] sm:$0xff]
  %v698 = vld [vmem:[%s4 + $0x350] sm:$0xff]
  %v699 = vld [vmem:[%s4 + $0x358] sm:$0xff]
  %v700 = vld [vmem:[%s4 + $0x360] sm:$0xff]
  %v701 = vld [vmem:[%s4 + $0x368] sm:$0xff]
  %v702 = vld [vmem:[%s4 + $0x370] sm:$0xff]
  %v703 = vld [vmem:[%s4 + $0x378] sm:$0xff]
  %v704 = vld [vmem:[%s4 + $0x380] sm:$0xff]
  %v705 = vld [vmem:[%s4 + $0x388] sm:$0xff]
  %v706 = vld [vmem:[%s4 + $0x390] sm:$0xff]
  %v707 = vld [vmem:[%s4 + $0x398] sm:$0xff]
  %v708 = vld [vmem:[%s4 + $0x3a0] sm:$0xff]
  %v709 = vld [vmem:[%s4 + $0x3a8] sm:$0xff]
  %v710 = vld [vmem:[%s4 + $0x3b0] sm:$0xff]
  %v711 = vld [vmem:[%s4 + $0x3b8] sm:$0xff]
  %v712 = vld [vmem:[%s4 + $0x3c0] sm:$0xff]
  %v713 = vld [vmem:[%s4 + $0x3c8] sm:$0xff]
  %v714 = vld [vmem:[%s4 + $0x3d0] sm:$0xff]
  %v715 = vld [vmem:[%s4 + $0x3d8] sm:$0xff]
  %v716 = vld [vmem:[%s4 + $0x3e0] sm:$0xff]
  %v717 = vld [vmem:[%s4 + $0x3e8] sm:$0xff]
  %v718 = vld [vmem:[%s4 + $0x3f0] sm:$0xff]
  %v719 = vld [vmem:[%s4 + $0x3f8] sm:$0xff]
  %v848 = vunpack.c.l.b16 %v592
  %v849 = vunpack.c.h.b16 %v592
  %v850 = vunpack.c.l.b16 %v593
  %v851 = vunpack.c.h.b16 %v593
  %v852 = vunpack.c.l.b16 %v594
  %v853 = vunpack.c.h.b16 %v594
  %v854 = vunpack.c.l.b16 %v595
  %v855 = vunpack.c.h.b16 %v595
  %v856 = vunpack.c.l.b16 %v596
  %v857 = vunpack.c.h.b16 %v596
  %v858 = vunpack.c.l.b16 %v597
  %v859 = vunpack.c.h.b16 %v597
  %v860 = vunpack.c.l.b16 %v598
  %v861 = vunpack.c.h.b16 %v598
  %v862 = vunpack.c.l.b16 %v599
  %v863 = vunpack.c.h.b16 %v599
  %v864 = vunpack.c.l.b16 %v600
  %v865 = vunpack.c.h.b16 %v600
  %v866 = vunpack.c.l.b16 %v601
  %v867 = vunpack.c.h.b16 %v601
  %v868 = vunpack.c.l.b16 %v602
  %v869 = vunpack.c.h.b16 %v602
  %v870 = vunpack.c.l.b16 %v603
  %v871 = vunpack.c.h.b16 %v603
  %v872 = vunpack.c.l.b16 %v604
  %v873 = vunpack.c.h.b16 %v604
  %v874 = vunpack.c.l.b16 %v605
  %v875 = vunpack.c.h.b16 %v605
  %v876 = vunpack.c.l.b16 %v606
  %v877 = vunpack.c.h.b16 %v606
  %v878 = vunpack.c.l.b16 %v607
  %v879 = vunpack.c.h.b16 %v607
  %v880 = vunpack.c.l.b16 %v608
  %v881 = vunpack.c.h.b16 %v608
  %v882 = vunpack.c.l.b16 %v609
  %v883 = vunpack.c.h.b16 %v609
  %v884 = vunpack.c.l.b16 %v610
  %v885 = vunpack.c.h.b16 %v610
  %v886 = vunpack.c.l.b16 %v611
  %v887 = vunpack.c.h.b16 %v611
  %v888 = vunpack.c.l.b16 %v612
  %v889 = vunpack.c.h.b16 %v612
  %v890 = vunpack.c.l.b16 %v613
  %v891 = vunpack.c.h.b16 %v613
  %v892 = vunpack.c.l.b16 %v614
  %v893 = vunpack.c.h.b16 %v614
  %v894 = vunpack.c.l.b16 %v615
  %v895 = vunpack.c.h.b16 %v615
  %v896 = vunpack.c.l.b16 %v616
  %v897 = vunpack.c.h.b16 %v616
  %v898 = vunpack.c.l.b16 %v617
  %v899 = vunpack.c.h.b16 %v617
  %v900 = vunpack.c.l.b16 %v618
  %v901 = vunpack.c.h.b16 %v618
  %v902 = vunpack.c.l.b16 %v619
  %v903 = vunpack.c.h.b16 %v619
  %v904 = vunpack.c.l.b16 %v620
  %v905 = vunpack.c.h.b16 %v620
  %v906 = vunpack.c.l.b16 %v621
  %v907 = vunpack.c.h.b16 %v621
  %v908 = vunpack.c.l.b16 %v622
  %v909 = vunpack.c.h.b16 %v622
  %v910 = vunpack.c.l.b16 %v623
  %v911 = vunpack.c.h.b16 %v623
  %v912 = vunpack.c.l.b16 %v624
  %v913 = vunpack.c.h.b16 %v624
  %v914 = vunpack.c.l.b16 %v625
  %v915 = vunpack.c.h.b16 %v625
  %v916 = vunpack.c.l.b16 %v626
  %v917 = vunpack.c.h.b16 %v626
  %v918 = vunpack.c.l.b16 %v627
  %v919 = vunpack.c.h.b16 %v627
  %v920 = vunpack.c.l.b16 %v628
  %v921 = vunpack.c.h.b16 %v628
  %v922 = vunpack.c.l.b16 %v629
  %v923 = vunpack.c.h.b16 %v629
  %v924 = vunpack.c.l.b16 %v630
  %v925 = vunpack.c.h.b16 %v630
  %v926 = vunpack.c.l.b16 %v631
  %v927 = vunpack.c.h.b16 %v631
  %v928 = vunpack.c.l.b16 %v632
  %v929 = vunpack.c.h.b16 %v632
  %v930 = vunpack.c.l.b16 %v633
  %v931 = vunpack.c.h.b16 %v633
  %v932 = vunpack.c.l.b16 %v634
  %v933 = vunpack.c.h.b16 %v634
  %v934 = vunpack.c.l.b16 %v635
  %v935 = vunpack.c.h.b16 %v635
  %v936 = vunpack.c.l.b16 %v636
  %v937 = vunpack.c.h.b16 %v636
  %v938 = vunpack.c.l.b16 %v637
  %v939 = vunpack.c.h.b16 %v637
  %v940 = vunpack.c.l.b16 %v638
  %v941 = vunpack.c.h.b16 %v638
  %v942 = vunpack.c.l.b16 %v639
  %v943 = vunpack.c.h.b16 %v639
  %v944 = vunpack.c.l.b16 %v640
  %v945 = vunpack.c.h.b16 %v640
  %v946 = vunpack.c.l.b16 %v641
  %v947 = vunpack.c.h.b16 %v641
  %v948 = vunpack.c.l.b16 %v642
  %v949 = vunpack.c.h.b16 %v642
  %v950 = vunpack.c.l.b16 %v643
  %v951 = vunpack.c.h.b16 %v643
  %v952 = vunpack.c.l.b16 %v644
  %v953 = vunpack.c.h.b16 %v644
  %v954 = vunpack.c.l.b16 %v645
  %v955 = vunpack.c.h.b16 %v645
  %v956 = vunpack.c.l.b16 %v646
  %v957 = vunpack.c.h.b16 %v646
  %v958 = vunpack.c.l.b16 %v647
  %v959 = vunpack.c.h.b16 %v647
  %v960 = vunpack.c.l.b16 %v648
  %v961 = vunpack.c.h.b16 %v648
  %v962 = vunpack.c.l.b16 %v649
  %v963 = vunpack.c.h.b16 %v649
  %v964 = vunpack.c.l.b16 %v650
  %v965 = vunpack.c.h.b16 %v650
  %v966 = vunpack.c.l.b16 %v651
  %v967 = vunpack.c.h.b16 %v651
  %v968 = vunpack.c.l.b16 %v652
  %v969 = vunpack.c.h.b16 %v652
  %v970 = vunpack.c.l.b16 %v653
  %v971 = vunpack.c.h.b16 %v653
  %v972 = vunpack.c.l.b16 %v654
  %v973 = vunpack.c.h.b16 %v654
  %v974 = vunpack.c.l.b16 %v655
  %v975 = vunpack.c.h.b16 %v655
  %v976 = vunpack.c.l.b16 %v656
  %v977 = vunpack.c.h.b16 %v656
  %v978 = vunpack.c.l.b16 %v657
  %v979 = vunpack.c.h.b16 %v657
  %v980 = vunpack.c.l.b16 %v658
  %v981 = vunpack.c.h.b16 %v658
  %v982 = vunpack.c.l.b16 %v659
  %v983 = vunpack.c.h.b16 %v659
  %v984 = vunpack.c.l.b16 %v660
  %v985 = vunpack.c.h.b16 %v660
  %v986 = vunpack.c.l.b16 %v661
  %v987 = vunpack.c.h.b16 %v661
  %v988 = vunpack.c.l.b16 %v662
  %v989 = vunpack.c.h.b16 %v662
  %v990 = vunpack.c.l.b16 %v663
  %v991 = vunpack.c.h.b16 %v663
  %v992 = vunpack.c.l.b16 %v664
  %v993 = vunpack.c.h.b16 %v664
  %v994 = vunpack.c.l.b16 %v665
  %v995 = vunpack.c.h.b16 %v665
  %v996 = vunpack.c.l.b16 %v666
  %v997 = vunpack.c.h.b16 %v666
  %v998 = vunpack.c.l.b16 %v667
  %v999 = vunpack.c.h.b16 %v667
  %v1000 = vunpack.c.l.b16 %v668
  %v1001 = vunpack.c.h.b16 %v668
  %v1002 = vunpack.c.l.b16 %v669
  %v1003 = vunpack.c.h.b16 %v669
  %v1004 = vunpack.c.l.b16 %v670
  %v1005 = vunpack.c.h.b16 %v670
  %v1006 = vunpack.c.l.b16 %v671
  %v1007 = vunpack.c.h.b16 %v671
  %v1008 = vunpack.c.l.b16 %v672
  %v1009 = vunpack.c.h.b16 %v672
  %v1010 = vunpack.c.l.b16 %v673
  %v1011 = vunpack.c.h.b16 %v673
  %v1012 = vunpack.c.l.b16 %v674
  %v1013 = vunpack.c.h.b16 %v674
  %v1014 = vunpack.c.l.b16 %v675
  %v1015 = vunpack.c.h.b16 %v675
  %v1016 = vunpack.c.l.b16 %v676
  %v1017 = vunpack.c.h.b16 %v676
  %v1018 = vunpack.c.l.b16 %v677
  %v1019 = vunpack.c.h.b16 %v677
  %v1020 = vunpack.c.l.b16 %v678
  %v1021 = vunpack.c.h.b16 %v678
  %v1022 = vunpack.c.l.b16 %v679
  %v1023 = vunpack.c.h.b16 %v679
  %v1024 = vunpack.c.l.b16 %v680
  %v1025 = vunpack.c.h.b16 %v680
  %v1026 = vunpack.c.l.b16 %v681
  %v1027 = vunpack.c.h.b16 %v681
  %v1028 = vunpack.c.l.b16 %v682
  %v1029 = vunpack.c.h.b16 %v682
  %v1030 = vunpack.c.l.b16 %v683
  %v1031 = vunpack.c.h.b16 %v683
  %v1032 = vunpack.c.l.b16 %v684
  %v1033 = vunpack.c.h.b16 %v684
  %v1034 = vunpack.c.l.b16 %v685
  %v1035 = vunpack.c.h.b16 %v685
  %v1036 = vunpack.c.l.b16 %v686
  %v1037 = vunpack.c.h.b16 %v686
  %v1038 = vunpack.c.l.b16 %v687
  %v1039 = vunpack.c.h.b16 %v687
  %v1040 = vunpack.c.l.b16 %v688
  %v1041 = vunpack.c.h.b16 %v688
  %v1042 = vunpack.c.l.b16 %v689
  %v1043 = vunpack.c.h.b16 %v689
  %v1044 = vunpack.c.l.b16 %v690
  %v1045 = vunpack.c.h.b16 %v690
  %v1046 = vunpack.c.l.b16 %v691
  %v1047 = vunpack.c.h.b16 %v691
  %v1048 = vunpack.c.l.b16 %v692
  %v1049 = vunpack.c.h.b16 %v692
  %v1050 = vunpack.c.l.b16 %v693
  %v1051 = vunpack.c.h.b16 %v693
  %v1052 = vunpack.c.l.b16 %v694
  %v1053 = vunpack.c.h.b16 %v694
  %v1054 = vunpack.c.l.b16 %v695
  %v1055 = vunpack.c.h.b16 %v695
  %v1056 = vunpack.c.l.b16 %v696
  %v1057 = vunpack.c.h.b16 %v696
  %v1058 = vunpack.c.l.b16 %v697
  %v1059 = vunpack.c.h.b16 %v697
  %v1060 = vunpack.c.l.b16 %v698
  %v1061 = vunpack.c.h.b16 %v698
  %v1062 = vunpack.c.l.b16 %v699
  %v1063 = vunpack.c.h.b16 %v699
  %v1064 = vunpack.c.l.b16 %v700
  %v1065 = vunpack.c.h.b16 %v700
  %v1066 = vunpack.c.l.b16 %v701
  %v1067 = vunpack.c.h.b16 %v701
  %v1068 = vunpack.c.l.b16 %v702
  %v1069 = vunpack.c.h.b16 %v702
  %v1070 = vunpack.c.l.b16 %v703
  %v1071 = vunpack.c.h.b16 %v703
  %v1072 = vunpack.c.l.b16 %v704
  %v1073 = vunpack.c.h.b16 %v704
  %v1074 = vunpack.c.l.b16 %v705
  %v1075 = vunpack.c.h.b16 %v705
  %v1076 = vunpack.c.l.b16 %v706
  %v1077 = vunpack.c.h.b16 %v706
  %v1078 = vunpack.c.l.b16 %v707
  %v1079 = vunpack.c.h.b16 %v707
  %v1080 = vunpack.c.l.b16 %v708
  %v1081 = vunpack.c.h.b16 %v708
  %v1082 = vunpack.c.l.b16 %v709
  %v1083 = vunpack.c.h.b16 %v709
  %v1084 = vunpack.c.l.b16 %v710
  %v1085 = vunpack.c.h.b16 %v710
  %v1086 = vunpack.c.l.b16 %v711
  %v1087 = vunpack.c.h.b16 %v711
  %v1088 = vunpack.c.l.b16 %v712
  %v1089 = vunpack.c.h.b16 %v712
  %v1090 = vunpack.c.l.b16 %v713
  %v1091 = vunpack.c.h.b16 %v713
  %v1092 = vunpack.c.l.b16 %v714
  %v1093 = vunpack.c.h.b16 %v714
  %v1094 = vunpack.c.l.b16 %v715
  %v1095 = vunpack.c.h.b16 %v715
  %v1096 = vunpack.c.l.b16 %v716
  %v1097 = vunpack.c.h.b16 %v716
  %v1098 = vunpack.c.l.b16 %v717
  %v1099 = vunpack.c.h.b16 %v717
  %v1100 = vunpack.c.l.b16 %v718
  %v1101 = vunpack.c.h.b16 %v718
  %v1102 = vunpack.c.l.b16 %v719
  %v1103 = vunpack.c.h.b16 %v719
  %v1104 = vpack.c.b16 %v852, %v848
  %v1105 = vpack.c.b16 %v853, %v849
  %v1106 = vpack.c.b16 %v854, %v850
  %v1107 = vpack.c.b16 %v855, %v851
  %v1108 = vpack.c.b16 %v860, %v856
  %v1109 = vpack.c.b16 %v861, %v857
  %v1110 = vpack.c.b16 %v862, %v858
  %v1111 = vpack.c.b16 %v863, %v859
  %v1112 = vpack.c.b16 %v868, %v864
  %v1113 = vpack.c.b16 %v869, %v865
  %v1114 = vpack.c.b16 %v870, %v866
  %v1115 = vpack.c.b16 %v871, %v867
  %v1116 = vpack.c.b16 %v876, %v872
  %v1117 = vpack.c.b16 %v877, %v873
  %v1118 = vpack.c.b16 %v878, %v874
  %v1119 = vpack.c.b16 %v879, %v875
  %v1120 = vpack.c.b16 %v884, %v880
  %v1121 = vpack.c.b16 %v885, %v881
  %v1122 = vpack.c.b16 %v886, %v882
  %v1123 = vpack.c.b16 %v887, %v883
  %v1124 = vpack.c.b16 %v892, %v888
  %v1125 = vpack.c.b16 %v893, %v889
  %v1126 = vpack.c.b16 %v894, %v890
  %v1127 = vpack.c.b16 %v895, %v891
  %v1128 = vpack.c.b16 %v900, %v896
  %v1129 = vpack.c.b16 %v901, %v897
  %v1130 = vpack.c.b16 %v902, %v898
  %v1131 = vpack.c.b16 %v903, %v899
  %v1132 = vpack.c.b16 %v908, %v904
  %v1133 = vpack.c.b16 %v909, %v905
  %v1134 = vpack.c.b16 %v910, %v906
  %v1135 = vpack.c.b16 %v911, %v907
  %v1136 = vpack.c.b16 %v916, %v912
  %v1137 = vpack.c.b16 %v917, %v913
  %v1138 = vpack.c.b16 %v918, %v914
  %v1139 = vpack.c.b16 %v919, %v915
  %v1140 = vpack.c.b16 %v924, %v920
  %v1141 = vpack.c.b16 %v925, %v921
  %v1142 = vpack.c.b16 %v926, %v922
  %v1143 = vpack.c.b16 %v927, %v923
  %v1144 = vpack.c.b16 %v932, %v928
  %v1145 = vpack.c.b16 %v933, %v929
  %v1146 = vpack.c.b16 %v934, %v930
  %v1147 = vpack.c.b16 %v935, %v931
  %v1148 = vpack.c.b16 %v940, %v936
  %v1149 = vpack.c.b16 %v941, %v937
  %v1150 = vpack.c.b16 %v942, %v938
  %v1151 = vpack.c.b16 %v943, %v939
  %v1152 = vpack.c.b16 %v948, %v944
  %v1153 = vpack.c.b16 %v949, %v945
  %v1154 = vpack.c.b16 %v950, %v946
  %v1155 = vpack.c.b16 %v951, %v947
  %v1156 = vpack.c.b16 %v956, %v952
  %v1157 = vpack.c.b16 %v957, %v953
  %v1158 = vpack.c.b16 %v958, %v954
  %v1159 = vpack.c.b16 %v959, %v955
  %v1160 = vpack.c.b16 %v964, %v960
  %v1161 = vpack.c.b16 %v965, %v961
  %v1162 = vpack.c.b16 %v966, %v962
  %v1163 = vpack.c.b16 %v967, %v963
  %v1164 = vpack.c.b16 %v972, %v968
  %v1165 = vpack.c.b16 %v973, %v969
  %v1166 = vpack.c.b16 %v974, %v970
  %v1167 = vpack.c.b16 %v975, %v971
  %v1168 = vpack.c.b16 %v980, %v976
  %v1169 = vpack.c.b16 %v981, %v977
  %v1170 = vpack.c.b16 %v982, %v978
  %v1171 = vpack.c.b16 %v983, %v979
  %v1172 = vpack.c.b16 %v988, %v984
  %v1173 = vpack.c.b16 %v989, %v985
  %v1174 = vpack.c.b16 %v990, %v986
  %v1175 = vpack.c.b16 %v991, %v987
  %v1176 = vpack.c.b16 %v996, %v992
  %v1177 = vpack.c.b16 %v997, %v993
  %v1178 = vpack.c.b16 %v998, %v994
  %v1179 = vpack.c.b16 %v999, %v995
  %v1180 = vpack.c.b16 %v1004, %v1000
  %v1181 = vpack.c.b16 %v1005, %v1001
  %v1182 = vpack.c.b16 %v1006, %v1002
  %v1183 = vpack.c.b16 %v1007, %v1003
  %v1184 = vpack.c.b16 %v1012, %v1008
  %v1185 = vpack.c.b16 %v1013, %v1009
  %v1186 = vpack.c.b16 %v1014, %v1010
  %v1187 = vpack.c.b16 %v1015, %v1011
  %v1188 = vpack.c.b16 %v1020, %v1016
  %v1189 = vpack.c.b16 %v1021, %v1017
  %v1190 = vpack.c.b16 %v1022, %v1018
  %v1191 = vpack.c.b16 %v1023, %v1019
  %v1192 = vpack.c.b16 %v1028, %v1024
  %v1193 = vpack.c.b16 %v1029, %v1025
  %v1194 = vpack.c.b16 %v1030, %v1026
  %v1195 = vpack.c.b16 %v1031, %v1027
  %v1196 = vpack.c.b16 %v1036, %v1032
  %v1197 = vpack.c.b16 %v1037, %v1033
  %v1198 = vpack.c.b16 %v1038, %v1034
  %v1199 = vpack.c.b16 %v1039, %v1035
  %v1200 = vpack.c.b16 %v1044, %v1040
  %v1201 = vpack.c.b16 %v1045, %v1041
  %v1202 = vpack.c.b16 %v1046, %v1042
  %v1203 = vpack.c.b16 %v1047, %v1043
  %v1204 = vpack.c.b16 %v1052, %v1048
  %v1205 = vpack.c.b16 %v1053, %v1049
  %v1206 = vpack.c.b16 %v1054, %v1050
  %v1207 = vpack.c.b16 %v1055, %v1051
  %v1208 = vpack.c.b16 %v1060, %v1056
  %v1209 = vpack.c.b16 %v1061, %v1057
  %v1210 = vpack.c.b16 %v1062, %v1058
  %v1211 = vpack.c.b16 %v1063, %v1059
  %v1212 = vpack.c.b16 %v1068, %v1064
  %v1213 = vpack.c.b16 %v1069, %v1065
  %v1214 = vpack.c.b16 %v1070, %v1066
  %v1215 = vpack.c.b16 %v1071, %v1067
  %v1216 = vpack.c.b16 %v1076, %v1072
  %v1217 = vpack.c.b16 %v1077, %v1073
  %v1218 = vpack.c.b16 %v1078, %v1074
  %v1219 = vpack.c.b16 %v1079, %v1075
  %v1220 = vpack.c.b16 %v1084, %v1080
  %v1221 = vpack.c.b16 %v1085, %v1081
  %v1222 = vpack.c.b16 %v1086, %v1082
  %v1223 = vpack.c.b16 %v1087, %v1083
  %v1224 = vpack.c.b16 %v1092, %v1088
  %v1225 = vpack.c.b16 %v1093, %v1089
  %v1226 = vpack.c.b16 %v1094, %v1090
  %v1227 = vpack.c.b16 %v1095, %v1091
  %v1228 = vpack.c.b16 %v1100, %v1096
  %v1229 = vpack.c.b16 %v1101, %v1097
  %v1230 = vpack.c.b16 %v1102, %v1098
  %v1231 = vpack.c.b16 %v1103, %v1099
  %1360 = vmatprep.subr.bf16.mxu0 %v1133
  %1361 = vmatpush1.bf16.msra.mxu0 %v1132
  %1362 = vmatprep.subr.bf16.mxu0 %v1129
  %1363 = vmatpush1.bf16.msra.mxu0 %v1128
  %1364 = vmatprep.subr.bf16.mxu0 %v1125
  %1365 = vmatpush1.bf16.msra.mxu0 %v1124
  %1366 = vmatprep.subr.bf16.mxu0 %v1121
  %1367 = vmatpush1.bf16.msra.mxu0 %v1120
  %1368 = vmatprep.subr.bf16.mxu0 %v1117
  %1369 = vmatpush1.bf16.msra.mxu0 %v1116
  %1370 = vmatprep.subr.bf16.mxu0 %v1113
  %1371 = vmatpush1.bf16.msra.mxu0 %v1112
  %1372 = vmatprep.subr.bf16.mxu0 %v1109
  %1373 = vmatpush1.bf16.msra.mxu0 %v1108
  %1374 = vmatprep.subr.bf16.mxu0 %v1105
  %1375 = vmatpush1.bf16.msra.mxu0 %v1104
  %1376 = vmatprep.subr.bf16.mxu0 %v1165
  %1377 = vmatpush2.bf16.msra.mxu0 %v1164
  %1378 = vmatprep.subr.bf16.mxu0 %v1161
  %1379 = vmatpush2.bf16.msra.mxu0 %v1160
  %1380 = vmatprep.subr.bf16.mxu0 %v1157
  %1381 = vmatpush2.bf16.msra.mxu0 %v1156
  %1382 = vmatprep.subr.bf16.mxu0 %v1153
  %1383 = vmatpush2.bf16.msra.mxu0 %v1152
  %1384 = vmatprep.subr.bf16.mxu0 %v1149
  %1385 = vmatpush2.bf16.msra.mxu0 %v1148
  %1386 = vmatprep.subr.bf16.mxu0 %v1145
  %1387 = vmatpush2.bf16.msra.mxu0 %v1144
  %1388 = vmatprep.subr.bf16.mxu0 %v1141
  %1389 = vmatpush2.bf16.msra.mxu0 %v1140
  %1390 = vmatprep.subr.bf16.mxu0 %v1137
  %1391 = vmatpush2.bf16.msra.mxu0 %v1136
  %1392 = vmatprep.mubr.bf16.mxu0 %v589
  %1393 = vmatmul.mubr.bf16.gmra.mxu0 %v588
  %v1394 = vpop.f32.mrf.mxu0
  %v1395 = vadd.f32 0.0, %v1394
  %v1396 = vpop.f32.mrf.mxu0
  %v1397 = vadd.f32 0.0, %v1396
  %v1398 = vpop.f32.mrf.mxu0
  %v1399 = vadd.f32 0.0, %v1398
  %v1400 = vpop.f32.mrf.mxu0
  %v1401 = vadd.f32 0.0, %v1400
  %1402 = vdwg.mxu0
  %1403 = vmatprep.subr.bf16.mxu0 %v1197
  %1404 = vmatpush1.bf16.msra.mxu0 %v1196
  %1405 = vmatprep.subr.bf16.mxu0 %v1193
  %1406 = vmatpush1.bf16.msra.mxu0 %v1192
  %1407 = vmatprep.subr.bf16.mxu0 %v1189
  %1408 = vmatpush1.bf16.msra.mxu0 %v1188
  %1409 = vmatprep.subr.bf16.mxu0 %v1185
  %1410 = vmatpush1.bf16.msra.mxu0 %v1184
  %1411 = vmatprep.subr.bf16.mxu0 %v1181
  %1412 = vmatpush1.bf16.msra.mxu0 %v1180
  %1413 = vmatprep.subr.bf16.mxu0 %v1177
  %1414 = vmatpush1.bf16.msra.mxu0 %v1176
  %1415 = vmatprep.subr.bf16.mxu0 %v1173
  %1416 = vmatpush1.bf16.msra.mxu0 %v1172
  %1417 = vmatprep.subr.bf16.mxu0 %v1169
  %1418 = vmatpush1.bf16.msra.mxu0 %v1168
  %1419 = vmatprep.subr.bf16.mxu0 %v1229
  %1420 = vmatpush2.bf16.msra.mxu0 %v1228
  %1421 = vmatprep.subr.bf16.mxu0 %v1225
  %1422 = vmatpush2.bf16.msra.mxu0 %v1224
  %1423 = vmatprep.subr.bf16.mxu0 %v1221
  %1424 = vmatpush2.bf16.msra.mxu0 %v1220
  %1425 = vmatprep.subr.bf16.mxu0 %v1217
  %1426 = vmatpush2.bf16.msra.mxu0 %v1216
  %1427 = vmatprep.subr.bf16.mxu0 %v1213
  %1428 = vmatpush2.bf16.msra.mxu0 %v1212
  %1429 = vmatprep.subr.bf16.mxu0 %v1209
  %1430 = vmatpush2.bf16.msra.mxu0 %v1208
  %1431 = vmatprep.subr.bf16.mxu0 %v1205
  %1432 = vmatpush2.bf16.msra.mxu0 %v1204
  %1433 = vmatprep.subr.bf16.mxu0 %v1201
  %1434 = vmatpush2.bf16.msra.mxu0 %v1200
  %1435 = vmatprep.mubr.bf16.mxu0 %v591
  %1436 = vmatmul.mubr.bf16.gmra.mxu0 %v590
  %v1437 = vpop.f32.mrf.mxu0
  %v1438 = vadd.f32 %v1395, %v1437
  %v1439 = vpop.f32.mrf.mxu0
  %v1440 = vadd.f32 %v1397, %v1439
  %v1441 = vpop.f32.mrf.mxu0
  %v1442 = vadd.f32 %v1399, %v1441
  %v1443 = vpop.f32.mrf.mxu0
  %v1444 = vadd.f32 %v1401, %v1443
  %1445 = vdwg.mxu0
  %1446 = vmatprep.subr.bf16.mxu0 %v1135
  %1447 = vmatpush1.bf16.msra.mxu0 %v1134
  %1448 = vmatprep.subr.bf16.mxu0 %v1131
  %1449 = vmatpush1.bf16.msra.mxu0 %v1130
  %1450 = vmatprep.subr.bf16.mxu0 %v1127
  %1451 = vmatpush1.bf16.msra.mxu0 %v1126
  %1452 = vmatprep.subr.bf16.mxu0 %v1123
  %1453 = vmatpush1.bf16.msra.mxu0 %v1122
  %1454 = vmatprep.subr.bf16.mxu0 %v1119
  %1455 = vmatpush1.bf16.msra.mxu0 %v1118
  %1456 = vmatprep.subr.bf16.mxu0 %v1115
  %1457 = vmatpush1.bf16.msra.mxu0 %v1114
  %1458 = vmatprep.subr.bf16.mxu0 %v1111
  %1459 = vmatpush1.bf16.msra.mxu0 %v1110
  %1460 = vmatprep.subr.bf16.mxu0 %v1107
  %1461 = vmatpush1.bf16.msra.mxu0 %v1106
  %1462 = vmatprep.subr.bf16.mxu0 %v1167
  %1463 = vmatpush2.bf16.msra.mxu0 %v1166
  %1464 = vmatprep.subr.bf16.mxu0 %v1163
  %1465 = vmatpush2.bf16.msra.mxu0 %v1162
  %1466 = vmatprep.subr.bf16.mxu0 %v1159
  %1467 = vmatpush2.bf16.msra.mxu0 %v1158
  %1468 = vmatprep.subr.bf16.mxu0 %v1155
  %1469 = vmatpush2.bf16.msra.mxu0 %v1154
  %1470 = vmatprep.subr.bf16.mxu0 %v1151
  %1471 = vmatpush2.bf16.msra.mxu0 %v1150
  %1472 = vmatprep.subr.bf16.mxu0 %v1147
  %1473 = vmatpush2.bf16.msra.mxu0 %v1146
  %1474 = vmatprep.subr.bf16.mxu0 %v1143
  %1475 = vmatpush2.bf16.msra.mxu0 %v1142
  %1476 = vmatprep.subr.bf16.mxu0 %v1139
  %1477 = vmatpush2.bf16.msra.mxu0 %v1138
  %1478 = vmatprep.mubr.bf16.mxu0 %v589
  %1479 = vmatmul.mubr.bf16.gmra.mxu0 %v588
  %v1480 = vpop.f32.mrf.mxu0
  %v1481 = vadd.f32 0.0, %v1480
  %v1482 = vpop.f32.mrf.mxu0
  %v1483 = vadd.f32 0.0, %v1482
  %v1484 = vpop.f32.mrf.mxu0
  %v1485 = vadd.f32 0.0, %v1484
  %v1486 = vpop.f32.mrf.mxu0
  %v1487 = vadd.f32 0.0, %v1486
  %1488 = vdwg.mxu0
  %1489 = vmatprep.subr.bf16.mxu0 %v1199
  %1490 = vmatpush1.bf16.msra.mxu0 %v1198
  %1491 = vmatprep.subr.bf16.mxu0 %v1195
  %1492 = vmatpush1.bf16.msra.mxu0 %v1194
  %1493 = vmatprep.subr.bf16.mxu0 %v1191
  %1494 = vmatpush1.bf16.msra.mxu0 %v1190
  %1495 = vmatprep.subr.bf16.mxu0 %v1187
  %1496 = vmatpush1.bf16.msra.mxu0 %v1186
  %1497 = vmatprep.subr.bf16.mxu0 %v1183
  %1498 = vmatpush1.bf16.msra.mxu0 %v1182
  %1499 = vmatprep.subr.bf16.mxu0 %v1179
  %1500 = vmatpush1.bf16.msra.mxu0 %v1178
  %1501 = vmatprep.subr.bf16.mxu0 %v1175
  %1502 = vmatpush1.bf16.msra.mxu0 %v1174
  %1503 = vmatprep.subr.bf16.mxu0 %v1171
  %1504 = vmatpush1.bf16.msra.mxu0 %v1170
  %1505 = vmatprep.subr.bf16.mxu0 %v1231
  %1506 = vmatpush2.bf16.msra.mxu0 %v1230
  %1507 = vmatprep.subr.bf16.mxu0 %v1227
  %1508 = vmatpush2.bf16.msra.mxu0 %v1226
  %1509 = vmatprep.subr.bf16.mxu0 %v1223
  %1510 = vmatpush2.bf16.msra.mxu0 %v1222
  %1511 = vmatprep.subr.bf16.mxu0 %v1219
  %1512 = vmatpush2.bf16.msra.mxu0 %v1218
  %1513 = vmatprep.subr.bf16.mxu0 %v1215
  %1514 = vmatpush2.bf16.msra.mxu0 %v1214
  %1515 = vmatprep.subr.bf16.mxu0 %v1211
  %1516 = vmatpush2.bf16.msra.mxu0 %v1210
  %1517 = vmatprep.subr.bf16.mxu0 %v1207
  %1518 = vmatpush2.bf16.msra.mxu0 %v1206
  %1519 = vmatprep.subr.bf16.mxu0 %v1203
  %1520 = vmatpush2.bf16.msra.mxu0 %v1202
  %1521 = vmatprep.mubr.bf16.mxu0 %v591
  %1522 = vmatmul.mubr.bf16.gmra.mxu0 %v590
  %v1523 = vpop.f32.mrf.mxu0
  %v1524 = vadd.f32 %v1481, %v1523
  %v1525 = vpop.f32.mrf.mxu0
  %v1526 = vadd.f32 %v1483, %v1525
  %v1527 = vpop.f32.mrf.mxu0
  %v1528 = vadd.f32 %v1485, %v1527
  %v1529 = vpop.f32.mrf.mxu0
  %v1530 = vadd.f32 %v1487, %v1529
  %1531 = vdwg.mxu0
  %v1532 = vld [vmem:[%s7] sm:$0xff]
  %v1533 = vld [vmem:[%s7 + $0x8] sm:$0xff]
  %v1534 = vld [vmem:[%s8] sm:$0xff]
  %v1535 = vld [vmem:[%s8 + $0x8] sm:$0xff]
  %v1536 = vld [vmem:[%s8 + $0x10] sm:$0xff]
  %v1537 = vld [vmem:[%s8 + $0x18] sm:$0xff]
  %v1538 = vld [vmem:[%s8 + $0x20] sm:$0xff]
  %v1539 = vld [vmem:[%s8 + $0x28] sm:$0xff]
  %v1540 = vld [vmem:[%s8 + $0x30] sm:$0xff]
  %v1541 = vld [vmem:[%s8 + $0x38] sm:$0xff]
  %v1542 = vld [vmem:[%s8 + $0x40] sm:$0xff]
  %v1543 = vld [vmem:[%s8 + $0x48] sm:$0xff]
  %v1544 = vld [vmem:[%s8 + $0x50] sm:$0xff]
  %v1545 = vld [vmem:[%s8 + $0x58] sm:$0xff]
  %v1546 = vld [vmem:[%s8 + $0x60] sm:$0xff]
  %v1547 = vld [vmem:[%s8 + $0x68] sm:$0xff]
  %v1548 = vld [vmem:[%s8 + $0x70] sm:$0xff]
  %v1549 = vld [vmem:[%s8 + $0x78] sm:$0xff]
  %v1550 = vld [vmem:[%s8 + $0x80] sm:$0xff]
  %v1551 = vld [vmem:[%s8 + $0x88] sm:$0xff]
  %v1552 = vld [vmem:[%s8 + $0x90] sm:$0xff]
  %v1553 = vld [vmem:[%s8 + $0x98] sm:$0xff]
  %v1554 = vld [vmem:[%s8 + $0xa0] sm:$0xff]
  %v1555 = vld [vmem:[%s8 + $0xa8] sm:$0xff]
  %v1556 = vld [vmem:[%s8 + $0xb0] sm:$0xff]
  %v1557 = vld [vmem:[%s8 + $0xb8] sm:$0xff]
  %v1558 = vld [vmem:[%s8 + $0xc0] sm:$0xff]
  %v1559 = vld [vmem:[%s8 + $0xc8] sm:$0xff]
  %v1560 = vld [vmem:[%s8 + $0xd0] sm:$0xff]
  %v1561 = vld [vmem:[%s8 + $0xd8] sm:$0xff]
  %v1562 = vld [vmem:[%s8 + $0xe0] sm:$0xff]
  %v1563 = vld [vmem:[%s8 + $0xe8] sm:$0xff]
  %v1564 = vld [vmem:[%s8 + $0xf0] sm:$0xff]
  %v1565 = vld [vmem:[%s8 + $0xf8] sm:$0xff]
  %v1566 = vld [vmem:[%s8 + $0x100] sm:$0xff]
  %v1567 = vld [vmem:[%s8 + $0x108] sm:$0xff]
  %v1568 = vld [vmem:[%s8 + $0x110] sm:$0xff]
  %v1569 = vld [vmem:[%s8 + $0x118] sm:$0xff]
  %v1570 = vld [vmem:[%s8 + $0x120] sm:$0xff]
  %v1571 = vld [vmem:[%s8 + $0x128] sm:$0xff]
  %v1572 = vld [vmem:[%s8 + $0x130] sm:$0xff]
  %v1573 = vld [vmem:[%s8 + $0x138] sm:$0xff]
  %v1574 = vld [vmem:[%s8 + $0x140] sm:$0xff]
  %v1575 = vld [vmem:[%s8 + $0x148] sm:$0xff]
  %v1576 = vld [vmem:[%s8 + $0x150] sm:$0xff]
  %v1577 = vld [vmem:[%s8 + $0x158] sm:$0xff]
  %v1578 = vld [vmem:[%s8 + $0x160] sm:$0xff]
  %v1579 = vld [vmem:[%s8 + $0x168] sm:$0xff]
  %v1580 = vld [vmem:[%s8 + $0x170] sm:$0xff]
  %v1581 = vld [vmem:[%s8 + $0x178] sm:$0xff]
  %v1582 = vld [vmem:[%s8 + $0x180] sm:$0xff]
  %v1583 = vld [vmem:[%s8 + $0x188] sm:$0xff]
  %v1584 = vld [vmem:[%s8 + $0x190] sm:$0xff]
  %v1585 = vld [vmem:[%s8 + $0x198] sm:$0xff]
  %v1586 = vld [vmem:[%s8 + $0x1a0] sm:$0xff]
  %v1587 = vld [vmem:[%s8 + $0x1a8] sm:$0xff]
  %v1588 = vld [vmem:[%s8 + $0x1b0] sm:$0xff]
  %v1589 = vld [vmem:[%s8 + $0x1b8] sm:$0xff]
  %v1590 = vld [vmem:[%s8 + $0x1c0] sm:$0xff]
  %v1591 = vld [vmem:[%s8 + $0x1c8] sm:$0xff]
  %v1592 = vld [vmem:[%s8 + $0x1d0] sm:$0xff]
  %v1593 = vld [vmem:[%s8 + $0x1d8] sm:$0xff]
  %v1594 = vld [vmem:[%s8 + $0x1e0] sm:$0xff]
  %v1595 = vld [vmem:[%s8 + $0x1e8] sm:$0xff]
  %v1596 = vld [vmem:[%s8 + $0x1f0] sm:$0xff]
  %v1597 = vld [vmem:[%s8 + $0x1f8] sm:$0xff]
  %v1600 = vunpack.c.l.b16 %v1532
  %v1601 = vunpack.c.h.b16 %v1532
  %v1602 = vunpack.c.l.b16 %v1533
  %v1603 = vunpack.c.h.b16 %v1533
  %v1604 = vpack.c.b16 %v1602, %v1600
  %v1605 = vpack.c.b16 %v1603, %v1601
  %v1672 = vunpack.c.l.b16 %v1534
  %v1673 = vunpack.c.h.b16 %v1534
  %v1674 = vunpack.c.l.b16 %v1535
  %v1675 = vunpack.c.h.b16 %v1535
  %v1676 = vunpack.c.l.b16 %v1536
  %v1677 = vunpack.c.h.b16 %v1536
  %v1678 = vunpack.c.l.b16 %v1537
  %v1679 = vunpack.c.h.b16 %v1537
  %v1680 = vunpack.c.l.b16 %v1538
  %v1681 = vunpack.c.h.b16 %v1538
  %v1682 = vunpack.c.l.b16 %v1539
  %v1683 = vunpack.c.h.b16 %v1539
  %v1684 = vunpack.c.l.b16 %v1540
  %v1685 = vunpack.c.h.b16 %v1540
  %v1686 = vunpack.c.l.b16 %v1541
  %v1687 = vunpack.c.h.b16 %v1541
  %v1688 = vunpack.c.l.b16 %v1542
  %v1689 = vunpack.c.h.b16 %v1542
  %v1690 = vunpack.c.l.b16 %v1543
  %v1691 = vunpack.c.h.b16 %v1543
  %v1692 = vunpack.c.l.b16 %v1544
  %v1693 = vunpack.c.h.b16 %v1544
  %v1694 = vunpack.c.l.b16 %v1545
  %v1695 = vunpack.c.h.b16 %v1545
  %v1696 = vunpack.c.l.b16 %v1546
  %v1697 = vunpack.c.h.b16 %v1546
  %v1698 = vunpack.c.l.b16 %v1547
  %v1699 = vunpack.c.h.b16 %v1547
  %v1700 = vunpack.c.l.b16 %v1548
  %v1701 = vunpack.c.h.b16 %v1548
  %v1702 = vunpack.c.l.b16 %v1549
  %v1703 = vunpack.c.h.b16 %v1549
  %v1704 = vunpack.c.l.b16 %v1550
  %v1705 = vunpack.c.h.b16 %v1550
  %v1706 = vunpack.c.l.b16 %v1551
  %v1707 = vunpack.c.h.b16 %v1551
  %v1708 = vunpack.c.l.b16 %v1552
  %v1709 = vunpack.c.h.b16 %v1552
  %v1710 = vunpack.c.l.b16 %v1553
  %v1711 = vunpack.c.h.b16 %v1553
  %v1712 = vunpack.c.l.b16 %v1554
  %v1713 = vunpack.c.h.b16 %v1554
  %v1714 = vunpack.c.l.b16 %v1555
  %v1715 = vunpack.c.h.b16 %v1555
  %v1716 = vunpack.c.l.b16 %v1556
  %v1717 = vunpack.c.h.b16 %v1556
  %v1718 = vunpack.c.l.b16 %v1557
  %v1719 = vunpack.c.h.b16 %v1557
  %v1720 = vunpack.c.l.b16 %v1558
  %v1721 = vunpack.c.h.b16 %v1558
  %v1722 = vunpack.c.l.b16 %v1559
  %v1723 = vunpack.c.h.b16 %v1559
  %v1724 = vunpack.c.l.b16 %v1560
  %v1725 = vunpack.c.h.b16 %v1560
  %v1726 = vunpack.c.l.b16 %v1561
  %v1727 = vunpack.c.h.b16 %v1561
  %v1728 = vunpack.c.l.b16 %v1562
  %v1729 = vunpack.c.h.b16 %v1562
  %v1730 = vunpack.c.l.b16 %v1563
  %v1731 = vunpack.c.h.b16 %v1563
  %v1732 = vunpack.c.l.b16 %v1564
  %v1733 = vunpack.c.h.b16 %v1564
  %v1734 = vunpack.c.l.b16 %v1565
  %v1735 = vunpack.c.h.b16 %v1565
  %v1736 = vunpack.c.l.b16 %v1566
  %v1737 = vunpack.c.h.b16 %v1566
  %v1738 = vunpack.c.l.b16 %v1567
  %v1739 = vunpack.c.h.b16 %v1567
  %v1740 = vunpack.c.l.b16 %v1568
  %v1741 = vunpack.c.h.b16 %v1568
  %v1742 = vunpack.c.l.b16 %v1569
  %v1743 = vunpack.c.h.b16 %v1569
  %v1744 = vunpack.c.l.b16 %v1570
  %v1745 = vunpack.c.h.b16 %v1570
  %v1746 = vunpack.c.l.b16 %v1571
  %v1747 = vunpack.c.h.b16 %v1571
  %v1748 = vunpack.c.l.b16 %v1572
  %v1749 = vunpack.c.h.b16 %v1572
  %v1750 = vunpack.c.l.b16 %v1573
  %v1751 = vunpack.c.h.b16 %v1573
  %v1752 = vunpack.c.l.b16 %v1574
  %v1753 = vunpack.c.h.b16 %v1574
  %v1754 = vunpack.c.l.b16 %v1575
  %v1755 = vunpack.c.h.b16 %v1575
  %v1756 = vunpack.c.l.b16 %v1576
  %v1757 = vunpack.c.h.b16 %v1576
  %v1758 = vunpack.c.l.b16 %v1577
  %v1759 = vunpack.c.h.b16 %v1577
  %v1760 = vunpack.c.l.b16 %v1578
  %v1761 = vunpack.c.h.b16 %v1578
  %v1762 = vunpack.c.l.b16 %v1579
  %v1763 = vunpack.c.h.b16 %v1579
  %v1764 = vunpack.c.l.b16 %v1580
  %v1765 = vunpack.c.h.b16 %v1580
  %v1766 = vunpack.c.l.b16 %v1581
  %v1767 = vunpack.c.h.b16 %v1581
  %v1768 = vunpack.c.l.b16 %v1582
  %v1769 = vunpack.c.h.b16 %v1582
  %v1770 = vunpack.c.l.b16 %v1583
  %v1771 = vunpack.c.h.b16 %v1583
  %v1772 = vunpack.c.l.b16 %v1584
  %v1773 = vunpack.c.h.b16 %v1584
  %v1774 = vunpack.c.l.b16 %v1585
  %v1775 = vunpack.c.h.b16 %v1585
  %v1776 = vunpack.c.l.b16 %v1586
  %v1777 = vunpack.c.h.b16 %v1586
  %v1778 = vunpack.c.l.b16 %v1587
  %v1779 = vunpack.c.h.b16 %v1587
  %v1780 = vunpack.c.l.b16 %v1588
  %v1781 = vunpack.c.h.b16 %v1588
  %v1782 = vunpack.c.l.b16 %v1589
  %v1783 = vunpack.c.h.b16 %v1589
  %v1784 = vunpack.c.l.b16 %v1590
  %v1785 = vunpack.c.h.b16 %v1590
  %v1786 = vunpack.c.l.b16 %v1591
  %v1787 = vunpack.c.h.b16 %v1591
  %v1788 = vunpack.c.l.b16 %v1592
  %v1789 = vunpack.c.h.b16 %v1592
  %v1790 = vunpack.c.l.b16 %v1593
  %v1791 = vunpack.c.h.b16 %v1593
  %v1792 = vunpack.c.l.b16 %v1594
  %v1793 = vunpack.c.h.b16 %v1594
  %v1794 = vunpack.c.l.b16 %v1595
  %v1795 = vunpack.c.h.b16 %v1595
  %v1796 = vunpack.c.l.b16 %v1596
  %v1797 = vunpack.c.h.b16 %v1596
  %v1798 = vunpack.c.l.b16 %v1597
  %v1799 = vunpack.c.h.b16 %v1597
  %v1800 = vpack.c.b16 %v1676, %v1672
  %v1801 = vpack.c.b16 %v1677, %v1673
  %v1802 = vpack.c.b16 %v1678, %v1674
  %v1803 = vpack.c.b16 %v1679, %v1675
  %v1804 = vpack.c.b16 %v1684, %v1680
  %v1805 = vpack.c.b16 %v1685, %v1681
  %v1806 = vpack.c.b16 %v1686, %v1682
  %v1807 = vpack.c.b16 %v1687, %v1683
  %v1808 = vpack.c.b16 %v1692, %v1688
  %v1809 = vpack.c.b16 %v1693, %v1689
  %v1810 = vpack.c.b16 %v1694, %v1690
  %v1811 = vpack.c.b16 %v1695, %v1691
  %v1812 = vpack.c.b16 %v1700, %v1696
  %v1813 = vpack.c.b16 %v1701, %v1697
  %v1814 = vpack.c.b16 %v1702, %v1698
  %v1815 = vpack.c.b16 %v1703, %v1699
  %v1816 = vpack.c.b16 %v1708, %v1704
  %v1817 = vpack.c.b16 %v1709, %v1705
  %v1818 = vpack.c.b16 %v1710, %v1706
  %v1819 = vpack.c.b16 %v1711, %v1707
  %v1820 = vpack.c.b16 %v1716, %v1712
  %v1821 = vpack.c.b16 %v1717, %v1713
  %v1822 = vpack.c.b16 %v1718, %v1714
  %v1823 = vpack.c.b16 %v1719, %v1715
  %v1824 = vpack.c.b16 %v1724, %v1720
  %v1825 = vpack.c.b16 %v1725, %v1721
  %v1826 = vpack.c.b16 %v1726, %v1722
  %v1827 = vpack.c.b16 %v1727, %v1723
  %v1828 = vpack.c.b16 %v1732, %v1728
  %v1829 = vpack.c.b16 %v1733, %v1729
  %v1830 = vpack.c.b16 %v1734, %v1730
  %v1831 = vpack.c.b16 %v1735, %v1731
  %v1832 = vpack.c.b16 %v1740, %v1736
  %v1833 = vpack.c.b16 %v1741, %v1737
  %v1834 = vpack.c.b16 %v1742, %v1738
  %v1835 = vpack.c.b16 %v1743, %v1739
  %v1836 = vpack.c.b16 %v1748, %v1744
  %v1837 = vpack.c.b16 %v1749, %v1745
  %v1838 = vpack.c.b16 %v1750, %v1746
  %v1839 = vpack.c.b16 %v1751, %v1747
  %v1840 = vpack.c.b16 %v1756, %v1752
  %v1841 = vpack.c.b16 %v1757, %v1753
  %v1842 = vpack.c.b16 %v1758, %v1754
  %v1843 = vpack.c.b16 %v1759, %v1755
  %v1844 = vpack.c.b16 %v1764, %v1760
  %v1845 = vpack.c.b16 %v1765, %v1761
  %v1846 = vpack.c.b16 %v1766, %v1762
  %v1847 = vpack.c.b16 %v1767, %v1763
  %v1848 = vpack.c.b16 %v1772, %v1768
  %v1849 = vpack.c.b16 %v1773, %v1769
  %v1850 = vpack.c.b16 %v1774, %v1770
  %v1851 = vpack.c.b16 %v1775, %v1771
  %v1852 = vpack.c.b16 %v1780, %v1776
  %v1853 = vpack.c.b16 %v1781, %v1777
  %v1854 = vpack.c.b16 %v1782, %v1778
  %v1855 = vpack.c.b16 %v1783, %v1779
  %v1856 = vpack.c.b16 %v1788, %v1784
  %v1857 = vpack.c.b16 %v1789, %v1785
  %v1858 = vpack.c.b16 %v1790, %v1786
  %v1859 = vpack.c.b16 %v1791, %v1787
  %v1860 = vpack.c.b16 %v1796, %v1792
  %v1861 = vpack.c.b16 %v1797, %v1793
  %v1862 = vpack.c.b16 %v1798, %v1794
  %v1863 = vpack.c.b16 %v1799, %v1795
  %1928 = vmatprep.subr.bf16.mxu0 %v1829
  %1929 = vmatpush1.bf16.msra.mxu0 %v1828
  %1930 = vmatprep.subr.bf16.mxu0 %v1825
  %1931 = vmatpush1.bf16.msra.mxu0 %v1824
  %1932 = vmatprep.subr.bf16.mxu0 %v1821
  %1933 = vmatpush1.bf16.msra.mxu0 %v1820
  %1934 = vmatprep.subr.bf16.mxu0 %v1817
  %1935 = vmatpush1.bf16.msra.mxu0 %v1816
  %1936 = vmatprep.subr.bf16.mxu0 %v1813
  %1937 = vmatpush1.bf16.msra.mxu0 %v1812
  %1938 = vmatprep.subr.bf16.mxu0 %v1809
  %1939 = vmatpush1.bf16.msra.mxu0 %v1808
  %1940 = vmatprep.subr.bf16.mxu0 %v1805
  %1941 = vmatpush1.bf16.msra.mxu0 %v1804
  %1942 = vmatprep.subr.bf16.mxu0 %v1801
  %1943 = vmatpush1.bf16.msra.mxu0 %v1800
  %1944 = vmatprep.subr.bf16.mxu0 %v1861
  %1945 = vmatpush2.bf16.msra.mxu0 %v1860
  %1946 = vmatprep.subr.bf16.mxu0 %v1857
  %1947 = vmatpush2.bf16.msra.mxu0 %v1856
  %1948 = vmatprep.subr.bf16.mxu0 %v1853
  %1949 = vmatpush2.bf16.msra.mxu0 %v1852
  %1950 = vmatprep.subr.bf16.mxu0 %v1849
  %1951 = vmatpush2.bf16.msra.mxu0 %v1848
  %1952 = vmatprep.subr.bf16.mxu0 %v1845
  %1953 = vmatpush2.bf16.msra.mxu0 %v1844
  %1954 = vmatprep.subr.bf16.mxu0 %v1841
  %1955 = vmatpush2.bf16.msra.mxu0 %v1840
  %1956 = vmatprep.subr.bf16.mxu0 %v1837
  %1957 = vmatpush2.bf16.msra.mxu0 %v1836
  %1958 = vmatprep.subr.bf16.mxu0 %v1833
  %1959 = vmatpush2.bf16.msra.mxu0 %v1832
  %1960 = vmatprep.mubr.bf16.mxu0 %v1605
  %1961 = vmatmul.mubr.bf16.gmra.mxu0 %v1604
  %v1962 = vpop.f32.mrf.mxu0
  %v1963 = vadd.f32 0.0, %v1962
  %v1964 = vpop.f32.mrf.mxu0
  %v1965 = vadd.f32 0.0, %v1964
  %v1966 = vpop.f32.mrf.mxu0
  %v1967 = vadd.f32 0.0, %v1966
  %v1968 = vpop.f32.mrf.mxu0
  %v1969 = vadd.f32 0.0, %v1968
  %1970 = vdwg.mxu0
  %1971 = vmatprep.subr.bf16.mxu0 %v1831
  %1972 = vmatpush1.bf16.msra.mxu0 %v1830
  %1973 = vmatprep.subr.bf16.mxu0 %v1827
  %1974 = vmatpush1.bf16.msra.mxu0 %v1826
  %1975 = vmatprep.subr.bf16.mxu0 %v1823
  %1976 = vmatpush1.bf16.msra.mxu0 %v1822
  %1977 = vmatprep.subr.bf16.mxu0 %v1819
  %1978 = vmatpush1.bf16.msra.mxu0 %v1818
  %1979 = vmatprep.subr.bf16.mxu0 %v1815
  %1980 = vmatpush1.bf16.msra.mxu0 %v1814
  %1981 = vmatprep.subr.bf16.mxu0 %v1811
  %1982 = vmatpush1.bf16.msra.mxu0 %v1810
  %1983 = vmatprep.subr.bf16.mxu0 %v1807
  %1984 = vmatpush1.bf16.msra.mxu0 %v1806
  %1985 = vmatprep.subr.bf16.mxu0 %v1803
  %1986 = vmatpush1.bf16.msra.mxu0 %v1802
  %1987 = vmatprep.subr.bf16.mxu0 %v1863
  %1988 = vmatpush2.bf16.msra.mxu0 %v1862
  %1989 = vmatprep.subr.bf16.mxu0 %v1859
  %1990 = vmatpush2.bf16.msra.mxu0 %v1858
  %1991 = vmatprep.subr.bf16.mxu0 %v1855
  %1992 = vmatpush2.bf16.msra.mxu0 %v1854
  %1993 = vmatprep.subr.bf16.mxu0 %v1851
  %1994 = vmatpush2.bf16.msra.mxu0 %v1850
  %1995 = vmatprep.subr.bf16.mxu0 %v1847
  %1996 = vmatpush2.bf16.msra.mxu0 %v1846
  %1997 = vmatprep.subr.bf16.mxu0 %v1843
  %1998 = vmatpush2.bf16.msra.mxu0 %v1842
  %1999 = vmatprep.subr.bf16.mxu0 %v1839
  %2000 = vmatpush2.bf16.msra.mxu0 %v1838
  %2001 = vmatprep.subr.bf16.mxu0 %v1835
  %2002 = vmatpush2.bf16.msra.mxu0 %v1834
  %2003 = vmatprep.mubr.bf16.mxu0 %v1605
  %2004 = vmatmul.mubr.bf16.gmra.mxu0 %v1604
  %v2005 = vpop.f32.mrf.mxu0
  %v2006 = vadd.f32 0.0, %v2005
  %v2007 = vpop.f32.mrf.mxu0
  %v2008 = vadd.f32 0.0, %v2007
  %v2009 = vpop.f32.mrf.mxu0
  %v2010 = vadd.f32 0.0, %v2009
  %v2011 = vpop.f32.mrf.mxu0
  %v2012 = vadd.f32 0.0, %v2011
  %2013 = vdwg.mxu0
  %v2014 = vld [vmem:[%s5] sm:$0xf]
  %v2016 = vlaneseq
  %v2017 = vshrl.u32 %v2016, 7
  %v2018 = vsub.s32 0, %v2017
  %v2019 = vrot.slane %v2014, %v2018
  %v2020 = vlaneseq
  %v2021 = vshrl.u32 %v2020, 7
  %v2022 = vsub.s32 1, %v2021
  %v2023 = vrot.slane %v2014, %v2022
  %v2024 = vlaneseq
  %v2025 = vshrl.u32 %v2024, 7
  %v2026 = vsub.s32 2, %v2025
  %v2027 = vrot.slane %v2014, %v2026
  %v2028 = vlaneseq
  %v2029 = vshrl.u32 %v2028, 7
  %v2030 = vsub.s32 3, %v2029
  %v2031 = vrot.slane %v2014, %v2030
  %v2036 = vmul.f32 %v1438, %v2019
  %v2037 = vmul.f32 %v1440, %v2023
  %v2038 = vmul.f32 %v1524, %v2027
  %v2039 = vmul.f32 %v1526, %v2031
  %v2040 = vmul.f32 %v1442, %v2019
  %v2041 = vmul.f32 %v1444, %v2023
  %v2042 = vmul.f32 %v1528, %v2027
  %v2043 = vmul.f32 %v1530, %v2031
  %v2044 = vld [vmem:[%s6] sm:$0xf]
  %v2046 = vlaneseq
  %v2047 = vshrl.u32 %v2046, 7
  %v2048 = vsub.s32 0, %v2047
  %v2049 = vrot.slane %v2044, %v2048
  %v2050 = vlaneseq
  %v2051 = vshrl.u32 %v2050, 7
  %v2052 = vsub.s32 1, %v2051
  %v2053 = vrot.slane %v2044, %v2052
  %v2054 = vlaneseq
  %v2055 = vshrl.u32 %v2054, 7
  %v2056 = vsub.s32 2, %v2055
  %v2057 = vrot.slane %v2044, %v2056
  %v2058 = vlaneseq
  %v2059 = vshrl.u32 %v2058, 7
  %v2060 = vsub.s32 3, %v2059
  %v2061 = vrot.slane %v2044, %v2060
  %v2066 = vadd.f32 %v2036, %v2049
  %v2067 = vadd.f32 %v2037, %v2053
  %v2068 = vadd.f32 %v2038, %v2057
  %v2069 = vadd.f32 %v2039, %v2061
  %v2070 = vadd.f32 %v2040, %v2049
  %v2071 = vadd.f32 %v2041, %v2053
  %v2072 = vadd.f32 %v2042, %v2057
  %v2073 = vadd.f32 %v2043, %v2061
  %v2074 = vld [vmem:[%s9] sm:$0xf]
  %v2076 = vlaneseq
  %v2077 = vshrl.u32 %v2076, 7
  %v2078 = vsub.s32 0, %v2077
  %v2079 = vrot.slane %v2074, %v2078
  %v2080 = vlaneseq
  %v2081 = vshrl.u32 %v2080, 7
  %v2082 = vsub.s32 1, %v2081
  %v2083 = vrot.slane %v2074, %v2082
  %v2084 = vlaneseq
  %v2085 = vshrl.u32 %v2084, 7
  %v2086 = vsub.s32 2, %v2085
  %v2087 = vrot.slane %v2074, %v2086
  %v2088 = vlaneseq
  %v2089 = vshrl.u32 %v2088, 7
  %v2090 = vsub.s32 3, %v2089
  %v2091 = vrot.slane %v2074, %v2090
  %v2096 = vmul.f32 %v1963, %v2079
  %v2097 = vmul.f32 %v1965, %v2083
  %v2098 = vmul.f32 %v2006, %v2087
  %v2099 = vmul.f32 %v2008, %v2091
  %v2100 = vmul.f32 %v1967, %v2079
  %v2101 = vmul.f32 %v1969, %v2083
  %v2102 = vmul.f32 %v2010, %v2087
  %v2103 = vmul.f32 %v2012, %v2091
  %v2104 = vadd.f32 %v2066, %v2096
  %v2105 = vadd.f32 %v2067, %v2097
  %v2106 = vadd.f32 %v2068, %v2098
  %v2107 = vadd.f32 %v2069, %v2099
  %v2108 = vadd.f32 %v2070, %v2100
  %v2109 = vadd.f32 %v2071, %v2101
  %v2110 = vadd.f32 %v2072, %v2102
  %v2111 = vadd.f32 %v2073, %v2103
  %v2112 = vld [vmem:[%s10] sm:$0xf]
  %v2114 = vlaneseq
  %v2115 = vshrl.u32 %v2114, 7
  %v2116 = vsub.s32 0, %v2115
  %v2117 = vrot.slane %v2112, %v2116
  %v2118 = vlaneseq
  %v2119 = vshrl.u32 %v2118, 7
  %v2120 = vsub.s32 1, %v2119
  %v2121 = vrot.slane %v2112, %v2120
  %v2122 = vlaneseq
  %v2123 = vshrl.u32 %v2122, 7
  %v2124 = vsub.s32 2, %v2123
  %v2125 = vrot.slane %v2112, %v2124
  %v2126 = vlaneseq
  %v2127 = vshrl.u32 %v2126, 7
  %v2128 = vsub.s32 3, %v2127
  %v2129 = vrot.slane %v2112, %v2128
  %v2134 = vadd.f32 %v2104, %v2117
  %v2135 = vadd.f32 %v2105, %v2121
  %v2136 = vadd.f32 %v2106, %v2125
  %v2137 = vadd.f32 %v2107, %v2129
  %v2138 = vadd.f32 %v2108, %v2117
  %v2139 = vadd.f32 %v2109, %v2121
  %v2140 = vadd.f32 %v2110, %v2125
  %v2141 = vadd.f32 %v2111, %v2129
  %v2142 = vmax.f32 %v2134, 0.0
  %v2143 = vmax.f32 %v2135, 0.0
  %v2144 = vmax.f32 %v2136, 0.0
  %v2145 = vmax.f32 %v2137, 0.0
  %v2146 = vmax.f32 %v2138, 0.0
  %v2147 = vmax.f32 %v2139, 0.0
  %v2148 = vmax.f32 %v2140, 0.0
  %v2149 = vmax.f32 %v2141, 0.0
  %v2150 = vpack.c.bf16 %v2146, %v2142
  %v2151 = vpack.c.bf16 %v2147, %v2143
  %v2152 = vpack.c.bf16 %v2148, %v2144
  %v2153 = vpack.c.bf16 %v2149, %v2145
  %v2158 = vunpack.c.l.b16 %v2150
  %v2159 = vunpack.c.l.b16 %v2151
  %v2160 = vunpack.c.l.b16 %v2152
  %v2161 = vunpack.c.l.b16 %v2153
  %v2162 = vunpack.c.h.b16 %v2150
  %v2163 = vunpack.c.h.b16 %v2151
  %v2164 = vunpack.c.h.b16 %v2152
  %v2165 = vunpack.c.h.b16 %v2153
  %v2166 = vpack.c.b16 %v2159, %v2158
  %v2167 = vpack.c.b16 %v2161, %v2160
  %v2168 = vpack.c.b16 %v2163, %v2162
  %v2169 = vpack.c.b16 %v2165, %v2164
  %2174 = vst [vmem:[%s11] sm:$0xff] %v2166
  %2175 = vst [vmem:[%s11 + $0x8] sm:$0xff] %v2167
  %2176 = vst [vmem:[%s11 + $0x10] sm:$0xff] %v2168
  %2177 = vst [vmem:[%s11 + $0x18] sm:$0xff] %v2169
  // Predicated region
  $region46: #{resnet_forward.48} parent=0 // pred_check
    _
  $region47: #{resnet_forward.48} parent=0 // pred_check_branch
    %2179 = sbr.rel (0) target = $region49
  $region48: #{resnet_forward.48} parent=0 // pred_region
    _
  $region49: #{resnet_forward.48} parent=0 // pred_fallthru
    _
  // Predicated region
  $region50: #{resnet_forward.48} parent=0 // pred_check
    _
  $region51: #{resnet_forward.48} parent=0 // pred_check_branch
    %2181 = sbr.rel (0) target = $region53
  $region52: #{resnet_forward.48} parent=0 // pred_region
    _
  $region53: #{resnet_forward.48} parent=0 // pred_fallthru
    _

// kernel: resnet_forward.49
$region0: #{resnet_forward.49}
  #allocation0 [shape = 'u32[]', space=smem, size = 0x4, offset = 0x4, fixed_abs, tag = 'smem constant byte address 0x4 - core index']
  #allocation1 [shape = 'u32[144,128]{1,0:T(1,128)}', space=vmem, size = 0x12000, scoped, tag = 'internal scratch']
  %s0 = inlined_call_operand.vmem [shape: bf16[16,512], index: 0, kind: input, shape index: {}]
  %s1 = inlined_call_operand.vmem [shape: bf16[512,512], index: 1, kind: input, shape index: {}]
  %s2 = inlined_call_operand.vmem [shape: f32[1,512], index: 2, kind: input, shape index: {}]
  %s3 = inlined_call_operand.vmem [shape: f32[1,512], index: 3, kind: input, shape index: {}]
  %s4 = inlined_call_operand.vmem [shape: bf16[512,512], index: 4, kind: input, shape index: {}]
  %s5 = inlined_call_operand.vmem [shape: f32[1,512], index: 5, kind: input, shape index: {}]
  %s6 = inlined_call_operand.vmem [shape: f32[1,512], index: 6, kind: input, shape index: {}]
  %s7 = inlined_call_operand.vmem [shape: bf16[16,512], index: 7, kind: output, shape index: {}]
  %s8 = sld [smem:[#allocation0]]
  $region38: #{resnet_forward.49} parent=0
    _
  %s10 = ssub.s32 1, %s8
  %s11 = scalar_select 0, %s10, %s8
  // Predicated region
  $region2: #{resnet_forward.49} parent=0 // pred_check
    _
  $region3: #{resnet_forward.49} parent=0 // pred_check_branch
    %13 = sbr.rel (0) target = $region5
  $region4: #{resnet_forward.49} parent=0 // pred_region
    _
  $region5: #{resnet_forward.49} parent=0 // pred_fallthru
    _
  // Predicated region
  $region6: #{resnet_forward.49} parent=0 // pred_check
    _
  $region7: #{resnet_forward.49} parent=0 // pred_check_branch
    %15 = sbr.rel (0) target = $region9
  $region8: #{resnet_forward.49} parent=0 // pred_region
    _
  $region9: #{resnet_forward.49} parent=0 // pred_fallthru
    _
  // Predicated region
  $region10: #{resnet_forward.49} parent=0 // pred_check
    _
  $region11: #{resnet_forward.49} parent=0 // pred_check_branch
    %17 = sbr.rel (0) target = $region13
  $region12: #{resnet_forward.49} parent=0 // pred_region
    _
  $region13: #{resnet_forward.49} parent=0 // pred_fallthru
    _
  // Predicated region
  $region14: #{resnet_forward.49} parent=0 // pred_check
    _
  $region15: #{resnet_forward.49} parent=0 // pred_check_branch
    %19 = sbr.rel (0) target = $region17
  $region16: #{resnet_forward.49} parent=0 // pred_region
    _
  $region17: #{resnet_forward.49} parent=0 // pred_fallthru
    _
  // Predicated region
  $region18: #{resnet_forward.49} parent=0 // pred_check
    _
  $region19: #{resnet_forward.49} parent=0 // pred_check_branch
    %21 = sbr.rel (0) target = $region21
  $region20: #{resnet_forward.49} parent=0 // pred_region
    _
  $region21: #{resnet_forward.49} parent=0 // pred_fallthru
    _
  // Predicated region
  $region22: #{resnet_forward.49} parent=0 // pred_check
    _
  $region23: #{resnet_forward.49} parent=0 // pred_check_branch
    %23 = sbr.rel (0) target = $region25
  $region24: #{resnet_forward.49} parent=0 // pred_region
    _
  $region25: #{resnet_forward.49} parent=0 // pred_fallthru
    _
  // Predicated region
  $region26: #{resnet_forward.49} parent=0 // pred_check
    _
  $region27: #{resnet_forward.49} parent=0 // pred_check_branch
    %25 = sbr.rel (0) target = $region29
  $region28: #{resnet_forward.49} parent=0 // pred_region
    _
  $region29: #{resnet_forward.49} parent=0 // pred_fallthru
    _
  %v26 = vld [vmem:[%s0] sm:$0xff]
  %v27 = vld [vmem:[%s0 + $0x8] sm:$0xff]
  %v28 = vld [vmem:[%s0 + $0x10] sm:$0xff]
  %v29 = vld [vmem:[%s0 + $0x18] sm:$0xff]
  %v30 = vld [vmem:[%s1] sm:$0xff]
  %v31 = vld [vmem:[%s1 + $0x8] sm:$0xff]
  %v32 = vld [vmem:[%s1 + $0x10] sm:$0xff]
  %v33 = vld [vmem:[%s1 + $0x18] sm:$0xff]
  %v34 = vld [vmem:[%s1 + $0x20] sm:$0xff]
  %v35 = vld [vmem:[%s1 + $0x28] sm:$0xff]
  %v36 = vld [vmem:[%s1 + $0x30] sm:$0xff]
  %v37 = vld [vmem:[%s1 + $0x38] sm:$0xff]
  %v38 = vld [vmem:[%s1 + $0x40] sm:$0xff]
  %v39 = vld [vmem:[%s1 + $0x48] sm:$0xff]
  %v40 = vld [vmem:[%s1 + $0x50] sm:$0xff]
  %v41 = vld [vmem:[%s1 + $0x58] sm:$0xff]
  %v42 = vld [vmem:[%s1 + $0x60] sm:$0xff]
  %v43 = vld [vmem:[%s1 + $0x68] sm:$0xff]
  %v44 = vld [vmem:[%s1 + $0x70] sm:$0xff]
  %v45 = vld [vmem:[%s1 + $0x78] sm:$0xff]
  %v46 = vld [vmem:[%s1 + $0x80] sm:$0xff]
  %v47 = vld [vmem:[%s1 + $0x88] sm:$0xff]
  %v48 = vld [vmem:[%s1 + $0x90] sm:$0xff]
  %v49 = vld [vmem:[%s1 + $0x98] sm:$0xff]
  %v50 = vld [vmem:[%s1 + $0xa0] sm:$0xff]
  %v51 = vld [vmem:[%s1 + $0xa8] sm:$0xff]
  %v52 = vld [vmem:[%s1 + $0xb0] sm:$0xff]
  %v53 = vld [vmem:[%s1 + $0xb8] sm:$0xff]
  %v54 = vld [vmem:[%s1 + $0xc0] sm:$0xff]
  %v55 = vld [vmem:[%s1 + $0xc8] sm:$0xff]
  %v56 = vld [vmem:[%s1 + $0xd0] sm:$0xff]
  %v57 = vld [vmem:[%s1 + $0xd8] sm:$0xff]
  %v58 = vld [vmem:[%s1 + $0xe0] sm:$0xff]
  %v59 = vld [vmem:[%s1 + $0xe8] sm:$0xff]
  %v60 = vld [vmem:[%s1 + $0xf0] sm:$0xff]
  %v61 = vld [vmem:[%s1 + $0xf8] sm:$0xff]
  %v62 = vld [vmem:[%s1 + $0x100] sm:$0xff]
  %v63 = vld [vmem:[%s1 + $0x108] sm:$0xff]
  %v64 = vld [vmem:[%s1 + $0x110] sm:$0xff]
  %v65 = vld [vmem:[%s1 + $0x118] sm:$0xff]
  %v66 = vld [vmem:[%s1 + $0x120] sm:$0xff]
  %v67 = vld [vmem:[%s1 + $0x128] sm:$0xff]
  %v68 = vld [vmem:[%s1 + $0x130] sm:$0xff]
  %v69 = vld [vmem:[%s1 + $0x138] sm:$0xff]
  %v70 = vld [vmem:[%s1 + $0x140] sm:$0xff]
  %v71 = vld [vmem:[%s1 + $0x148] sm:$0xff]
  %v72 = vld [vmem:[%s1 + $0x150] sm:$0xff]
  %v73 = vld [vmem:[%s1 + $0x158] sm:$0xff]
  %v74 = vld [vmem:[%s1 + $0x160] sm:$0xff]
  %v75 = vld [vmem:[%s1 + $0x168] sm:$0xff]
  %v76 = vld [vmem:[%s1 + $0x170] sm:$0xff]
  %v77 = vld [vmem:[%s1 + $0x178] sm:$0xff]
  %v78 = vld [vmem:[%s1 + $0x180] sm:$0xff]
  %v79 = vld [vmem:[%s1 + $0x188] sm:$0xff]
  %v80 = vld [vmem:[%s1 + $0x190] sm:$0xff]
  %v81 = vld [vmem:[%s1 + $0x198] sm:$0xff]
  %v82 = vld [vmem:[%s1 + $0x1a0] sm:$0xff]
  %v83 = vld [vmem:[%s1 + $0x1a8] sm:$0xff]
  %v84 = vld [vmem:[%s1 + $0x1b0] sm:$0xff]
  %v85 = vld [vmem:[%s1 + $0x1b8] sm:$0xff]
  %v86 = vld [vmem:[%s1 + $0x1c0] sm:$0xff]
  %v87 = vld [vmem:[%s1 + $0x1c8] sm:$0xff]
  %v88 = vld [vmem:[%s1 + $0x1d0] sm:$0xff]
  %v89 = vld [vmem:[%s1 + $0x1d8] sm:$0xff]
  %v90 = vld [vmem:[%s1 + $0x1e0] sm:$0xff]
  %v91 = vld [vmem:[%s1 + $0x1e8] sm:$0xff]
  %v92 = vld [vmem:[%s1 + $0x1f0] sm:$0xff]
  %v93 = vld [vmem:[%s1 + $0x1f8] sm:$0xff]
  %v94 = vld [vmem:[%s1 + $0x200] sm:$0xff]
  %v95 = vld [vmem:[%s1 + $0x208] sm:$0xff]
  %v96 = vld [vmem:[%s1 + $0x210] sm:$0xff]
  %v97 = vld [vmem:[%s1 + $0x218] sm:$0xff]
  %v98 = vld [vmem:[%s1 + $0x220] sm:$0xff]
  %v99 = vld [vmem:[%s1 + $0x228] sm:$0xff]
  %v100 = vld [vmem:[%s1 + $0x230] sm:$0xff]
  %v101 = vld [vmem:[%s1 + $0x238] sm:$0xff]
  %v102 = vld [vmem:[%s1 + $0x240] sm:$0xff]
  %v103 = vld [vmem:[%s1 + $0x248] sm:$0xff]
  %v104 = vld [vmem:[%s1 + $0x250] sm:$0xff]
  %v105 = vld [vmem:[%s1 + $0x258] sm:$0xff]
  %v106 = vld [vmem:[%s1 + $0x260] sm:$0xff]
  %v107 = vld [vmem:[%s1 + $0x268] sm:$0xff]
  %v108 = vld [vmem:[%s1 + $0x270] sm:$0xff]
  %v109 = vld [vmem:[%s1 + $0x278] sm:$0xff]
  %v110 = vld [vmem:[%s1 + $0x280] sm:$0xff]
  %v111 = vld [vmem:[%s1 + $0x288] sm:$0xff]
  %v112 = vld [vmem:[%s1 + $0x290] sm:$0xff]
  %v113 = vld [vmem:[%s1 + $0x298] sm:$0xff]
  %v114 = vld [vmem:[%s1 + $0x2a0] sm:$0xff]
  %v115 = vld [vmem:[%s1 + $0x2a8] sm:$0xff]
  %v116 = vld [vmem:[%s1 + $0x2b0] sm:$0xff]
  %v117 = vld [vmem:[%s1 + $0x2b8] sm:$0xff]
  %v118 = vld [vmem:[%s1 + $0x2c0] sm:$0xff]
  %v119 = vld [vmem:[%s1 + $0x2c8] sm:$0xff]
  %v120 = vld [vmem:[%s1 + $0x2d0] sm:$0xff]
  %v121 = vld [vmem:[%s1 + $0x2d8] sm:$0xff]
  %v122 = vld [vmem:[%s1 + $0x2e0] sm:$0xff]
  %v123 = vld [vmem:[%s1 + $0x2e8] sm:$0xff]
  %v124 = vld [vmem:[%s1 + $0x2f0] sm:$0xff]
  %v125 = vld [vmem:[%s1 + $0x2f8] sm:$0xff]
  %v126 = vld [vmem:[%s1 + $0x300] sm:$0xff]
  %v127 = vld [vmem:[%s1 + $0x308] sm:$0xff]
  %v128 = vld [vmem:[%s1 + $0x310] sm:$0xff]
  %v129 = vld [vmem:[%s1 + $0x318] sm:$0xff]
  %v130 = vld [vmem:[%s1 + $0x320] sm:$0xff]
  %v131 = vld [vmem:[%s1 + $0x328] sm:$0xff]
  %v132 = vld [vmem:[%s1 + $0x330] sm:$0xff]
  %v133 = vld [vmem:[%s1 + $0x338] sm:$0xff]
  %v134 = vld [vmem:[%s1 + $0x340] sm:$0xff]
  %v135 = vld [vmem:[%s1 + $0x348] sm:$0xff]
  %v136 = vld [vmem:[%s1 + $0x350] sm:$0xff]
  %v137 = vld [vmem:[%s1 + $0x358] sm:$0xff]
  %v138 = vld [vmem:[%s1 + $0x360] sm:$0xff]
  %v139 = vld [vmem:[%s1 + $0x368] sm:$0xff]
  %v140 = vld [vmem:[%s1 + $0x370] sm:$0xff]
  %v141 = vld [vmem:[%s1 + $0x378] sm:$0xff]
  %v142 = vld [vmem:[%s1 + $0x380] sm:$0xff]
  %v143 = vld [vmem:[%s1 + $0x388] sm:$0xff]
  %v144 = vld [vmem:[%s1 + $0x390] sm:$0xff]
  %v145 = vld [vmem:[%s1 + $0x398] sm:$0xff]
  %v146 = vld [vmem:[%s1 + $0x3a0] sm:$0xff]
  %v147 = vld [vmem:[%s1 + $0x3a8] sm:$0xff]
  %v148 = vld [vmem:[%s1 + $0x3b0] sm:$0xff]
  %v149 = vld [vmem:[%s1 + $0x3b8] sm:$0xff]
  %v150 = vld [vmem:[%s1 + $0x3c0] sm:$0xff]
  %v151 = vld [vmem:[%s1 + $0x3c8] sm:$0xff]
  %v152 = vld [vmem:[%s1 + $0x3d0] sm:$0xff]
  %v153 = vld [vmem:[%s1 + $0x3d8] sm:$0xff]
  %v154 = vld [vmem:[%s1 + $0x3e0] sm:$0xff]
  %v155 = vld [vmem:[%s1 + $0x3e8] sm:$0xff]
  %v156 = vld [vmem:[%s1 + $0x3f0] sm:$0xff]
  %v157 = vld [vmem:[%s1 + $0x3f8] sm:$0xff]
  %v162 = vunpack.c.l.b16 %v26
  %v163 = vunpack.c.h.b16 %v26
  %v164 = vunpack.c.l.b16 %v27
  %v165 = vunpack.c.h.b16 %v27
  %v166 = vunpack.c.l.b16 %v28
  %v167 = vunpack.c.h.b16 %v28
  %v168 = vunpack.c.l.b16 %v29
  %v169 = vunpack.c.h.b16 %v29
  %v170 = vpack.c.b16 %v166, %v162
  %v171 = vpack.c.b16 %v167, %v163
  %v172 = vpack.c.b16 %v168, %v164
  %v173 = vpack.c.b16 %v169, %v165
  %v306 = vunpack.c.l.b16 %v30
  %v307 = vunpack.c.h.b16 %v30
  %v308 = vunpack.c.l.b16 %v31
  %v309 = vunpack.c.h.b16 %v31
  %v310 = vunpack.c.l.b16 %v32
  %v311 = vunpack.c.h.b16 %v32
  %v312 = vunpack.c.l.b16 %v33
  %v313 = vunpack.c.h.b16 %v33
  %v314 = vunpack.c.l.b16 %v34
  %v315 = vunpack.c.h.b16 %v34
  %v316 = vunpack.c.l.b16 %v35
  %v317 = vunpack.c.h.b16 %v35
  %v318 = vunpack.c.l.b16 %v36
  %v319 = vunpack.c.h.b16 %v36
  %v320 = vunpack.c.l.b16 %v37
  %v321 = vunpack.c.h.b16 %v37
  %v322 = vunpack.c.l.b16 %v38
  %v323 = vunpack.c.h.b16 %v38
  %v324 = vunpack.c.l.b16 %v39
  %v325 = vunpack.c.h.b16 %v39
  %v326 = vunpack.c.l.b16 %v40
  %v327 = vunpack.c.h.b16 %v40
  %v328 = vunpack.c.l.b16 %v41
  %v329 = vunpack.c.h.b16 %v41
  %v330 = vunpack.c.l.b16 %v42
  %v331 = vunpack.c.h.b16 %v42
  %v332 = vunpack.c.l.b16 %v43
  %v333 = vunpack.c.h.b16 %v43
  %v334 = vunpack.c.l.b16 %v44
  %v335 = vunpack.c.h.b16 %v44
  %v336 = vunpack.c.l.b16 %v45
  %v337 = vunpack.c.h.b16 %v45
  %v338 = vunpack.c.l.b16 %v46
  %v339 = vunpack.c.h.b16 %v46
  %v340 = vunpack.c.l.b16 %v47
  %v341 = vunpack.c.h.b16 %v47
  %v342 = vunpack.c.l.b16 %v48
  %v343 = vunpack.c.h.b16 %v48
  %v344 = vunpack.c.l.b16 %v49
  %v345 = vunpack.c.h.b16 %v49
  %v346 = vunpack.c.l.b16 %v50
  %v347 = vunpack.c.h.b16 %v50
  %v348 = vunpack.c.l.b16 %v51
  %v349 = vunpack.c.h.b16 %v51
  %v350 = vunpack.c.l.b16 %v52
  %v351 = vunpack.c.h.b16 %v52
  %v352 = vunpack.c.l.b16 %v53
  %v353 = vunpack.c.h.b16 %v53
  %v354 = vunpack.c.l.b16 %v54
  %v355 = vunpack.c.h.b16 %v54
  %v356 = vunpack.c.l.b16 %v55
  %v357 = vunpack.c.h.b16 %v55
  %v358 = vunpack.c.l.b16 %v56
  %v359 = vunpack.c.h.b16 %v56
  %v360 = vunpack.c.l.b16 %v57
  %v361 = vunpack.c.h.b16 %v57
  %v362 = vunpack.c.l.b16 %v58
  %v363 = vunpack.c.h.b16 %v58
  %v364 = vunpack.c.l.b16 %v59
  %v365 = vunpack.c.h.b16 %v59
  %v366 = vunpack.c.l.b16 %v60
  %v367 = vunpack.c.h.b16 %v60
  %v368 = vunpack.c.l.b16 %v61
  %v369 = vunpack.c.h.b16 %v61
  %v370 = vunpack.c.l.b16 %v62
  %v371 = vunpack.c.h.b16 %v62
  %v372 = vunpack.c.l.b16 %v63
  %v373 = vunpack.c.h.b16 %v63
  %v374 = vunpack.c.l.b16 %v64
  %v375 = vunpack.c.h.b16 %v64
  %v376 = vunpack.c.l.b16 %v65
  %v377 = vunpack.c.h.b16 %v65
  %v378 = vunpack.c.l.b16 %v66
  %v379 = vunpack.c.h.b16 %v66
  %v380 = vunpack.c.l.b16 %v67
  %v381 = vunpack.c.h.b16 %v67
  %v382 = vunpack.c.l.b16 %v68
  %v383 = vunpack.c.h.b16 %v68
  %v384 = vunpack.c.l.b16 %v69
  %v385 = vunpack.c.h.b16 %v69
  %v386 = vunpack.c.l.b16 %v70
  %v387 = vunpack.c.h.b16 %v70
  %v388 = vunpack.c.l.b16 %v71
  %v389 = vunpack.c.h.b16 %v71
  %v390 = vunpack.c.l.b16 %v72
  %v391 = vunpack.c.h.b16 %v72
  %v392 = vunpack.c.l.b16 %v73
  %v393 = vunpack.c.h.b16 %v73
  %v394 = vunpack.c.l.b16 %v74
  %v395 = vunpack.c.h.b16 %v74
  %v396 = vunpack.c.l.b16 %v75
  %v397 = vunpack.c.h.b16 %v75
  %v398 = vunpack.c.l.b16 %v76
  %v399 = vunpack.c.h.b16 %v76
  %v400 = vunpack.c.l.b16 %v77
  %v401 = vunpack.c.h.b16 %v77
  %v402 = vunpack.c.l.b16 %v78
  %v403 = vunpack.c.h.b16 %v78
  %v404 = vunpack.c.l.b16 %v79
  %v405 = vunpack.c.h.b16 %v79
  %v406 = vunpack.c.l.b16 %v80
  %v407 = vunpack.c.h.b16 %v80
  %v408 = vunpack.c.l.b16 %v81
  %v409 = vunpack.c.h.b16 %v81
  %v410 = vunpack.c.l.b16 %v82
  %v411 = vunpack.c.h.b16 %v82
  %v412 = vunpack.c.l.b16 %v83
  %v413 = vunpack.c.h.b16 %v83
  %v414 = vunpack.c.l.b16 %v84
  %v415 = vunpack.c.h.b16 %v84
  %v416 = vunpack.c.l.b16 %v85
  %v417 = vunpack.c.h.b16 %v85
  %v418 = vunpack.c.l.b16 %v86
  %v419 = vunpack.c.h.b16 %v86
  %v420 = vunpack.c.l.b16 %v87
  %v421 = vunpack.c.h.b16 %v87
  %v422 = vunpack.c.l.b16 %v88
  %v423 = vunpack.c.h.b16 %v88
  %v424 = vunpack.c.l.b16 %v89
  %v425 = vunpack.c.h.b16 %v89
  %v426 = vunpack.c.l.b16 %v90
  %v427 = vunpack.c.h.b16 %v90
  %v428 = vunpack.c.l.b16 %v91
  %v429 = vunpack.c.h.b16 %v91
  %v430 = vunpack.c.l.b16 %v92
  %v431 = vunpack.c.h.b16 %v92
  %v432 = vunpack.c.l.b16 %v93
  %v433 = vunpack.c.h.b16 %v93
  %v434 = vunpack.c.l.b16 %v94
  %v435 = vunpack.c.h.b16 %v94
  %v436 = vunpack.c.l.b16 %v95
  %v437 = vunpack.c.h.b16 %v95
  %v438 = vunpack.c.l.b16 %v96
  %v439 = vunpack.c.h.b16 %v96
  %v440 = vunpack.c.l.b16 %v97
  %v441 = vunpack.c.h.b16 %v97
  %v442 = vunpack.c.l.b16 %v98
  %v443 = vunpack.c.h.b16 %v98
  %v444 = vunpack.c.l.b16 %v99
  %v445 = vunpack.c.h.b16 %v99
  %v446 = vunpack.c.l.b16 %v100
  %v447 = vunpack.c.h.b16 %v100
  %v448 = vunpack.c.l.b16 %v101
  %v449 = vunpack.c.h.b16 %v101
  %v450 = vunpack.c.l.b16 %v102
  %v451 = vunpack.c.h.b16 %v102
  %v452 = vunpack.c.l.b16 %v103
  %v453 = vunpack.c.h.b16 %v103
  %v454 = vunpack.c.l.b16 %v104
  %v455 = vunpack.c.h.b16 %v104
  %v456 = vunpack.c.l.b16 %v105
  %v457 = vunpack.c.h.b16 %v105
  %v458 = vunpack.c.l.b16 %v106
  %v459 = vunpack.c.h.b16 %v106
  %v460 = vunpack.c.l.b16 %v107
  %v461 = vunpack.c.h.b16 %v107
  %v462 = vunpack.c.l.b16 %v108
  %v463 = vunpack.c.h.b16 %v108
  %v464 = vunpack.c.l.b16 %v109
  %v465 = vunpack.c.h.b16 %v109
  %v466 = vunpack.c.l.b16 %v110
  %v467 = vunpack.c.h.b16 %v110
  %v468 = vunpack.c.l.b16 %v111
  %v469 = vunpack.c.h.b16 %v111
  %v470 = vunpack.c.l.b16 %v112
  %v471 = vunpack.c.h.b16 %v112
  %v472 = vunpack.c.l.b16 %v113
  %v473 = vunpack.c.h.b16 %v113
  %v474 = vunpack.c.l.b16 %v114
  %v475 = vunpack.c.h.b16 %v114
  %v476 = vunpack.c.l.b16 %v115
  %v477 = vunpack.c.h.b16 %v115
  %v478 = vunpack.c.l.b16 %v116
  %v479 = vunpack.c.h.b16 %v116
  %v480 = vunpack.c.l.b16 %v117
  %v481 = vunpack.c.h.b16 %v117
  %v482 = vunpack.c.l.b16 %v118
  %v483 = vunpack.c.h.b16 %v118
  %v484 = vunpack.c.l.b16 %v119
  %v485 = vunpack.c.h.b16 %v119
  %v486 = vunpack.c.l.b16 %v120
  %v487 = vunpack.c.h.b16 %v120
  %v488 = vunpack.c.l.b16 %v121
  %v489 = vunpack.c.h.b16 %v121
  %v490 = vunpack.c.l.b16 %v122
  %v491 = vunpack.c.h.b16 %v122
  %v492 = vunpack.c.l.b16 %v123
  %v493 = vunpack.c.h.b16 %v123
  %v494 = vunpack.c.l.b16 %v124
  %v495 = vunpack.c.h.b16 %v124
  %v496 = vunpack.c.l.b16 %v125
  %v497 = vunpack.c.h.b16 %v125
  %v498 = vunpack.c.l.b16 %v126
  %v499 = vunpack.c.h.b16 %v126
  %v500 = vunpack.c.l.b16 %v127
  %v501 = vunpack.c.h.b16 %v127
  %v502 = vunpack.c.l.b16 %v128
  %v503 = vunpack.c.h.b16 %v128
  %v504 = vunpack.c.l.b16 %v129
  %v505 = vunpack.c.h.b16 %v129
  %v506 = vunpack.c.l.b16 %v130
  %v507 = vunpack.c.h.b16 %v130
  %v508 = vunpack.c.l.b16 %v131
  %v509 = vunpack.c.h.b16 %v131
  %v510 = vunpack.c.l.b16 %v132
  %v511 = vunpack.c.h.b16 %v132
  %v512 = vunpack.c.l.b16 %v133
  %v513 = vunpack.c.h.b16 %v133
  %v514 = vunpack.c.l.b16 %v134
  %v515 = vunpack.c.h.b16 %v134
  %v516 = vunpack.c.l.b16 %v135
  %v517 = vunpack.c.h.b16 %v135
  %v518 = vunpack.c.l.b16 %v136
  %v519 = vunpack.c.h.b16 %v136
  %v520 = vunpack.c.l.b16 %v137
  %v521 = vunpack.c.h.b16 %v137
  %v522 = vunpack.c.l.b16 %v138
  %v523 = vunpack.c.h.b16 %v138
  %v524 = vunpack.c.l.b16 %v139
  %v525 = vunpack.c.h.b16 %v139
  %v526 = vunpack.c.l.b16 %v140
  %v527 = vunpack.c.h.b16 %v140
  %v528 = vunpack.c.l.b16 %v141
  %v529 = vunpack.c.h.b16 %v141
  %v530 = vunpack.c.l.b16 %v142
  %v531 = vunpack.c.h.b16 %v142
  %v532 = vunpack.c.l.b16 %v143
  %v533 = vunpack.c.h.b16 %v143
  %v534 = vunpack.c.l.b16 %v144
  %v535 = vunpack.c.h.b16 %v144
  %v536 = vunpack.c.l.b16 %v145
  %v537 = vunpack.c.h.b16 %v145
  %v538 = vunpack.c.l.b16 %v146
  %v539 = vunpack.c.h.b16 %v146
  %v540 = vunpack.c.l.b16 %v147
  %v541 = vunpack.c.h.b16 %v147
  %v542 = vunpack.c.l.b16 %v148
  %v543 = vunpack.c.h.b16 %v148
  %v544 = vunpack.c.l.b16 %v149
  %v545 = vunpack.c.h.b16 %v149
  %v546 = vunpack.c.l.b16 %v150
  %v547 = vunpack.c.h.b16 %v150
  %v548 = vunpack.c.l.b16 %v151
  %v549 = vunpack.c.h.b16 %v151
  %v550 = vunpack.c.l.b16 %v152
  %v551 = vunpack.c.h.b16 %v152
  %v552 = vunpack.c.l.b16 %v153
  %v553 = vunpack.c.h.b16 %v153
  %v554 = vunpack.c.l.b16 %v154
  %v555 = vunpack.c.h.b16 %v154
  %v556 = vunpack.c.l.b16 %v155
  %v557 = vunpack.c.h.b16 %v155
  %v558 = vunpack.c.l.b16 %v156
  %v559 = vunpack.c.h.b16 %v156
  %v560 = vunpack.c.l.b16 %v157
  %v561 = vunpack.c.h.b16 %v157
  %v562 = vpack.c.b16 %v310, %v306
  %v563 = vpack.c.b16 %v311, %v307
  %v564 = vpack.c.b16 %v312, %v308
  %v565 = vpack.c.b16 %v313, %v309
  %v566 = vpack.c.b16 %v318, %v314
  %v567 = vpack.c.b16 %v319, %v315
  %v568 = vpack.c.b16 %v320, %v316
  %v569 = vpack.c.b16 %v321, %v317
  %v570 = vpack.c.b16 %v326, %v322
  %v571 = vpack.c.b16 %v327, %v323
  %v572 = vpack.c.b16 %v328, %v324
  %v573 = vpack.c.b16 %v329, %v325
  %v574 = vpack.c.b16 %v334, %v330
  %v575 = vpack.c.b16 %v335, %v331
  %v576 = vpack.c.b16 %v336, %v332
  %v577 = vpack.c.b16 %v337, %v333
  %v578 = vpack.c.b16 %v342, %v338
  %v579 = vpack.c.b16 %v343, %v339
  %v580 = vpack.c.b16 %v344, %v340
  %v581 = vpack.c.b16 %v345, %v341
  %v582 = vpack.c.b16 %v350, %v346
  %v583 = vpack.c.b16 %v351, %v347
  %v584 = vpack.c.b16 %v352, %v348
  %v585 = vpack.c.b16 %v353, %v349
  %v586 = vpack.c.b16 %v358, %v354
  %v587 = vpack.c.b16 %v359, %v355
  %v588 = vpack.c.b16 %v360, %v356
  %v589 = vpack.c.b16 %v361, %v357
  %v590 = vpack.c.b16 %v366, %v362
  %v591 = vpack.c.b16 %v367, %v363
  %v592 = vpack.c.b16 %v368, %v364
  %v593 = vpack.c.b16 %v369, %v365
  %v594 = vpack.c.b16 %v374, %v370
  %v595 = vpack.c.b16 %v375, %v371
  %v596 = vpack.c.b16 %v376, %v372
  %v597 = vpack.c.b16 %v377, %v373
  %v598 = vpack.c.b16 %v382, %v378
  %v599 = vpack.c.b16 %v383, %v379
  %v600 = vpack.c.b16 %v384, %v380
  %v601 = vpack.c.b16 %v385, %v381
  %v602 = vpack.c.b16 %v390, %v386
  %v603 = vpack.c.b16 %v391, %v387
  %v604 = vpack.c.b16 %v392, %v388
  %v605 = vpack.c.b16 %v393, %v389
  %v606 = vpack.c.b16 %v398, %v394
  %v607 = vpack.c.b16 %v399, %v395
  %v608 = vpack.c.b16 %v400, %v396
  %v609 = vpack.c.b16 %v401, %v397
  %v610 = vpack.c.b16 %v406, %v402
  %v611 = vpack.c.b16 %v407, %v403
  %v612 = vpack.c.b16 %v408, %v404
  %v613 = vpack.c.b16 %v409, %v405
  %v614 = vpack.c.b16 %v414, %v410
  %v615 = vpack.c.b16 %v415, %v411
  %v616 = vpack.c.b16 %v416, %v412
  %v617 = vpack.c.b16 %v417, %v413
  %v618 = vpack.c.b16 %v422, %v418
  %v619 = vpack.c.b16 %v423, %v419
  %v620 = vpack.c.b16 %v424, %v420
  %v621 = vpack.c.b16 %v425, %v421
  %v622 = vpack.c.b16 %v430, %v426
  %v623 = vpack.c.b16 %v431, %v427
  %v624 = vpack.c.b16 %v432, %v428
  %v625 = vpack.c.b16 %v433, %v429
  %v626 = vpack.c.b16 %v438, %v434
  %v627 = vpack.c.b16 %v439, %v435
  %v628 = vpack.c.b16 %v440, %v436
  %v629 = vpack.c.b16 %v441, %v437
  %v630 = vpack.c.b16 %v446, %v442
  %v631 = vpack.c.b16 %v447, %v443
  %v632 = vpack.c.b16 %v448, %v444
  %v633 = vpack.c.b16 %v449, %v445
  %v634 = vpack.c.b16 %v454, %v450
  %v635 = vpack.c.b16 %v455, %v451
  %v636 = vpack.c.b16 %v456, %v452
  %v637 = vpack.c.b16 %v457, %v453
  %v638 = vpack.c.b16 %v462, %v458
  %v639 = vpack.c.b16 %v463, %v459
  %v640 = vpack.c.b16 %v464, %v460
  %v641 = vpack.c.b16 %v465, %v461
  %v642 = vpack.c.b16 %v470, %v466
  %v643 = vpack.c.b16 %v471, %v467
  %v644 = vpack.c.b16 %v472, %v468
  %v645 = vpack.c.b16 %v473, %v469
  %v646 = vpack.c.b16 %v478, %v474
  %v647 = vpack.c.b16 %v479, %v475
  %v648 = vpack.c.b16 %v480, %v476
  %v649 = vpack.c.b16 %v481, %v477
  %v650 = vpack.c.b16 %v486, %v482
  %v651 = vpack.c.b16 %v487, %v483
  %v652 = vpack.c.b16 %v488, %v484
  %v653 = vpack.c.b16 %v489, %v485
  %v654 = vpack.c.b16 %v494, %v490
  %v655 = vpack.c.b16 %v495, %v491
  %v656 = vpack.c.b16 %v496, %v492
  %v657 = vpack.c.b16 %v497, %v493
  %v658 = vpack.c.b16 %v502, %v498
  %v659 = vpack.c.b16 %v503, %v499
  %v660 = vpack.c.b16 %v504, %v500
  %v661 = vpack.c.b16 %v505, %v501
  %v662 = vpack.c.b16 %v510, %v506
  %v663 = vpack.c.b16 %v511, %v507
  %v664 = vpack.c.b16 %v512, %v508
  %v665 = vpack.c.b16 %v513, %v509
  %v666 = vpack.c.b16 %v518, %v514
  %v667 = vpack.c.b16 %v519, %v515
  %v668 = vpack.c.b16 %v520, %v516
  %v669 = vpack.c.b16 %v521, %v517
  %v670 = vpack.c.b16 %v526, %v522
  %v671 = vpack.c.b16 %v527, %v523
  %v672 = vpack.c.b16 %v528, %v524
  %v673 = vpack.c.b16 %v529, %v525
  %v674 = vpack.c.b16 %v534, %v530
  %v675 = vpack.c.b16 %v535, %v531
  %v676 = vpack.c.b16 %v536, %v532
  %v677 = vpack.c.b16 %v537, %v533
  %v678 = vpack.c.b16 %v542, %v538
  %v679 = vpack.c.b16 %v543, %v539
  %v680 = vpack.c.b16 %v544, %v540
  %v681 = vpack.c.b16 %v545, %v541
  %v682 = vpack.c.b16 %v550, %v546
  %v683 = vpack.c.b16 %v551, %v547
  %v684 = vpack.c.b16 %v552, %v548
  %v685 = vpack.c.b16 %v553, %v549
  %v686 = vpack.c.b16 %v558, %v554
  %v687 = vpack.c.b16 %v559, %v555
  %v688 = vpack.c.b16 %v560, %v556
  %v689 = vpack.c.b16 %v561, %v557
  %818 = vmatprep.subr.bf16.mxu0 %v591
  %819 = vmatpush1.bf16.msra.mxu0 %v590
  %820 = vmatprep.subr.bf16.mxu0 %v587
  %821 = vmatpush1.bf16.msra.mxu0 %v586
  %822 = vmatprep.subr.bf16.mxu0 %v583
  %823 = vmatpush1.bf16.msra.mxu0 %v582
  %824 = vmatprep.subr.bf16.mxu0 %v579
  %825 = vmatpush1.bf16.msra.mxu0 %v578
  %826 = vmatprep.subr.bf16.mxu0 %v575
  %827 = vmatpush1.bf16.msra.mxu0 %v574
  %828 = vmatprep.subr.bf16.mxu0 %v571
  %829 = vmatpush1.bf16.msra.mxu0 %v570
  %830 = vmatprep.subr.bf16.mxu0 %v567
  %831 = vmatpush1.bf16.msra.mxu0 %v566
  %832 = vmatprep.subr.bf16.mxu0 %v563
  %833 = vmatpush1.bf16.msra.mxu0 %v562
  %834 = vmatprep.subr.bf16.mxu0 %v623
  %835 = vmatpush2.bf16.msra.mxu0 %v622
  %836 = vmatprep.subr.bf16.mxu0 %v619
  %837 = vmatpush2.bf16.msra.mxu0 %v618
  %838 = vmatprep.subr.bf16.mxu0 %v615
  %839 = vmatpush2.bf16.msra.mxu0 %v614
  %840 = vmatprep.subr.bf16.mxu0 %v611
  %841 = vmatpush2.bf16.msra.mxu0 %v610
  %842 = vmatprep.subr.bf16.mxu0 %v607
  %843 = vmatpush2.bf16.msra.mxu0 %v606
  %844 = vmatprep.subr.bf16.mxu0 %v603
  %845 = vmatpush2.bf16.msra.mxu0 %v602
  %846 = vmatprep.subr.bf16.mxu0 %v599
  %847 = vmatpush2.bf16.msra.mxu0 %v598
  %848 = vmatprep.subr.bf16.mxu0 %v595
  %849 = vmatpush2.bf16.msra.mxu0 %v594
  %850 = vmatprep.mubr.bf16.mxu0 %v171
  %851 = vmatmul.mubr.bf16.gmra.mxu0 %v170
  %v852 = vpop.f32.mrf.mxu0
  %v853 = vadd.f32 0.0, %v852
  %v854 = vpop.f32.mrf.mxu0
  %v855 = vadd.f32 0.0, %v854
  %v856 = vpop.f32.mrf.mxu0
  %v857 = vadd.f32 0.0, %v856
  %v858 = vpop.f32.mrf.mxu0
  %v859 = vadd.f32 0.0, %v858
  %860 = vdwg.mxu0
  %861 = vmatprep.subr.bf16.mxu0 %v655
  %862 = vmatpush1.bf16.msra.mxu0 %v654
  %863 = vmatprep.subr.bf16.mxu0 %v651
  %864 = vmatpush1.bf16.msra.mxu0 %v650
  %865 = vmatprep.subr.bf16.mxu0 %v647
  %866 = vmatpush1.bf16.msra.mxu0 %v646
  %867 = vmatprep.subr.bf16.mxu0 %v643
  %868 = vmatpush1.bf16.msra.mxu0 %v642
  %869 = vmatprep.subr.bf16.mxu0 %v639
  %870 = vmatpush1.bf16.msra.mxu0 %v638
  %871 = vmatprep.subr.bf16.mxu0 %v635
  %872 = vmatpush1.bf16.msra.mxu0 %v634
  %873 = vmatprep.subr.bf16.mxu0 %v631
  %874 = vmatpush1.bf16.msra.mxu0 %v630
  %875 = vmatprep.subr.bf16.mxu0 %v627
  %876 = vmatpush1.bf16.msra.mxu0 %v626
  %877 = vmatprep.subr.bf16.mxu0 %v687
  %878 = vmatpush2.bf16.msra.mxu0 %v686
  %879 = vmatprep.subr.bf16.mxu0 %v683
  %880 = vmatpush2.bf16.msra.mxu0 %v682
  %881 = vmatprep.subr.bf16.mxu0 %v679
  %882 = vmatpush2.bf16.msra.mxu0 %v678
  %883 = vmatprep.subr.bf16.mxu0 %v675
  %884 = vmatpush2.bf16.msra.mxu0 %v674
  %885 = vmatprep.subr.bf16.mxu0 %v671
  %886 = vmatpush2.bf16.msra.mxu0 %v670
  %887 = vmatprep.subr.bf16.mxu0 %v667
  %888 = vmatpush2.bf16.msra.mxu0 %v666
  %889 = vmatprep.subr.bf16.mxu0 %v663
  %890 = vmatpush2.bf16.msra.mxu0 %v662
  %891 = vmatprep.subr.bf16.mxu0 %v659
  %892 = vmatpush2.bf16.msra.mxu0 %v658
  %893 = vmatprep.mubr.bf16.mxu0 %v173
  %894 = vmatmul.mubr.bf16.gmra.mxu0 %v172
  %v895 = vpop.f32.mrf.mxu0
  %v896 = vadd.f32 %v853, %v895
  %v897 = vpop.f32.mrf.mxu0
  %v898 = vadd.f32 %v855, %v897
  %v899 = vpop.f32.mrf.mxu0
  %v900 = vadd.f32 %v857, %v899
  %v901 = vpop.f32.mrf.mxu0
  %v902 = vadd.f32 %v859, %v901
  %903 = vdwg.mxu0
  %904 = vmatprep.subr.bf16.mxu0 %v593
  %905 = vmatpush1.bf16.msra.mxu0 %v592
  %906 = vmatprep.subr.bf16.mxu0 %v589
  %907 = vmatpush1.bf16.msra.mxu0 %v588
  %908 = vmatprep.subr.bf16.mxu0 %v585
  %909 = vmatpush1.bf16.msra.mxu0 %v584
  %910 = vmatprep.subr.bf16.mxu0 %v581
  %911 = vmatpush1.bf16.msra.mxu0 %v580
  %912 = vmatprep.subr.bf16.mxu0 %v577
  %913 = vmatpush1.bf16.msra.mxu0 %v576
  %914 = vmatprep.subr.bf16.mxu0 %v573
  %915 = vmatpush1.bf16.msra.mxu0 %v572
  %916 = vmatprep.subr.bf16.mxu0 %v569
  %917 = vmatpush1.bf16.msra.mxu0 %v568
  %918 = vmatprep.subr.bf16.mxu0 %v565
  %919 = vmatpush1.bf16.msra.mxu0 %v564
  %920 = vmatprep.subr.bf16.mxu0 %v625
  %921 = vmatpush2.bf16.msra.mxu0 %v624
  %922 = vmatprep.subr.bf16.mxu0 %v621
  %923 = vmatpush2.bf16.msra.mxu0 %v620
  %924 = vmatprep.subr.bf16.mxu0 %v617
  %925 = vmatpush2.bf16.msra.mxu0 %v616
  %926 = vmatprep.subr.bf16.mxu0 %v613
  %927 = vmatpush2.bf16.msra.mxu0 %v612
  %928 = vmatprep.subr.bf16.mxu0 %v609
  %929 = vmatpush2.bf16.msra.mxu0 %v608
  %930 = vmatprep.subr.bf16.mxu0 %v605
  %931 = vmatpush2.bf16.msra.mxu0 %v604
  %932 = vmatprep.subr.bf16.mxu0 %v601
  %933 = vmatpush2.bf16.msra.mxu0 %v600
  %934 = vmatprep.subr.bf16.mxu0 %v597
  %935 = vmatpush2.bf16.msra.mxu0 %v596
  %936 = vmatprep.mubr.bf16.mxu0 %v171
  %937 = vmatmul.mubr.bf16.gmra.mxu0 %v170
  %v938 = vpop.f32.mrf.mxu0
  %v939 = vadd.f32 0.0, %v938
  %v940 = vpop.f32.mrf.mxu0
  %v941 = vadd.f32 0.0, %v940
  %v942 = vpop.f32.mrf.mxu0
  %v943 = vadd.f32 0.0, %v942
  %v944 = vpop.f32.mrf.mxu0
  %v945 = vadd.f32 0.0, %v944
  %946 = vdwg.mxu0
  %947 = vmatprep.subr.bf16.mxu0 %v657
  %948 = vmatpush1.bf16.msra.mxu0 %v656
  %949 = vmatprep.subr.bf16.mxu0 %v653
  %950 = vmatpush1.bf16.msra.mxu0 %v652
  %951 = vmatprep.subr.bf16.mxu0 %v649
  %952 = vmatpush1.bf16.msra.mxu0 %v648
  %953 = vmatprep.subr.bf16.mxu0 %v645
  %954 = vmatpush1.bf16.msra.mxu0 %v644
  %955 = vmatprep.subr.bf16.mxu0 %v641
  %956 = vmatpush1.bf16.msra.mxu0 %v640
  %957 = vmatprep.subr.bf16.mxu0 %v637
  %958 = vmatpush1.bf16.msra.mxu0 %v636
  %959 = vmatprep.subr.bf16.mxu0 %v633
  %960 = vmatpush1.bf16.msra.mxu0 %v632
  %961 = vmatprep.subr.bf16.mxu0 %v629
  %962 = vmatpush1.bf16.msra.mxu0 %v628
  %963 = vmatprep.subr.bf16.mxu0 %v689
  %964 = vmatpush2.bf16.msra.mxu0 %v688
  %965 = vmatprep.subr.bf16.mxu0 %v685
  %966 = vmatpush2.bf16.msra.mxu0 %v684
  %967 = vmatprep.subr.bf16.mxu0 %v681
  %968 = vmatpush2.bf16.msra.mxu0 %v680
  %969 = vmatprep.subr.bf16.mxu0 %v677
  %970 = vmatpush2.bf16.msra.mxu0 %v676
  %971 = vmatprep.subr.bf16.mxu0 %v673
  %972 = vmatpush2.bf16.msra.mxu0 %v672
  %973 = vmatprep.subr.bf16.mxu0 %v669
  %974 = vmatpush2.bf16.msra.mxu0 %v668
  %975 = vmatprep.subr.bf16.mxu0 %v665
  %976 = vmatpush2.bf16.msra.mxu0 %v664
  %977 = vmatprep.subr.bf16.mxu0 %v661
  %978 = vmatpush2.bf16.msra.mxu0 %v660
  %979 = vmatprep.mubr.bf16.mxu0 %v173
  %980 = vmatmul.mubr.bf16.gmra.mxu0 %v172
  %v981 = vpop.f32.mrf.mxu0
  %v982 = vadd.f32 %v939, %v981
  %v983 = vpop.f32.mrf.mxu0
  %v984 = vadd.f32 %v941, %v983
  %v985 = vpop.f32.mrf.mxu0
  %v986 = vadd.f32 %v943, %v985
  %v987 = vpop.f32.mrf.mxu0
  %v988 = vadd.f32 %v945, %v987
  %989 = vdwg.mxu0
  %v990 = vld [vmem:[%s2] sm:$0xf]
  %v992 = vlaneseq
  %v993 = vshrl.u32 %v992, 7
  %v994 = vsub.s32 0, %v993
  %v995 = vrot.slane %v990, %v994
  %v996 = vlaneseq
  %v997 = vshrl.u32 %v996, 7
  %v998 = vsub.s32 1, %v997
  %v999 = vrot.slane %v990, %v998
  %v1000 = vlaneseq
  %v1001 = vshrl.u32 %v1000, 7
  %v1002 = vsub.s32 2, %v1001
  %v1003 = vrot.slane %v990, %v1002
  %v1004 = vlaneseq
  %v1005 = vshrl.u32 %v1004, 7
  %v1006 = vsub.s32 3, %v1005
  %v1007 = vrot.slane %v990, %v1006
  %v1012 = vmul.f32 %v896, %v995
  %v1013 = vmul.f32 %v898, %v999
  %v1014 = vmul.f32 %v982, %v1003
  %v1015 = vmul.f32 %v984, %v1007
  %v1016 = vmul.f32 %v900, %v995
  %v1017 = vmul.f32 %v902, %v999
  %v1018 = vmul.f32 %v986, %v1003
  %v1019 = vmul.f32 %v988, %v1007
  %v1020 = vld [vmem:[%s3] sm:$0xf]
  %v1022 = vlaneseq
  %v1023 = vshrl.u32 %v1022, 7
  %v1024 = vsub.s32 0, %v1023
  %v1025 = vrot.slane %v1020, %v1024
  %v1026 = vlaneseq
  %v1027 = vshrl.u32 %v1026, 7
  %v1028 = vsub.s32 1, %v1027
  %v1029 = vrot.slane %v1020, %v1028
  %v1030 = vlaneseq
  %v1031 = vshrl.u32 %v1030, 7
  %v1032 = vsub.s32 2, %v1031
  %v1033 = vrot.slane %v1020, %v1032
  %v1034 = vlaneseq
  %v1035 = vshrl.u32 %v1034, 7
  %v1036 = vsub.s32 3, %v1035
  %v1037 = vrot.slane %v1020, %v1036
  %v1042 = vadd.f32 %v1012, %v1025
  %v1043 = vadd.f32 %v1013, %v1029
  %v1044 = vadd.f32 %v1014, %v1033
  %v1045 = vadd.f32 %v1015, %v1037
  %v1046 = vadd.f32 %v1016, %v1025
  %v1047 = vadd.f32 %v1017, %v1029
  %v1048 = vadd.f32 %v1018, %v1033
  %v1049 = vadd.f32 %v1019, %v1037
  %v1050 = vmax.f32 %v1042, 0.0
  %v1051 = vmax.f32 %v1043, 0.0
  %v1052 = vmax.f32 %v1044, 0.0
  %v1053 = vmax.f32 %v1045, 0.0
  %v1054 = vmax.f32 %v1046, 0.0
  %v1055 = vmax.f32 %v1047, 0.0
  %v1056 = vmax.f32 %v1048, 0.0
  %v1057 = vmax.f32 %v1049, 0.0
  %v1058 = vpack.c.bf16 %v1054, %v1050
  %v1059 = vpack.c.bf16 %v1055, %v1051
  %v1060 = vpack.c.bf16 %v1056, %v1052
  %v1061 = vpack.c.bf16 %v1057, %v1053
  %v1062 = vld [vmem:[%s4] sm:$0xff]
  %v1063 = vld [vmem:[%s4 + $0x8] sm:$0xff]
  %v1064 = vld [vmem:[%s4 + $0x10] sm:$0xff]
  %v1065 = vld [vmem:[%s4 + $0x18] sm:$0xff]
  %v1066 = vld [vmem:[%s4 + $0x20] sm:$0xff]
  %v1067 = vld [vmem:[%s4 + $0x28] sm:$0xff]
  %v1068 = vld [vmem:[%s4 + $0x30] sm:$0xff]
  %v1069 = vld [vmem:[%s4 + $0x38] sm:$0xff]
  %v1070 = vld [vmem:[%s4 + $0x40] sm:$0xff]
  %v1071 = vld [vmem:[%s4 + $0x48] sm:$0xff]
  %v1072 = vld [vmem:[%s4 + $0x50] sm:$0xff]
  %v1073 = vld [vmem:[%s4 + $0x58] sm:$0xff]
  %v1074 = vld [vmem:[%s4 + $0x60] sm:$0xff]
  %v1075 = vld [vmem:[%s4 + $0x68] sm:$0xff]
  %v1076 = vld [vmem:[%s4 + $0x70] sm:$0xff]
  %v1077 = vld [vmem:[%s4 + $0x78] sm:$0xff]
  %v1078 = vld [vmem:[%s4 + $0x80] sm:$0xff]
  %v1079 = vld [vmem:[%s4 + $0x88] sm:$0xff]
  %v1080 = vld [vmem:[%s4 + $0x90] sm:$0xff]
  %v1081 = vld [vmem:[%s4 + $0x98] sm:$0xff]
  %v1082 = vld [vmem:[%s4 + $0xa0] sm:$0xff]
  %v1083 = vld [vmem:[%s4 + $0xa8] sm:$0xff]
  %v1084 = vld [vmem:[%s4 + $0xb0] sm:$0xff]
  %v1085 = vld [vmem:[%s4 + $0xb8] sm:$0xff]
  %v1086 = vld [vmem:[%s4 + $0xc0] sm:$0xff]
  %v1087 = vld [vmem:[%s4 + $0xc8] sm:$0xff]
  %v1088 = vld [vmem:[%s4 + $0xd0] sm:$0xff]
  %v1089 = vld [vmem:[%s4 + $0xd8] sm:$0xff]
  %v1090 = vld [vmem:[%s4 + $0xe0] sm:$0xff]
  %v1091 = vld [vmem:[%s4 + $0xe8] sm:$0xff]
  %v1092 = vld [vmem:[%s4 + $0xf0] sm:$0xff]
  %v1093 = vld [vmem:[%s4 + $0xf8] sm:$0xff]
  %v1094 = vld [vmem:[%s4 + $0x100] sm:$0xff]
  %v1095 = vld [vmem:[%s4 + $0x108] sm:$0xff]
  %v1096 = vld [vmem:[%s4 + $0x110] sm:$0xff]
  %v1097 = vld [vmem:[%s4 + $0x118] sm:$0xff]
  %v1098 = vld [vmem:[%s4 + $0x120] sm:$0xff]
  %v1099 = vld [vmem:[%s4 + $0x128] sm:$0xff]
  %v1100 = vld [vmem:[%s4 + $0x130] sm:$0xff]
  %v1101 = vld [vmem:[%s4 + $0x138] sm:$0xff]
  %v1102 = vld [vmem:[%s4 + $0x140] sm:$0xff]
  %v1103 = vld [vmem:[%s4 + $0x148] sm:$0xff]
  %v1104 = vld [vmem:[%s4 + $0x150] sm:$0xff]
  %v1105 = vld [vmem:[%s4 + $0x158] sm:$0xff]
  %v1106 = vld [vmem:[%s4 + $0x160] sm:$0xff]
  %v1107 = vld [vmem:[%s4 + $0x168] sm:$0xff]
  %v1108 = vld [vmem:[%s4 + $0x170] sm:$0xff]
  %v1109 = vld [vmem:[%s4 + $0x178] sm:$0xff]
  %v1110 = vld [vmem:[%s4 + $0x180] sm:$0xff]
  %v1111 = vld [vmem:[%s4 + $0x188] sm:$0xff]
  %v1112 = vld [vmem:[%s4 + $0x190] sm:$0xff]
  %v1113 = vld [vmem:[%s4 + $0x198] sm:$0xff]
  %v1114 = vld [vmem:[%s4 + $0x1a0] sm:$0xff]
  %v1115 = vld [vmem:[%s4 + $0x1a8] sm:$0xff]
  %v1116 = vld [vmem:[%s4 + $0x1b0] sm:$0xff]
  %v1117 = vld [vmem:[%s4 + $0x1b8] sm:$0xff]
  %v1118 = vld [vmem:[%s4 + $0x1c0] sm:$0xff]
  %v1119 = vld [vmem:[%s4 + $0x1c8] sm:$0xff]
  %v1120 = vld [vmem:[%s4 + $0x1d0] sm:$0xff]
  %v1121 = vld [vmem:[%s4 + $0x1d8] sm:$0xff]
  %v1122 = vld [vmem:[%s4 + $0x1e0] sm:$0xff]
  %v1123 = vld [vmem:[%s4 + $0x1e8] sm:$0xff]
  %v1124 = vld [vmem:[%s4 + $0x1f0] sm:$0xff]
  %v1125 = vld [vmem:[%s4 + $0x1f8] sm:$0xff]
  %v1126 = vld [vmem:[%s4 + $0x200] sm:$0xff]
  %v1127 = vld [vmem:[%s4 + $0x208] sm:$0xff]
  %v1128 = vld [vmem:[%s4 + $0x210] sm:$0xff]
  %v1129 = vld [vmem:[%s4 + $0x218] sm:$0xff]
  %v1130 = vld [vmem:[%s4 + $0x220] sm:$0xff]
  %v1131 = vld [vmem:[%s4 + $0x228] sm:$0xff]
  %v1132 = vld [vmem:[%s4 + $0x230] sm:$0xff]
  %v1133 = vld [vmem:[%s4 + $0x238] sm:$0xff]
  %v1134 = vld [vmem:[%s4 + $0x240] sm:$0xff]
  %v1135 = vld [vmem:[%s4 + $0x248] sm:$0xff]
  %v1136 = vld [vmem:[%s4 + $0x250] sm:$0xff]
  %v1137 = vld [vmem:[%s4 + $0x258] sm:$0xff]
  %v1138 = vld [vmem:[%s4 + $0x260] sm:$0xff]
  %v1139 = vld [vmem:[%s4 + $0x268] sm:$0xff]
  %v1140 = vld [vmem:[%s4 + $0x270] sm:$0xff]
  %v1141 = vld [vmem:[%s4 + $0x278] sm:$0xff]
  %v1142 = vld [vmem:[%s4 + $0x280] sm:$0xff]
  %v1143 = vld [vmem:[%s4 + $0x288] sm:$0xff]
  %v1144 = vld [vmem:[%s4 + $0x290] sm:$0xff]
  %v1145 = vld [vmem:[%s4 + $0x298] sm:$0xff]
  %v1146 = vld [vmem:[%s4 + $0x2a0] sm:$0xff]
  %v1147 = vld [vmem:[%s4 + $0x2a8] sm:$0xff]
  %v1148 = vld [vmem:[%s4 + $0x2b0] sm:$0xff]
  %v1149 = vld [vmem:[%s4 + $0x2b8] sm:$0xff]
  %v1150 = vld [vmem:[%s4 + $0x2c0] sm:$0xff]
  %v1151 = vld [vmem:[%s4 + $0x2c8] sm:$0xff]
  %v1152 = vld [vmem:[%s4 + $0x2d0] sm:$0xff]
  %v1153 = vld [vmem:[%s4 + $0x2d8] sm:$0xff]
  %v1154 = vld [vmem:[%s4 + $0x2e0] sm:$0xff]
  %v1155 = vld [vmem:[%s4 + $0x2e8] sm:$0xff]
  %v1156 = vld [vmem:[%s4 + $0x2f0] sm:$0xff]
  %v1157 = vld [vmem:[%s4 + $0x2f8] sm:$0xff]
  %v1158 = vld [vmem:[%s4 + $0x300] sm:$0xff]
  %v1159 = vld [vmem:[%s4 + $0x308] sm:$0xff]
  %v1160 = vld [vmem:[%s4 + $0x310] sm:$0xff]
  %v1161 = vld [vmem:[%s4 + $0x318] sm:$0xff]
  %v1162 = vld [vmem:[%s4 + $0x320] sm:$0xff]
  %v1163 = vld [vmem:[%s4 + $0x328] sm:$0xff]
  %v1164 = vld [vmem:[%s4 + $0x330] sm:$0xff]
  %v1165 = vld [vmem:[%s4 + $0x338] sm:$0xff]
  %v1166 = vld [vmem:[%s4 + $0x340] sm:$0xff]
  %v1167 = vld [vmem:[%s4 + $0x348] sm:$0xff]
  %v1168 = vld [vmem:[%s4 + $0x350] sm:$0xff]
  %v1169 = vld [vmem:[%s4 + $0x358] sm:$0xff]
  %v1170 = vld [vmem:[%s4 + $0x360] sm:$0xff]
  %v1171 = vld [vmem:[%s4 + $0x368] sm:$0xff]
  %v1172 = vld [vmem:[%s4 + $0x370] sm:$0xff]
  %v1173 = vld [vmem:[%s4 + $0x378] sm:$0xff]
  %v1174 = vld [vmem:[%s4 + $0x380] sm:$0xff]
  %v1175 = vld [vmem:[%s4 + $0x388] sm:$0xff]
  %v1176 = vld [vmem:[%s4 + $0x390] sm:$0xff]
  %v1177 = vld [vmem:[%s4 + $0x398] sm:$0xff]
  %v1178 = vld [vmem:[%s4 + $0x3a0] sm:$0xff]
  %v1179 = vld [vmem:[%s4 + $0x3a8] sm:$0xff]
  %v1180 = vld [vmem:[%s4 + $0x3b0] sm:$0xff]
  %v1181 = vld [vmem:[%s4 + $0x3b8] sm:$0xff]
  %v1182 = vld [vmem:[%s4 + $0x3c0] sm:$0xff]
  %v1183 = vld [vmem:[%s4 + $0x3c8] sm:$0xff]
  %v1184 = vld [vmem:[%s4 + $0x3d0] sm:$0xff]
  %v1185 = vld [vmem:[%s4 + $0x3d8] sm:$0xff]
  %v1186 = vld [vmem:[%s4 + $0x3e0] sm:$0xff]
  %v1187 = vld [vmem:[%s4 + $0x3e8] sm:$0xff]
  %v1188 = vld [vmem:[%s4 + $0x3f0] sm:$0xff]
  %v1189 = vld [vmem:[%s4 + $0x3f8] sm:$0xff]
  %v1318 = vunpack.c.l.b16 %v1062
  %v1319 = vunpack.c.h.b16 %v1062
  %v1320 = vunpack.c.l.b16 %v1063
  %v1321 = vunpack.c.h.b16 %v1063
  %v1322 = vunpack.c.l.b16 %v1064
  %v1323 = vunpack.c.h.b16 %v1064
  %v1324 = vunpack.c.l.b16 %v1065
  %v1325 = vunpack.c.h.b16 %v1065
  %v1326 = vunpack.c.l.b16 %v1066
  %v1327 = vunpack.c.h.b16 %v1066
  %v1328 = vunpack.c.l.b16 %v1067
  %v1329 = vunpack.c.h.b16 %v1067
  %v1330 = vunpack.c.l.b16 %v1068
  %v1331 = vunpack.c.h.b16 %v1068
  %v1332 = vunpack.c.l.b16 %v1069
  %v1333 = vunpack.c.h.b16 %v1069
  %v1334 = vunpack.c.l.b16 %v1070
  %v1335 = vunpack.c.h.b16 %v1070
  %v1336 = vunpack.c.l.b16 %v1071
  %v1337 = vunpack.c.h.b16 %v1071
  %v1338 = vunpack.c.l.b16 %v1072
  %v1339 = vunpack.c.h.b16 %v1072
  %v1340 = vunpack.c.l.b16 %v1073
  %v1341 = vunpack.c.h.b16 %v1073
  %v1342 = vunpack.c.l.b16 %v1074
  %v1343 = vunpack.c.h.b16 %v1074
  %v1344 = vunpack.c.l.b16 %v1075
  %v1345 = vunpack.c.h.b16 %v1075
  %v1346 = vunpack.c.l.b16 %v1076
  %v1347 = vunpack.c.h.b16 %v1076
  %v1348 = vunpack.c.l.b16 %v1077
  %v1349 = vunpack.c.h.b16 %v1077
  %v1350 = vunpack.c.l.b16 %v1078
  %v1351 = vunpack.c.h.b16 %v1078
  %v1352 = vunpack.c.l.b16 %v1079
  %v1353 = vunpack.c.h.b16 %v1079
  %v1354 = vunpack.c.l.b16 %v1080
  %v1355 = vunpack.c.h.b16 %v1080
  %v1356 = vunpack.c.l.b16 %v1081
  %v1357 = vunpack.c.h.b16 %v1081
  %v1358 = vunpack.c.l.b16 %v1082
  %v1359 = vunpack.c.h.b16 %v1082
  %v1360 = vunpack.c.l.b16 %v1083
  %v1361 = vunpack.c.h.b16 %v1083
  %v1362 = vunpack.c.l.b16 %v1084
  %v1363 = vunpack.c.h.b16 %v1084
  %v1364 = vunpack.c.l.b16 %v1085
  %v1365 = vunpack.c.h.b16 %v1085
  %v1366 = vunpack.c.l.b16 %v1086
  %v1367 = vunpack.c.h.b16 %v1086
  %v1368 = vunpack.c.l.b16 %v1087
  %v1369 = vunpack.c.h.b16 %v1087
  %v1370 = vunpack.c.l.b16 %v1088
  %v1371 = vunpack.c.h.b16 %v1088
  %v1372 = vunpack.c.l.b16 %v1089
  %v1373 = vunpack.c.h.b16 %v1089
  %v1374 = vunpack.c.l.b16 %v1090
  %v1375 = vunpack.c.h.b16 %v1090
  %v1376 = vunpack.c.l.b16 %v1091
  %v1377 = vunpack.c.h.b16 %v1091
  %v1378 = vunpack.c.l.b16 %v1092
  %v1379 = vunpack.c.h.b16 %v1092
  %v1380 = vunpack.c.l.b16 %v1093
  %v1381 = vunpack.c.h.b16 %v1093
  %v1382 = vunpack.c.l.b16 %v1094
  %v1383 = vunpack.c.h.b16 %v1094
  %v1384 = vunpack.c.l.b16 %v1095
  %v1385 = vunpack.c.h.b16 %v1095
  %v1386 = vunpack.c.l.b16 %v1096
  %v1387 = vunpack.c.h.b16 %v1096
  %v1388 = vunpack.c.l.b16 %v1097
  %v1389 = vunpack.c.h.b16 %v1097
  %v1390 = vunpack.c.l.b16 %v1098
  %v1391 = vunpack.c.h.b16 %v1098
  %v1392 = vunpack.c.l.b16 %v1099
  %v1393 = vunpack.c.h.b16 %v1099
  %v1394 = vunpack.c.l.b16 %v1100
  %v1395 = vunpack.c.h.b16 %v1100
  %v1396 = vunpack.c.l.b16 %v1101
  %v1397 = vunpack.c.h.b16 %v1101
  %v1398 = vunpack.c.l.b16 %v1102
  %v1399 = vunpack.c.h.b16 %v1102
  %v1400 = vunpack.c.l.b16 %v1103
  %v1401 = vunpack.c.h.b16 %v1103
  %v1402 = vunpack.c.l.b16 %v1104
  %v1403 = vunpack.c.h.b16 %v1104
  %v1404 = vunpack.c.l.b16 %v1105
  %v1405 = vunpack.c.h.b16 %v1105
  %v1406 = vunpack.c.l.b16 %v1106
  %v1407 = vunpack.c.h.b16 %v1106
  %v1408 = vunpack.c.l.b16 %v1107
  %v1409 = vunpack.c.h.b16 %v1107
  %v1410 = vunpack.c.l.b16 %v1108
  %v1411 = vunpack.c.h.b16 %v1108
  %v1412 = vunpack.c.l.b16 %v1109
  %v1413 = vunpack.c.h.b16 %v1109
  %v1414 = vunpack.c.l.b16 %v1110
  %v1415 = vunpack.c.h.b16 %v1110
  %v1416 = vunpack.c.l.b16 %v1111
  %v1417 = vunpack.c.h.b16 %v1111
  %v1418 = vunpack.c.l.b16 %v1112
  %v1419 = vunpack.c.h.b16 %v1112
  %v1420 = vunpack.c.l.b16 %v1113
  %v1421 = vunpack.c.h.b16 %v1113
  %v1422 = vunpack.c.l.b16 %v1114
  %v1423 = vunpack.c.h.b16 %v1114
  %v1424 = vunpack.c.l.b16 %v1115
  %v1425 = vunpack.c.h.b16 %v1115
  %v1426 = vunpack.c.l.b16 %v1116
  %v1427 = vunpack.c.h.b16 %v1116
  %v1428 = vunpack.c.l.b16 %v1117
  %v1429 = vunpack.c.h.b16 %v1117
  %v1430 = vunpack.c.l.b16 %v1118
  %v1431 = vunpack.c.h.b16 %v1118
  %v1432 = vunpack.c.l.b16 %v1119
  %v1433 = vunpack.c.h.b16 %v1119
  %v1434 = vunpack.c.l.b16 %v1120
  %v1435 = vunpack.c.h.b16 %v1120
  %v1436 = vunpack.c.l.b16 %v1121
  %v1437 = vunpack.c.h.b16 %v1121
  %v1438 = vunpack.c.l.b16 %v1122
  %v1439 = vunpack.c.h.b16 %v1122
  %v1440 = vunpack.c.l.b16 %v1123
  %v1441 = vunpack.c.h.b16 %v1123
  %v1442 = vunpack.c.l.b16 %v1124
  %v1443 = vunpack.c.h.b16 %v1124
  %v1444 = vunpack.c.l.b16 %v1125
  %v1445 = vunpack.c.h.b16 %v1125
  %v1446 = vunpack.c.l.b16 %v1126
  %v1447 = vunpack.c.h.b16 %v1126
  %v1448 = vunpack.c.l.b16 %v1127
  %v1449 = vunpack.c.h.b16 %v1127
  %v1450 = vunpack.c.l.b16 %v1128
  %v1451 = vunpack.c.h.b16 %v1128
  %v1452 = vunpack.c.l.b16 %v1129
  %v1453 = vunpack.c.h.b16 %v1129
  %v1454 = vunpack.c.l.b16 %v1130
  %v1455 = vunpack.c.h.b16 %v1130
  %v1456 = vunpack.c.l.b16 %v1131
  %v1457 = vunpack.c.h.b16 %v1131
  %v1458 = vunpack.c.l.b16 %v1132
  %v1459 = vunpack.c.h.b16 %v1132
  %v1460 = vunpack.c.l.b16 %v1133
  %v1461 = vunpack.c.h.b16 %v1133
  %v1462 = vunpack.c.l.b16 %v1134
  %v1463 = vunpack.c.h.b16 %v1134
  %v1464 = vunpack.c.l.b16 %v1135
  %v1465 = vunpack.c.h.b16 %v1135
  %v1466 = vunpack.c.l.b16 %v1136
  %v1467 = vunpack.c.h.b16 %v1136
  %v1468 = vunpack.c.l.b16 %v1137
  %v1469 = vunpack.c.h.b16 %v1137
  %v1470 = vunpack.c.l.b16 %v1138
  %v1471 = vunpack.c.h.b16 %v1138
  %v1472 = vunpack.c.l.b16 %v1139
  %v1473 = vunpack.c.h.b16 %v1139
  %v1474 = vunpack.c.l.b16 %v1140
  %v1475 = vunpack.c.h.b16 %v1140
  %v1476 = vunpack.c.l.b16 %v1141
  %v1477 = vunpack.c.h.b16 %v1141
  %v1478 = vunpack.c.l.b16 %v1142
  %v1479 = vunpack.c.h.b16 %v1142
  %v1480 = vunpack.c.l.b16 %v1143
  %v1481 = vunpack.c.h.b16 %v1143
  %v1482 = vunpack.c.l.b16 %v1144
  %v1483 = vunpack.c.h.b16 %v1144
  %v1484 = vunpack.c.l.b16 %v1145
  %v1485 = vunpack.c.h.b16 %v1145
  %v1486 = vunpack.c.l.b16 %v1146
  %v1487 = vunpack.c.h.b16 %v1146
  %v1488 = vunpack.c.l.b16 %v1147
  %v1489 = vunpack.c.h.b16 %v1147
  %v1490 = vunpack.c.l.b16 %v1148
  %v1491 = vunpack.c.h.b16 %v1148
  %v1492 = vunpack.c.l.b16 %v1149
  %v1493 = vunpack.c.h.b16 %v1149
  %v1494 = vunpack.c.l.b16 %v1150
  %v1495 = vunpack.c.h.b16 %v1150
  %v1496 = vunpack.c.l.b16 %v1151
  %v1497 = vunpack.c.h.b16 %v1151
  %v1498 = vunpack.c.l.b16 %v1152
  %v1499 = vunpack.c.h.b16 %v1152
  %v1500 = vunpack.c.l.b16 %v1153
  %v1501 = vunpack.c.h.b16 %v1153
  %v1502 = vunpack.c.l.b16 %v1154
  %v1503 = vunpack.c.h.b16 %v1154
  %v1504 = vunpack.c.l.b16 %v1155
  %v1505 = vunpack.c.h.b16 %v1155
  %v1506 = vunpack.c.l.b16 %v1156
  %v1507 = vunpack.c.h.b16 %v1156
  %v1508 = vunpack.c.l.b16 %v1157
  %v1509 = vunpack.c.h.b16 %v1157
  %v1510 = vunpack.c.l.b16 %v1158
  %v1511 = vunpack.c.h.b16 %v1158
  %v1512 = vunpack.c.l.b16 %v1159
  %v1513 = vunpack.c.h.b16 %v1159
  %v1514 = vunpack.c.l.b16 %v1160
  %v1515 = vunpack.c.h.b16 %v1160
  %v1516 = vunpack.c.l.b16 %v1161
  %v1517 = vunpack.c.h.b16 %v1161
  %v1518 = vunpack.c.l.b16 %v1162
  %v1519 = vunpack.c.h.b16 %v1162
  %v1520 = vunpack.c.l.b16 %v1163
  %v1521 = vunpack.c.h.b16 %v1163
  %v1522 = vunpack.c.l.b16 %v1164
  %v1523 = vunpack.c.h.b16 %v1164
  %v1524 = vunpack.c.l.b16 %v1165
  %v1525 = vunpack.c.h.b16 %v1165
  %v1526 = vunpack.c.l.b16 %v1166
  %v1527 = vunpack.c.h.b16 %v1166
  %v1528 = vunpack.c.l.b16 %v1167
  %v1529 = vunpack.c.h.b16 %v1167
  %v1530 = vunpack.c.l.b16 %v1168
  %v1531 = vunpack.c.h.b16 %v1168
  %v1532 = vunpack.c.l.b16 %v1169
  %v1533 = vunpack.c.h.b16 %v1169
  %v1534 = vunpack.c.l.b16 %v1170
  %v1535 = vunpack.c.h.b16 %v1170
  %v1536 = vunpack.c.l.b16 %v1171
  %v1537 = vunpack.c.h.b16 %v1171
  %v1538 = vunpack.c.l.b16 %v1172
  %v1539 = vunpack.c.h.b16 %v1172
  %v1540 = vunpack.c.l.b16 %v1173
  %v1541 = vunpack.c.h.b16 %v1173
  %v1542 = vunpack.c.l.b16 %v1174
  %v1543 = vunpack.c.h.b16 %v1174
  %v1544 = vunpack.c.l.b16 %v1175
  %v1545 = vunpack.c.h.b16 %v1175
  %v1546 = vunpack.c.l.b16 %v1176
  %v1547 = vunpack.c.h.b16 %v1176
  %v1548 = vunpack.c.l.b16 %v1177
  %v1549 = vunpack.c.h.b16 %v1177
  %v1550 = vunpack.c.l.b16 %v1178
  %v1551 = vunpack.c.h.b16 %v1178
  %v1552 = vunpack.c.l.b16 %v1179
  %v1553 = vunpack.c.h.b16 %v1179
  %v1554 = vunpack.c.l.b16 %v1180
  %v1555 = vunpack.c.h.b16 %v1180
  %v1556 = vunpack.c.l.b16 %v1181
  %v1557 = vunpack.c.h.b16 %v1181
  %v1558 = vunpack.c.l.b16 %v1182
  %v1559 = vunpack.c.h.b16 %v1182
  %v1560 = vunpack.c.l.b16 %v1183
  %v1561 = vunpack.c.h.b16 %v1183
  %v1562 = vunpack.c.l.b16 %v1184
  %v1563 = vunpack.c.h.b16 %v1184
  %v1564 = vunpack.c.l.b16 %v1185
  %v1565 = vunpack.c.h.b16 %v1185
  %v1566 = vunpack.c.l.b16 %v1186
  %v1567 = vunpack.c.h.b16 %v1186
  %v1568 = vunpack.c.l.b16 %v1187
  %v1569 = vunpack.c.h.b16 %v1187
  %v1570 = vunpack.c.l.b16 %v1188
  %v1571 = vunpack.c.h.b16 %v1188
  %v1572 = vunpack.c.l.b16 %v1189
  %v1573 = vunpack.c.h.b16 %v1189
  %v1574 = vpack.c.b16 %v1322, %v1318
  %v1575 = vpack.c.b16 %v1323, %v1319
  %v1576 = vpack.c.b16 %v1324, %v1320
  %v1577 = vpack.c.b16 %v1325, %v1321
  %v1578 = vpack.c.b16 %v1330, %v1326
  %v1579 = vpack.c.b16 %v1331, %v1327
  %v1580 = vpack.c.b16 %v1332, %v1328
  %v1581 = vpack.c.b16 %v1333, %v1329
  %v1582 = vpack.c.b16 %v1338, %v1334
  %v1583 = vpack.c.b16 %v1339, %v1335
  %v1584 = vpack.c.b16 %v1340, %v1336
  %v1585 = vpack.c.b16 %v1341, %v1337
  %v1586 = vpack.c.b16 %v1346, %v1342
  %v1587 = vpack.c.b16 %v1347, %v1343
  %v1588 = vpack.c.b16 %v1348, %v1344
  %v1589 = vpack.c.b16 %v1349, %v1345
  %v1590 = vpack.c.b16 %v1354, %v1350
  %v1591 = vpack.c.b16 %v1355, %v1351
  %v1592 = vpack.c.b16 %v1356, %v1352
  %v1593 = vpack.c.b16 %v1357, %v1353
  %v1594 = vpack.c.b16 %v1362, %v1358
  %v1595 = vpack.c.b16 %v1363, %v1359
  %v1596 = vpack.c.b16 %v1364, %v1360
  %v1597 = vpack.c.b16 %v1365, %v1361
  %v1598 = vpack.c.b16 %v1370, %v1366
  %v1599 = vpack.c.b16 %v1371, %v1367
  %v1600 = vpack.c.b16 %v1372, %v1368
  %v1601 = vpack.c.b16 %v1373, %v1369
  %v1602 = vpack.c.b16 %v1378, %v1374
  %v1603 = vpack.c.b16 %v1379, %v1375
  %v1604 = vpack.c.b16 %v1380, %v1376
  %v1605 = vpack.c.b16 %v1381, %v1377
  %v1606 = vpack.c.b16 %v1386, %v1382
  %v1607 = vpack.c.b16 %v1387, %v1383
  %v1608 = vpack.c.b16 %v1388, %v1384
  %v1609 = vpack.c.b16 %v1389, %v1385
  %v1610 = vpack.c.b16 %v1394, %v1390
  %v1611 = vpack.c.b16 %v1395, %v1391
  %v1612 = vpack.c.b16 %v1396, %v1392
  %v1613 = vpack.c.b16 %v1397, %v1393
  %v1614 = vpack.c.b16 %v1402, %v1398
  %v1615 = vpack.c.b16 %v1403, %v1399
  %v1616 = vpack.c.b16 %v1404, %v1400
  %v1617 = vpack.c.b16 %v1405, %v1401
  %v1618 = vpack.c.b16 %v1410, %v1406
  %v1619 = vpack.c.b16 %v1411, %v1407
  %v1620 = vpack.c.b16 %v1412, %v1408
  %v1621 = vpack.c.b16 %v1413, %v1409
  %v1622 = vpack.c.b16 %v1418, %v1414
  %v1623 = vpack.c.b16 %v1419, %v1415
  %v1624 = vpack.c.b16 %v1420, %v1416
  %v1625 = vpack.c.b16 %v1421, %v1417
  %v1626 = vpack.c.b16 %v1426, %v1422
  %v1627 = vpack.c.b16 %v1427, %v1423
  %v1628 = vpack.c.b16 %v1428, %v1424
  %v1629 = vpack.c.b16 %v1429, %v1425
  %v1630 = vpack.c.b16 %v1434, %v1430
  %v1631 = vpack.c.b16 %v1435, %v1431
  %v1632 = vpack.c.b16 %v1436, %v1432
  %v1633 = vpack.c.b16 %v1437, %v1433
  %v1634 = vpack.c.b16 %v1442, %v1438
  %v1635 = vpack.c.b16 %v1443, %v1439
  %v1636 = vpack.c.b16 %v1444, %v1440
  %v1637 = vpack.c.b16 %v1445, %v1441
  %v1638 = vpack.c.b16 %v1450, %v1446
  %v1639 = vpack.c.b16 %v1451, %v1447
  %v1640 = vpack.c.b16 %v1452, %v1448
  %v1641 = vpack.c.b16 %v1453, %v1449
  %v1642 = vpack.c.b16 %v1458, %v1454
  %v1643 = vpack.c.b16 %v1459, %v1455
  %v1644 = vpack.c.b16 %v1460, %v1456
  %v1645 = vpack.c.b16 %v1461, %v1457
  %v1646 = vpack.c.b16 %v1466, %v1462
  %v1647 = vpack.c.b16 %v1467, %v1463
  %v1648 = vpack.c.b16 %v1468, %v1464
  %v1649 = vpack.c.b16 %v1469, %v1465
  %v1650 = vpack.c.b16 %v1474, %v1470
  %v1651 = vpack.c.b16 %v1475, %v1471
  %v1652 = vpack.c.b16 %v1476, %v1472
  %v1653 = vpack.c.b16 %v1477, %v1473
  %v1654 = vpack.c.b16 %v1482, %v1478
  %v1655 = vpack.c.b16 %v1483, %v1479
  %v1656 = vpack.c.b16 %v1484, %v1480
  %v1657 = vpack.c.b16 %v1485, %v1481
  %v1658 = vpack.c.b16 %v1490, %v1486
  %v1659 = vpack.c.b16 %v1491, %v1487
  %v1660 = vpack.c.b16 %v1492, %v1488
  %v1661 = vpack.c.b16 %v1493, %v1489
  %v1662 = vpack.c.b16 %v1498, %v1494
  %v1663 = vpack.c.b16 %v1499, %v1495
  %v1664 = vpack.c.b16 %v1500, %v1496
  %v1665 = vpack.c.b16 %v1501, %v1497
  %v1666 = vpack.c.b16 %v1506, %v1502
  %v1667 = vpack.c.b16 %v1507, %v1503
  %v1668 = vpack.c.b16 %v1508, %v1504
  %v1669 = vpack.c.b16 %v1509, %v1505
  %v1670 = vpack.c.b16 %v1514, %v1510
  %v1671 = vpack.c.b16 %v1515, %v1511
  %v1672 = vpack.c.b16 %v1516, %v1512
  %v1673 = vpack.c.b16 %v1517, %v1513
  %v1674 = vpack.c.b16 %v1522, %v1518
  %v1675 = vpack.c.b16 %v1523, %v1519
  %v1676 = vpack.c.b16 %v1524, %v1520
  %v1677 = vpack.c.b16 %v1525, %v1521
  %v1678 = vpack.c.b16 %v1530, %v1526
  %v1679 = vpack.c.b16 %v1531, %v1527
  %v1680 = vpack.c.b16 %v1532, %v1528
  %v1681 = vpack.c.b16 %v1533, %v1529
  %v1682 = vpack.c.b16 %v1538, %v1534
  %v1683 = vpack.c.b16 %v1539, %v1535
  %v1684 = vpack.c.b16 %v1540, %v1536
  %v1685 = vpack.c.b16 %v1541, %v1537
  %v1686 = vpack.c.b16 %v1546, %v1542
  %v1687 = vpack.c.b16 %v1547, %v1543
  %v1688 = vpack.c.b16 %v1548, %v1544
  %v1689 = vpack.c.b16 %v1549, %v1545
  %v1690 = vpack.c.b16 %v1554, %v1550
  %v1691 = vpack.c.b16 %v1555, %v1551
  %v1692 = vpack.c.b16 %v1556, %v1552
  %v1693 = vpack.c.b16 %v1557, %v1553
  %v1694 = vpack.c.b16 %v1562, %v1558
  %v1695 = vpack.c.b16 %v1563, %v1559
  %v1696 = vpack.c.b16 %v1564, %v1560
  %v1697 = vpack.c.b16 %v1565, %v1561
  %v1698 = vpack.c.b16 %v1570, %v1566
  %v1699 = vpack.c.b16 %v1571, %v1567
  %v1700 = vpack.c.b16 %v1572, %v1568
  %v1701 = vpack.c.b16 %v1573, %v1569
  %1830 = vmatprep.subr.bf16.mxu0 %v1603
  %1831 = vmatpush1.bf16.msra.mxu0 %v1602
  %1832 = vmatprep.subr.bf16.mxu0 %v1599
  %1833 = vmatpush1.bf16.msra.mxu0 %v1598
  %1834 = vmatprep.subr.bf16.mxu0 %v1595
  %1835 = vmatpush1.bf16.msra.mxu0 %v1594
  %1836 = vmatprep.subr.bf16.mxu0 %v1591
  %1837 = vmatpush1.bf16.msra.mxu0 %v1590
  %1838 = vmatprep.subr.bf16.mxu0 %v1587
  %1839 = vmatpush1.bf16.msra.mxu0 %v1586
  %1840 = vmatprep.subr.bf16.mxu0 %v1583
  %1841 = vmatpush1.bf16.msra.mxu0 %v1582
  %1842 = vmatprep.subr.bf16.mxu0 %v1579
  %1843 = vmatpush1.bf16.msra.mxu0 %v1578
  %1844 = vmatprep.subr.bf16.mxu0 %v1575
  %1845 = vmatpush1.bf16.msra.mxu0 %v1574
  %1846 = vmatprep.subr.bf16.mxu0 %v1635
  %1847 = vmatpush2.bf16.msra.mxu0 %v1634
  %1848 = vmatprep.subr.bf16.mxu0 %v1631
  %1849 = vmatpush2.bf16.msra.mxu0 %v1630
  %1850 = vmatprep.subr.bf16.mxu0 %v1627
  %1851 = vmatpush2.bf16.msra.mxu0 %v1626
  %1852 = vmatprep.subr.bf16.mxu0 %v1623
  %1853 = vmatpush2.bf16.msra.mxu0 %v1622
  %1854 = vmatprep.subr.bf16.mxu0 %v1619
  %1855 = vmatpush2.bf16.msra.mxu0 %v1618
  %1856 = vmatprep.subr.bf16.mxu0 %v1615
  %1857 = vmatpush2.bf16.msra.mxu0 %v1614
  %1858 = vmatprep.subr.bf16.mxu0 %v1611
  %1859 = vmatpush2.bf16.msra.mxu0 %v1610
  %1860 = vmatprep.subr.bf16.mxu0 %v1607
  %1861 = vmatpush2.bf16.msra.mxu0 %v1606
  %1862 = vmatprep.mubr.bf16.mxu0 %v1059
  %1863 = vmatmul.mubr.bf16.gmra.mxu0 %v1058
  %v1864 = vpop.f32.mrf.mxu0
  %v1865 = vadd.f32 0.0, %v1864
  %v1866 = vpop.f32.mrf.mxu0
  %v1867 = vadd.f32 0.0, %v1866
  %v1868 = vpop.f32.mrf.mxu0
  %v1869 = vadd.f32 0.0, %v1868
  %v1870 = vpop.f32.mrf.mxu0
  %v1871 = vadd.f32 0.0, %v1870
  %1872 = vdwg.mxu0
  %1873 = vmatprep.subr.bf16.mxu0 %v1667
  %1874 = vmatpush1.bf16.msra.mxu0 %v1666
  %1875 = vmatprep.subr.bf16.mxu0 %v1663
  %1876 = vmatpush1.bf16.msra.mxu0 %v1662
  %1877 = vmatprep.subr.bf16.mxu0 %v1659
  %1878 = vmatpush1.bf16.msra.mxu0 %v1658
  %1879 = vmatprep.subr.bf16.mxu0 %v1655
  %1880 = vmatpush1.bf16.msra.mxu0 %v1654
  %1881 = vmatprep.subr.bf16.mxu0 %v1651
  %1882 = vmatpush1.bf16.msra.mxu0 %v1650
  %1883 = vmatprep.subr.bf16.mxu0 %v1647
  %1884 = vmatpush1.bf16.msra.mxu0 %v1646
  %1885 = vmatprep.subr.bf16.mxu0 %v1643
  %1886 = vmatpush1.bf16.msra.mxu0 %v1642
  %1887 = vmatprep.subr.bf16.mxu0 %v1639
  %1888 = vmatpush1.bf16.msra.mxu0 %v1638
  %1889 = vmatprep.subr.bf16.mxu0 %v1699
  %1890 = vmatpush2.bf16.msra.mxu0 %v1698
  %1891 = vmatprep.subr.bf16.mxu0 %v1695
  %1892 = vmatpush2.bf16.msra.mxu0 %v1694
  %1893 = vmatprep.subr.bf16.mxu0 %v1691
  %1894 = vmatpush2.bf16.msra.mxu0 %v1690
  %1895 = vmatprep.subr.bf16.mxu0 %v1687
  %1896 = vmatpush2.bf16.msra.mxu0 %v1686
  %1897 = vmatprep.subr.bf16.mxu0 %v1683
  %1898 = vmatpush2.bf16.msra.mxu0 %v1682
  %1899 = vmatprep.subr.bf16.mxu0 %v1679
  %1900 = vmatpush2.bf16.msra.mxu0 %v1678
  %1901 = vmatprep.subr.bf16.mxu0 %v1675
  %1902 = vmatpush2.bf16.msra.mxu0 %v1674
  %1903 = vmatprep.subr.bf16.mxu0 %v1671
  %1904 = vmatpush2.bf16.msra.mxu0 %v1670
  %1905 = vmatprep.mubr.bf16.mxu0 %v1061
  %1906 = vmatmul.mubr.bf16.gmra.mxu0 %v1060
  %v1907 = vpop.f32.mrf.mxu0
  %v1908 = vadd.f32 %v1865, %v1907
  %v1909 = vpop.f32.mrf.mxu0
  %v1910 = vadd.f32 %v1867, %v1909
  %v1911 = vpop.f32.mrf.mxu0
  %v1912 = vadd.f32 %v1869, %v1911
  %v1913 = vpop.f32.mrf.mxu0
  %v1914 = vadd.f32 %v1871, %v1913
  %1915 = vdwg.mxu0
  %1916 = vmatprep.subr.bf16.mxu0 %v1605
  %1917 = vmatpush1.bf16.msra.mxu0 %v1604
  %1918 = vmatprep.subr.bf16.mxu0 %v1601
  %1919 = vmatpush1.bf16.msra.mxu0 %v1600
  %1920 = vmatprep.subr.bf16.mxu0 %v1597
  %1921 = vmatpush1.bf16.msra.mxu0 %v1596
  %1922 = vmatprep.subr.bf16.mxu0 %v1593
  %1923 = vmatpush1.bf16.msra.mxu0 %v1592
  %1924 = vmatprep.subr.bf16.mxu0 %v1589
  %1925 = vmatpush1.bf16.msra.mxu0 %v1588
  %1926 = vmatprep.subr.bf16.mxu0 %v1585
  %1927 = vmatpush1.bf16.msra.mxu0 %v1584
  %1928 = vmatprep.subr.bf16.mxu0 %v1581
  %1929 = vmatpush1.bf16.msra.mxu0 %v1580
  %1930 = vmatprep.subr.bf16.mxu0 %v1577
  %1931 = vmatpush1.bf16.msra.mxu0 %v1576
  %1932 = vmatprep.subr.bf16.mxu0 %v1637
  %1933 = vmatpush2.bf16.msra.mxu0 %v1636
  %1934 = vmatprep.subr.bf16.mxu0 %v1633
  %1935 = vmatpush2.bf16.msra.mxu0 %v1632
  %1936 = vmatprep.subr.bf16.mxu0 %v1629
  %1937 = vmatpush2.bf16.msra.mxu0 %v1628
  %1938 = vmatprep.subr.bf16.mxu0 %v1625
  %1939 = vmatpush2.bf16.msra.mxu0 %v1624
  %1940 = vmatprep.subr.bf16.mxu0 %v1621
  %1941 = vmatpush2.bf16.msra.mxu0 %v1620
  %1942 = vmatprep.subr.bf16.mxu0 %v1617
  %1943 = vmatpush2.bf16.msra.mxu0 %v1616
  %1944 = vmatprep.subr.bf16.mxu0 %v1613
  %1945 = vmatpush2.bf16.msra.mxu0 %v1612
  %1946 = vmatprep.subr.bf16.mxu0 %v1609
  %1947 = vmatpush2.bf16.msra.mxu0 %v1608
  %1948 = vmatprep.mubr.bf16.mxu0 %v1059
  %1949 = vmatmul.mubr.bf16.gmra.mxu0 %v1058
  %v1950 = vpop.f32.mrf.mxu0
  %v1951 = vadd.f32 0.0, %v1950
  %v1952 = vpop.f32.mrf.mxu0
  %v1953 = vadd.f32 0.0, %v1952
  %v1954 = vpop.f32.mrf.mxu0
  %v1955 = vadd.f32 0.0, %v1954
  %v1956 = vpop.f32.mrf.mxu0
  %v1957 = vadd.f32 0.0, %v1956
  %1958 = vdwg.mxu0
  %1959 = vmatprep.subr.bf16.mxu0 %v1669
  %1960 = vmatpush1.bf16.msra.mxu0 %v1668
  %1961 = vmatprep.subr.bf16.mxu0 %v1665
  %1962 = vmatpush1.bf16.msra.mxu0 %v1664
  %1963 = vmatprep.subr.bf16.mxu0 %v1661
  %1964 = vmatpush1.bf16.msra.mxu0 %v1660
  %1965 = vmatprep.subr.bf16.mxu0 %v1657
  %1966 = vmatpush1.bf16.msra.mxu0 %v1656
  %1967 = vmatprep.subr.bf16.mxu0 %v1653
  %1968 = vmatpush1.bf16.msra.mxu0 %v1652
  %1969 = vmatprep.subr.bf16.mxu0 %v1649
  %1970 = vmatpush1.bf16.msra.mxu0 %v1648
  %1971 = vmatprep.subr.bf16.mxu0 %v1645
  %1972 = vmatpush1.bf16.msra.mxu0 %v1644
  %1973 = vmatprep.subr.bf16.mxu0 %v1641
  %1974 = vmatpush1.bf16.msra.mxu0 %v1640
  %1975 = vmatprep.subr.bf16.mxu0 %v1701
  %1976 = vmatpush2.bf16.msra.mxu0 %v1700
  %1977 = vmatprep.subr.bf16.mxu0 %v1697
  %1978 = vmatpush2.bf16.msra.mxu0 %v1696
  %1979 = vmatprep.subr.bf16.mxu0 %v1693
  %1980 = vmatpush2.bf16.msra.mxu0 %v1692
  %1981 = vmatprep.subr.bf16.mxu0 %v1689
  %1982 = vmatpush2.bf16.msra.mxu0 %v1688
  %1983 = vmatprep.subr.bf16.mxu0 %v1685
  %1984 = vmatpush2.bf16.msra.mxu0 %v1684
  %1985 = vmatprep.subr.bf16.mxu0 %v1681
  %1986 = vmatpush2.bf16.msra.mxu0 %v1680
  %1987 = vmatprep.subr.bf16.mxu0 %v1677
  %1988 = vmatpush2.bf16.msra.mxu0 %v1676
  %1989 = vmatprep.subr.bf16.mxu0 %v1673
  %1990 = vmatpush2.bf16.msra.mxu0 %v1672
  %1991 = vmatprep.mubr.bf16.mxu0 %v1061
  %1992 = vmatmul.mubr.bf16.gmra.mxu0 %v1060
  %v1993 = vpop.f32.mrf.mxu0
  %v1994 = vadd.f32 %v1951, %v1993
  %v1995 = vpop.f32.mrf.mxu0
  %v1996 = vadd.f32 %v1953, %v1995
  %v1997 = vpop.f32.mrf.mxu0
  %v1998 = vadd.f32 %v1955, %v1997
  %v1999 = vpop.f32.mrf.mxu0
  %v2000 = vadd.f32 %v1957, %v1999
  %2001 = vdwg.mxu0
  %v2002 = vld [vmem:[%s5] sm:$0xf]
  %v2004 = vlaneseq
  %v2005 = vshrl.u32 %v2004, 7
  %v2006 = vsub.s32 0, %v2005
  %v2007 = vrot.slane %v2002, %v2006
  %v2008 = vlaneseq
  %v2009 = vshrl.u32 %v2008, 7
  %v2010 = vsub.s32 1, %v2009
  %v2011 = vrot.slane %v2002, %v2010
  %v2012 = vlaneseq
  %v2013 = vshrl.u32 %v2012, 7
  %v2014 = vsub.s32 2, %v2013
  %v2015 = vrot.slane %v2002, %v2014
  %v2016 = vlaneseq
  %v2017 = vshrl.u32 %v2016, 7
  %v2018 = vsub.s32 3, %v2017
  %v2019 = vrot.slane %v2002, %v2018
  %v2024 = vmul.f32 %v1908, %v2007
  %v2025 = vmul.f32 %v1910, %v2011
  %v2026 = vmul.f32 %v1994, %v2015
  %v2027 = vmul.f32 %v1996, %v2019
  %v2028 = vmul.f32 %v1912, %v2007
  %v2029 = vmul.f32 %v1914, %v2011
  %v2030 = vmul.f32 %v1998, %v2015
  %v2031 = vmul.f32 %v2000, %v2019
  %v2032 = vld [vmem:[%s6] sm:$0xf]
  %v2034 = vlaneseq
  %v2035 = vshrl.u32 %v2034, 7
  %v2036 = vsub.s32 0, %v2035
  %v2037 = vrot.slane %v2032, %v2036
  %v2038 = vlaneseq
  %v2039 = vshrl.u32 %v2038, 7
  %v2040 = vsub.s32 1, %v2039
  %v2041 = vrot.slane %v2032, %v2040
  %v2042 = vlaneseq
  %v2043 = vshrl.u32 %v2042, 7
  %v2044 = vsub.s32 2, %v2043
  %v2045 = vrot.slane %v2032, %v2044
  %v2046 = vlaneseq
  %v2047 = vshrl.u32 %v2046, 7
  %v2048 = vsub.s32 3, %v2047
  %v2049 = vrot.slane %v2032, %v2048
  %v2054 = vadd.f32 %v2024, %v2037
  %v2055 = vadd.f32 %v2025, %v2041
  %v2056 = vadd.f32 %v2026, %v2045
  %v2057 = vadd.f32 %v2027, %v2049
  %v2058 = vadd.f32 %v2028, %v2037
  %v2059 = vadd.f32 %v2029, %v2041
  %v2060 = vadd.f32 %v2030, %v2045
  %v2061 = vadd.f32 %v2031, %v2049
  %v2062 = vunpack.c.l.bf16 %v26
  %v2063 = vunpack.c.h.bf16 %v26
  %v2064 = vunpack.c.l.bf16 %v27
  %v2065 = vunpack.c.h.bf16 %v27
  %v2066 = vunpack.c.l.bf16 %v28
  %v2067 = vunpack.c.h.bf16 %v28
  %v2068 = vunpack.c.l.bf16 %v29
  %v2069 = vunpack.c.h.bf16 %v29
  %v2070 = vadd.f32 %v2054, %v2062
  %v2071 = vadd.f32 %v2055, %v2063
  %v2072 = vadd.f32 %v2056, %v2064
  %v2073 = vadd.f32 %v2057, %v2065
  %v2074 = vadd.f32 %v2058, %v2066
  %v2075 = vadd.f32 %v2059, %v2067
  %v2076 = vadd.f32 %v2060, %v2068
  %v2077 = vadd.f32 %v2061, %v2069
  %v2078 = vmax.f32 %v2070, 0.0
  %v2079 = vmax.f32 %v2071, 0.0
  %v2080 = vmax.f32 %v2072, 0.0
  %v2081 = vmax.f32 %v2073, 0.0
  %v2082 = vmax.f32 %v2074, 0.0
  %v2083 = vmax.f32 %v2075, 0.0
  %v2084 = vmax.f32 %v2076, 0.0
  %v2085 = vmax.f32 %v2077, 0.0
  %v2086 = vpack.c.bf16 %v2082, %v2078
  %v2087 = vpack.c.bf16 %v2083, %v2079
  %v2088 = vpack.c.bf16 %v2084, %v2080
  %v2089 = vpack.c.bf16 %v2085, %v2081
  %v2094 = vunpack.c.l.b16 %v2086
  %v2095 = vunpack.c.l.b16 %v2087
  %v2096 = vunpack.c.l.b16 %v2088
  %v2097 = vunpack.c.l.b16 %v2089
  %v2098 = vunpack.c.h.b16 %v2086
  %v2099 = vunpack.c.h.b16 %v2087
  %v2100 = vunpack.c.h.b16 %v2088
  %v2101 = vunpack.c.h.b16 %v2089
  %v2102 = vpack.c.b16 %v2095, %v2094
  %v2103 = vpack.c.b16 %v2097, %v2096
  %v2104 = vpack.c.b16 %v2099, %v2098
  %v2105 = vpack.c.b16 %v2101, %v2100
  %2110 = vst [vmem:[%s7] sm:$0xff] %v2102
  %2111 = vst [vmem:[%s7 + $0x8] sm:$0xff] %v2103
  %2112 = vst [vmem:[%s7 + $0x10] sm:$0xff] %v2104
  %2113 = vst [vmem:[%s7 + $0x18] sm:$0xff] %v2105
  // Predicated region
  $region30: #{resnet_forward.49} parent=0 // pred_check
    _
  $region31: #{resnet_forward.49} parent=0 // pred_check_branch
    %2115 = sbr.rel (0) target = $region33
  $region32: #{resnet_forward.49} parent=0 // pred_region
    _
  $region33: #{resnet_forward.49} parent=0 // pred_fallthru
    _
  // Predicated region
  $region34: #{resnet_forward.49} parent=0 // pred_check
    _
  $region35: #{resnet_forward.49} parent=0 // pred_check_branch
    %2117 = sbr.rel (0) target = $region37
  $region36: #{resnet_forward.49} parent=0 // pred_region
    _
  $region37: #{resnet_forward.49} parent=0 // pred_fallthru
    _

</llo_original>
